<compile_context>
chip_gen: v7x
topology: tpu7x:2x2x1
jax: 0.10.0
libtpu: 0.0.40
codegen_flags: <defaults>
</compile_context>

<pallas_src>
import jax
import jax.numpy as jnp
import numpy as np
from jax.experimental import pallas as pl
from jax.experimental.pallas import tpu as pltpu

GROUPS = 32
EPS = 1e-6


def _vmem_limit_bytes():
    # Per-generation scoped-VMEM limit instead of a hard-coded 48 MiB:
    # ~3/4 of physical VMEM (v5e/v6e -> 96 MiB, v7x -> 48 MiB).
    try:
        cap = getattr(pltpu.get_tpu_info(), "vmem_capacity_bytes", None)
    except Exception:
        cap = None
    if not cap:
        return 48 * 1024 * 1024          # known-good fallback
    return int(min(cap * 3 // 4, 112 * 1024 * 1024))


_COMPILER_PARAMS = pltpu.CompilerParams(
    dimension_semantics=("parallel",),   # batch axis -> megacore split
    vmem_limit_bytes=_vmem_limit_bytes(),
)


# ----------------------------------------------------------------------------
# In-kernel helpers
# ----------------------------------------------------------------------------
def _gn_silu(x2d, gamma_ref, beta_ref, gavg_ref):
    """GroupNorm(32, eps=1e-6) + SiLU on an (M, C) tile -> bf16 (M, C).

    Single elementwise pass for the stats (mean and mean-of-squares together),
    then one (2, C) x (C, C) group-averaging matmul; var = E[x^2] - E[x]^2
    kept in f32.  Result is cast to bf16 once (it feeds the bf16 MXU patches).
    """
    x = x2d.astype(jnp.float32)
    mean_c = jnp.mean(x, axis=0, keepdims=True)            # (1, C)
    meansq_c = jnp.mean(x * x, axis=0, keepdims=True)      # (1, C)
    mom = jnp.concatenate([mean_c, meansq_c], axis=0)      # (2, C)
    gmom = jnp.dot(mom, gavg_ref[...], preferred_element_type=jnp.float32)
    gmean = gmom[0:1, :]
    gvar = gmom[1:2, :] - gmean * gmean
    scale = jax.lax.rsqrt(gvar + EPS) * gamma_ref[...]
    y = (x - gmean) * scale + beta_ref[...]
    return (y * jax.nn.sigmoid(y)).astype(jnp.bfloat16)    # SiLU: x * sigmoid(x)


def _fill_halo(xp_ref, val_hwc):
    """Write val into the interior of the (H+2, W+2, C) bf16 halo scratch.

    Only the 1-pixel border is zeroed (not the whole scratch): the interior is
    fully overwritten on every call, so a full-tile zero store is redundant.
    """
    H, W, C = val_hwc.shape
    zrow = jnp.zeros((1, W + 2, C), xp_ref.dtype)
    zcol = jnp.zeros((H, 1, C), xp_ref.dtype)
    xp_ref[0:1, :, :] = zrow
    xp_ref[H + 1:H + 2, :, :] = zrow
    xp_ref[1:H + 1, 0:1, :] = zcol
    xp_ref[1:H + 1, W + 1:W + 2, :] = zcol
    xp_ref[1:H + 1, 1:W + 1, :] = val_hwc.astype(xp_ref.dtype)


def _conv3x3_into_acc(xp_ref, w_ref, acc_ref, init):
    """acc (H*W, Cout) f32 <- init + 3x3 conv of the bf16 halo scratch.

    One wide-K (K = 3*Cin) bf16 MXU matmul per dy, f32 accumulation.  The
    zero-init, conv bias and (optionally) the residual are folded into the
    dy == 0 matmul via `init`, so the accumulator is written exactly three
    times (adjacent += chain -> MRB-friendly in-place accumulation on v7x).
    """
    Hp, Wp, Cin = xp_ref.shape
    H, W = Hp - 2, Wp - 2
    for dy in range(3):                                     # static unroll (3 taps)
        rows = xp_ref[dy:dy + H]                            # (H, W+2, Cin) bf16
        patch = jnp.concatenate(
            [rows[:, 0:W, :], rows[:, 1:W + 1, :], rows[:, 2:W + 2, :]],
            axis=-1,
        ).reshape(H * W, 3 * Cin)
        contrib = jnp.dot(patch, w_ref[dy], preferred_element_type=jnp.float32)
        if dy == 0:
            acc_ref[...] = contrib + init
        else:
            acc_ref[...] += contrib


# ----------------------------------------------------------------------------
# Single fused kernel (one grid step == one batch element)
# ----------------------------------------------------------------------------
def _make_fused_kernel(variant):
    """variant in {"identity", "nin", "conv"} (residual path, baked at trace)."""

    def kernel(*refs):
        if variant == "identity":
            (x_ref, g1, b1, ga1, w1, cb1, g2, b2, ga2, w2, cb2,
             o_ref, xp1, xp2, acc) = refs
            sw = sb = None
        else:
            (x_ref, g1, b1, ga1, w1, cb1, g2, b2, ga2, w2, cb2, sw, sb,
             o_ref, xp1, xp2, acc) = refs
        _, H, W, Cout = o_ref.shape
        Cin = x_ref.shape[3]

        # ---- stage 1: h = conv1(silu(gn1(x)));  h stays in VMEM (acc) ----
        y1 = _gn_silu(x_ref[0].reshape(H * W, Cin), g1, b1, ga1)
        _fill_halo(xp1, y1.reshape(H, W, Cin))
        _conv3x3_into_acc(xp1, w1, acc, cb1[...])

        # ---- stage 2 prologue: silu(gn2(h));  Dropout == identity here ----
        y2 = _gn_silu(acc[...], g2, b2, ga2)
        _fill_halo(xp2, y2.reshape(H, W, Cout))

        if variant == "conv":
            # 3x3 conv_shortcut: reuse xp1 (conv1 already consumed it) and
            # park the shortcut result in the output block so nothing large
            # stays live in vregs across conv2.
            _fill_halo(xp1, x_ref[0])
            _conv3x3_into_acc(xp1, sw, acc, sb[...])
            o_ref[0] = acc[...].reshape(H, W, Cout)
            _conv3x3_into_acc(xp2, w2, acc, cb2[...])
            o_ref[0] = o_ref[0] + acc[...].reshape(H, W, Cout)
        else:
            if variant == "identity":
                res = x_ref[0].reshape(H * W, Cout)         # f32 identity residual
            else:  # "nin": fused 1x1 shortcut (single MXU matmul)
                res = jnp.dot(
                    x_ref[0].reshape(H * W, Cin).astype(jnp.bfloat16), sw[...],
                    preferred_element_type=jnp.float32) + sb[...]
            # Residual + conv2 bias both folded into conv2's dy == 0 matmul.
            _conv3x3_into_acc(xp2, w2, acc, cb2[...] + res)
            o_ref[0] = acc[...].reshape(H, W, Cout)

    return kernel


# ----------------------------------------------------------------------------
# pallas_call wrapper
# ----------------------------------------------------------------------------
def _img_spec(H, W, C):
    return pl.BlockSpec((1, H, W, C), lambda n: (n, 0, 0, 0))


def _bcast_spec(shape):
    nd = len(shape)
    return pl.BlockSpec(shape, lambda n, _nd=nd: (0,) * _nd)


def _run_fused(variant, x, operands, out_channels):
    N, H, W, Cin = x.shape
    Cout = out_channels
    in_specs = [
        _img_spec(H, W, Cin),               # x
        _bcast_spec((1, Cin)),              # gn1 gamma
        _bcast_spec((1, Cin)),              # gn1 beta
        _bcast_spec((Cin, Cin)),            # group-average matrix (in)
        _bcast_spec((3, 3 * Cin, Cout)),    # conv1 weight (dy-stacked, bf16)
        _bcast_spec((1, Cout)),             # conv1 bias
        _bcast_spec((1, Cout)),             # gn2 gamma
        _bcast_spec((1, Cout)),             # gn2 beta
        _bcast_spec((Cout, Cout)),          # group-average matrix (out)
        _bcast_spec((3, 3 * Cout, Cout)),   # conv2 weight (dy-stacked, bf16)
        _bcast_spec((1, Cout)),             # conv2 bias
    ]
    if variant == "nin":
        in_specs += [_bcast_spec((Cin, Cout)), _bcast_spec((1, Cout))]
    elif variant == "conv":
        in_specs += [_bcast_spec((3, 3 * Cin, Cout)), _bcast_spec((1, Cout))]

    return pl.pallas_call(
        _make_fused_kernel(variant),
        grid=(N,),
        in_specs=in_specs,
        out_specs=_img_spec(H, W, Cout),
        out_shape=jax.ShapeDtypeStruct((N, H, W, Cout), jnp.float32),
        scratch_shapes=[
            pltpu.VMEM((H + 2, W + 2, Cin), jnp.bfloat16),   # conv1/shortcut halo
            pltpu.VMEM((H + 2, W + 2, Cout), jnp.bfloat16),  # conv2 halo
            pltpu.VMEM((H * W, Cout), jnp.float32),          # conv accumulator
        ],
        compiler_params=_COMPILER_PARAMS,
    )(x, *operands)


# ----------------------------------------------------------------------------
# Module forward (glue: layout transpose, weight re-packing)
# ----------------------------------------------------------------------------
def group_avg_matrix(C, groups=GROUPS):
    cpg = C // groups
    g = np.arange(C) // cpg
    return jnp.asarray((g[:, None] == g[None, :]).astype(np.float32) / cpg)


def _stack_conv_weight(w_hwio):
    # (3, 3, Cin, Cout) -> (3, 3*Cin, Cout) bf16, matching the per-dy dx-concat
    k, _, cin, cout = w_hwio.shape
    return w_hwio.reshape(k, 3 * cin, cout).astype(jnp.bfloat16)


def chameleon_resnet_block(x_nchw, params, in_channels, out_channels,
                           use_conv_shortcut=False):
    # Module interface is NCHW (PyTorch); the kernel runs NHWC (channels = lanes).
    x = jnp.transpose(x_nchw, (0, 2, 3, 1)).astype(jnp.float32)
    gavg_in = group_avg_matrix(in_channels)
    gavg_out = group_avg_matrix(out_channels)
    w1 = _stack_conv_weight(params["conv1_w"])
    w2 = _stack_conv_weight(params["conv2_w"])
    common = [params["gn1_gamma"], params["gn1_beta"], gavg_in, w1,
              params["conv1_b"],
              params["gn2_gamma"], params["gn2_beta"], gavg_out, w2,
              params["conv2_b"]]
    if in_channels != out_channels:
        if use_conv_shortcut:
            out = _run_fused("conv", x,
                             common + [_stack_conv_weight(params["short_w"]),
                                       params["short_b"]], out_channels)
        else:
            out = _run_fused("nin", x,
                             common + [params["nin_w"].astype(jnp.bfloat16),
                                       params["nin_b"]], out_channels)
    else:
        out = _run_fused("identity", x, common, out_channels)
    return jnp.transpose(out, (0, 3, 1, 2))                  # NHWC -> NCHW


# ----------------------------------------------------------------------------
# Pure-JAX reference (dot_dtype = bf16 mirrors the kernel's MXU operands)
# ----------------------------------------------------------------------------
def _ref_groupnorm(x, gamma, beta):
    N, H, W, C = x.shape
    xg = x.reshape(N, H, W, GROUPS, C // GROUPS)
    mean = xg.mean(axis=(1, 2, 4), keepdims=True)
    var = ((xg - mean) ** 2).mean(axis=(1, 2, 4), keepdims=True)
    xn = ((xg - mean) / jnp.sqrt(var + EPS)).reshape(N, H, W, C)
    return xn * gamma.reshape(1, 1, 1, C) + beta.reshape(1, 1, 1, C)


def _ref_conv(x, w, b, pad, dot_dtype):
    y = jax.lax.conv_general_dilated(
        x.astype(dot_dtype), w.astype(dot_dtype), window_strides=(1, 1),
        padding=[(pad, pad), (pad, pad)],
        dimension_numbers=("NHWC", "HWIO", "NHWC"),
        preferred_element_type=jnp.float32)
    return y + b.reshape(1, 1, 1, -1)


def ref_block(x_nchw, params, cin, cout, use_conv_shortcut=False,
              dot_dtype=jnp.float32):
    x = jnp.transpose(x_nchw, (0, 2, 3, 1)).astype(jnp.float32)
    res = x
    h = _ref_groupnorm(x, params["gn1_gamma"][0], params["gn1_beta"][0])
    h = h * jax.nn.sigmoid(h)
    h = _ref_conv(h, params["conv1_w"], params["conv1_b"][0], 1, dot_dtype)
    h = _ref_groupnorm(h, params["gn2_gamma"][0], params["gn2_beta"][0])
    h = h * jax.nn.sigmoid(h)
    h = _ref_conv(h, params["conv2_w"], params["conv2_b"][0], 1, dot_dtype)
    if cin != cout:
        if use_conv_shortcut:
            res = _ref_conv(res, params["short_w"], params["short_b"][0], 1, dot_dtype)
        else:
            res = _ref_conv(res, params["nin_w"].reshape(1, 1, cin, cout),
                            params["nin_b"][0], 0, dot_dtype)
    return jnp.transpose(res + h, (0, 3, 1, 2))


# ----------------------------------------------------------------------------
def make_params(key, cin, cout):
    ks = jax.random.split(key, 12)
    return {
        "gn1_gamma": 1.0 + 0.1 * jax.random.normal(ks[0], (1, cin), jnp.float32),
        "gn1_beta": 0.1 * jax.random.normal(ks[1], (1, cin), jnp.float32),
        "conv1_w": 0.05 * jax.random.normal(ks[2], (3, 3, cin, cout), jnp.float32),
        "conv1_b": 0.1 * jax.random.normal(ks[3], (1, cout), jnp.float32),
        "gn2_gamma": 1.0 + 0.1 * jax.random.normal(ks[4], (1, cout), jnp.float32),
        "gn2_beta": 0.1 * jax.random.normal(ks[5], (1, cout), jnp.float32),
        "conv2_w": 0.05 * jax.random.normal(ks[6], (3, 3, cout, cout), jnp.float32),
        "conv2_b": 0.1 * jax.random.normal(ks[7], (1, cout), jnp.float32),
        "nin_w": 0.05 * jax.random.normal(ks[8], (cin, cout), jnp.float32),
        "nin_b": 0.1 * jax.random.normal(ks[9], (1, cout), jnp.float32),
        "short_w": 0.05 * jax.random.normal(ks[10], (3, 3, cin, cout), jnp.float32),
        "short_b": 0.1 * jax.random.normal(ks[11], (1, cout), jnp.float32),
    }


if __name__ == "__main__":
    # GroupNorm(32) requires channel counts divisible by 32.
    N, H, W = 2, 16, 16
    key = jax.random.PRNGKey(0)
    block_jit = jax.jit(chameleon_resnet_block, static_argnums=(2, 3, 4))

    configs = [
        (64, 128, False),   # Cin != Cout, nin_shortcut (1x1) fused
        (64, 64, False),    # Cin == Cout, identity residual
        (64, 128, True),    # Cin != Cout, conv_shortcut (3x3) fused
    ]
    for cin, cout, conv_short in configs:
        key, kx, kp = jax.random.split(key, 3)
        x = jax.random.normal(kx, (N, cin, H, W), jnp.float32)   # NCHW like PyTorch
        params = make_params(kp, cin, cout)

        out = jax.block_until_ready(block_jit(x, params, cin, cout, conv_short))

        # Tight check vs a reference that mirrors the kernel's bf16 MXU operands
        # (f32 accumulation, f32 in-VMEM intermediate h).
        ref_matched = jax.block_until_ready(
            ref_block(x, params, cin, cout, conv_short, dot_dtype=jnp.bfloat16))
        np.testing.assert_allclose(np.asarray(out), np.asarray(ref_matched),
                                   atol=2e-3, rtol=2e-3)

        # Looser check vs the strict f32 reference: bf16 MXU operands across the
        # two 3x3 convs cost a few 1e-3 absolute error (well inside this bound).
        ref_f32 = jax.block_until_ready(
            ref_block(x, params, cin, cout, conv_short))
        np.testing.assert_allclose(np.asarray(out), np.asarray(ref_f32),
                                   atol=5e-2, rtol=5e-2)

    print("KERNEL_OK")
</pallas_src>

<mosaic_0001>
module attributes {stable_mosaic.version = 11 : i64} {
  func.func @kernel(%arg0: i32, %arg1: memref<1x16x16x64xf32, #tpu.memory_space<vmem>>, %arg2: memref<1x64xf32, #tpu.memory_space<vmem>>, %arg3: memref<1x64xf32, #tpu.memory_space<vmem>>, %arg4: memref<64x64xf32, #tpu.memory_space<vmem>>, %arg5: memref<3x192x128xbf16, #tpu.memory_space<vmem>>, %arg6: memref<1x128xf32, #tpu.memory_space<vmem>>, %arg7: memref<1x128xf32, #tpu.memory_space<vmem>>, %arg8: memref<1x128xf32, #tpu.memory_space<vmem>>, %arg9: memref<128x128xf32, #tpu.memory_space<vmem>>, %arg10: memref<3x384x128xbf16, #tpu.memory_space<vmem>>, %arg11: memref<1x128xf32, #tpu.memory_space<vmem>>, %arg12: memref<64x128xbf16, #tpu.memory_space<vmem>>, %arg13: memref<1x128xf32, #tpu.memory_space<vmem>>, %arg14: memref<1x16x16x128xf32, #tpu.memory_space<vmem>>, %arg15: memref<18x18x64xbf16, #tpu.memory_space<vmem>>, %arg16: memref<18x18x128xbf16, #tpu.memory_space<vmem>>, %arg17: memref<256x128xf32, #tpu.memory_space<vmem>>) attributes {dimension_semantics = [#tpu.dimension_semantics<parallel>], iteration_bounds = array<i64: 2>, scalar_prefetch = 0 : i64, scratch_operands = 3 : i64, tpu.core_type = #tpu.core_type<tc>, window_params = [{transform_indices = @transform_0, window_bounds = array<i64: 1, 16, 16, 64>}, {pipeline_mode = #tpu.pipeline_mode<synchronous>, transform_indices = @transform_1, window_bounds = array<i64: 1, 64>}, {pipeline_mode = #tpu.pipeline_mode<synchronous>, transform_indices = @transform_2, window_bounds = array<i64: 1, 64>}, {pipeline_mode = #tpu.pipeline_mode<synchronous>, transform_indices = @transform_3, window_bounds = array<i64: 64, 64>}, {pipeline_mode = #tpu.pipeline_mode<synchronous>, transform_indices = @transform_4, window_bounds = array<i64: 3, 192, 128>}, {pipeline_mode = #tpu.pipeline_mode<synchronous>, transform_indices = @transform_5, window_bounds = array<i64: 1, 128>}, {pipeline_mode = #tpu.pipeline_mode<synchronous>, transform_indices = @transform_6, window_bounds = array<i64: 1, 128>}, {pipeline_mode = #tpu.pipeline_mode<synchronous>, transform_indices = @transform_7, window_bounds = array<i64: 1, 128>}, {pipeline_mode = #tpu.pipeline_mode<synchronous>, transform_indices = @transform_8, window_bounds = array<i64: 128, 128>}, {pipeline_mode = #tpu.pipeline_mode<synchronous>, transform_indices = @transform_9, window_bounds = array<i64: 3, 384, 128>}, {pipeline_mode = #tpu.pipeline_mode<synchronous>, transform_indices = @transform_10, window_bounds = array<i64: 1, 128>}, {pipeline_mode = #tpu.pipeline_mode<synchronous>, transform_indices = @transform_11, window_bounds = array<i64: 64, 128>}, {pipeline_mode = #tpu.pipeline_mode<synchronous>, transform_indices = @transform_12, window_bounds = array<i64: 1, 128>}, {transform_indices = @transform_13, window_bounds = array<i64: 1, 16, 16, 128>}]} {
    %c0 = arith.constant 0 : index
    %c0_0 = arith.constant 0 : index
    %c0_1 = arith.constant 0 : index
    %c0_2 = arith.constant 0 : index
    %0 = vector.load %arg1[%c0, %c0_0, %c0_1, %c0_2] : memref<1x16x16x64xf32, #tpu.memory_space<vmem>>, vector<1x16x16x64xf32>
    %1 = vector.shape_cast %0 : vector<1x16x16x64xf32> to vector<16x16x64xf32>
    %2 = vector.shape_cast %1 : vector<16x16x64xf32> to vector<256x64xf32>
    %cst = arith.constant dense<0.000000e+00> : vector<64xf32>
    %3 = vector.multi_reduction <add>, %2, %cst [0] : vector<256x64xf32> to vector<64xf32>
    %4 = vector.shape_cast %3 : vector<64xf32> to vector<1x64xf32>
    %cst_3 = arith.constant 2.560000e+02 : f32
    %5 = vector.broadcast %cst_3 : f32 to vector<1x64xf32>
    %6 = arith.divf %4, %5 : vector<1x64xf32>
    %7 = arith.mulf %2, %2 : vector<256x64xf32>
    %cst_4 = arith.constant dense<0.000000e+00> : vector<64xf32>
    %8 = vector.multi_reduction <add>, %7, %cst_4 [0] : vector<256x64xf32> to vector<64xf32>
    %9 = vector.shape_cast %8 : vector<64xf32> to vector<1x64xf32>
    %cst_5 = arith.constant 2.560000e+02 : f32
    %10 = vector.broadcast %cst_5 : f32 to vector<1x64xf32>
    %11 = arith.divf %9, %10 : vector<1x64xf32>
    %12 = tpu.concatenate %6, %11 in 0 : vector<1x64xf32>, vector<1x64xf32> -> vector<2x64xf32>
    %c0_6 = arith.constant 0 : index
    %c0_7 = arith.constant 0 : index
    %13 = vector.load %arg4[%c0_6, %c0_7] : memref<64x64xf32, #tpu.memory_space<vmem>>, vector<64x64xf32>
    %cst_8 = arith.constant dense<0.000000e+00> : vector<2x64xf32>
    %14 = tpu.matmul %12, %13, %cst_8 {dimension_numbers = #tpu.dot_dimension_numbers<[1], [0], [0], [1], [0, 0, 1, 1], [], []>} : vector<2x64xf32>, vector<64x64xf32>, vector<2x64xf32> -> vector<2x64xf32>
    %15 = vector.extract_strided_slice %14 {offsets = [0, 0], sizes = [1, 64], strides = [1, 1]} : vector<2x64xf32> to vector<1x64xf32>
    %16 = vector.extract_strided_slice %14 {offsets = [1, 0], sizes = [1, 64], strides = [1, 1]} : vector<2x64xf32> to vector<1x64xf32>
    %17 = arith.mulf %15, %15 : vector<1x64xf32>
    %18 = arith.subf %16, %17 : vector<1x64xf32>
    %cst_9 = arith.constant 9.99999997E-7 : f32
    %19 = vector.broadcast %cst_9 : f32 to vector<1x64xf32>
    %20 = arith.addf %18, %19 : vector<1x64xf32>
    %21 = math.rsqrt %20 : vector<1x64xf32>
    %c0_10 = arith.constant 0 : index
    %c0_11 = arith.constant 0 : index
    %22 = vector.load %arg2[%c0_10, %c0_11] : memref<1x64xf32, #tpu.memory_space<vmem>>, vector<1x64xf32>
    %23 = arith.mulf %21, %22 : vector<1x64xf32>
    %24 = vector.broadcast %15 : vector<1x64xf32> to vector<256x64xf32>
    %25 = arith.subf %2, %24 : vector<256x64xf32>
    %26 = vector.broadcast %23 : vector<1x64xf32> to vector<256x64xf32>
    %27 = arith.mulf %25, %26 : vector<256x64xf32>
    %c0_12 = arith.constant 0 : index
    %c0_13 = arith.constant 0 : index
    %28 = vector.load %arg3[%c0_12, %c0_13] : memref<1x64xf32, #tpu.memory_space<vmem>>, vector<1x64xf32>
    %29 = vector.broadcast %28 : vector<1x64xf32> to vector<256x64xf32>
    %30 = arith.addf %27, %29 : vector<256x64xf32>
    %31 = arith.negf %30 : vector<256x64xf32>
    %32 = math.exp %31 : vector<256x64xf32>
    %cst_14 = arith.constant 1.000000e+00 : f32
    %33 = vector.broadcast %cst_14 : f32 to vector<256x64xf32>
    %34 = arith.addf %33, %32 : vector<256x64xf32>
    %35 = arith.divf %33, %34 : vector<256x64xf32>
    %36 = arith.mulf %30, %35 : vector<256x64xf32>
    %37 = arith.truncf %36 : vector<256x64xf32> to vector<256x64xbf16>
    %38 = vector.shape_cast %37 : vector<256x64xbf16> to vector<16x16x64xbf16>
    %cst_15 = arith.constant 0.000000e+00 : bf16
    %39 = vector.broadcast %cst_15 : bf16 to vector<1x18x64xbf16>
    %cst_16 = arith.constant 0.000000e+00 : bf16
    %40 = vector.broadcast %cst_16 : bf16 to vector<16x1x64xbf16>
    %c0_17 = arith.constant 0 : index
    %c0_18 = arith.constant 0 : index
    %c0_19 = arith.constant 0 : index
    %41 = vector.load %arg15[%c0_17, %c0_18, %c0_19] : memref<18x18x64xbf16, #tpu.memory_space<vmem>>, vector<1x18x64xbf16>
    tpu.vector_store %arg15[%c0_17, %c0_18, %c0_19], %39 {strides = array<i32>} : memref<18x18x64xbf16, #tpu.memory_space<vmem>>, vector<1x18x64xbf16>,
    %c17 = arith.constant 17 : index
    %c0_20 = arith.constant 0 : index
    %c0_21 = arith.constant 0 : index
    %42 = vector.load %arg15[%c17, %c0_20, %c0_21] : memref<18x18x64xbf16, #tpu.memory_space<vmem>>, vector<1x18x64xbf16>
    tpu.vector_store %arg15[%c17, %c0_20, %c0_21], %39 {strides = array<i32>} : memref<18x18x64xbf16, #tpu.memory_space<vmem>>, vector<1x18x64xbf16>,
    %c1 = arith.constant 1 : index
    %c0_22 = arith.constant 0 : index
    %c0_23 = arith.constant 0 : index
    %43 = vector.load %arg15[%c1, %c0_22, %c0_23] : memref<18x18x64xbf16, #tpu.memory_space<vmem>>, vector<16x1x64xbf16>
    tpu.vector_store %arg15[%c1, %c0_22, %c0_23], %40 {strides = array<i32>} : memref<18x18x64xbf16, #tpu.memory_space<vmem>>, vector<16x1x64xbf16>,
    %c1_24 = arith.constant 1 : index
    %c17_25 = arith.constant 17 : index
    %c0_26 = arith.constant 0 : index
    %44 = vector.load %arg15[%c1_24, %c17_25, %c0_26] : memref<18x18x64xbf16, #tpu.memory_space<vmem>>, vector<16x1x64xbf16>
    tpu.vector_store %arg15[%c1_24, %c17_25, %c0_26], %40 {strides = array<i32>} : memref<18x18x64xbf16, #tpu.memory_space<vmem>>, vector<16x1x64xbf16>,
    %c1_27 = arith.constant 1 : index
    %c1_28 = arith.constant 1 : index
    %c0_29 = arith.constant 0 : index
    %45 = vector.load %arg15[%c1_27, %c1_28, %c0_29] : memref<18x18x64xbf16, #tpu.memory_space<vmem>>, vector<16x16x64xbf16>
    tpu.vector_store %arg15[%c1_27, %c1_28, %c0_29], %38 {strides = array<i32>} : memref<18x18x64xbf16, #tpu.memory_space<vmem>>, vector<16x16x64xbf16>,
    %c0_30 = arith.constant 0 : index
    %c0_31 = arith.constant 0 : index
    %46 = vector.load %arg6[%c0_30, %c0_31] : memref<1x128xf32, #tpu.memory_space<vmem>>, vector<1x128xf32>
    %c0_32 = arith.constant 0 : index
    %c0_33 = arith.constant 0 : index
    %c0_34 = arith.constant 0 : index
    %47 = vector.load %arg15[%c0_32, %c0_33, %c0_34] : memref<18x18x64xbf16, #tpu.memory_space<vmem>>, vector<16x18x64xbf16>
    %48 = vector.extract_strided_slice %47 {offsets = [0, 0, 0], sizes = [16, 16, 64], strides = [1, 1, 1]} : vector<16x18x64xbf16> to vector<16x16x64xbf16>
    %49 = vector.extract_strided_slice %47 {offsets = [0, 1, 0], sizes = [16, 16, 64], strides = [1, 1, 1]} : vector<16x18x64xbf16> to vector<16x16x64xbf16>
    %50 = vector.extract_strided_slice %47 {offsets = [0, 2, 0], sizes = [16, 16, 64], strides = [1, 1, 1]} : vector<16x18x64xbf16> to vector<16x16x64xbf16>
    %51 = tpu.concatenate %48, %49, %50 in 2 : vector<16x16x64xbf16>, vector<16x16x64xbf16>, vector<16x16x64xbf16> -> vector<16x16x192xbf16>
    %52 = vector.shape_cast %51 : vector<16x16x192xbf16> to vector<256x192xbf16>
    %c0_35 = arith.constant 0 : index
    %c0_36 = arith.constant 0 : index
    %c0_37 = arith.constant 0 : index
    %53 = vector.load %arg5[%c0_35, %c0_36, %c0_37] : memref<3x192x128xbf16, #tpu.memory_space<vmem>>, vector<1x192x128xbf16>
    %54 = vector.shape_cast %53 : vector<1x192x128xbf16> to vector<192x128xbf16>
    %cst_38 = arith.constant dense<0.000000e+00> : vector<256x128xf32>
    %55 = tpu.matmul %52, %54, %cst_38 {dimension_numbers = #tpu.dot_dimension_numbers<[1], [0], [0], [1], [0, 0, 1, 1], [], []>} : vector<256x192xbf16>, vector<192x128xbf16>, vector<256x128xf32> -> vector<256x128xf32>
    %56 = vector.broadcast %46 : vector<1x128xf32> to vector<256x128xf32>
    %57 = arith.addf %55, %56 : vector<256x128xf32>
    %c0_39 = arith.constant 0 : index
    %c0_40 = arith.constant 0 : index
    %58 = vector.load %arg17[%c0_39, %c0_40] : memref<256x128xf32, #tpu.memory_space<vmem>>, vector<256x128xf32>
    tpu.vector_store %arg17[%c0_39, %c0_40], %57 {strides = array<i32>} : memref<256x128xf32, #tpu.memory_space<vmem>>, vector<256x128xf32>,
    %c1_41 = arith.constant 1 : index
    %c0_42 = arith.constant 0 : index
    %c0_43 = arith.constant 0 : index
    %59 = vector.load %arg15[%c1_41, %c0_42, %c0_43] : memref<18x18x64xbf16, #tpu.memory_space<vmem>>, vector<16x18x64xbf16>
    %60 = vector.extract_strided_slice %59 {offsets = [0, 0, 0], sizes = [16, 16, 64], strides = [1, 1, 1]} : vector<16x18x64xbf16> to vector<16x16x64xbf16>
    %61 = vector.extract_strided_slice %59 {offsets = [0, 1, 0], sizes = [16, 16, 64], strides = [1, 1, 1]} : vector<16x18x64xbf16> to vector<16x16x64xbf16>
    %62 = vector.extract_strided_slice %59 {offsets = [0, 2, 0], sizes = [16, 16, 64], strides = [1, 1, 1]} : vector<16x18x64xbf16> to vector<16x16x64xbf16>
    %63 = tpu.concatenate %60, %61, %62 in 2 : vector<16x16x64xbf16>, vector<16x16x64xbf16>, vector<16x16x64xbf16> -> vector<16x16x192xbf16>
    %64 = vector.shape_cast %63 : vector<16x16x192xbf16> to vector<256x192xbf16>
    %c1_44 = arith.constant 1 : index
    %c0_45 = arith.constant 0 : index
    %c0_46 = arith.constant 0 : index
    %65 = vector.load %arg5[%c1_44, %c0_45, %c0_46] : memref<3x192x128xbf16, #tpu.memory_space<vmem>>, vector<1x192x128xbf16>
    %66 = vector.shape_cast %65 : vector<1x192x128xbf16> to vector<192x128xbf16>
    %cst_47 = arith.constant dense<0.000000e+00> : vector<256x128xf32>
    %67 = tpu.matmul %64, %66, %cst_47 {dimension_numbers = #tpu.dot_dimension_numbers<[1], [0], [0], [1], [0, 0, 1, 1], [], []>} : vector<256x192xbf16>, vector<192x128xbf16>, vector<256x128xf32> -> vector<256x128xf32>
    %c0_48 = arith.constant 0 : index
    %c0_49 = arith.constant 0 : index
    %68 = vector.load %arg17[%c0_48, %c0_49] : memref<256x128xf32, #tpu.memory_space<vmem>>, vector<256x128xf32>
    %69 = arith.addf %68, %67 : vector<256x128xf32>
    %c0_50 = arith.constant 0 : index
    %c0_51 = arith.constant 0 : index
    %70 = vector.load %arg17[%c0_50, %c0_51] : memref<256x128xf32, #tpu.memory_space<vmem>>, vector<256x128xf32>
    tpu.vector_store %arg17[%c0_50, %c0_51], %69 {strides = array<i32>} : memref<256x128xf32, #tpu.memory_space<vmem>>, vector<256x128xf32>,
    %c2 = arith.constant 2 : index
    %c0_52 = arith.constant 0 : index
    %c0_53 = arith.constant 0 : index
    %71 = vector.load %arg15[%c2, %c0_52, %c0_53] : memref<18x18x64xbf16, #tpu.memory_space<vmem>>, vector<16x18x64xbf16>
    %72 = vector.extract_strided_slice %71 {offsets = [0, 0, 0], sizes = [16, 16, 64], strides = [1, 1, 1]} : vector<16x18x64xbf16> to vector<16x16x64xbf16>
    %73 = vector.extract_strided_slice %71 {offsets = [0, 1, 0], sizes = [16, 16, 64], strides = [1, 1, 1]} : vector<16x18x64xbf16> to vector<16x16x64xbf16>
    %74 = vector.extract_strided_slice %71 {offsets = [0, 2, 0], sizes = [16, 16, 64], strides = [1, 1, 1]} : vector<16x18x64xbf16> to vector<16x16x64xbf16>
    %75 = tpu.concatenate %72, %73, %74 in 2 : vector<16x16x64xbf16>, vector<16x16x64xbf16>, vector<16x16x64xbf16> -> vector<16x16x192xbf16>
    %76 = vector.shape_cast %75 : vector<16x16x192xbf16> to vector<256x192xbf16>
    %c2_54 = arith.constant 2 : index
    %c0_55 = arith.constant 0 : index
    %c0_56 = arith.constant 0 : index
    %77 = vector.load %arg5[%c2_54, %c0_55, %c0_56] : memref<3x192x128xbf16, #tpu.memory_space<vmem>>, vector<1x192x128xbf16>
    %78 = vector.shape_cast %77 : vector<1x192x128xbf16> to vector<192x128xbf16>
    %cst_57 = arith.constant dense<0.000000e+00> : vector<256x128xf32>
    %79 = tpu.matmul %76, %78, %cst_57 {dimension_numbers = #tpu.dot_dimension_numbers<[1], [0], [0], [1], [0, 0, 1, 1], [], []>} : vector<256x192xbf16>, vector<192x128xbf16>, vector<256x128xf32> -> vector<256x128xf32>
    %c0_58 = arith.constant 0 : index
    %c0_59 = arith.constant 0 : index
    %80 = vector.load %arg17[%c0_58, %c0_59] : memref<256x128xf32, #tpu.memory_space<vmem>>, vector<256x128xf32>
    %81 = arith.addf %80, %79 : vector<256x128xf32>
    %c0_60 = arith.constant 0 : index
    %c0_61 = arith.constant 0 : index
    %82 = vector.load %arg17[%c0_60, %c0_61] : memref<256x128xf32, #tpu.memory_space<vmem>>, vector<256x128xf32>
    tpu.vector_store %arg17[%c0_60, %c0_61], %81 {strides = array<i32>} : memref<256x128xf32, #tpu.memory_space<vmem>>, vector<256x128xf32>,
    %c0_62 = arith.constant 0 : index
    %c0_63 = arith.constant 0 : index
    %83 = vector.load %arg17[%c0_62, %c0_63] : memref<256x128xf32, #tpu.memory_space<vmem>>, vector<256x128xf32>
    %cst_64 = arith.constant dense<0.000000e+00> : vector<128xf32>
    %84 = vector.multi_reduction <add>, %83, %cst_64 [0] : vector<256x128xf32> to vector<128xf32>
    %85 = vector.shape_cast %84 : vector<128xf32> to vector<1x128xf32>
    %cst_65 = arith.constant 2.560000e+02 : f32
    %86 = vector.broadcast %cst_65 : f32 to vector<1x128xf32>
    %87 = arith.divf %85, %86 : vector<1x128xf32>
    %88 = arith.mulf %83, %83 : vector<256x128xf32>
    %cst_66 = arith.constant dense<0.000000e+00> : vector<128xf32>
    %89 = vector.multi_reduction <add>, %88, %cst_66 [0] : vector<256x128xf32> to vector<128xf32>
    %90 = vector.shape_cast %89 : vector<128xf32> to vector<1x128xf32>
    %cst_67 = arith.constant 2.560000e+02 : f32
    %91 = vector.broadcast %cst_67 : f32 to vector<1x128xf32>
    %92 = arith.divf %90, %91 : vector<1x128xf32>
    %93 = tpu.concatenate %87, %92 in 0 : vector<1x128xf32>, vector<1x128xf32> -> vector<2x128xf32>
    %c0_68 = arith.constant 0 : index
    %c0_69 = arith.constant 0 : index
    %94 = vector.load %arg9[%c0_68, %c0_69] : memref<128x128xf32, #tpu.memory_space<vmem>>, vector<128x128xf32>
    %cst_70 = arith.constant dense<0.000000e+00> : vector<2x128xf32>
    %95 = tpu.matmul %93, %94, %cst_70 {dimension_numbers = #tpu.dot_dimension_numbers<[1], [0], [0], [1], [0, 0, 1, 1], [], []>} : vector<2x128xf32>, vector<128x128xf32>, vector<2x128xf32> -> vector<2x128xf32>
    %96 = vector.extract_strided_slice %95 {offsets = [0, 0], sizes = [1, 128], strides = [1, 1]} : vector<2x128xf32> to vector<1x128xf32>
    %97 = vector.extract_strided_slice %95 {offsets = [1, 0], sizes = [1, 128], strides = [1, 1]} : vector<2x128xf32> to vector<1x128xf32>
    %98 = arith.mulf %96, %96 : vector<1x128xf32>
    %99 = arith.subf %97, %98 : vector<1x128xf32>
    %cst_71 = arith.constant 9.99999997E-7 : f32
    %100 = vector.broadcast %cst_71 : f32 to vector<1x128xf32>
    %101 = arith.addf %99, %100 : vector<1x128xf32>
    %102 = math.rsqrt %101 : vector<1x128xf32>
    %c0_72 = arith.constant 0 : index
    %c0_73 = arith.constant 0 : index
    %103 = vector.load %arg7[%c0_72, %c0_73] : memref<1x128xf32, #tpu.memory_space<vmem>>, vector<1x128xf32>
    %104 = arith.mulf %102, %103 : vector<1x128xf32>
    %105 = vector.broadcast %96 : vector<1x128xf32> to vector<256x128xf32>
    %106 = arith.subf %83, %105 : vector<256x128xf32>
    %107 = vector.broadcast %104 : vector<1x128xf32> to vector<256x128xf32>
    %108 = arith.mulf %106, %107 : vector<256x128xf32>
    %c0_74 = arith.constant 0 : index
    %c0_75 = arith.constant 0 : index
    %109 = vector.load %arg8[%c0_74, %c0_75] : memref<1x128xf32, #tpu.memory_space<vmem>>, vector<1x128xf32>
    %110 = vector.broadcast %109 : vector<1x128xf32> to vector<256x128xf32>
    %111 = arith.addf %108, %110 : vector<256x128xf32>
    %112 = arith.negf %111 : vector<256x128xf32>
    %113 = math.exp %112 : vector<256x128xf32>
    %cst_76 = arith.constant 1.000000e+00 : f32
    %114 = vector.broadcast %cst_76 : f32 to vector<256x128xf32>
    %115 = arith.addf %114, %113 : vector<256x128xf32>
    %116 = arith.divf %114, %115 : vector<256x128xf32>
    %117 = arith.mulf %111, %116 : vector<256x128xf32>
    %118 = arith.truncf %117 : vector<256x128xf32> to vector<256x128xbf16>
    %119 = vector.shape_cast %118 : vector<256x128xbf16> to vector<16x16x128xbf16>
    %cst_77 = arith.constant 0.000000e+00 : bf16
    %120 = vector.broadcast %cst_77 : bf16 to vector<1x18x128xbf16>
    %cst_78 = arith.constant 0.000000e+00 : bf16
    %121 = vector.broadcast %cst_78 : bf16 to vector<16x1x128xbf16>
    %c0_79 = arith.constant 0 : index
    %c0_80 = arith.constant 0 : index
    %c0_81 = arith.constant 0 : index
    %122 = vector.load %arg16[%c0_79, %c0_80, %c0_81] : memref<18x18x128xbf16, #tpu.memory_space<vmem>>, vector<1x18x128xbf16>
    tpu.vector_store %arg16[%c0_79, %c0_80, %c0_81], %120 {strides = array<i32>} : memref<18x18x128xbf16, #tpu.memory_space<vmem>>, vector<1x18x128xbf16>,
    %c17_82 = arith.constant 17 : index
    %c0_83 = arith.constant 0 : index
    %c0_84 = arith.constant 0 : index
    %123 = vector.load %arg16[%c17_82, %c0_83, %c0_84] : memref<18x18x128xbf16, #tpu.memory_space<vmem>>, vector<1x18x128xbf16>
    tpu.vector_store %arg16[%c17_82, %c0_83, %c0_84], %120 {strides = array<i32>} : memref<18x18x128xbf16, #tpu.memory_space<vmem>>, vector<1x18x128xbf16>,
    %c1_85 = arith.constant 1 : index
    %c0_86 = arith.constant 0 : index
    %c0_87 = arith.constant 0 : index
    %124 = vector.load %arg16[%c1_85, %c0_86, %c0_87] : memref<18x18x128xbf16, #tpu.memory_space<vmem>>, vector<16x1x128xbf16>
    tpu.vector_store %arg16[%c1_85, %c0_86, %c0_87], %121 {strides = array<i32>} : memref<18x18x128xbf16, #tpu.memory_space<vmem>>, vector<16x1x128xbf16>,
    %c1_88 = arith.constant 1 : index
    %c17_89 = arith.constant 17 : index
    %c0_90 = arith.constant 0 : index
    %125 = vector.load %arg16[%c1_88, %c17_89, %c0_90] : memref<18x18x128xbf16, #tpu.memory_space<vmem>>, vector<16x1x128xbf16>
    tpu.vector_store %arg16[%c1_88, %c17_89, %c0_90], %121 {strides = array<i32>} : memref<18x18x128xbf16, #tpu.memory_space<vmem>>, vector<16x1x128xbf16>,
    %c1_91 = arith.constant 1 : index
    %c1_92 = arith.constant 1 : index
    %c0_93 = arith.constant 0 : index
    %126 = vector.load %arg16[%c1_91, %c1_92, %c0_93] : memref<18x18x128xbf16, #tpu.memory_space<vmem>>, vector<16x16x128xbf16>
    tpu.vector_store %arg16[%c1_91, %c1_92, %c0_93], %119 {strides = array<i32>} : memref<18x18x128xbf16, #tpu.memory_space<vmem>>, vector<16x16x128xbf16>,
    %c0_94 = arith.constant 0 : index
    %c0_95 = arith.constant 0 : index
    %c0_96 = arith.constant 0 : index
    %c0_97 = arith.constant 0 : index
    %127 = vector.load %arg1[%c0_94, %c0_95, %c0_96, %c0_97] : memref<1x16x16x64xf32, #tpu.memory_space<vmem>>, vector<1x16x16x64xf32>
    %128 = vector.shape_cast %127 : vector<1x16x16x64xf32> to vector<16x16x64xf32>
    %129 = vector.shape_cast %128 : vector<16x16x64xf32> to vector<256x64xf32>
    %130 = arith.truncf %129 : vector<256x64xf32> to vector<256x64xbf16>
    %c0_98 = arith.constant 0 : index
    %c0_99 = arith.constant 0 : index
    %131 = vector.load %arg12[%c0_98, %c0_99] : memref<64x128xbf16, #tpu.memory_space<vmem>>, vector<64x128xbf16>
    %cst_100 = arith.constant dense<0.000000e+00> : vector<256x128xf32>
    %132 = tpu.matmul %130, %131, %cst_100 {dimension_numbers = #tpu.dot_dimension_numbers<[1], [0], [0], [1], [0, 0, 1, 1], [], []>} : vector<256x64xbf16>, vector<64x128xbf16>, vector<256x128xf32> -> vector<256x128xf32>
    %c0_101 = arith.constant 0 : index
    %c0_102 = arith.constant 0 : index
    %133 = vector.load %arg13[%c0_101, %c0_102] : memref<1x128xf32, #tpu.memory_space<vmem>>, vector<1x128xf32>
    %134 = vector.broadcast %133 : vector<1x128xf32> to vector<256x128xf32>
    %135 = arith.addf %132, %134 : vector<256x128xf32>
    %c0_103 = arith.constant 0 : index
    %c0_104 = arith.constant 0 : index
    %136 = vector.load %arg11[%c0_103, %c0_104] : memref<1x128xf32, #tpu.memory_space<vmem>>, vector<1x128xf32>
    %137 = vector.broadcast %136 : vector<1x128xf32> to vector<256x128xf32>
    %138 = arith.addf %137, %135 : vector<256x128xf32>
    %c0_105 = arith.constant 0 : index
    %c0_106 = arith.constant 0 : index
    %c0_107 = arith.constant 0 : index
    %139 = vector.load %arg16[%c0_105, %c0_106, %c0_107] : memref<18x18x128xbf16, #tpu.memory_space<vmem>>, vector<16x18x128xbf16>
    %140 = vector.extract_strided_slice %139 {offsets = [0, 0, 0], sizes = [16, 16, 128], strides = [1, 1, 1]} : vector<16x18x128xbf16> to vector<16x16x128xbf16>
    %141 = vector.extract_strided_slice %139 {offsets = [0, 1, 0], sizes = [16, 16, 128], strides = [1, 1, 1]} : vector<16x18x128xbf16> to vector<16x16x128xbf16>
    %142 = vector.extract_strided_slice %139 {offsets = [0, 2, 0], sizes = [16, 16, 128], strides = [1, 1, 1]} : vector<16x18x128xbf16> to vector<16x16x128xbf16>
    %143 = tpu.concatenate %140, %141, %142 in 2 : vector<16x16x128xbf16>, vector<16x16x128xbf16>, vector<16x16x128xbf16> -> vector<16x16x384xbf16>
    %144 = vector.shape_cast %143 : vector<16x16x384xbf16> to vector<256x384xbf16>
    %c0_108 = arith.constant 0 : index
    %c0_109 = arith.constant 0 : index
    %c0_110 = arith.constant 0 : index
    %145 = vector.load %arg10[%c0_108, %c0_109, %c0_110] : memref<3x384x128xbf16, #tpu.memory_space<vmem>>, vector<1x384x128xbf16>
    %146 = vector.shape_cast %145 : vector<1x384x128xbf16> to vector<384x128xbf16>
    %cst_111 = arith.constant dense<0.000000e+00> : vector<256x128xf32>
    %147 = tpu.matmul %144, %146, %cst_111 {dimension_numbers = #tpu.dot_dimension_numbers<[1], [0], [0], [1], [0, 0, 1, 1], [], []>} : vector<256x384xbf16>, vector<384x128xbf16>, vector<256x128xf32> -> vector<256x128xf32>
    %148 = arith.addf %147, %138 : vector<256x128xf32>
    %c0_112 = arith.constant 0 : index
    %c0_113 = arith.constant 0 : index
    %149 = vector.load %arg17[%c0_112, %c0_113] : memref<256x128xf32, #tpu.memory_space<vmem>>, vector<256x128xf32>
    tpu.vector_store %arg17[%c0_112, %c0_113], %148 {strides = array<i32>} : memref<256x128xf32, #tpu.memory_space<vmem>>, vector<256x128xf32>,
    %c1_114 = arith.constant 1 : index
    %c0_115 = arith.constant 0 : index
    %c0_116 = arith.constant 0 : index
    %150 = vector.load %arg16[%c1_114, %c0_115, %c0_116] : memref<18x18x128xbf16, #tpu.memory_space<vmem>>, vector<16x18x128xbf16>
    %151 = vector.extract_strided_slice %150 {offsets = [0, 0, 0], sizes = [16, 16, 128], strides = [1, 1, 1]} : vector<16x18x128xbf16> to vector<16x16x128xbf16>
    %152 = vector.extract_strided_slice %150 {offsets = [0, 1, 0], sizes = [16, 16, 128], strides = [1, 1, 1]} : vector<16x18x128xbf16> to vector<16x16x128xbf16>
    %153 = vector.extract_strided_slice %150 {offsets = [0, 2, 0], sizes = [16, 16, 128], strides = [1, 1, 1]} : vector<16x18x128xbf16> to vector<16x16x128xbf16>
    %154 = tpu.concatenate %151, %152, %153 in 2 : vector<16x16x128xbf16>, vector<16x16x128xbf16>, vector<16x16x128xbf16> -> vector<16x16x384xbf16>
    %155 = vector.shape_cast %154 : vector<16x16x384xbf16> to vector<256x384xbf16>
    %c1_117 = arith.constant 1 : index
    %c0_118 = arith.constant 0 : index
    %c0_119 = arith.constant 0 : index
    %156 = vector.load %arg10[%c1_117, %c0_118, %c0_119] : memref<3x384x128xbf16, #tpu.memory_space<vmem>>, vector<1x384x128xbf16>
    %157 = vector.shape_cast %156 : vector<1x384x128xbf16> to vector<384x128xbf16>
    %cst_120 = arith.constant dense<0.000000e+00> : vector<256x128xf32>
    %158 = tpu.matmul %155, %157, %cst_120 {dimension_numbers = #tpu.dot_dimension_numbers<[1], [0], [0], [1], [0, 0, 1, 1], [], []>} : vector<256x384xbf16>, vector<384x128xbf16>, vector<256x128xf32> -> vector<256x128xf32>
    %c0_121 = arith.constant 0 : index
    %c0_122 = arith.constant 0 : index
    %159 = vector.load %arg17[%c0_121, %c0_122] : memref<256x128xf32, #tpu.memory_space<vmem>>, vector<256x128xf32>
    %160 = arith.addf %159, %158 : vector<256x128xf32>
    %c0_123 = arith.constant 0 : index
    %c0_124 = arith.constant 0 : index
    %161 = vector.load %arg17[%c0_123, %c0_124] : memref<256x128xf32, #tpu.memory_space<vmem>>, vector<256x128xf32>
    tpu.vector_store %arg17[%c0_123, %c0_124], %160 {strides = array<i32>} : memref<256x128xf32, #tpu.memory_space<vmem>>, vector<256x128xf32>,
    %c2_125 = arith.constant 2 : index
    %c0_126 = arith.constant 0 : index
    %c0_127 = arith.constant 0 : index
    %162 = vector.load %arg16[%c2_125, %c0_126, %c0_127] : memref<18x18x128xbf16, #tpu.memory_space<vmem>>, vector<16x18x128xbf16>
    %163 = vector.extract_strided_slice %162 {offsets = [0, 0, 0], sizes = [16, 16, 128], strides = [1, 1, 1]} : vector<16x18x128xbf16> to vector<16x16x128xbf16>
    %164 = vector.extract_strided_slice %162 {offsets = [0, 1, 0], sizes = [16, 16, 128], strides = [1, 1, 1]} : vector<16x18x128xbf16> to vector<16x16x128xbf16>
    %165 = vector.extract_strided_slice %162 {offsets = [0, 2, 0], sizes = [16, 16, 128], strides = [1, 1, 1]} : vector<16x18x128xbf16> to vector<16x16x128xbf16>
    %166 = tpu.concatenate %163, %164, %165 in 2 : vector<16x16x128xbf16>, vector<16x16x128xbf16>, vector<16x16x128xbf16> -> vector<16x16x384xbf16>
    %167 = vector.shape_cast %166 : vector<16x16x384xbf16> to vector<256x384xbf16>
    %c2_128 = arith.constant 2 : index
    %c0_129 = arith.constant 0 : index
    %c0_130 = arith.constant 0 : index
    %168 = vector.load %arg10[%c2_128, %c0_129, %c0_130] : memref<3x384x128xbf16, #tpu.memory_space<vmem>>, vector<1x384x128xbf16>
    %169 = vector.shape_cast %168 : vector<1x384x128xbf16> to vector<384x128xbf16>
    %cst_131 = arith.constant dense<0.000000e+00> : vector<256x128xf32>
    %170 = tpu.matmul %167, %169, %cst_131 {dimension_numbers = #tpu.dot_dimension_numbers<[1], [0], [0], [1], [0, 0, 1, 1], [], []>} : vector<256x384xbf16>, vector<384x128xbf16>, vector<256x128xf32> -> vector<256x128xf32>
    %c0_132 = arith.constant 0 : index
    %c0_133 = arith.constant 0 : index
    %171 = vector.load %arg17[%c0_132, %c0_133] : memref<256x128xf32, #tpu.memory_space<vmem>>, vector<256x128xf32>
    %172 = arith.addf %171, %170 : vector<256x128xf32>
    %c0_134 = arith.constant 0 : index
    %c0_135 = arith.constant 0 : index
    %173 = vector.load %arg17[%c0_134, %c0_135] : memref<256x128xf32, #tpu.memory_space<vmem>>, vector<256x128xf32>
    tpu.vector_store %arg17[%c0_134, %c0_135], %172 {strides = array<i32>} : memref<256x128xf32, #tpu.memory_space<vmem>>, vector<256x128xf32>,
    %c0_136 = arith.constant 0 : index
    %c0_137 = arith.constant 0 : index
    %174 = vector.load %arg17[%c0_136, %c0_137] : memref<256x128xf32, #tpu.memory_space<vmem>>, vector<256x128xf32>
    %175 = vector.shape_cast %174 : vector<256x128xf32> to vector<16x16x128xf32>
    %c0_138 = arith.constant 0 : index
    %c0_139 = arith.constant 0 : index
    %c0_140 = arith.constant 0 : index
    %c0_141 = arith.constant 0 : index
    %176 = vector.load %arg14[%c0_138, %c0_139, %c0_140, %c0_141] : memref<1x16x16x128xf32, #tpu.memory_space<vmem>>, vector<1x16x16x128xf32>
    %177 = vector.shape_cast %176 : vector<1x16x16x128xf32> to vector<16x16x128xf32>
    %178 = vector.shape_cast %175 : vector<16x16x128xf32> to vector<1x16x16x128xf32>
    tpu.vector_store %arg14[%c0_138, %c0_139, %c0_140, %c0_141], %178 {strides = array<i32>} : memref<1x16x16x128xf32, #tpu.memory_space<vmem>>, vector<1x16x16x128xf32>,
    return
  }
  func.func @transform_0(%arg0: i32) -> (i32, i32, i32, i32) {
    %c0_i32 = arith.constant 0 : i32
    %c0_i32_0 = arith.constant 0 : i32
    %c0_i32_1 = arith.constant 0 : i32
    %c0_i32_2 = arith.constant 0 : i32
    return %arg0, %c0_i32, %c0_i32_0, %c0_i32_1 : i32, i32, i32, i32
  }
  func.func @transform_1(%arg0: i32) -> (i32, i32) {
    %c0_i32 = arith.constant 0 : i32
    %c0_i32_0 = arith.constant 0 : i32
    %c0_i32_1 = arith.constant 0 : i32
    return %c0_i32, %c0_i32_0 : i32, i32
  }
  func.func @transform_2(%arg0: i32) -> (i32, i32) {
    %c0_i32 = arith.constant 0 : i32
    %c0_i32_0 = arith.constant 0 : i32
    %c0_i32_1 = arith.constant 0 : i32
    return %c0_i32, %c0_i32_0 : i32, i32
  }
  func.func @transform_3(%arg0: i32) -> (i32, i32) {
    %c0_i32 = arith.constant 0 : i32
    %c0_i32_0 = arith.constant 0 : i32
    %c0_i32_1 = arith.constant 0 : i32
    return %c0_i32, %c0_i32_0 : i32, i32
  }
  func.func @transform_4(%arg0: i32) -> (i32, i32, i32) {
    %c0_i32 = arith.constant 0 : i32
    %c0_i32_0 = arith.constant 0 : i32
    %c0_i32_1 = arith.constant 0 : i32
    %c0_i32_2 = arith.constant 0 : i32
    return %c0_i32, %c0_i32_0, %c0_i32_1 : i32, i32, i32
  }
  func.func @transform_5(%arg0: i32) -> (i32, i32) {
    %c0_i32 = arith.constant 0 : i32
    %c0_i32_0 = arith.constant 0 : i32
    %c0_i32_1 = arith.constant 0 : i32
    return %c0_i32, %c0_i32_0 : i32, i32
  }
  func.func @transform_6(%arg0: i32) -> (i32, i32) {
    %c0_i32 = arith.constant 0 : i32
    %c0_i32_0 = arith.constant 0 : i32
    %c0_i32_1 = arith.constant 0 : i32
    return %c0_i32, %c0_i32_0 : i32, i32
  }
  func.func @transform_7(%arg0: i32) -> (i32, i32) {
    %c0_i32 = arith.constant 0 : i32
    %c0_i32_0 = arith.constant 0 : i32
    %c0_i32_1 = arith.constant 0 : i32
    return %c0_i32, %c0_i32_0 : i32, i32
  }
  func.func @transform_8(%arg0: i32) -> (i32, i32) {
    %c0_i32 = arith.constant 0 : i32
    %c0_i32_0 = arith.constant 0 : i32
    %c0_i32_1 = arith.constant 0 : i32
    return %c0_i32, %c0_i32_0 : i32, i32
  }
  func.func @transform_9(%arg0: i32) -> (i32, i32, i32) {
    %c0_i32 = arith.constant 0 : i32
    %c0_i32_0 = arith.constant 0 : i32
    %c0_i32_1 = arith.constant 0 : i32
    %c0_i32_2 = arith.constant 0 : i32
    return %c0_i32, %c0_i32_0, %c0_i32_1 : i32, i32, i32
  }
  func.func @transform_10(%arg0: i32) -> (i32, i32) {
    %c0_i32 = arith.constant 0 : i32
    %c0_i32_0 = arith.constant 0 : i32
    %c0_i32_1 = arith.constant 0 : i32
    return %c0_i32, %c0_i32_0 : i32, i32
  }
  func.func @transform_11(%arg0: i32) -> (i32, i32) {
    %c0_i32 = arith.constant 0 : i32
    %c0_i32_0 = arith.constant 0 : i32
    %c0_i32_1 = arith.constant 0 : i32
    return %c0_i32, %c0_i32_0 : i32, i32
  }
  func.func @transform_12(%arg0: i32) -> (i32, i32) {
    %c0_i32 = arith.constant 0 : i32
    %c0_i32_0 = arith.constant 0 : i32
    %c0_i32_1 = arith.constant 0 : i32
    return %c0_i32, %c0_i32_0 : i32, i32
  }
  func.func @transform_13(%arg0: i32) -> (i32, i32, i32, i32) {
    %c0_i32 = arith.constant 0 : i32
    %c0_i32_0 = arith.constant 0 : i32
    %c0_i32_1 = arith.constant 0 : i32
    %c0_i32_2 = arith.constant 0 : i32
    return %arg0, %c0_i32, %c0_i32_0, %c0_i32_1 : i32, i32, i32, i32
  }
}

</mosaic_0001>

<llo_original>
// kernel: chameleon_resnet_block.1
$region0: #{chameleon_resnet_block.1}
  #allocation0 [shape = 'u32[]', space=smem, size = 0x4, offset = 0x4, fixed_abs, tag = 'smem constant byte address 0x4 - core index']
  #allocation1 [shape = 'u32[144,128]{1,0:T(1,128)}', space=vmem, size = 0x12000, scoped, tag = 'internal scratch']
  #allocation2 [shape = 'bf16[18,18,64]{2,1,0:T(8,128)(2,1)}', space=vmem, size = 0x1b000, scoped, tag = 'scratch operand']
  #allocation3 [shape = 'bf16[18,18,128]{2,1,0:T(8,128)(2,1)}', space=vmem, size = 0x1b000, scoped, tag = 'scratch operand']
  #allocation4 [shape = 'f32[256,128]{1,0:T(8,128)}', space=vmem, size = 0x20000, scoped, tag = 'scratch operand']
  %s0 = inlined_call_operand.vmem [shape: f32[2,16,16,64], index: 0, kind: input, shape index: {}]
  %s1 = inlined_call_operand.vmem [shape: f32[1,64], index: 1, kind: input, shape index: {}]
  %s2 = inlined_call_operand.vmem [shape: f32[1,64], index: 2, kind: input, shape index: {}]
  %s3 = inlined_call_operand.vmem [shape: f32[64,64], index: 3, kind: input, shape index: {}]
  %s4 = inlined_call_operand.vmem [shape: bf16[3,192,128], index: 4, kind: input, shape index: {}]
  %s5 = inlined_call_operand.vmem [shape: f32[1,128], index: 5, kind: input, shape index: {}]
  %s6 = inlined_call_operand.vmem [shape: f32[1,128], index: 6, kind: input, shape index: {}]
  %s7 = inlined_call_operand.vmem [shape: f32[1,128], index: 7, kind: input, shape index: {}]
  %s8 = inlined_call_operand.vmem [shape: f32[128,128], index: 8, kind: input, shape index: {}]
  %s9 = inlined_call_operand.vmem [shape: bf16[3,384,128], index: 9, kind: input, shape index: {}]
  %s10 = inlined_call_operand.vmem [shape: f32[1,128], index: 10, kind: input, shape index: {}]
  %s11 = inlined_call_operand.vmem [shape: bf16[64,128], index: 11, kind: input, shape index: {}]
  %s12 = inlined_call_operand.vmem [shape: f32[1,128], index: 12, kind: input, shape index: {}]
  %s13 = inlined_call_operand.hbm [shape: f32[2,16,16,128], index: 13, kind: output, shape index: {}]
  %s14 = sld [smem:[#allocation0]]
  $region85: #{chameleon_resnet_block.1} parent=0
    _
  %s16 = ssub.s32 1, %s14
  %s17 = scalar_select 0, %s16, %s14
  $region1: #{chameleon_resnet_block.1} parent=0
    #allocation5 [shape = 'u8[262144]{0}', space=vmem, size = 0x40000, scoped, tag = 'output window, operand 0']
    #allocation6 [shape = 's32[2]{0}', space=sflag, size = 0x8, scoped, tag = 'scoped memory for chameleon_resnet_block.1']
    %18 = vsyncpa [#allocation6], 0
    %s19 = scalar_lea.sflag [#allocation6], 1
    %20 = vsyncpa %s19, 0
    loop: start=0, step=1, limit=4
    $region2: #{chameleon_resnet_block.1} parent=1 // loop_pre_header
      _
    $region3: #{chameleon_resnet_block.1} parent=1 // loop_header
      %s22 = sphi 0, %s26
      %p23 = scmp.ge.s32.totalorder %s22, 4
      %s32 = sphi 0, %s34
      %s35 = sphi 0, %s32
      %s36 = sphi 0, %s35
      %s52 = sphi 0, %s36
      %s56 = sphi 0, %s56
      %s58 = sphi 0, %s56
      %s59 = sphi 0, %s58
      %s73 = sphi 0, %s59
      %s77 = sphi 0, %s77
      %s79 = sphi 0, %s77
      %s80 = sphi 0, %s79
      %s94 = sphi 0, %s80
      %s98 = sphi 0, %s98
      %s100 = sphi 0, %s98
      %s101 = sphi 0, %s100
      %s115 = sphi 0, %s101
      %s119 = sphi 0, %s119
      %s121 = sphi 0, %s119
      %s122 = sphi 0, %s121
      %s136 = sphi 0, %s122
      %s140 = sphi 0, %s140
      %s142 = sphi 0, %s140
      %s143 = sphi 0, %s142
      %s157 = sphi 0, %s143
      %s161 = sphi 0, %s161
      %s163 = sphi 0, %s161
      %s164 = sphi 0, %s163
      %s178 = sphi 0, %s164
      %s182 = sphi 0, %s182
      %s184 = sphi 0, %s182
      %s185 = sphi 0, %s184
      %s199 = sphi 0, %s185
      %s203 = sphi 0, %s203
      %s205 = sphi 0, %s203
      %s206 = sphi 0, %s205
      %s220 = sphi 0, %s206
      %s224 = sphi 0, %s224
      %s226 = sphi 0, %s224
      %s227 = sphi 0, %s226
      %s241 = sphi 0, %s227
      %s245 = sphi 0, %s245
      %s247 = sphi 0, %s245
      %s248 = sphi 0, %s247
      %s262 = sphi 0, %s248
      %s266 = sphi 0, %s266
      %s268 = sphi 0, %s266
      %s269 = sphi 0, %s268
      %s283 = sphi 0, %s269
      %s287 = sphi 0, %s287
      %s289 = sphi 0, %s287
      %s290 = sphi 0, %s289
      %s304 = sphi 0, %s290
      %s310 = sphi 0, %s312
      %s313 = sphi 0, %s310
      %s314 = sphi 0, %s313
      %s330 = sphi 0, %s314
    $region4: #{chameleon_resnet_block.1} parent=1 // loop_header_branch
      %25 = sbr.rel (%p23) target = $region8
    $region5: #{chameleon_resnet_block.1} parent=1 // loop_body
      %s27 = ssub.s32 %s22, 1
      %s28 = ssub.s32 %s22, 2
      %s29 = sadd.s32 %s22, 1
      %s30 = ssub.s32 %s22, %s29
      %p31 = scmp.eq.s32.totalorder %s30, 0
      %s33 = sadd.s32 %s32, 1
      %s34 = scalar_select %p31, %s32, %s33
      %p37 = pneg %p31
      %p38 = scmp.eq.s32.totalorder %s22, 1
      %p39 = por %p37, %p38
      %p40 = scmp.ne.s32.totalorder %s32, %s35
      %p41 = scmp.eq.s32.totalorder %s22, 0
      %p42 = por %p40, %p41
      %p43 = scmp.ne.s32.totalorder %s32, %s35
      %p44 = scmp.eq.s32.totalorder %s27, 1
      %p45 = por %p43, %p44
      %p46 = scmp.ne.s32.totalorder %s35, %s36
      %p47 = scmp.eq.s32.totalorder %s27, 0
      %p48 = por %p46, %p47
      %p49 = scmp.ne.s32.totalorder %s35, %s36
      %p50 = scmp.eq.s32.totalorder %s28, 1
      %p51 = por %p49, %p50
      %p53 = scmp.ne.s32.totalorder %s36, %s52
      %p54 = scmp.eq.s32.totalorder %s28, 0
      %p55 = por %p53, %p54
      %s57 = sadd.s32 %s56, 1
      %p60 = scmp.eq.s32.totalorder %s22, 1
      %p61 = scmp.ne.s32.totalorder %s56, %s58
      %p62 = scmp.eq.s32.totalorder %s22, 0
      %p63 = por %p61, %p62
      %p64 = scmp.ne.s32.totalorder %s56, %s58
      %p65 = scmp.eq.s32.totalorder %s27, 1
      %p66 = por %p64, %p65
      %p67 = scmp.ne.s32.totalorder %s58, %s59
      %p68 = scmp.eq.s32.totalorder %s27, 0
      %p69 = por %p67, %p68
      %p70 = scmp.ne.s32.totalorder %s58, %s59
      %p71 = scmp.eq.s32.totalorder %s28, 1
      %p72 = por %p70, %p71
      %p74 = scmp.ne.s32.totalorder %s59, %s73
      %p75 = scmp.eq.s32.totalorder %s28, 0
      %p76 = por %p74, %p75
      %s78 = sadd.s32 %s77, 1
      %p81 = scmp.eq.s32.totalorder %s22, 1
      %p82 = scmp.ne.s32.totalorder %s77, %s79
      %p83 = scmp.eq.s32.totalorder %s22, 0
      %p84 = por %p82, %p83
      %p85 = scmp.ne.s32.totalorder %s77, %s79
      %p86 = scmp.eq.s32.totalorder %s27, 1
      %p87 = por %p85, %p86
      %p88 = scmp.ne.s32.totalorder %s79, %s80
      %p89 = scmp.eq.s32.totalorder %s27, 0
      %p90 = por %p88, %p89
      %p91 = scmp.ne.s32.totalorder %s79, %s80
      %p92 = scmp.eq.s32.totalorder %s28, 1
      %p93 = por %p91, %p92
      %p95 = scmp.ne.s32.totalorder %s80, %s94
      %p96 = scmp.eq.s32.totalorder %s28, 0
      %p97 = por %p95, %p96
      %s99 = sadd.s32 %s98, 1
      %p102 = scmp.eq.s32.totalorder %s22, 1
      %p103 = scmp.ne.s32.totalorder %s98, %s100
      %p104 = scmp.eq.s32.totalorder %s22, 0
      %p105 = por %p103, %p104
      %p106 = scmp.ne.s32.totalorder %s98, %s100
      %p107 = scmp.eq.s32.totalorder %s27, 1
      %p108 = por %p106, %p107
      %p109 = scmp.ne.s32.totalorder %s100, %s101
      %p110 = scmp.eq.s32.totalorder %s27, 0
      %p111 = por %p109, %p110
      %p112 = scmp.ne.s32.totalorder %s100, %s101
      %p113 = scmp.eq.s32.totalorder %s28, 1
      %p114 = por %p112, %p113
      %p116 = scmp.ne.s32.totalorder %s101, %s115
      %p117 = scmp.eq.s32.totalorder %s28, 0
      %p118 = por %p116, %p117
      %s120 = sadd.s32 %s119, 1
      %p123 = scmp.eq.s32.totalorder %s22, 1
      %p124 = scmp.ne.s32.totalorder %s119, %s121
      %p125 = scmp.eq.s32.totalorder %s22, 0
      %p126 = por %p124, %p125
      %p127 = scmp.ne.s32.totalorder %s119, %s121
      %p128 = scmp.eq.s32.totalorder %s27, 1
      %p129 = por %p127, %p128
      %p130 = scmp.ne.s32.totalorder %s121, %s122
      %p131 = scmp.eq.s32.totalorder %s27, 0
      %p132 = por %p130, %p131
      %p133 = scmp.ne.s32.totalorder %s121, %s122
      %p134 = scmp.eq.s32.totalorder %s28, 1
      %p135 = por %p133, %p134
      %p137 = scmp.ne.s32.totalorder %s122, %s136
      %p138 = scmp.eq.s32.totalorder %s28, 0
      %p139 = por %p137, %p138
      %s141 = sadd.s32 %s140, 1
      %p144 = scmp.eq.s32.totalorder %s22, 1
      %p145 = scmp.ne.s32.totalorder %s140, %s142
      %p146 = scmp.eq.s32.totalorder %s22, 0
      %p147 = por %p145, %p146
      %p148 = scmp.ne.s32.totalorder %s140, %s142
      %p149 = scmp.eq.s32.totalorder %s27, 1
      %p150 = por %p148, %p149
      %p151 = scmp.ne.s32.totalorder %s142, %s143
      %p152 = scmp.eq.s32.totalorder %s27, 0
      %p153 = por %p151, %p152
      %p154 = scmp.ne.s32.totalorder %s142, %s143
      %p155 = scmp.eq.s32.totalorder %s28, 1
      %p156 = por %p154, %p155
      %p158 = scmp.ne.s32.totalorder %s143, %s157
      %p159 = scmp.eq.s32.totalorder %s28, 0
      %p160 = por %p158, %p159
      %s162 = sadd.s32 %s161, 1
      %p165 = scmp.eq.s32.totalorder %s22, 1
      %p166 = scmp.ne.s32.totalorder %s161, %s163
      %p167 = scmp.eq.s32.totalorder %s22, 0
      %p168 = por %p166, %p167
      %p169 = scmp.ne.s32.totalorder %s161, %s163
      %p170 = scmp.eq.s32.totalorder %s27, 1
      %p171 = por %p169, %p170
      %p172 = scmp.ne.s32.totalorder %s163, %s164
      %p173 = scmp.eq.s32.totalorder %s27, 0
      %p174 = por %p172, %p173
      %p175 = scmp.ne.s32.totalorder %s163, %s164
      %p176 = scmp.eq.s32.totalorder %s28, 1
      %p177 = por %p175, %p176
      %p179 = scmp.ne.s32.totalorder %s164, %s178
      %p180 = scmp.eq.s32.totalorder %s28, 0
      %p181 = por %p179, %p180
      %s183 = sadd.s32 %s182, 1
      %p186 = scmp.eq.s32.totalorder %s22, 1
      %p187 = scmp.ne.s32.totalorder %s182, %s184
      %p188 = scmp.eq.s32.totalorder %s22, 0
      %p189 = por %p187, %p188
      %p190 = scmp.ne.s32.totalorder %s182, %s184
      %p191 = scmp.eq.s32.totalorder %s27, 1
      %p192 = por %p190, %p191
      %p193 = scmp.ne.s32.totalorder %s184, %s185
      %p194 = scmp.eq.s32.totalorder %s27, 0
      %p195 = por %p193, %p194
      %p196 = scmp.ne.s32.totalorder %s184, %s185
      %p197 = scmp.eq.s32.totalorder %s28, 1
      %p198 = por %p196, %p197
      %p200 = scmp.ne.s32.totalorder %s185, %s199
      %p201 = scmp.eq.s32.totalorder %s28, 0
      %p202 = por %p200, %p201
      %s204 = sadd.s32 %s203, 1
      %p207 = scmp.eq.s32.totalorder %s22, 1
      %p208 = scmp.ne.s32.totalorder %s203, %s205
      %p209 = scmp.eq.s32.totalorder %s22, 0
      %p210 = por %p208, %p209
      %p211 = scmp.ne.s32.totalorder %s203, %s205
      %p212 = scmp.eq.s32.totalorder %s27, 1
      %p213 = por %p211, %p212
      %p214 = scmp.ne.s32.totalorder %s205, %s206
      %p215 = scmp.eq.s32.totalorder %s27, 0
      %p216 = por %p214, %p215
      %p217 = scmp.ne.s32.totalorder %s205, %s206
      %p218 = scmp.eq.s32.totalorder %s28, 1
      %p219 = por %p217, %p218
      %p221 = scmp.ne.s32.totalorder %s206, %s220
      %p222 = scmp.eq.s32.totalorder %s28, 0
      %p223 = por %p221, %p222
      %s225 = sadd.s32 %s224, 1
      %p228 = scmp.eq.s32.totalorder %s22, 1
      %p229 = scmp.ne.s32.totalorder %s224, %s226
      %p230 = scmp.eq.s32.totalorder %s22, 0
      %p231 = por %p229, %p230
      %p232 = scmp.ne.s32.totalorder %s224, %s226
      %p233 = scmp.eq.s32.totalorder %s27, 1
      %p234 = por %p232, %p233
      %p235 = scmp.ne.s32.totalorder %s226, %s227
      %p236 = scmp.eq.s32.totalorder %s27, 0
      %p237 = por %p235, %p236
      %p238 = scmp.ne.s32.totalorder %s226, %s227
      %p239 = scmp.eq.s32.totalorder %s28, 1
      %p240 = por %p238, %p239
      %p242 = scmp.ne.s32.totalorder %s227, %s241
      %p243 = scmp.eq.s32.totalorder %s28, 0
      %p244 = por %p242, %p243
      %s246 = sadd.s32 %s245, 1
      %p249 = scmp.eq.s32.totalorder %s22, 1
      %p250 = scmp.ne.s32.totalorder %s245, %s247
      %p251 = scmp.eq.s32.totalorder %s22, 0
      %p252 = por %p250, %p251
      %p253 = scmp.ne.s32.totalorder %s245, %s247
      %p254 = scmp.eq.s32.totalorder %s27, 1
      %p255 = por %p253, %p254
      %p256 = scmp.ne.s32.totalorder %s247, %s248
      %p257 = scmp.eq.s32.totalorder %s27, 0
      %p258 = por %p256, %p257
      %p259 = scmp.ne.s32.totalorder %s247, %s248
      %p260 = scmp.eq.s32.totalorder %s28, 1
      %p261 = por %p259, %p260
      %p263 = scmp.ne.s32.totalorder %s248, %s262
      %p264 = scmp.eq.s32.totalorder %s28, 0
      %p265 = por %p263, %p264
      %s267 = sadd.s32 %s266, 1
      %p270 = scmp.eq.s32.totalorder %s22, 1
      %p271 = scmp.ne.s32.totalorder %s266, %s268
      %p272 = scmp.eq.s32.totalorder %s22, 0
      %p273 = por %p271, %p272
      %p274 = scmp.ne.s32.totalorder %s266, %s268
      %p275 = scmp.eq.s32.totalorder %s27, 1
      %p276 = por %p274, %p275
      %p277 = scmp.ne.s32.totalorder %s268, %s269
      %p278 = scmp.eq.s32.totalorder %s27, 0
      %p279 = por %p277, %p278
      %p280 = scmp.ne.s32.totalorder %s268, %s269
      %p281 = scmp.eq.s32.totalorder %s28, 1
      %p282 = por %p280, %p281
      %p284 = scmp.ne.s32.totalorder %s269, %s283
      %p285 = scmp.eq.s32.totalorder %s28, 0
      %p286 = por %p284, %p285
      %s288 = sadd.s32 %s287, 1
      %p291 = scmp.eq.s32.totalorder %s22, 1
      %p292 = scmp.ne.s32.totalorder %s287, %s289
      %p293 = scmp.eq.s32.totalorder %s22, 0
      %p294 = por %p292, %p293
      %p295 = scmp.ne.s32.totalorder %s287, %s289
      %p296 = scmp.eq.s32.totalorder %s27, 1
      %p297 = por %p295, %p296
      %p298 = scmp.ne.s32.totalorder %s289, %s290
      %p299 = scmp.eq.s32.totalorder %s27, 0
      %p300 = por %p298, %p299
      %p301 = scmp.ne.s32.totalorder %s289, %s290
      %p302 = scmp.eq.s32.totalorder %s28, 1
      %p303 = por %p301, %p302
      %p305 = scmp.ne.s32.totalorder %s290, %s304
      %p306 = scmp.eq.s32.totalorder %s28, 0
      %p307 = por %p305, %p306
      %s308 = ssub.s32 %s22, %s29
      %p309 = scmp.eq.s32.totalorder %s308, 0
      %s311 = sadd.s32 %s310, 1
      %s312 = scalar_select %p309, %s310, %s311
      %p315 = pneg %p309
      %p316 = scmp.eq.s32.totalorder %s22, 1
      %p317 = por %p315, %p316
      %p318 = scmp.ne.s32.totalorder %s310, %s313
      %p319 = scmp.eq.s32.totalorder %s22, 0
      %p320 = por %p318, %p319
      %p321 = scmp.ne.s32.totalorder %s310, %s313
      %p322 = scmp.eq.s32.totalorder %s27, 1
      %p323 = por %p321, %p322
      %p324 = scmp.ne.s32.totalorder %s313, %s314
      %p325 = scmp.eq.s32.totalorder %s27, 0
      %p326 = por %p324, %p325
      %p327 = scmp.ne.s32.totalorder %s313, %s314
      %p328 = scmp.eq.s32.totalorder %s28, 1
      %p329 = por %p327, %p328
      %p331 = scmp.ne.s32.totalorder %s314, %s330
      %p332 = scmp.eq.s32.totalorder %s28, 0
      %p333 = por %p331, %p332
      %p334 = scmp.le.s32.totalorder 1, %s22
      %p335 = scmp.lt.s32.totalorder %s22, 3
      %p336 = pnand %p334, %p335
      %p337 = pneg %p336
      // Predicated region
      $region9: #{chameleon_resnet_block.1} parent=5 // pred_check
        _
      $region10: #{chameleon_resnet_block.1} parent=5 // pred_check_branch
        %339 = sbr.rel (%p336) target = $region12
      $region11: #{chameleon_resnet_block.1} parent=5 // pred_region
        %s340 = ssub.s32 %s22, 1
        // Predicated region
        $region13: #{chameleon_resnet_block.1} parent=11 // pred_check
          %p341 = pneg %p69
        $region14: #{chameleon_resnet_block.1} parent=11 // pred_check_branch
          %343 = sbr.rel (%p341) target = $region16
        $region15: #{chameleon_resnet_block.1} parent=11 // pred_region
          _
        $region16: #{chameleon_resnet_block.1} parent=11 // pred_fallthru
          _
        // Predicated region
        $region17: #{chameleon_resnet_block.1} parent=11 // pred_check
          %p344 = pneg %p90
        $region18: #{chameleon_resnet_block.1} parent=11 // pred_check_branch
          %346 = sbr.rel (%p344) target = $region20
        $region19: #{chameleon_resnet_block.1} parent=11 // pred_region
          _
        $region20: #{chameleon_resnet_block.1} parent=11 // pred_fallthru
          _
        // Predicated region
        $region21: #{chameleon_resnet_block.1} parent=11 // pred_check
          %p347 = pneg %p111
        $region22: #{chameleon_resnet_block.1} parent=11 // pred_check_branch
          %349 = sbr.rel (%p347) target = $region24
        $region23: #{chameleon_resnet_block.1} parent=11 // pred_region
          _
        $region24: #{chameleon_resnet_block.1} parent=11 // pred_fallthru
          _
        // Predicated region
        $region25: #{chameleon_resnet_block.1} parent=11 // pred_check
          %p350 = pneg %p132
        $region26: #{chameleon_resnet_block.1} parent=11 // pred_check_branch
          %352 = sbr.rel (%p350) target = $region28
        $region27: #{chameleon_resnet_block.1} parent=11 // pred_region
          _
        $region28: #{chameleon_resnet_block.1} parent=11 // pred_fallthru
          _
        // Predicated region
        $region29: #{chameleon_resnet_block.1} parent=11 // pred_check
          %p353 = pneg %p153
        $region30: #{chameleon_resnet_block.1} parent=11 // pred_check_branch
          %355 = sbr.rel (%p353) target = $region32
        $region31: #{chameleon_resnet_block.1} parent=11 // pred_region
          _
        $region32: #{chameleon_resnet_block.1} parent=11 // pred_fallthru
          _
        // Predicated region
        $region33: #{chameleon_resnet_block.1} parent=11 // pred_check
          %p356 = pneg %p174
        $region34: #{chameleon_resnet_block.1} parent=11 // pred_check_branch
          %358 = sbr.rel (%p356) target = $region36
        $region35: #{chameleon_resnet_block.1} parent=11 // pred_region
          _
        $region36: #{chameleon_resnet_block.1} parent=11 // pred_fallthru
          _
        // Predicated region
        $region37: #{chameleon_resnet_block.1} parent=11 // pred_check
          %p359 = pneg %p195
        $region38: #{chameleon_resnet_block.1} parent=11 // pred_check_branch
          %361 = sbr.rel (%p359) target = $region40
        $region39: #{chameleon_resnet_block.1} parent=11 // pred_region
          _
        $region40: #{chameleon_resnet_block.1} parent=11 // pred_fallthru
          _
        // Predicated region
        $region41: #{chameleon_resnet_block.1} parent=11 // pred_check
          %p362 = pneg %p216
        $region42: #{chameleon_resnet_block.1} parent=11 // pred_check_branch
          %364 = sbr.rel (%p362) target = $region44
        $region43: #{chameleon_resnet_block.1} parent=11 // pred_region
          _
        $region44: #{chameleon_resnet_block.1} parent=11 // pred_fallthru
          _
        // Predicated region
        $region45: #{chameleon_resnet_block.1} parent=11 // pred_check
          %p365 = pneg %p237
        $region46: #{chameleon_resnet_block.1} parent=11 // pred_check_branch
          %367 = sbr.rel (%p365) target = $region48
        $region47: #{chameleon_resnet_block.1} parent=11 // pred_region
          _
        $region48: #{chameleon_resnet_block.1} parent=11 // pred_fallthru
          _
        // Predicated region
        $region49: #{chameleon_resnet_block.1} parent=11 // pred_check
          %p368 = pneg %p258
        $region50: #{chameleon_resnet_block.1} parent=11 // pred_check_branch
          %370 = sbr.rel (%p368) target = $region52
        $region51: #{chameleon_resnet_block.1} parent=11 // pred_region
          _
        $region52: #{chameleon_resnet_block.1} parent=11 // pred_fallthru
          _
        // Predicated region
        $region53: #{chameleon_resnet_block.1} parent=11 // pred_check
          %p371 = pneg %p279
        $region54: #{chameleon_resnet_block.1} parent=11 // pred_check_branch
          %373 = sbr.rel (%p371) target = $region56
        $region55: #{chameleon_resnet_block.1} parent=11 // pred_region
          _
        $region56: #{chameleon_resnet_block.1} parent=11 // pred_fallthru
          _
        // Predicated region
        $region57: #{chameleon_resnet_block.1} parent=11 // pred_check
          %p374 = pneg %p300
        $region58: #{chameleon_resnet_block.1} parent=11 // pred_check_branch
          %376 = sbr.rel (%p374) target = $region60
        $region59: #{chameleon_resnet_block.1} parent=11 // pred_region
          _
        $region60: #{chameleon_resnet_block.1} parent=11 // pred_fallthru
          _
      $region12: #{chameleon_resnet_block.1} parent=5 // pred_fallthru
        _
      %p377 = scmp.lt.s32.totalorder %s22, 2
      // Predicated region
      $region61: #{chameleon_resnet_block.1} parent=5 // pred_check
        %p378 = pneg %p377
      $region62: #{chameleon_resnet_block.1} parent=5 // pred_check_branch
        %380 = sbr.rel (%p378) target = $region64
      $region63: #{chameleon_resnet_block.1} parent=5 // pred_region
        // Predicated region
        $region65: #{chameleon_resnet_block.1} parent=63 // pred_check
          %p381 = pneg %p42
        $region66: #{chameleon_resnet_block.1} parent=63 // pred_check_branch
          %383 = sbr.rel (%p381) target = $region68
        $region67: #{chameleon_resnet_block.1} parent=63 // pred_region
          %p384 = scmp.lt.s32.totalorder %s22, 1
          %s385 = scalar_select %p384, %s22, 1
          %s386 = smul.addr %s385, 32
          %s387 = smul.addr %s386, 8
          %s388 = scalar_lea.vmem %s0, %s387
        $region68: #{chameleon_resnet_block.1} parent=63 // pred_fallthru
          _
      $region64: #{chameleon_resnet_block.1} parent=5 // pred_fallthru
        _
      %p389 = scmp.le.s32.totalorder 1, %s22
      %p390 = scmp.lt.s32.totalorder %s22, 3
      %p391 = pnand %p389, %p390
      %p392 = pneg %p391
      // Predicated region
      $region69: #{chameleon_resnet_block.1} parent=5 // pred_check
        _
      $region70: #{chameleon_resnet_block.1} parent=5 // pred_check_branch
        %394 = sbr.rel (%p391) target = $region72
      $region71: #{chameleon_resnet_block.1} parent=5 // pred_region
        %s395 = ssub.s32 %s22, 1
        %p396 = scmp.lt.s32.totalorder %s27, 1
        %s397 = scalar_select %p396, %s27, 1
        %s398 = smul.addr %s397, 32
        %s399 = smul.addr %s398, 8
        %s400 = scalar_lea.vmem %s0, %s399
        %p401 = pneg %p48
        %p402 = pneg %p45
        %p403 = pneg %p69
        %p404 = pneg %p66
        %p405 = pneg %p90
        %p406 = pneg %p87
        %p407 = pneg %p111
        %p408 = pneg %p108
        %p409 = pneg %p132
        %p410 = pneg %p129
        %p411 = pneg %p153
        %p412 = pneg %p150
        %p413 = pneg %p174
        %p414 = pneg %p171
        %p415 = pneg %p195
        %p416 = pneg %p192
        %p417 = pneg %p216
        %p418 = pneg %p213
        %p419 = pneg %p237
        %p420 = pneg %p234
        %p421 = pneg %p258
        %p422 = pneg %p255
        %p423 = pneg %p279
        %p424 = pneg %p276
        %p425 = pneg %p300
        %p426 = pneg %p297
        %p427 = pneg %p326
        %p428 = pneg %p323
        %s429 = sand.u32 %s313, 1
        %s430 = scalar_lea.sflag [#allocation6], %s429
        %s431 = sand.u32 %s313, 1
        %s432 = smul.addr %s431, 256
        %s433 = scalar_lea.vmem [#allocation5], %s432
        %p434 = scmp.lt.s32.totalorder %s27, 1
        %s435 = scalar_select %p434, %s27, 1
        %s436 = smul.addr %s435, 32
        %s437 = smul.addr %s436, 8
        %s438 = scalar_lea.vmem %s0, %s437
        %v440 = vld [vmem:[%s438] sm:$0xff]
        %v441 = vld [vmem:[%s438 + $0x8] sm:$0xff]
        %v442 = vld [vmem:[%s438 + $0x10] sm:$0xff]
        %v443 = vld [vmem:[%s438 + $0x18] sm:$0xff]
        %v444 = vld [vmem:[%s438 + $0x20] sm:$0xff]
        %v445 = vld [vmem:[%s438 + $0x28] sm:$0xff]
        %v446 = vld [vmem:[%s438 + $0x30] sm:$0xff]
        %v447 = vld [vmem:[%s438 + $0x38] sm:$0xff]
        %v448 = vld [vmem:[%s438 + $0x40] sm:$0xff]
        %v449 = vld [vmem:[%s438 + $0x48] sm:$0xff]
        %v450 = vld [vmem:[%s438 + $0x50] sm:$0xff]
        %v451 = vld [vmem:[%s438 + $0x58] sm:$0xff]
        %v452 = vld [vmem:[%s438 + $0x60] sm:$0xff]
        %v453 = vld [vmem:[%s438 + $0x68] sm:$0xff]
        %v454 = vld [vmem:[%s438 + $0x70] sm:$0xff]
        %v455 = vld [vmem:[%s438 + $0x78] sm:$0xff]
        %v456 = vld [vmem:[%s438 + $0x80] sm:$0xff]
        %v457 = vld [vmem:[%s438 + $0x88] sm:$0xff]
        %v458 = vld [vmem:[%s438 + $0x90] sm:$0xff]
        %v459 = vld [vmem:[%s438 + $0x98] sm:$0xff]
        %v460 = vld [vmem:[%s438 + $0xa0] sm:$0xff]
        %v461 = vld [vmem:[%s438 + $0xa8] sm:$0xff]
        %v462 = vld [vmem:[%s438 + $0xb0] sm:$0xff]
        %v463 = vld [vmem:[%s438 + $0xb8] sm:$0xff]
        %v464 = vld [vmem:[%s438 + $0xc0] sm:$0xff]
        %v465 = vld [vmem:[%s438 + $0xc8] sm:$0xff]
        %v466 = vld [vmem:[%s438 + $0xd0] sm:$0xff]
        %v467 = vld [vmem:[%s438 + $0xd8] sm:$0xff]
        %v468 = vld [vmem:[%s438 + $0xe0] sm:$0xff]
        %v469 = vld [vmem:[%s438 + $0xe8] sm:$0xff]
        %v470 = vld [vmem:[%s438 + $0xf0] sm:$0xff]
        %v471 = vld [vmem:[%s438 + $0xf8] sm:$0xff]
        %vm472 = vcmask 523264
        %v473 = vsel %vm472, %v440, 0.0
        %v474 = vsel %vm472, %v441, 0.0
        %v475 = vadd.f32 %v473, %v474
        %v476 = vsel %vm472, %v442, 0.0
        %v477 = vadd.f32 %v475, %v476
        %v478 = vsel %vm472, %v443, 0.0
        %v479 = vadd.f32 %v477, %v478
        %v480 = vsel %vm472, %v444, 0.0
        %v481 = vadd.f32 %v479, %v480
        %v482 = vsel %vm472, %v445, 0.0
        %v483 = vadd.f32 %v481, %v482
        %v484 = vsel %vm472, %v446, 0.0
        %v485 = vadd.f32 %v483, %v484
        %v486 = vsel %vm472, %v447, 0.0
        %v487 = vadd.f32 %v485, %v486
        %v488 = vsel %vm472, %v448, 0.0
        %v489 = vadd.f32 %v487, %v488
        %v490 = vsel %vm472, %v449, 0.0
        %v491 = vadd.f32 %v489, %v490
        %v492 = vsel %vm472, %v450, 0.0
        %v493 = vadd.f32 %v491, %v492
        %v494 = vsel %vm472, %v451, 0.0
        %v495 = vadd.f32 %v493, %v494
        %v496 = vsel %vm472, %v452, 0.0
        %v497 = vadd.f32 %v495, %v496
        %v498 = vsel %vm472, %v453, 0.0
        %v499 = vadd.f32 %v497, %v498
        %v500 = vsel %vm472, %v454, 0.0
        %v501 = vadd.f32 %v499, %v500
        %v502 = vsel %vm472, %v455, 0.0
        %v503 = vadd.f32 %v501, %v502
        %v504 = vsel %vm472, %v456, 0.0
        %v505 = vadd.f32 %v503, %v504
        %v506 = vsel %vm472, %v457, 0.0
        %v507 = vadd.f32 %v505, %v506
        %v508 = vsel %vm472, %v458, 0.0
        %v509 = vadd.f32 %v507, %v508
        %v510 = vsel %vm472, %v459, 0.0
        %v511 = vadd.f32 %v509, %v510
        %v512 = vsel %vm472, %v460, 0.0
        %v513 = vadd.f32 %v511, %v512
        %v514 = vsel %vm472, %v461, 0.0
        %v515 = vadd.f32 %v513, %v514
        %v516 = vsel %vm472, %v462, 0.0
        %v517 = vadd.f32 %v515, %v516
        %v518 = vsel %vm472, %v463, 0.0
        %v519 = vadd.f32 %v517, %v518
        %v520 = vsel %vm472, %v464, 0.0
        %v521 = vadd.f32 %v519, %v520
        %v522 = vsel %vm472, %v465, 0.0
        %v523 = vadd.f32 %v521, %v522
        %v524 = vsel %vm472, %v466, 0.0
        %v525 = vadd.f32 %v523, %v524
        %v526 = vsel %vm472, %v467, 0.0
        %v527 = vadd.f32 %v525, %v526
        %v528 = vsel %vm472, %v468, 0.0
        %v529 = vadd.f32 %v527, %v528
        %v530 = vsel %vm472, %v469, 0.0
        %v531 = vadd.f32 %v529, %v530
        %v532 = vsel %vm472, %v470, 0.0
        %v533 = vadd.f32 %v531, %v532
        %v534 = vsel %vm472, %v471, 0.0
        %v535 = vadd.f32 %v533, %v534
        %v536 = vrot.slane %v535, 4
        %v537 = vadd.f32 %v535, %v536
        %v538 = vrot.slane %v537, 2
        %v539 = vadd.f32 %v537, %v538
        %v540 = vrot.slane %v539, 1
        %v541 = vadd.f32 %v539, %v540
        %v542 = vrcp.pop 256.0
        %v543 = vmul.f32 %v541, %v542
        %v544 = vmul.f32 %v440, %v440
        %v545 = vmul.f32 %v441, %v441
        %v546 = vmul.f32 %v442, %v442
        %v547 = vmul.f32 %v443, %v443
        %v548 = vmul.f32 %v444, %v444
        %v549 = vmul.f32 %v445, %v445
        %v550 = vmul.f32 %v446, %v446
        %v551 = vmul.f32 %v447, %v447
        %v552 = vmul.f32 %v448, %v448
        %v553 = vmul.f32 %v449, %v449
        %v554 = vmul.f32 %v450, %v450
        %v555 = vmul.f32 %v451, %v451
        %v556 = vmul.f32 %v452, %v452
        %v557 = vmul.f32 %v453, %v453
        %v558 = vmul.f32 %v454, %v454
        %v559 = vmul.f32 %v455, %v455
        %v560 = vmul.f32 %v456, %v456
        %v561 = vmul.f32 %v457, %v457
        %v562 = vmul.f32 %v458, %v458
        %v563 = vmul.f32 %v459, %v459
        %v564 = vmul.f32 %v460, %v460
        %v565 = vmul.f32 %v461, %v461
        %v566 = vmul.f32 %v462, %v462
        %v567 = vmul.f32 %v463, %v463
        %v568 = vmul.f32 %v464, %v464
        %v569 = vmul.f32 %v465, %v465
        %v570 = vmul.f32 %v466, %v466
        %v571 = vmul.f32 %v467, %v467
        %v572 = vmul.f32 %v468, %v468
        %v573 = vmul.f32 %v469, %v469
        %v574 = vmul.f32 %v470, %v470
        %v575 = vmul.f32 %v471, %v471
        %v576 = vsel %vm472, %v544, 0.0
        %v577 = vsel %vm472, %v545, 0.0
        %v578 = vadd.f32 %v576, %v577
        %v579 = vsel %vm472, %v546, 0.0
        %v580 = vadd.f32 %v578, %v579
        %v581 = vsel %vm472, %v547, 0.0
        %v582 = vadd.f32 %v580, %v581
        %v583 = vsel %vm472, %v548, 0.0
        %v584 = vadd.f32 %v582, %v583
        %v585 = vsel %vm472, %v549, 0.0
        %v586 = vadd.f32 %v584, %v585
        %v587 = vsel %vm472, %v550, 0.0
        %v588 = vadd.f32 %v586, %v587
        %v589 = vsel %vm472, %v551, 0.0
        %v590 = vadd.f32 %v588, %v589
        %v591 = vsel %vm472, %v552, 0.0
        %v592 = vadd.f32 %v590, %v591
        %v593 = vsel %vm472, %v553, 0.0
        %v594 = vadd.f32 %v592, %v593
        %v595 = vsel %vm472, %v554, 0.0
        %v596 = vadd.f32 %v594, %v595
        %v597 = vsel %vm472, %v555, 0.0
        %v598 = vadd.f32 %v596, %v597
        %v599 = vsel %vm472, %v556, 0.0
        %v600 = vadd.f32 %v598, %v599
        %v601 = vsel %vm472, %v557, 0.0
        %v602 = vadd.f32 %v600, %v601
        %v603 = vsel %vm472, %v558, 0.0
        %v604 = vadd.f32 %v602, %v603
        %v605 = vsel %vm472, %v559, 0.0
        %v606 = vadd.f32 %v604, %v605
        %v607 = vsel %vm472, %v560, 0.0
        %v608 = vadd.f32 %v606, %v607
        %v609 = vsel %vm472, %v561, 0.0
        %v610 = vadd.f32 %v608, %v609
        %v611 = vsel %vm472, %v562, 0.0
        %v612 = vadd.f32 %v610, %v611
        %v613 = vsel %vm472, %v563, 0.0
        %v614 = vadd.f32 %v612, %v613
        %v615 = vsel %vm472, %v564, 0.0
        %v616 = vadd.f32 %v614, %v615
        %v617 = vsel %vm472, %v565, 0.0
        %v618 = vadd.f32 %v616, %v617
        %v619 = vsel %vm472, %v566, 0.0
        %v620 = vadd.f32 %v618, %v619
        %v621 = vsel %vm472, %v567, 0.0
        %v622 = vadd.f32 %v620, %v621
        %v623 = vsel %vm472, %v568, 0.0
        %v624 = vadd.f32 %v622, %v623
        %v625 = vsel %vm472, %v569, 0.0
        %v626 = vadd.f32 %v624, %v625
        %v627 = vsel %vm472, %v570, 0.0
        %v628 = vadd.f32 %v626, %v627
        %v629 = vsel %vm472, %v571, 0.0
        %v630 = vadd.f32 %v628, %v629
        %v631 = vsel %vm472, %v572, 0.0
        %v632 = vadd.f32 %v630, %v631
        %v633 = vsel %vm472, %v573, 0.0
        %v634 = vadd.f32 %v632, %v633
        %v635 = vsel %vm472, %v574, 0.0
        %v636 = vadd.f32 %v634, %v635
        %v637 = vsel %vm472, %v575, 0.0
        %v638 = vadd.f32 %v636, %v637
        %v639 = vrot.slane %v638, 4
        %v640 = vadd.f32 %v638, %v639
        %v641 = vrot.slane %v640, 2
        %v642 = vadd.f32 %v640, %v641
        %v643 = vrot.slane %v642, 1
        %v644 = vadd.f32 %v642, %v643
        %v645 = vmul.f32 %v644, %v542
        %vm646 = vcmask 1040384
        %v647 = vsel %vm646, %v543, %v645
        %v648 = vld [vmem:[%s3] sm:$0xff]
        %v649 = vld [vmem:[%s3 + $0x8] sm:$0xff]
        %v650 = vld [vmem:[%s3 + $0x10] sm:$0xff]
        %v651 = vld [vmem:[%s3 + $0x18] sm:$0xff]
        %v652 = vld [vmem:[%s3 + $0x20] sm:$0xff]
        %v653 = vld [vmem:[%s3 + $0x28] sm:$0xff]
        %v654 = vld [vmem:[%s3 + $0x30] sm:$0xff]
        %v655 = vld [vmem:[%s3 + $0x38] sm:$0xff]
        %v657 = vsel %vm472, %v647, 0
        %659 = vmatprep.subr.mxu0 0.0
        %660 = vmatpush1.msra.mxu0 %v648
        %661 = vmatprep.subr.mxu0 0.0
        %662 = vmatpush1.msra.mxu0 %v649
        %663 = vmatprep.subr.mxu0 0.0
        %664 = vmatpush1.msra.mxu0 %v650
        %665 = vmatprep.subr.mxu0 0.0
        %666 = vmatpush1.msra.mxu0 %v651
        %667 = vmatprep.subr.mxu0 0.0
        %668 = vmatpush1.msra.mxu0 %v652
        %669 = vmatprep.subr.mxu0 0.0
        %670 = vmatpush1.msra.mxu0 %v653
        %671 = vmatprep.subr.mxu0 0.0
        %672 = vmatpush1.msra.mxu0 %v654
        %673 = vmatprep.subr.mxu0 0.0
        %674 = vmatpush1.msra.mxu0 %v655
        %675 = vmatprep.subr.mxu0 0.0
        %676 = vmatpush1.msra.mxu0 0.0
        %677 = vmatprep.subr.mxu0 0.0
        %678 = vmatpush1.msra.mxu0 0.0
        %679 = vmatprep.subr.mxu0 0.0
        %680 = vmatpush1.msra.mxu0 0.0
        %681 = vmatprep.subr.mxu0 0.0
        %682 = vmatpush1.msra.mxu0 0.0
        %683 = vmatprep.subr.mxu0 0.0
        %684 = vmatpush1.msra.mxu0 0.0
        %685 = vmatprep.subr.mxu0 0.0
        %686 = vmatpush1.msra.mxu0 0.0
        %687 = vmatprep.subr.mxu0 0.0
        %688 = vmatpush1.msra.mxu0 0.0
        %689 = vmatprep.subr.mxu0 0.0
        %690 = vmatpush1.msra.mxu0 0.0
        %691 = vmatprep.subr.mxu0 0.0
        %692 = vmatpush1.msra.mxu0 0.0
        %693 = vmatprep.subr.mxu0 0.0
        %694 = vmatpush1.msra.mxu0 0.0
        %695 = vmatprep.subr.mxu0 0.0
        %696 = vmatpush1.msra.mxu0 0.0
        %697 = vmatprep.subr.mxu0 0.0
        %698 = vmatpush1.msra.mxu0 0.0
        %699 = vmatprep.subr.mxu0 0.0
        %700 = vmatpush1.msra.mxu0 0.0
        %701 = vmatprep.subr.mxu0 0.0
        %702 = vmatpush1.msra.mxu0 0.0
        %703 = vmatprep.subr.mxu0 0.0
        %704 = vmatpush1.msra.mxu0 0.0
        %705 = vmatprep.subr.mxu0 0.0
        %706 = vmatpush1.msra.mxu0 0.0
        %707 = vmatprep.subr.mxu0 0.0
        %708 = vmatpush1.msra.mxu0 0.0
        %709 = vmatprep.subr.mxu0 0.0
        %710 = vmatpush1.msra.mxu0 0.0
        %711 = vmatprep.subr.mxu0 0.0
        %712 = vmatpush1.msra.mxu0 0.0
        %713 = vmatprep.subr.mxu0 0.0
        %714 = vmatpush1.msra.mxu0 0.0
        %715 = vmatprep.subr.mxu0 0.0
        %716 = vmatpush1.msra.mxu0 0.0
        %717 = vmatprep.subr.mxu0 0.0
        %718 = vmatpush1.msra.mxu0 0.0
        %719 = vmatprep.subr.mxu0 0.0
        %720 = vmatpush1.msra.mxu0 0.0
        %721 = vmatprep.subr.mxu0 0.0
        %722 = vmatpush1.msra.mxu0 0.0
        %723 = vmatprep.mubr.f32.mxu0 0.0
        %724 = vmatmul.mubr.f32.gmra.mrb[0].mxu0 %v657
        %v725 = vpop.f32.mrb[0].mxu0
        %v726 = vadd.f32 0.0, %v725
        %v727 = vpop.f32.mrb[0].mxu0
        %728 = vdwg.mxu0
        %v729 = vmul.f32 %v726, %v726
        %v731 = vrot.slane %v729, 7
        %v733 = vsub.f32 %v726, %v731
        %v734 = vadd.f32 %v733, 1e-06
        %v735 = vrsqrt.pop %v734
        %v736 = vld [vmem:[%s1] sm:$0x1]
        %v738 = vlaneseq
        %v739 = vshrl.u32 %v738, 7
        %v740 = vsub.s32 0, %v739
        %v741 = vrot.slane %v736, %v740
        %v743 = vmul.f32 %v735, %v741
        %v744 = vlaneseq
        %v745 = vshrl.u32 %v744, 7
        %v746 = vsub.s32 0, %v745
        %v747 = vrot.slane %v726, %v746
        %v748 = vsub.f32 %v440, %v747
        %v749 = vsub.f32 %v441, %v747
        %v750 = vsub.f32 %v442, %v747
        %v751 = vsub.f32 %v443, %v747
        %v752 = vsub.f32 %v444, %v747
        %v753 = vsub.f32 %v445, %v747
        %v754 = vsub.f32 %v446, %v747
        %v755 = vsub.f32 %v447, %v747
        %v756 = vsub.f32 %v448, %v747
        %v757 = vsub.f32 %v449, %v747
        %v758 = vsub.f32 %v450, %v747
        %v759 = vsub.f32 %v451, %v747
        %v760 = vsub.f32 %v452, %v747
        %v761 = vsub.f32 %v453, %v747
        %v762 = vsub.f32 %v454, %v747
        %v763 = vsub.f32 %v455, %v747
        %v764 = vsub.f32 %v456, %v747
        %v765 = vsub.f32 %v457, %v747
        %v766 = vsub.f32 %v458, %v747
        %v767 = vsub.f32 %v459, %v747
        %v768 = vsub.f32 %v460, %v747
        %v769 = vsub.f32 %v461, %v747
        %v770 = vsub.f32 %v462, %v747
        %v771 = vsub.f32 %v463, %v747
        %v772 = vsub.f32 %v464, %v747
        %v773 = vsub.f32 %v465, %v747
        %v774 = vsub.f32 %v466, %v747
        %v775 = vsub.f32 %v467, %v747
        %v776 = vsub.f32 %v468, %v747
        %v777 = vsub.f32 %v469, %v747
        %v778 = vsub.f32 %v470, %v747
        %v779 = vsub.f32 %v471, %v747
        %v780 = vlaneseq
        %v781 = vshrl.u32 %v780, 7
        %v782 = vsub.s32 1, %v781
        %v783 = vrot.slane %v743, %v782
        %v784 = vmul.f32 %v748, %v783
        %v785 = vmul.f32 %v749, %v783
        %v786 = vmul.f32 %v750, %v783
        %v787 = vmul.f32 %v751, %v783
        %v788 = vmul.f32 %v752, %v783
        %v789 = vmul.f32 %v753, %v783
        %v790 = vmul.f32 %v754, %v783
        %v791 = vmul.f32 %v755, %v783
        %v792 = vmul.f32 %v756, %v783
        %v793 = vmul.f32 %v757, %v783
        %v794 = vmul.f32 %v758, %v783
        %v795 = vmul.f32 %v759, %v783
        %v796 = vmul.f32 %v760, %v783
        %v797 = vmul.f32 %v761, %v783
        %v798 = vmul.f32 %v762, %v783
        %v799 = vmul.f32 %v763, %v783
        %v800 = vmul.f32 %v764, %v783
        %v801 = vmul.f32 %v765, %v783
        %v802 = vmul.f32 %v766, %v783
        %v803 = vmul.f32 %v767, %v783
        %v804 = vmul.f32 %v768, %v783
        %v805 = vmul.f32 %v769, %v783
        %v806 = vmul.f32 %v770, %v783
        %v807 = vmul.f32 %v771, %v783
        %v808 = vmul.f32 %v772, %v783
        %v809 = vmul.f32 %v773, %v783
        %v810 = vmul.f32 %v774, %v783
        %v811 = vmul.f32 %v775, %v783
        %v812 = vmul.f32 %v776, %v783
        %v813 = vmul.f32 %v777, %v783
        %v814 = vmul.f32 %v778, %v783
        %v815 = vmul.f32 %v779, %v783
        %v816 = vld [vmem:[%s2] sm:$0x1]
        %v818 = vlaneseq
        %v819 = vshrl.u32 %v818, 7
        %v820 = vsub.s32 0, %v819
        %v821 = vrot.slane %v816, %v820
        %v823 = vadd.f32 %v784, %v821
        %v824 = vadd.f32 %v785, %v821
        %v825 = vadd.f32 %v786, %v821
        %v826 = vadd.f32 %v787, %v821
        %v827 = vadd.f32 %v788, %v821
        %v828 = vadd.f32 %v789, %v821
        %v829 = vadd.f32 %v790, %v821
        %v830 = vadd.f32 %v791, %v821
        %v831 = vadd.f32 %v792, %v821
        %v832 = vadd.f32 %v793, %v821
        %v833 = vadd.f32 %v794, %v821
        %v834 = vadd.f32 %v795, %v821
        %v835 = vadd.f32 %v796, %v821
        %v836 = vadd.f32 %v797, %v821
        %v837 = vadd.f32 %v798, %v821
        %v838 = vadd.f32 %v799, %v821
        %v839 = vadd.f32 %v800, %v821
        %v840 = vadd.f32 %v801, %v821
        %v841 = vadd.f32 %v802, %v821
        %v842 = vadd.f32 %v803, %v821
        %v843 = vadd.f32 %v804, %v821
        %v844 = vadd.f32 %v805, %v821
        %v845 = vadd.f32 %v806, %v821
        %v846 = vadd.f32 %v807, %v821
        %v847 = vadd.f32 %v808, %v821
        %v848 = vadd.f32 %v809, %v821
        %v849 = vadd.f32 %v810, %v821
        %v850 = vadd.f32 %v811, %v821
        %v851 = vadd.f32 %v812, %v821
        %v852 = vadd.f32 %v813, %v821
        %v853 = vadd.f32 %v814, %v821
        %v854 = vadd.f32 %v815, %v821
        %v855 = vxor.u32 %v823, 2147483648
        %v856 = vxor.u32 %v824, 2147483648
        %v857 = vxor.u32 %v825, 2147483648
        %v858 = vxor.u32 %v826, 2147483648
        %v859 = vxor.u32 %v827, 2147483648
        %v860 = vxor.u32 %v828, 2147483648
        %v861 = vxor.u32 %v829, 2147483648
        %v862 = vxor.u32 %v830, 2147483648
        %v863 = vxor.u32 %v831, 2147483648
        %v864 = vxor.u32 %v832, 2147483648
        %v865 = vxor.u32 %v833, 2147483648
        %v866 = vxor.u32 %v834, 2147483648
        %v867 = vxor.u32 %v835, 2147483648
        %v868 = vxor.u32 %v836, 2147483648
        %v869 = vxor.u32 %v837, 2147483648
        %v870 = vxor.u32 %v838, 2147483648
        %v871 = vxor.u32 %v839, 2147483648
        %v872 = vxor.u32 %v840, 2147483648
        %v873 = vxor.u32 %v841, 2147483648
        %v874 = vxor.u32 %v842, 2147483648
        %v875 = vxor.u32 %v843, 2147483648
        %v876 = vxor.u32 %v844, 2147483648
        %v877 = vxor.u32 %v845, 2147483648
        %v878 = vxor.u32 %v846, 2147483648
        %v879 = vxor.u32 %v847, 2147483648
        %v880 = vxor.u32 %v848, 2147483648
        %v881 = vxor.u32 %v849, 2147483648
        %v882 = vxor.u32 %v850, 2147483648
        %v883 = vxor.u32 %v851, 2147483648
        %v884 = vxor.u32 %v852, 2147483648
        %v885 = vxor.u32 %v853, 2147483648
        %v886 = vxor.u32 %v854, 2147483648
        %v887 = vmul.f32 %v855, 1.442695
        %v888 = vpow.pop %v887
        %v889 = vmul.f32 %v856, 1.442695
        %v890 = vpow.pop %v889
        %v891 = vmul.f32 %v857, 1.442695
        %v892 = vpow.pop %v891
        %v893 = vmul.f32 %v858, 1.442695
        %v894 = vpow.pop %v893
        %v895 = vmul.f32 %v859, 1.442695
        %v896 = vpow.pop %v895
        %v897 = vmul.f32 %v860, 1.442695
        %v898 = vpow.pop %v897
        %v899 = vmul.f32 %v861, 1.442695
        %v900 = vpow.pop %v899
        %v901 = vmul.f32 %v862, 1.442695
        %v902 = vpow.pop %v901
        %v903 = vmul.f32 %v863, 1.442695
        %v904 = vpow.pop %v903
        %v905 = vmul.f32 %v864, 1.442695
        %v906 = vpow.pop %v905
        %v907 = vmul.f32 %v865, 1.442695
        %v908 = vpow.pop %v907
        %v909 = vmul.f32 %v866, 1.442695
        %v910 = vpow.pop %v909
        %v911 = vmul.f32 %v867, 1.442695
        %v912 = vpow.pop %v911
        %v913 = vmul.f32 %v868, 1.442695
        %v914 = vpow.pop %v913
        %v915 = vmul.f32 %v869, 1.442695
        %v916 = vpow.pop %v915
        %v917 = vmul.f32 %v870, 1.442695
        %v918 = vpow.pop %v917
        %v919 = vmul.f32 %v871, 1.442695
        %v920 = vpow.pop %v919
        %v921 = vmul.f32 %v872, 1.442695
        %v922 = vpow.pop %v921
        %v923 = vmul.f32 %v873, 1.442695
        %v924 = vpow.pop %v923
        %v925 = vmul.f32 %v874, 1.442695
        %v926 = vpow.pop %v925
        %v927 = vmul.f32 %v875, 1.442695
        %v928 = vpow.pop %v927
        %v929 = vmul.f32 %v876, 1.442695
        %v930 = vpow.pop %v929
        %v931 = vmul.f32 %v877, 1.442695
        %v932 = vpow.pop %v931
        %v933 = vmul.f32 %v878, 1.442695
        %v934 = vpow.pop %v933
        %v935 = vmul.f32 %v879, 1.442695
        %v936 = vpow.pop %v935
        %v937 = vmul.f32 %v880, 1.442695
        %v938 = vpow.pop %v937
        %v939 = vmul.f32 %v881, 1.442695
        %v940 = vpow.pop %v939
        %v941 = vmul.f32 %v882, 1.442695
        %v942 = vpow.pop %v941
        %v943 = vmul.f32 %v883, 1.442695
        %v944 = vpow.pop %v943
        %v945 = vmul.f32 %v884, 1.442695
        %v946 = vpow.pop %v945
        %v947 = vmul.f32 %v885, 1.442695
        %v948 = vpow.pop %v947
        %v949 = vmul.f32 %v886, 1.442695
        %v950 = vpow.pop %v949
        %v951 = vadd.f32 %v888, 1.0
        %v952 = vadd.f32 %v890, 1.0
        %v953 = vadd.f32 %v892, 1.0
        %v954 = vadd.f32 %v894, 1.0
        %v955 = vadd.f32 %v896, 1.0
        %v956 = vadd.f32 %v898, 1.0
        %v957 = vadd.f32 %v900, 1.0
        %v958 = vadd.f32 %v902, 1.0
        %v959 = vadd.f32 %v904, 1.0
        %v960 = vadd.f32 %v906, 1.0
        %v961 = vadd.f32 %v908, 1.0
        %v962 = vadd.f32 %v910, 1.0
        %v963 = vadd.f32 %v912, 1.0
        %v964 = vadd.f32 %v914, 1.0
        %v965 = vadd.f32 %v916, 1.0
        %v966 = vadd.f32 %v918, 1.0
        %v967 = vadd.f32 %v920, 1.0
        %v968 = vadd.f32 %v922, 1.0
        %v969 = vadd.f32 %v924, 1.0
        %v970 = vadd.f32 %v926, 1.0
        %v971 = vadd.f32 %v928, 1.0
        %v972 = vadd.f32 %v930, 1.0
        %v973 = vadd.f32 %v932, 1.0
        %v974 = vadd.f32 %v934, 1.0
        %v975 = vadd.f32 %v936, 1.0
        %v976 = vadd.f32 %v938, 1.0
        %v977 = vadd.f32 %v940, 1.0
        %v978 = vadd.f32 %v942, 1.0
        %v979 = vadd.f32 %v944, 1.0
        %v980 = vadd.f32 %v946, 1.0
        %v981 = vadd.f32 %v948, 1.0
        %v982 = vadd.f32 %v950, 1.0
        %v983 = vrcp.pop %v951
        %v984 = vmul.f32 1.0, %v983
        %v985 = vrcp.pop %v952
        %v986 = vmul.f32 1.0, %v985
        %v987 = vrcp.pop %v953
        %v988 = vmul.f32 1.0, %v987
        %v989 = vrcp.pop %v954
        %v990 = vmul.f32 1.0, %v989
        %v991 = vrcp.pop %v955
        %v992 = vmul.f32 1.0, %v991
        %v993 = vrcp.pop %v956
        %v994 = vmul.f32 1.0, %v993
        %v995 = vrcp.pop %v957
        %v996 = vmul.f32 1.0, %v995
        %v997 = vrcp.pop %v958
        %v998 = vmul.f32 1.0, %v997
        %v999 = vrcp.pop %v959
        %v1000 = vmul.f32 1.0, %v999
        %v1001 = vrcp.pop %v960
        %v1002 = vmul.f32 1.0, %v1001
        %v1003 = vrcp.pop %v961
        %v1004 = vmul.f32 1.0, %v1003
        %v1005 = vrcp.pop %v962
        %v1006 = vmul.f32 1.0, %v1005
        %v1007 = vrcp.pop %v963
        %v1008 = vmul.f32 1.0, %v1007
        %v1009 = vrcp.pop %v964
        %v1010 = vmul.f32 1.0, %v1009
        %v1011 = vrcp.pop %v965
        %v1012 = vmul.f32 1.0, %v1011
        %v1013 = vrcp.pop %v966
        %v1014 = vmul.f32 1.0, %v1013
        %v1015 = vrcp.pop %v967
        %v1016 = vmul.f32 1.0, %v1015
        %v1017 = vrcp.pop %v968
        %v1018 = vmul.f32 1.0, %v1017
        %v1019 = vrcp.pop %v969
        %v1020 = vmul.f32 1.0, %v1019
        %v1021 = vrcp.pop %v970
        %v1022 = vmul.f32 1.0, %v1021
        %v1023 = vrcp.pop %v971
        %v1024 = vmul.f32 1.0, %v1023
        %v1025 = vrcp.pop %v972
        %v1026 = vmul.f32 1.0, %v1025
        %v1027 = vrcp.pop %v973
        %v1028 = vmul.f32 1.0, %v1027
        %v1029 = vrcp.pop %v974
        %v1030 = vmul.f32 1.0, %v1029
        %v1031 = vrcp.pop %v975
        %v1032 = vmul.f32 1.0, %v1031
        %v1033 = vrcp.pop %v976
        %v1034 = vmul.f32 1.0, %v1033
        %v1035 = vrcp.pop %v977
        %v1036 = vmul.f32 1.0, %v1035
        %v1037 = vrcp.pop %v978
        %v1038 = vmul.f32 1.0, %v1037
        %v1039 = vrcp.pop %v979
        %v1040 = vmul.f32 1.0, %v1039
        %v1041 = vrcp.pop %v980
        %v1042 = vmul.f32 1.0, %v1041
        %v1043 = vrcp.pop %v981
        %v1044 = vmul.f32 1.0, %v1043
        %v1045 = vrcp.pop %v982
        %v1046 = vmul.f32 1.0, %v1045
        %v1047 = vmul.f32 %v823, %v984
        %v1048 = vmul.f32 %v824, %v986
        %v1049 = vmul.f32 %v825, %v988
        %v1050 = vmul.f32 %v826, %v990
        %v1051 = vmul.f32 %v827, %v992
        %v1052 = vmul.f32 %v828, %v994
        %v1053 = vmul.f32 %v829, %v996
        %v1054 = vmul.f32 %v830, %v998
        %v1055 = vmul.f32 %v831, %v1000
        %v1056 = vmul.f32 %v832, %v1002
        %v1057 = vmul.f32 %v833, %v1004
        %v1058 = vmul.f32 %v834, %v1006
        %v1059 = vmul.f32 %v835, %v1008
        %v1060 = vmul.f32 %v836, %v1010
        %v1061 = vmul.f32 %v837, %v1012
        %v1062 = vmul.f32 %v838, %v1014
        %v1063 = vmul.f32 %v839, %v1016
        %v1064 = vmul.f32 %v840, %v1018
        %v1065 = vmul.f32 %v841, %v1020
        %v1066 = vmul.f32 %v842, %v1022
        %v1067 = vmul.f32 %v843, %v1024
        %v1068 = vmul.f32 %v844, %v1026
        %v1069 = vmul.f32 %v845, %v1028
        %v1070 = vmul.f32 %v846, %v1030
        %v1071 = vmul.f32 %v847, %v1032
        %v1072 = vmul.f32 %v848, %v1034
        %v1073 = vmul.f32 %v849, %v1036
        %v1074 = vmul.f32 %v850, %v1038
        %v1075 = vmul.f32 %v851, %v1040
        %v1076 = vmul.f32 %v852, %v1042
        %v1077 = vmul.f32 %v853, %v1044
        %v1078 = vmul.f32 %v854, %v1046
        %v1079 = vpack.c.bf16 %v1048, %v1047
        %v1080 = vpack.c.bf16 %v1050, %v1049
        %v1081 = vpack.c.bf16 %v1052, %v1051
        %v1082 = vpack.c.bf16 %v1054, %v1053
        %v1083 = vpack.c.bf16 %v1056, %v1055
        %v1084 = vpack.c.bf16 %v1058, %v1057
        %v1085 = vpack.c.bf16 %v1060, %v1059
        %v1086 = vpack.c.bf16 %v1062, %v1061
        %v1087 = vpack.c.bf16 %v1064, %v1063
        %v1088 = vpack.c.bf16 %v1066, %v1065
        %v1089 = vpack.c.bf16 %v1068, %v1067
        %v1090 = vpack.c.bf16 %v1070, %v1069
        %v1091 = vpack.c.bf16 %v1072, %v1071
        %v1092 = vpack.c.bf16 %v1074, %v1073
        %v1093 = vpack.c.bf16 %v1076, %v1075
        %v1094 = vpack.c.bf16 %v1078, %v1077
        %vm1095 = vcmask 519168
        %1096 = vst.msk [vmem:[#allocation2] sm:$0xf] %vm1095, 0
        %1097 = vst.msk [vmem:[#allocation2 + $0x4] sm:$0xf] %vm1095, 0
        %vm1098 = vcmask 516096
        %1099 = vst.msk [vmem:[#allocation2 + $0x8] sm:$0x1] %vm1098, 0
        %s1100 = scalar_lea.vmem [#allocation2], 204
        %1101 = vst.msk [vmem:[%s1100] sm:$0xf] %vm1095, 0
        %1102 = vst.msk [vmem:[%s1100 + $0x4] sm:$0xf] %vm1095, 0
        %1103 = vst.msk [vmem:[%s1100 + $0x8] sm:$0x1] %vm1098, 0
        %s1104 = scalar_lea.vmem [#allocation2], 12
        %vm1105 = vcmask 516096
        %vm1106 = vsmask.f32 256
        %vm1107 = vmand %vm1105, %vm1106
        %v1108 = vld [vmem:[%s1104] sm:$0x1]
        %v1109 = vsel %vm1107, 0, %v1108
        %1110 = vst [vmem:[%s1104] sm:$0x1] %v1109
        %v1111 = vld [vmem:[%s1104 + $0xc] sm:$0x1]
        %v1112 = vsel %vm1107, 0, %v1111
        %1113 = vst [vmem:[%s1104 + $0xc] sm:$0x1] %v1112
        %v1114 = vld [vmem:[%s1104 + $0x18] sm:$0x1]
        %v1115 = vsel %vm1107, 0, %v1114
        %1116 = vst [vmem:[%s1104 + $0x18] sm:$0x1] %v1115
        %v1117 = vld [vmem:[%s1104 + $0x24] sm:$0x1]
        %v1118 = vsel %vm1107, 0, %v1117
        %1119 = vst [vmem:[%s1104 + $0x24] sm:$0x1] %v1118
        %v1120 = vld [vmem:[%s1104 + $0x30] sm:$0x1]
        %v1121 = vsel %vm1107, 0, %v1120
        %1122 = vst [vmem:[%s1104 + $0x30] sm:$0x1] %v1121
        %v1123 = vld [vmem:[%s1104 + $0x3c] sm:$0x1]
        %v1124 = vsel %vm1107, 0, %v1123
        %1125 = vst [vmem:[%s1104 + $0x3c] sm:$0x1] %v1124
        %v1126 = vld [vmem:[%s1104 + $0x48] sm:$0x1]
        %v1127 = vsel %vm1107, 0, %v1126
        %1128 = vst [vmem:[%s1104 + $0x48] sm:$0x1] %v1127
        %v1129 = vld [vmem:[%s1104 + $0x54] sm:$0x1]
        %v1130 = vsel %vm1107, 0, %v1129
        %1131 = vst [vmem:[%s1104 + $0x54] sm:$0x1] %v1130
        %v1132 = vld [vmem:[%s1104 + $0x60] sm:$0x1]
        %v1133 = vsel %vm1107, 0, %v1132
        %1134 = vst [vmem:[%s1104 + $0x60] sm:$0x1] %v1133
        %v1135 = vld [vmem:[%s1104 + $0x6c] sm:$0x1]
        %v1136 = vsel %vm1107, 0, %v1135
        %1137 = vst [vmem:[%s1104 + $0x6c] sm:$0x1] %v1136
        %v1138 = vld [vmem:[%s1104 + $0x78] sm:$0x1]
        %v1139 = vsel %vm1107, 0, %v1138
        %1140 = vst [vmem:[%s1104 + $0x78] sm:$0x1] %v1139
        %v1141 = vld [vmem:[%s1104 + $0x84] sm:$0x1]
        %v1142 = vsel %vm1107, 0, %v1141
        %1143 = vst [vmem:[%s1104 + $0x84] sm:$0x1] %v1142
        %v1144 = vld [vmem:[%s1104 + $0x90] sm:$0x1]
        %v1145 = vsel %vm1107, 0, %v1144
        %1146 = vst [vmem:[%s1104 + $0x90] sm:$0x1] %v1145
        %v1147 = vld [vmem:[%s1104 + $0x9c] sm:$0x1]
        %v1148 = vsel %vm1107, 0, %v1147
        %1149 = vst [vmem:[%s1104 + $0x9c] sm:$0x1] %v1148
        %v1150 = vld [vmem:[%s1104 + $0xa8] sm:$0x1]
        %v1151 = vsel %vm1107, 0, %v1150
        %1152 = vst [vmem:[%s1104 + $0xa8] sm:$0x1] %v1151
        %v1153 = vld [vmem:[%s1104 + $0xb4] sm:$0x1]
        %v1154 = vsel %vm1107, 0, %v1153
        %1155 = vst [vmem:[%s1104 + $0xb4] sm:$0x1] %v1154
        %vm1156 = vsmask.f32 7938
        %vm1157 = vmand %vm1105, %vm1156
        %v1158 = vld [vmem:[%s1104 + $0x8] sm:$0x1]
        %v1159 = vsel %vm1157, 0, %v1158
        %1160 = vst [vmem:[%s1104 + $0x8] sm:$0x1] %v1159
        %v1161 = vld [vmem:[%s1104 + $0x14] sm:$0x1]
        %v1162 = vsel %vm1157, 0, %v1161
        %1163 = vst [vmem:[%s1104 + $0x14] sm:$0x1] %v1162
        %v1164 = vld [vmem:[%s1104 + $0x20] sm:$0x1]
        %v1165 = vsel %vm1157, 0, %v1164
        %1166 = vst [vmem:[%s1104 + $0x20] sm:$0x1] %v1165
        %v1167 = vld [vmem:[%s1104 + $0x2c] sm:$0x1]
        %v1168 = vsel %vm1157, 0, %v1167
        %1169 = vst [vmem:[%s1104 + $0x2c] sm:$0x1] %v1168
        %v1170 = vld [vmem:[%s1104 + $0x38] sm:$0x1]
        %v1171 = vsel %vm1157, 0, %v1170
        %1172 = vst [vmem:[%s1104 + $0x38] sm:$0x1] %v1171
        %v1173 = vld [vmem:[%s1104 + $0x44] sm:$0x1]
        %v1174 = vsel %vm1157, 0, %v1173
        %1175 = vst [vmem:[%s1104 + $0x44] sm:$0x1] %v1174
        %v1176 = vld [vmem:[%s1104 + $0x50] sm:$0x1]
        %v1177 = vsel %vm1157, 0, %v1176
        %1178 = vst [vmem:[%s1104 + $0x50] sm:$0x1] %v1177
        %v1179 = vld [vmem:[%s1104 + $0x5c] sm:$0x1]
        %v1180 = vsel %vm1157, 0, %v1179
        %1181 = vst [vmem:[%s1104 + $0x5c] sm:$0x1] %v1180
        %v1182 = vld [vmem:[%s1104 + $0x68] sm:$0x1]
        %v1183 = vsel %vm1157, 0, %v1182
        %1184 = vst [vmem:[%s1104 + $0x68] sm:$0x1] %v1183
        %v1185 = vld [vmem:[%s1104 + $0x74] sm:$0x1]
        %v1186 = vsel %vm1157, 0, %v1185
        %1187 = vst [vmem:[%s1104 + $0x74] sm:$0x1] %v1186
        %v1188 = vld [vmem:[%s1104 + $0x80] sm:$0x1]
        %v1189 = vsel %vm1157, 0, %v1188
        %1190 = vst [vmem:[%s1104 + $0x80] sm:$0x1] %v1189
        %v1191 = vld [vmem:[%s1104 + $0x8c] sm:$0x1]
        %v1192 = vsel %vm1157, 0, %v1191
        %1193 = vst [vmem:[%s1104 + $0x8c] sm:$0x1] %v1192
        %v1194 = vld [vmem:[%s1104 + $0x98] sm:$0x1]
        %v1195 = vsel %vm1157, 0, %v1194
        %1196 = vst [vmem:[%s1104 + $0x98] sm:$0x1] %v1195
        %v1197 = vld [vmem:[%s1104 + $0xa4] sm:$0x1]
        %v1198 = vsel %vm1157, 0, %v1197
        %1199 = vst [vmem:[%s1104 + $0xa4] sm:$0x1] %v1198
        %v1200 = vld [vmem:[%s1104 + $0xb0] sm:$0x1]
        %v1201 = vsel %vm1157, 0, %v1200
        %1202 = vst [vmem:[%s1104 + $0xb0] sm:$0x1] %v1201
        %v1203 = vld [vmem:[%s1104 + $0xbc] sm:$0x1]
        %v1204 = vsel %vm1157, 0, %v1203
        %1205 = vst [vmem:[%s1104 + $0xbc] sm:$0x1] %v1204
        %v1222 = vunpack.c.l.b16 %v1079
        %v1223 = vunpack.c.h.b16 %v1079
        %v1224 = vunpack.c.l.b16 %v1080
        %v1225 = vunpack.c.h.b16 %v1080
        %v1226 = vunpack.c.l.b16 %v1081
        %v1227 = vunpack.c.h.b16 %v1081
        %v1228 = vunpack.c.l.b16 %v1082
        %v1229 = vunpack.c.h.b16 %v1082
        %v1230 = vunpack.c.l.b16 %v1083
        %v1231 = vunpack.c.h.b16 %v1083
        %v1232 = vunpack.c.l.b16 %v1084
        %v1233 = vunpack.c.h.b16 %v1084
        %v1234 = vunpack.c.l.b16 %v1085
        %v1235 = vunpack.c.h.b16 %v1085
        %v1236 = vunpack.c.l.b16 %v1086
        %v1237 = vunpack.c.h.b16 %v1086
        %v1238 = vunpack.c.l.b16 %v1087
        %v1239 = vunpack.c.h.b16 %v1087
        %v1240 = vunpack.c.l.b16 %v1088
        %v1241 = vunpack.c.h.b16 %v1088
        %v1242 = vunpack.c.l.b16 %v1089
        %v1243 = vunpack.c.h.b16 %v1089
        %v1244 = vunpack.c.l.b16 %v1090
        %v1245 = vunpack.c.h.b16 %v1090
        %v1246 = vunpack.c.l.b16 %v1091
        %v1247 = vunpack.c.h.b16 %v1091
        %v1248 = vunpack.c.l.b16 %v1092
        %v1249 = vunpack.c.h.b16 %v1092
        %v1250 = vunpack.c.l.b16 %v1093
        %v1251 = vunpack.c.h.b16 %v1093
        %v1252 = vunpack.c.l.b16 %v1094
        %v1253 = vunpack.c.h.b16 %v1094
        %v1254 = vpack.c.b16 %v1222, %v1222
        %v1255 = vpack.c.b16 %v1223, %v1223
        %v1256 = vpack.c.b16 %v1224, %v1224
        %v1257 = vpack.c.b16 %v1225, %v1225
        %v1258 = vpack.c.b16 %v1226, %v1226
        %v1259 = vpack.c.b16 %v1227, %v1227
        %v1260 = vpack.c.b16 %v1228, %v1228
        %v1261 = vpack.c.b16 %v1229, %v1229
        %v1262 = vpack.c.b16 %v1230, %v1230
        %v1263 = vpack.c.b16 %v1231, %v1231
        %v1264 = vpack.c.b16 %v1232, %v1232
        %v1265 = vpack.c.b16 %v1233, %v1233
        %v1266 = vpack.c.b16 %v1234, %v1234
        %v1267 = vpack.c.b16 %v1235, %v1235
        %v1268 = vpack.c.b16 %v1236, %v1236
        %v1269 = vpack.c.b16 %v1237, %v1237
        %v1270 = vpack.c.b16 %v1238, %v1238
        %v1271 = vpack.c.b16 %v1239, %v1239
        %v1272 = vpack.c.b16 %v1240, %v1240
        %v1273 = vpack.c.b16 %v1241, %v1241
        %v1274 = vpack.c.b16 %v1242, %v1242
        %v1275 = vpack.c.b16 %v1243, %v1243
        %v1276 = vpack.c.b16 %v1244, %v1244
        %v1277 = vpack.c.b16 %v1245, %v1245
        %v1278 = vpack.c.b16 %v1246, %v1246
        %v1279 = vpack.c.b16 %v1247, %v1247
        %v1280 = vpack.c.b16 %v1248, %v1248
        %v1281 = vpack.c.b16 %v1249, %v1249
        %v1282 = vpack.c.b16 %v1250, %v1250
        %v1283 = vpack.c.b16 %v1251, %v1251
        %v1284 = vpack.c.b16 %v1252, %v1252
        %v1285 = vpack.c.b16 %v1253, %v1253
        %vm1286 = vsmask.f32 4368
        %vm1287 = vmor %vm1106, %vm1286
        %v1289 = vshrl.u32 %v1254, 16
        %v1291 = vrot.slane %v1289, 7
        %v1292 = vshll.u32 %v1254, 16
        %v1294 = vor.u32 %v1291, %v1292
        %v1295 = vrot.slane %v1291, 4
        %v1297 = vshrl.u32 %v1255, 16
        %v1299 = vrot.slane %v1297, 7
        %v1300 = vshll.u32 %v1255, 16
        %v1302 = vor.u32 %v1299, %v1300
        %v1303 = vsel %vm1287, %v1295, %v1302
        %v1304 = vrot.slane %v1299, 4
        %v1306 = vshrl.u32 %v1256, 16
        %v1308 = vrot.slane %v1306, 7
        %v1309 = vshll.u32 %v1256, 16
        %v1311 = vor.u32 %v1308, %v1309
        %v1312 = vrot.slane %v1308, 4
        %v1314 = vshrl.u32 %v1257, 16
        %v1316 = vrot.slane %v1314, 7
        %v1317 = vshll.u32 %v1257, 16
        %v1319 = vor.u32 %v1316, %v1317
        %v1320 = vsel %vm1287, %v1312, %v1319
        %v1321 = vrot.slane %v1316, 4
        %v1323 = vshrl.u32 %v1258, 16
        %v1325 = vrot.slane %v1323, 7
        %v1326 = vshll.u32 %v1258, 16
        %v1328 = vor.u32 %v1325, %v1326
        %v1329 = vrot.slane %v1325, 4
        %v1331 = vshrl.u32 %v1259, 16
        %v1333 = vrot.slane %v1331, 7
        %v1334 = vshll.u32 %v1259, 16
        %v1336 = vor.u32 %v1333, %v1334
        %v1337 = vsel %vm1287, %v1329, %v1336
        %v1338 = vrot.slane %v1333, 4
        %v1340 = vshrl.u32 %v1260, 16
        %v1342 = vrot.slane %v1340, 7
        %v1343 = vshll.u32 %v1260, 16
        %v1345 = vor.u32 %v1342, %v1343
        %v1346 = vrot.slane %v1342, 4
        %v1348 = vshrl.u32 %v1261, 16
        %v1350 = vrot.slane %v1348, 7
        %v1351 = vshll.u32 %v1261, 16
        %v1353 = vor.u32 %v1350, %v1351
        %v1354 = vsel %vm1287, %v1346, %v1353
        %v1355 = vrot.slane %v1350, 4
        %v1357 = vshrl.u32 %v1262, 16
        %v1359 = vrot.slane %v1357, 7
        %v1360 = vshll.u32 %v1262, 16
        %v1362 = vor.u32 %v1359, %v1360
        %v1363 = vrot.slane %v1359, 4
        %v1365 = vshrl.u32 %v1263, 16
        %v1367 = vrot.slane %v1365, 7
        %v1368 = vshll.u32 %v1263, 16
        %v1370 = vor.u32 %v1367, %v1368
        %v1371 = vsel %vm1287, %v1363, %v1370
        %v1372 = vrot.slane %v1367, 4
        %v1374 = vshrl.u32 %v1264, 16
        %v1376 = vrot.slane %v1374, 7
        %v1377 = vshll.u32 %v1264, 16
        %v1379 = vor.u32 %v1376, %v1377
        %v1380 = vrot.slane %v1376, 4
        %v1382 = vshrl.u32 %v1265, 16
        %v1384 = vrot.slane %v1382, 7
        %v1385 = vshll.u32 %v1265, 16
        %v1387 = vor.u32 %v1384, %v1385
        %v1388 = vsel %vm1287, %v1380, %v1387
        %v1389 = vrot.slane %v1384, 4
        %v1391 = vshrl.u32 %v1266, 16
        %v1393 = vrot.slane %v1391, 7
        %v1394 = vshll.u32 %v1266, 16
        %v1396 = vor.u32 %v1393, %v1394
        %v1397 = vrot.slane %v1393, 4
        %v1399 = vshrl.u32 %v1267, 16
        %v1401 = vrot.slane %v1399, 7
        %v1402 = vshll.u32 %v1267, 16
        %v1404 = vor.u32 %v1401, %v1402
        %v1405 = vsel %vm1287, %v1397, %v1404
        %v1406 = vrot.slane %v1401, 4
        %v1408 = vshrl.u32 %v1268, 16
        %v1410 = vrot.slane %v1408, 7
        %v1411 = vshll.u32 %v1268, 16
        %v1413 = vor.u32 %v1410, %v1411
        %v1414 = vrot.slane %v1410, 4
        %v1416 = vshrl.u32 %v1269, 16
        %v1418 = vrot.slane %v1416, 7
        %v1419 = vshll.u32 %v1269, 16
        %v1421 = vor.u32 %v1418, %v1419
        %v1422 = vsel %vm1287, %v1414, %v1421
        %v1423 = vrot.slane %v1418, 4
        %v1425 = vshrl.u32 %v1270, 16
        %v1427 = vrot.slane %v1425, 7
        %v1428 = vshll.u32 %v1270, 16
        %v1430 = vor.u32 %v1427, %v1428
        %v1431 = vrot.slane %v1427, 4
        %v1433 = vshrl.u32 %v1271, 16
        %v1435 = vrot.slane %v1433, 7
        %v1436 = vshll.u32 %v1271, 16
        %v1438 = vor.u32 %v1435, %v1436
        %v1439 = vsel %vm1287, %v1431, %v1438
        %v1440 = vrot.slane %v1435, 4
        %v1442 = vshrl.u32 %v1272, 16
        %v1444 = vrot.slane %v1442, 7
        %v1445 = vshll.u32 %v1272, 16
        %v1447 = vor.u32 %v1444, %v1445
        %v1448 = vrot.slane %v1444, 4
        %v1450 = vshrl.u32 %v1273, 16
        %v1452 = vrot.slane %v1450, 7
        %v1453 = vshll.u32 %v1273, 16
        %v1455 = vor.u32 %v1452, %v1453
        %v1456 = vsel %vm1287, %v1448, %v1455
        %v1457 = vrot.slane %v1452, 4
        %v1459 = vshrl.u32 %v1274, 16
        %v1461 = vrot.slane %v1459, 7
        %v1462 = vshll.u32 %v1274, 16
        %v1464 = vor.u32 %v1461, %v1462
        %v1465 = vrot.slane %v1461, 4
        %v1467 = vshrl.u32 %v1275, 16
        %v1469 = vrot.slane %v1467, 7
        %v1470 = vshll.u32 %v1275, 16
        %v1472 = vor.u32 %v1469, %v1470
        %v1473 = vsel %vm1287, %v1465, %v1472
        %v1474 = vrot.slane %v1469, 4
        %v1476 = vshrl.u32 %v1276, 16
        %v1478 = vrot.slane %v1476, 7
        %v1479 = vshll.u32 %v1276, 16
        %v1481 = vor.u32 %v1478, %v1479
        %v1482 = vrot.slane %v1478, 4
        %v1484 = vshrl.u32 %v1277, 16
        %v1486 = vrot.slane %v1484, 7
        %v1487 = vshll.u32 %v1277, 16
        %v1489 = vor.u32 %v1486, %v1487
        %v1490 = vsel %vm1287, %v1482, %v1489
        %v1491 = vrot.slane %v1486, 4
        %v1493 = vshrl.u32 %v1278, 16
        %v1495 = vrot.slane %v1493, 7
        %v1496 = vshll.u32 %v1278, 16
        %v1498 = vor.u32 %v1495, %v1496
        %v1499 = vrot.slane %v1495, 4
        %v1501 = vshrl.u32 %v1279, 16
        %v1503 = vrot.slane %v1501, 7
        %v1504 = vshll.u32 %v1279, 16
        %v1506 = vor.u32 %v1503, %v1504
        %v1507 = vsel %vm1287, %v1499, %v1506
        %v1508 = vrot.slane %v1503, 4
        %v1510 = vshrl.u32 %v1280, 16
        %v1512 = vrot.slane %v1510, 7
        %v1513 = vshll.u32 %v1280, 16
        %v1515 = vor.u32 %v1512, %v1513
        %v1516 = vrot.slane %v1512, 4
        %v1518 = vshrl.u32 %v1281, 16
        %v1520 = vrot.slane %v1518, 7
        %v1521 = vshll.u32 %v1281, 16
        %v1523 = vor.u32 %v1520, %v1521
        %v1524 = vsel %vm1287, %v1516, %v1523
        %v1525 = vrot.slane %v1520, 4
        %v1527 = vshrl.u32 %v1282, 16
        %v1529 = vrot.slane %v1527, 7
        %v1530 = vshll.u32 %v1282, 16
        %v1532 = vor.u32 %v1529, %v1530
        %v1533 = vrot.slane %v1529, 4
        %v1535 = vshrl.u32 %v1283, 16
        %v1537 = vrot.slane %v1535, 7
        %v1538 = vshll.u32 %v1283, 16
        %v1540 = vor.u32 %v1537, %v1538
        %v1541 = vsel %vm1287, %v1533, %v1540
        %v1542 = vrot.slane %v1537, 4
        %v1544 = vshrl.u32 %v1284, 16
        %v1546 = vrot.slane %v1544, 7
        %v1547 = vshll.u32 %v1284, 16
        %v1549 = vor.u32 %v1546, %v1547
        %v1550 = vrot.slane %v1546, 4
        %v1552 = vshrl.u32 %v1285, 16
        %v1554 = vrot.slane %v1552, 7
        %v1555 = vshll.u32 %v1285, 16
        %v1557 = vor.u32 %v1554, %v1555
        %v1558 = vsel %vm1287, %v1550, %v1557
        %v1559 = vrot.slane %v1554, 4
        %vm1608 = vcmask 519168
        %vm1609 = vmand %vm1608, %vm1156
        %v1610 = vld [vmem:[%s1104] sm:$0xf]
        %v1611 = vsel %vm1609, %v1294, %v1610
        %1612 = vst [vmem:[%s1104] sm:$0xf] %v1611
        %1613 = vst.msk [vmem:[%s1104 + $0x4] sm:$0xf] %vm1095, %v1303
        %v1614 = vld [vmem:[%s1104 + $0x8] sm:$0x1]
        %v1615 = vsel %vm1107, %v1304, %v1614
        %1616 = vst [vmem:[%s1104 + $0x8] sm:$0x1] %v1615
        %v1617 = vld [vmem:[%s1104 + $0xc] sm:$0xf]
        %v1618 = vsel %vm1609, %v1311, %v1617
        %1619 = vst [vmem:[%s1104 + $0xc] sm:$0xf] %v1618
        %1620 = vst.msk [vmem:[%s1104 + $0x10] sm:$0xf] %vm1095, %v1320
        %v1621 = vld [vmem:[%s1104 + $0x14] sm:$0x1]
        %v1622 = vsel %vm1107, %v1321, %v1621
        %1623 = vst [vmem:[%s1104 + $0x14] sm:$0x1] %v1622
        %v1624 = vld [vmem:[%s1104 + $0x18] sm:$0xf]
        %v1625 = vsel %vm1609, %v1328, %v1624
        %1626 = vst [vmem:[%s1104 + $0x18] sm:$0xf] %v1625
        %1627 = vst.msk [vmem:[%s1104 + $0x1c] sm:$0xf] %vm1095, %v1337
        %v1628 = vld [vmem:[%s1104 + $0x20] sm:$0x1]
        %v1629 = vsel %vm1107, %v1338, %v1628
        %1630 = vst [vmem:[%s1104 + $0x20] sm:$0x1] %v1629
        %v1631 = vld [vmem:[%s1104 + $0x24] sm:$0xf]
        %v1632 = vsel %vm1609, %v1345, %v1631
        %1633 = vst [vmem:[%s1104 + $0x24] sm:$0xf] %v1632
        %1634 = vst.msk [vmem:[%s1104 + $0x28] sm:$0xf] %vm1095, %v1354
        %v1635 = vld [vmem:[%s1104 + $0x2c] sm:$0x1]
        %v1636 = vsel %vm1107, %v1355, %v1635
        %1637 = vst [vmem:[%s1104 + $0x2c] sm:$0x1] %v1636
        %v1638 = vld [vmem:[%s1104 + $0x30] sm:$0xf]
        %v1639 = vsel %vm1609, %v1362, %v1638
        %1640 = vst [vmem:[%s1104 + $0x30] sm:$0xf] %v1639
        %1641 = vst.msk [vmem:[%s1104 + $0x34] sm:$0xf] %vm1095, %v1371
        %v1642 = vld [vmem:[%s1104 + $0x38] sm:$0x1]
        %v1643 = vsel %vm1107, %v1372, %v1642
        %1644 = vst [vmem:[%s1104 + $0x38] sm:$0x1] %v1643
        %v1645 = vld [vmem:[%s1104 + $0x3c] sm:$0xf]
        %v1646 = vsel %vm1609, %v1379, %v1645
        %1647 = vst [vmem:[%s1104 + $0x3c] sm:$0xf] %v1646
        %1648 = vst.msk [vmem:[%s1104 + $0x40] sm:$0xf] %vm1095, %v1388
        %v1649 = vld [vmem:[%s1104 + $0x44] sm:$0x1]
        %v1650 = vsel %vm1107, %v1389, %v1649
        %1651 = vst [vmem:[%s1104 + $0x44] sm:$0x1] %v1650
        %v1652 = vld [vmem:[%s1104 + $0x48] sm:$0xf]
        %v1653 = vsel %vm1609, %v1396, %v1652
        %1654 = vst [vmem:[%s1104 + $0x48] sm:$0xf] %v1653
        %1655 = vst.msk [vmem:[%s1104 + $0x4c] sm:$0xf] %vm1095, %v1405
        %v1656 = vld [vmem:[%s1104 + $0x50] sm:$0x1]
        %v1657 = vsel %vm1107, %v1406, %v1656
        %1658 = vst [vmem:[%s1104 + $0x50] sm:$0x1] %v1657
        %v1659 = vld [vmem:[%s1104 + $0x54] sm:$0xf]
        %v1660 = vsel %vm1609, %v1413, %v1659
        %1661 = vst [vmem:[%s1104 + $0x54] sm:$0xf] %v1660
        %1662 = vst.msk [vmem:[%s1104 + $0x58] sm:$0xf] %vm1095, %v1422
        %v1663 = vld [vmem:[%s1104 + $0x5c] sm:$0x1]
        %v1664 = vsel %vm1107, %v1423, %v1663
        %1665 = vst [vmem:[%s1104 + $0x5c] sm:$0x1] %v1664
        %v1666 = vld [vmem:[%s1104 + $0x60] sm:$0xf]
        %v1667 = vsel %vm1609, %v1430, %v1666
        %1668 = vst [vmem:[%s1104 + $0x60] sm:$0xf] %v1667
        %1669 = vst.msk [vmem:[%s1104 + $0x64] sm:$0xf] %vm1095, %v1439
        %v1670 = vld [vmem:[%s1104 + $0x68] sm:$0x1]
        %v1671 = vsel %vm1107, %v1440, %v1670
        %1672 = vst [vmem:[%s1104 + $0x68] sm:$0x1] %v1671
        %v1673 = vld [vmem:[%s1104 + $0x6c] sm:$0xf]
        %v1674 = vsel %vm1609, %v1447, %v1673
        %1675 = vst [vmem:[%s1104 + $0x6c] sm:$0xf] %v1674
        %1676 = vst.msk [vmem:[%s1104 + $0x70] sm:$0xf] %vm1095, %v1456
        %v1677 = vld [vmem:[%s1104 + $0x74] sm:$0x1]
        %v1678 = vsel %vm1107, %v1457, %v1677
        %1679 = vst [vmem:[%s1104 + $0x74] sm:$0x1] %v1678
        %v1680 = vld [vmem:[%s1104 + $0x78] sm:$0xf]
        %v1681 = vsel %vm1609, %v1464, %v1680
        %1682 = vst [vmem:[%s1104 + $0x78] sm:$0xf] %v1681
        %1683 = vst.msk [vmem:[%s1104 + $0x7c] sm:$0xf] %vm1095, %v1473
        %v1684 = vld [vmem:[%s1104 + $0x80] sm:$0x1]
        %v1685 = vsel %vm1107, %v1474, %v1684
        %1686 = vst [vmem:[%s1104 + $0x80] sm:$0x1] %v1685
        %v1687 = vld [vmem:[%s1104 + $0x84] sm:$0xf]
        %v1688 = vsel %vm1609, %v1481, %v1687
        %1689 = vst [vmem:[%s1104 + $0x84] sm:$0xf] %v1688
        %1690 = vst.msk [vmem:[%s1104 + $0x88] sm:$0xf] %vm1095, %v1490
        %v1691 = vld [vmem:[%s1104 + $0x8c] sm:$0x1]
        %v1692 = vsel %vm1107, %v1491, %v1691
        %1693 = vst [vmem:[%s1104 + $0x8c] sm:$0x1] %v1692
        %v1694 = vld [vmem:[%s1104 + $0x90] sm:$0xf]
        %v1695 = vsel %vm1609, %v1498, %v1694
        %1696 = vst [vmem:[%s1104 + $0x90] sm:$0xf] %v1695
        %1697 = vst.msk [vmem:[%s1104 + $0x94] sm:$0xf] %vm1095, %v1507
        %v1698 = vld [vmem:[%s1104 + $0x98] sm:$0x1]
        %v1699 = vsel %vm1107, %v1508, %v1698
        %1700 = vst [vmem:[%s1104 + $0x98] sm:$0x1] %v1699
        %v1701 = vld [vmem:[%s1104 + $0x9c] sm:$0xf]
        %v1702 = vsel %vm1609, %v1515, %v1701
        %1703 = vst [vmem:[%s1104 + $0x9c] sm:$0xf] %v1702
        %1704 = vst.msk [vmem:[%s1104 + $0xa0] sm:$0xf] %vm1095, %v1524
        %v1705 = vld [vmem:[%s1104 + $0xa4] sm:$0x1]
        %v1706 = vsel %vm1107, %v1525, %v1705
        %1707 = vst [vmem:[%s1104 + $0xa4] sm:$0x1] %v1706
        %v1708 = vld [vmem:[%s1104 + $0xa8] sm:$0xf]
        %v1709 = vsel %vm1609, %v1532, %v1708
        %1710 = vst [vmem:[%s1104 + $0xa8] sm:$0xf] %v1709
        %1711 = vst.msk [vmem:[%s1104 + $0xac] sm:$0xf] %vm1095, %v1541
        %v1712 = vld [vmem:[%s1104 + $0xb0] sm:$0x1]
        %v1713 = vsel %vm1107, %v1542, %v1712
        %1714 = vst [vmem:[%s1104 + $0xb0] sm:$0x1] %v1713
        %v1715 = vld [vmem:[%s1104 + $0xb4] sm:$0xf]
        %v1716 = vsel %vm1609, %v1549, %v1715
        %1717 = vst [vmem:[%s1104 + $0xb4] sm:$0xf] %v1716
        %1718 = vst.msk [vmem:[%s1104 + $0xb8] sm:$0xf] %vm1095, %v1558
        %v1719 = vld [vmem:[%s1104 + $0xbc] sm:$0x1]
        %v1720 = vsel %vm1107, %v1559, %v1719
        %1721 = vst [vmem:[%s1104 + $0xbc] sm:$0x1] %v1720
        %v1722 = vld [vmem:[%s5] sm:$0x1]
        %v1723 = vld [vmem:[#allocation2] sm:$0xf]
        %v1724 = vld [vmem:[#allocation2 + $0x4] sm:$0xf]
        %v1725 = vld [vmem:[#allocation2 + $0x8] sm:$0x1]
        %v1726 = vld [vmem:[#allocation2 + $0xc] sm:$0xf]
        %v1727 = vld [vmem:[#allocation2 + $0x10] sm:$0xf]
        %v1728 = vld [vmem:[#allocation2 + $0x14] sm:$0x1]
        %v1729 = vld [vmem:[#allocation2 + $0x18] sm:$0xf]
        %v1730 = vld [vmem:[#allocation2 + $0x1c] sm:$0xf]
        %v1731 = vld [vmem:[#allocation2 + $0x20] sm:$0x1]
        %v1732 = vld [vmem:[#allocation2 + $0x24] sm:$0xf]
        %v1733 = vld [vmem:[#allocation2 + $0x28] sm:$0xf]
        %v1734 = vld [vmem:[#allocation2 + $0x2c] sm:$0x1]
        %v1735 = vld [vmem:[#allocation2 + $0x30] sm:$0xf]
        %v1736 = vld [vmem:[#allocation2 + $0x34] sm:$0xf]
        %v1737 = vld [vmem:[#allocation2 + $0x38] sm:$0x1]
        %v1738 = vld [vmem:[#allocation2 + $0x3c] sm:$0xf]
        %v1739 = vld [vmem:[#allocation2 + $0x40] sm:$0xf]
        %v1740 = vld [vmem:[#allocation2 + $0x44] sm:$0x1]
        %v1741 = vld [vmem:[#allocation2 + $0x48] sm:$0xf]
        %v1742 = vld [vmem:[#allocation2 + $0x4c] sm:$0xf]
        %v1743 = vld [vmem:[#allocation2 + $0x50] sm:$0x1]
        %v1744 = vld [vmem:[#allocation2 + $0x54] sm:$0xf]
        %v1745 = vld [vmem:[#allocation2 + $0x58] sm:$0xf]
        %v1746 = vld [vmem:[#allocation2 + $0x5c] sm:$0x1]
        %v1747 = vld [vmem:[#allocation2 + $0x60] sm:$0xf]
        %v1748 = vld [vmem:[#allocation2 + $0x64] sm:$0xf]
        %v1749 = vld [vmem:[#allocation2 + $0x68] sm:$0x1]
        %v1750 = vld [vmem:[#allocation2 + $0x6c] sm:$0xf]
        %v1751 = vld [vmem:[#allocation2 + $0x70] sm:$0xf]
        %v1752 = vld [vmem:[#allocation2 + $0x74] sm:$0x1]
        %v1753 = vld [vmem:[#allocation2 + $0x78] sm:$0xf]
        %v1754 = vld [vmem:[#allocation2 + $0x7c] sm:$0xf]
        %v1755 = vld [vmem:[#allocation2 + $0x80] sm:$0x1]
        %v1756 = vld [vmem:[#allocation2 + $0x84] sm:$0xf]
        %v1757 = vld [vmem:[#allocation2 + $0x88] sm:$0xf]
        %v1758 = vld [vmem:[#allocation2 + $0x8c] sm:$0x1]
        %v1759 = vld [vmem:[#allocation2 + $0x90] sm:$0xf]
        %v1760 = vld [vmem:[#allocation2 + $0x94] sm:$0xf]
        %v1761 = vld [vmem:[#allocation2 + $0x98] sm:$0x1]
        %v1762 = vld [vmem:[#allocation2 + $0x9c] sm:$0xf]
        %v1763 = vld [vmem:[#allocation2 + $0xa0] sm:$0xf]
        %v1764 = vld [vmem:[#allocation2 + $0xa4] sm:$0x1]
        %v1765 = vld [vmem:[#allocation2 + $0xa8] sm:$0xf]
        %v1766 = vld [vmem:[#allocation2 + $0xac] sm:$0xf]
        %v1767 = vld [vmem:[#allocation2 + $0xb0] sm:$0x1]
        %v1768 = vld [vmem:[#allocation2 + $0xb4] sm:$0xf]
        %v1769 = vld [vmem:[#allocation2 + $0xb8] sm:$0xf]
        %v1770 = vld [vmem:[#allocation2 + $0xbc] sm:$0x1]
        %v1803 = vunpack.c.l.b16 %v1723
        %v1804 = vunpack.c.l.b16 %v1724
        %v1805 = vunpack.c.l.b16 %v1726
        %v1806 = vunpack.c.l.b16 %v1727
        %v1807 = vunpack.c.l.b16 %v1729
        %v1808 = vunpack.c.l.b16 %v1730
        %v1809 = vunpack.c.l.b16 %v1732
        %v1810 = vunpack.c.l.b16 %v1733
        %v1811 = vunpack.c.l.b16 %v1735
        %v1812 = vunpack.c.l.b16 %v1736
        %v1813 = vunpack.c.l.b16 %v1738
        %v1814 = vunpack.c.l.b16 %v1739
        %v1815 = vunpack.c.l.b16 %v1741
        %v1816 = vunpack.c.l.b16 %v1742
        %v1817 = vunpack.c.l.b16 %v1744
        %v1818 = vunpack.c.l.b16 %v1745
        %v1819 = vunpack.c.l.b16 %v1747
        %v1820 = vunpack.c.l.b16 %v1748
        %v1821 = vunpack.c.l.b16 %v1750
        %v1822 = vunpack.c.l.b16 %v1751
        %v1823 = vunpack.c.l.b16 %v1753
        %v1824 = vunpack.c.l.b16 %v1754
        %v1825 = vunpack.c.l.b16 %v1756
        %v1826 = vunpack.c.l.b16 %v1757
        %v1827 = vunpack.c.l.b16 %v1759
        %v1828 = vunpack.c.l.b16 %v1760
        %v1829 = vunpack.c.l.b16 %v1762
        %v1830 = vunpack.c.l.b16 %v1763
        %v1831 = vunpack.c.l.b16 %v1765
        %v1832 = vunpack.c.l.b16 %v1766
        %v1833 = vunpack.c.l.b16 %v1768
        %v1834 = vunpack.c.l.b16 %v1769
        %v1835 = vpack.c.b16 %v1804, %v1803
        %v1836 = vpack.c.b16 %v1806, %v1805
        %v1837 = vpack.c.b16 %v1808, %v1807
        %v1838 = vpack.c.b16 %v1810, %v1809
        %v1839 = vpack.c.b16 %v1812, %v1811
        %v1840 = vpack.c.b16 %v1814, %v1813
        %v1841 = vpack.c.b16 %v1816, %v1815
        %v1842 = vpack.c.b16 %v1818, %v1817
        %v1843 = vpack.c.b16 %v1820, %v1819
        %v1844 = vpack.c.b16 %v1822, %v1821
        %v1845 = vpack.c.b16 %v1824, %v1823
        %v1846 = vpack.c.b16 %v1826, %v1825
        %v1847 = vpack.c.b16 %v1828, %v1827
        %v1848 = vpack.c.b16 %v1830, %v1829
        %v1849 = vpack.c.b16 %v1832, %v1831
        %v1850 = vpack.c.b16 %v1834, %v1833
        %v1867 = vunpack.c.l.b16 %v1725
        %v1868 = vunpack.c.l.b16 %v1728
        %v1869 = vunpack.c.l.b16 %v1731
        %v1870 = vunpack.c.l.b16 %v1734
        %v1871 = vunpack.c.l.b16 %v1737
        %v1872 = vunpack.c.l.b16 %v1740
        %v1873 = vunpack.c.l.b16 %v1743
        %v1874 = vunpack.c.l.b16 %v1746
        %v1875 = vunpack.c.l.b16 %v1749
        %v1876 = vunpack.c.l.b16 %v1752
        %v1877 = vunpack.c.l.b16 %v1755
        %v1878 = vunpack.c.l.b16 %v1758
        %v1879 = vunpack.c.l.b16 %v1761
        %v1880 = vunpack.c.l.b16 %v1764
        %v1881 = vunpack.c.l.b16 %v1767
        %v1882 = vunpack.c.l.b16 %v1770
        %v1883 = vpack.c.b16 %v1867, %v1867
        %v1884 = vpack.c.b16 %v1868, %v1868
        %v1885 = vpack.c.b16 %v1869, %v1869
        %v1886 = vpack.c.b16 %v1870, %v1870
        %v1887 = vpack.c.b16 %v1871, %v1871
        %v1888 = vpack.c.b16 %v1872, %v1872
        %v1889 = vpack.c.b16 %v1873, %v1873
        %v1890 = vpack.c.b16 %v1874, %v1874
        %v1891 = vpack.c.b16 %v1875, %v1875
        %v1892 = vpack.c.b16 %v1876, %v1876
        %v1893 = vpack.c.b16 %v1877, %v1877
        %v1894 = vpack.c.b16 %v1878, %v1878
        %v1895 = vpack.c.b16 %v1879, %v1879
        %v1896 = vpack.c.b16 %v1880, %v1880
        %v1897 = vpack.c.b16 %v1881, %v1881
        %v1898 = vpack.c.b16 %v1882, %v1882
        %vm1899 = vsmask.f32 7424
        %v1901 = vshrl.u32 %v1835, 16
        %v1903 = vshll.u32 %v1835, 16
        %v1905 = vrot.slane %v1903, 1
        %v1906 = vor.u32 %v1901, %v1905
        %v1908 = vshll.u32 %v1883, 16
        %v1910 = vrot.slane %v1908, 1
        %v1911 = vsel %vm1899, %v1906, %v1910
        %v1913 = vshrl.u32 %v1836, 16
        %v1915 = vshll.u32 %v1836, 16
        %v1917 = vrot.slane %v1915, 1
        %v1918 = vor.u32 %v1913, %v1917
        %v1920 = vshll.u32 %v1884, 16
        %v1922 = vrot.slane %v1920, 1
        %v1923 = vsel %vm1899, %v1918, %v1922
        %v1925 = vshrl.u32 %v1837, 16
        %v1927 = vshll.u32 %v1837, 16
        %v1929 = vrot.slane %v1927, 1
        %v1930 = vor.u32 %v1925, %v1929
        %v1932 = vshll.u32 %v1885, 16
        %v1934 = vrot.slane %v1932, 1
        %v1935 = vsel %vm1899, %v1930, %v1934
        %v1937 = vshrl.u32 %v1838, 16
        %v1939 = vshll.u32 %v1838, 16
        %v1941 = vrot.slane %v1939, 1
        %v1942 = vor.u32 %v1937, %v1941
        %v1944 = vshll.u32 %v1886, 16
        %v1946 = vrot.slane %v1944, 1
        %v1947 = vsel %vm1899, %v1942, %v1946
        %v1949 = vshrl.u32 %v1839, 16
        %v1951 = vshll.u32 %v1839, 16
        %v1953 = vrot.slane %v1951, 1
        %v1954 = vor.u32 %v1949, %v1953
        %v1956 = vshll.u32 %v1887, 16
        %v1958 = vrot.slane %v1956, 1
        %v1959 = vsel %vm1899, %v1954, %v1958
        %v1961 = vshrl.u32 %v1840, 16
        %v1963 = vshll.u32 %v1840, 16
        %v1965 = vrot.slane %v1963, 1
        %v1966 = vor.u32 %v1961, %v1965
        %v1968 = vshll.u32 %v1888, 16
        %v1970 = vrot.slane %v1968, 1
        %v1971 = vsel %vm1899, %v1966, %v1970
        %v1973 = vshrl.u32 %v1841, 16
        %v1975 = vshll.u32 %v1841, 16
        %v1977 = vrot.slane %v1975, 1
        %v1978 = vor.u32 %v1973, %v1977
        %v1980 = vshll.u32 %v1889, 16
        %v1982 = vrot.slane %v1980, 1
        %v1983 = vsel %vm1899, %v1978, %v1982
        %v1985 = vshrl.u32 %v1842, 16
        %v1987 = vshll.u32 %v1842, 16
        %v1989 = vrot.slane %v1987, 1
        %v1990 = vor.u32 %v1985, %v1989
        %v1992 = vshll.u32 %v1890, 16
        %v1994 = vrot.slane %v1992, 1
        %v1995 = vsel %vm1899, %v1990, %v1994
        %v1997 = vshrl.u32 %v1843, 16
        %v1999 = vshll.u32 %v1843, 16
        %v2001 = vrot.slane %v1999, 1
        %v2002 = vor.u32 %v1997, %v2001
        %v2004 = vshll.u32 %v1891, 16
        %v2006 = vrot.slane %v2004, 1
        %v2007 = vsel %vm1899, %v2002, %v2006
        %v2009 = vshrl.u32 %v1844, 16
        %v2011 = vshll.u32 %v1844, 16
        %v2013 = vrot.slane %v2011, 1
        %v2014 = vor.u32 %v2009, %v2013
        %v2016 = vshll.u32 %v1892, 16
        %v2018 = vrot.slane %v2016, 1
        %v2019 = vsel %vm1899, %v2014, %v2018
        %v2021 = vshrl.u32 %v1845, 16
        %v2023 = vshll.u32 %v1845, 16
        %v2025 = vrot.slane %v2023, 1
        %v2026 = vor.u32 %v2021, %v2025
        %v2028 = vshll.u32 %v1893, 16
        %v2030 = vrot.slane %v2028, 1
        %v2031 = vsel %vm1899, %v2026, %v2030
        %v2033 = vshrl.u32 %v1846, 16
        %v2035 = vshll.u32 %v1846, 16
        %v2037 = vrot.slane %v2035, 1
        %v2038 = vor.u32 %v2033, %v2037
        %v2040 = vshll.u32 %v1894, 16
        %v2042 = vrot.slane %v2040, 1
        %v2043 = vsel %vm1899, %v2038, %v2042
        %v2045 = vshrl.u32 %v1847, 16
        %v2047 = vshll.u32 %v1847, 16
        %v2049 = vrot.slane %v2047, 1
        %v2050 = vor.u32 %v2045, %v2049
        %v2052 = vshll.u32 %v1895, 16
        %v2054 = vrot.slane %v2052, 1
        %v2055 = vsel %vm1899, %v2050, %v2054
        %v2057 = vshrl.u32 %v1848, 16
        %v2059 = vshll.u32 %v1848, 16
        %v2061 = vrot.slane %v2059, 1
        %v2062 = vor.u32 %v2057, %v2061
        %v2064 = vshll.u32 %v1896, 16
        %v2066 = vrot.slane %v2064, 1
        %v2067 = vsel %vm1899, %v2062, %v2066
        %v2069 = vshrl.u32 %v1849, 16
        %v2071 = vshll.u32 %v1849, 16
        %v2073 = vrot.slane %v2071, 1
        %v2074 = vor.u32 %v2069, %v2073
        %v2076 = vshll.u32 %v1897, 16
        %v2078 = vrot.slane %v2076, 1
        %v2079 = vsel %vm1899, %v2074, %v2078
        %v2081 = vshrl.u32 %v1850, 16
        %v2083 = vshll.u32 %v1850, 16
        %v2085 = vrot.slane %v2083, 1
        %v2086 = vor.u32 %v2081, %v2085
        %v2088 = vshll.u32 %v1898, 16
        %v2090 = vrot.slane %v2088, 1
        %v2091 = vsel %vm1899, %v2086, %v2090
        %2092 = vrot.lane.b32.xlu0 %v1911, 64
        %v2093 = vpop.permute.xlu0 %2092
        %2094 = vrot.lane.b32.xlu0 %v1923, 64
        %v2095 = vpop.permute.xlu0 %2094
        %2096 = vrot.lane.b32.xlu0 %v1935, 64
        %v2097 = vpop.permute.xlu0 %2096
        %2098 = vrot.lane.b32.xlu0 %v1947, 64
        %v2099 = vpop.permute.xlu0 %2098
        %2100 = vrot.lane.b32.xlu0 %v1959, 64
        %v2101 = vpop.permute.xlu0 %2100
        %2102 = vrot.lane.b32.xlu0 %v1971, 64
        %v2103 = vpop.permute.xlu0 %2102
        %2104 = vrot.lane.b32.xlu0 %v1983, 64
        %v2105 = vpop.permute.xlu0 %2104
        %2106 = vrot.lane.b32.xlu0 %v1995, 64
        %v2107 = vpop.permute.xlu0 %2106
        %2108 = vrot.lane.b32.xlu0 %v2007, 64
        %v2109 = vpop.permute.xlu0 %2108
        %2110 = vrot.lane.b32.xlu0 %v2019, 64
        %v2111 = vpop.permute.xlu0 %2110
        %2112 = vrot.lane.b32.xlu0 %v2031, 64
        %v2113 = vpop.permute.xlu0 %2112
        %2114 = vrot.lane.b32.xlu0 %v2043, 64
        %v2115 = vpop.permute.xlu0 %2114
        %2116 = vrot.lane.b32.xlu0 %v2055, 64
        %v2117 = vpop.permute.xlu0 %2116
        %2118 = vrot.lane.b32.xlu0 %v2067, 64
        %v2119 = vpop.permute.xlu0 %2118
        %2120 = vrot.lane.b32.xlu0 %v2079, 64
        %v2121 = vpop.permute.xlu0 %2120
        %2122 = vrot.lane.b32.xlu0 %v2091, 64
        %v2123 = vpop.permute.xlu0 %2122
        %vm2124 = vcmask 1046528
        %v2125 = vrot.slane %v1835, 1
        %v2126 = vrot.slane %v1883, 1
        %v2127 = vsel %vm2124, %v2125, %v2126
        %v2128 = vrot.slane %v1836, 1
        %v2129 = vrot.slane %v1884, 1
        %v2130 = vsel %vm2124, %v2128, %v2129
        %v2131 = vrot.slane %v1837, 1
        %v2132 = vrot.slane %v1885, 1
        %v2133 = vsel %vm2124, %v2131, %v2132
        %v2134 = vrot.slane %v1838, 1
        %v2135 = vrot.slane %v1886, 1
        %v2136 = vsel %vm2124, %v2134, %v2135
        %v2137 = vrot.slane %v1839, 1
        %v2138 = vrot.slane %v1887, 1
        %v2139 = vsel %vm2124, %v2137, %v2138
        %v2140 = vrot.slane %v1840, 1
        %v2141 = vrot.slane %v1888, 1
        %v2142 = vsel %vm2124, %v2140, %v2141
        %v2143 = vrot.slane %v1841, 1
        %v2144 = vrot.slane %v1889, 1
        %v2145 = vsel %vm2124, %v2143, %v2144
        %v2146 = vrot.slane %v1842, 1
        %v2147 = vrot.slane %v1890, 1
        %v2148 = vsel %vm2124, %v2146, %v2147
        %v2149 = vrot.slane %v1843, 1
        %v2150 = vrot.slane %v1891, 1
        %v2151 = vsel %vm2124, %v2149, %v2150
        %v2152 = vrot.slane %v1844, 1
        %v2153 = vrot.slane %v1892, 1
        %v2154 = vsel %vm2124, %v2152, %v2153
        %v2155 = vrot.slane %v1845, 1
        %v2156 = vrot.slane %v1893, 1
        %v2157 = vsel %vm2124, %v2155, %v2156
        %v2158 = vrot.slane %v1846, 1
        %v2159 = vrot.slane %v1894, 1
        %v2160 = vsel %vm2124, %v2158, %v2159
        %v2161 = vrot.slane %v1847, 1
        %v2162 = vrot.slane %v1895, 1
        %v2163 = vsel %vm2124, %v2161, %v2162
        %v2164 = vrot.slane %v1848, 1
        %v2165 = vrot.slane %v1896, 1
        %v2166 = vsel %vm2124, %v2164, %v2165
        %v2167 = vrot.slane %v1849, 1
        %v2168 = vrot.slane %v1897, 1
        %v2169 = vsel %vm2124, %v2167, %v2168
        %v2170 = vrot.slane %v1850, 1
        %v2171 = vrot.slane %v1898, 1
        %v2172 = vsel %vm2124, %v2170, %v2171
        %v2174 = vsel %vm472, %v1835, %v2093
        %v2177 = vsel %vm472, %v1836, %v2095
        %v2180 = vsel %vm472, %v1837, %v2097
        %v2183 = vsel %vm472, %v1838, %v2099
        %v2186 = vsel %vm472, %v1839, %v2101
        %v2189 = vsel %vm472, %v1840, %v2103
        %v2192 = vsel %vm472, %v1841, %v2105
        %v2195 = vsel %vm472, %v1842, %v2107
        %v2198 = vsel %vm472, %v1843, %v2109
        %v2201 = vsel %vm472, %v1844, %v2111
        %v2204 = vsel %vm472, %v1845, %v2113
        %v2207 = vsel %vm472, %v1846, %v2115
        %v2210 = vsel %vm472, %v1847, %v2117
        %v2213 = vsel %vm472, %v1848, %v2119
        %v2216 = vsel %vm472, %v1849, %v2121
        %v2219 = vsel %vm472, %v1850, %v2123
        %v2221 = vld [vmem:[%s4] sm:$0xf]
        %v2222 = vld [vmem:[%s4 + $0x4] sm:$0xf]
        %v2223 = vld [vmem:[%s4 + $0x8] sm:$0xf]
        %v2224 = vld [vmem:[%s4 + $0xc] sm:$0xf]
        %v2225 = vld [vmem:[%s4 + $0x10] sm:$0xf]
        %v2226 = vld [vmem:[%s4 + $0x14] sm:$0xf]
        %v2227 = vld [vmem:[%s4 + $0x18] sm:$0xf]
        %v2228 = vld [vmem:[%s4 + $0x1c] sm:$0xf]
        %v2229 = vld [vmem:[%s4 + $0x20] sm:$0xf]
        %v2230 = vld [vmem:[%s4 + $0x24] sm:$0xf]
        %v2231 = vld [vmem:[%s4 + $0x28] sm:$0xf]
        %v2232 = vld [vmem:[%s4 + $0x2c] sm:$0xf]
        %v2233 = vld [vmem:[%s4 + $0x30] sm:$0xf]
        %v2234 = vld [vmem:[%s4 + $0x34] sm:$0xf]
        %v2235 = vld [vmem:[%s4 + $0x38] sm:$0xf]
        %v2236 = vld [vmem:[%s4 + $0x3c] sm:$0xf]
        %v2237 = vld [vmem:[%s4 + $0x40] sm:$0xf]
        %v2238 = vld [vmem:[%s4 + $0x44] sm:$0xf]
        %v2239 = vld [vmem:[%s4 + $0x48] sm:$0xf]
        %v2240 = vld [vmem:[%s4 + $0x4c] sm:$0xf]
        %v2241 = vld [vmem:[%s4 + $0x50] sm:$0xf]
        %v2242 = vld [vmem:[%s4 + $0x54] sm:$0xf]
        %v2243 = vld [vmem:[%s4 + $0x58] sm:$0xf]
        %v2244 = vld [vmem:[%s4 + $0x5c] sm:$0xf]
        %v2246 = vlaneseq
        %v2247 = vshrl.u32 %v2246, 7
        %v2248 = vsub.s32 0, %v2247
        %v2249 = vrot.slane %v1722, %v2248
        %v2275 = vunpack.c.l.b16 %v2221
        %v2276 = vunpack.c.l.b16 %v2222
        %v2277 = vunpack.c.l.b16 %v2223
        %v2278 = vunpack.c.l.b16 %v2224
        %v2279 = vunpack.c.l.b16 %v2225
        %v2280 = vunpack.c.l.b16 %v2226
        %v2281 = vunpack.c.l.b16 %v2227
        %v2282 = vunpack.c.l.b16 %v2228
        %v2283 = vunpack.c.l.b16 %v2229
        %v2284 = vunpack.c.l.b16 %v2230
        %v2285 = vunpack.c.l.b16 %v2231
        %v2286 = vunpack.c.l.b16 %v2232
        %v2287 = vunpack.c.l.b16 %v2233
        %v2288 = vunpack.c.l.b16 %v2234
        %v2289 = vunpack.c.l.b16 %v2235
        %v2290 = vunpack.c.l.b16 %v2236
        %v2291 = vunpack.c.l.b16 %v2237
        %v2292 = vunpack.c.l.b16 %v2238
        %v2293 = vunpack.c.l.b16 %v2239
        %v2294 = vunpack.c.l.b16 %v2240
        %v2295 = vunpack.c.l.b16 %v2241
        %v2296 = vunpack.c.l.b16 %v2242
        %v2297 = vunpack.c.l.b16 %v2243
        %v2298 = vunpack.c.l.b16 %v2244
        %v2299 = vpack.c.b16 %v2276, %v2275
        %v2300 = vpack.c.b16 %v2278, %v2277
        %v2301 = vpack.c.b16 %v2280, %v2279
        %v2302 = vpack.c.b16 %v2282, %v2281
        %v2303 = vpack.c.b16 %v2284, %v2283
        %v2304 = vpack.c.b16 %v2286, %v2285
        %v2305 = vpack.c.b16 %v2288, %v2287
        %v2306 = vpack.c.b16 %v2290, %v2289
        %v2307 = vpack.c.b16 %v2292, %v2291
        %v2308 = vpack.c.b16 %v2294, %v2293
        %v2309 = vpack.c.b16 %v2296, %v2295
        %v2310 = vpack.c.b16 %v2298, %v2297
        %v2324 = vsel %vm472, %v2127, 0
        %v2327 = vsel %vm472, %v2130, 0
        %v2330 = vsel %vm472, %v2133, 0
        %v2333 = vsel %vm472, %v2136, 0
        %v2336 = vsel %vm472, %v2139, 0
        %v2339 = vsel %vm472, %v2142, 0
        %v2342 = vsel %vm472, %v2145, 0
        %v2345 = vsel %vm472, %v2148, 0
        %v2348 = vsel %vm472, %v2151, 0
        %v2351 = vsel %vm472, %v2154, 0
        %v2354 = vsel %vm472, %v2157, 0
        %v2357 = vsel %vm472, %v2160, 0
        %v2360 = vsel %vm472, %v2163, 0
        %v2363 = vsel %vm472, %v2166, 0
        %v2366 = vsel %vm472, %v2169, 0
        %v2369 = vsel %vm472, %v2172, 0
        %2371 = vmatprep.subr.bf16.mxu0 0
        %2372 = vmatpush1.bf16.msra.mxu0 %v2299
        %2373 = vmatprep.subr.bf16.mxu0 0
        %2374 = vmatpush1.bf16.msra.mxu0 %v2300
        %2375 = vmatprep.subr.bf16.mxu0 0
        %2376 = vmatpush1.bf16.msra.mxu0 %v2301
        %2377 = vmatprep.subr.bf16.mxu0 0
        %2378 = vmatpush1.bf16.msra.mxu0 %v2302
        %2379 = vmatprep.subr.bf16.mxu0 0
        %2380 = vmatpush1.bf16.msra.mxu0 %v2303
        %2381 = vmatprep.subr.bf16.mxu0 0
        %2382 = vmatpush1.bf16.msra.mxu0 %v2304
        %2383 = vmatprep.subr.bf16.mxu0 0
        %2384 = vmatpush1.bf16.msra.mxu0 %v2305
        %2385 = vmatprep.subr.bf16.mxu0 0
        %2386 = vmatpush1.bf16.msra.mxu0 %v2306
        %2387 = vmatprep.subr.bf16.mxu0 0
        %2388 = vmatpush1.bf16.msra.mxu0 %v2307
        %2389 = vmatprep.subr.bf16.mxu0 0
        %2390 = vmatpush1.bf16.msra.mxu0 %v2308
        %2391 = vmatprep.subr.bf16.mxu0 0
        %2392 = vmatpush1.bf16.msra.mxu0 %v2309
        %2393 = vmatprep.subr.bf16.mxu0 0
        %2394 = vmatpush1.bf16.msra.mxu0 %v2310
        %2395 = vmatprep.subr.bf16.mxu0 0
        %2396 = vmatpush1.bf16.msra.mxu0 0
        %2397 = vmatprep.subr.bf16.mxu0 0
        %2398 = vmatpush1.bf16.msra.mxu0 0
        %2399 = vmatprep.subr.bf16.mxu0 0
        %2400 = vmatpush1.bf16.msra.mxu0 0
        %2401 = vmatprep.subr.bf16.mxu0 0
        %2402 = vmatpush1.bf16.msra.mxu0 0
        %2403 = vmatprep.mubr.bf16.mxu0 %v2324
        %2404 = vmatmul.mubr.bf16.gmra.mrb[0].mxu0 %v2174
        %v2405 = vpop.f32.mrb[0].mxu0
        %v2406 = vadd.f32 %v2249, %v2405
        %v2407 = vpop.f32.mrb[0].mxu0
        %v2408 = vpop.f32.mrb[0].mxu0
        %v2409 = vadd.f32 %v2249, %v2408
        %v2410 = vpop.f32.mrb[0].mxu0
        %2411 = vmatprep.mubr.bf16.mxu0 %v2327
        %2412 = vmatmul.mubr.bf16.gmra.mrb[0].mxu0 %v2177
        %v2413 = vpop.f32.mrb[0].mxu0
        %v2414 = vadd.f32 %v2249, %v2413
        %v2415 = vpop.f32.mrb[0].mxu0
        %v2416 = vpop.f32.mrb[0].mxu0
        %v2417 = vadd.f32 %v2249, %v2416
        %v2418 = vpop.f32.mrb[0].mxu0
        %2419 = vmatprep.mubr.bf16.mxu0 %v2330
        %2420 = vmatmul.mubr.bf16.gmra.mrb[0].mxu0 %v2180
        %v2421 = vpop.f32.mrb[0].mxu0
        %v2422 = vadd.f32 %v2249, %v2421
        %v2423 = vpop.f32.mrb[0].mxu0
        %v2424 = vpop.f32.mrb[0].mxu0
        %v2425 = vadd.f32 %v2249, %v2424
        %v2426 = vpop.f32.mrb[0].mxu0
        %2427 = vmatprep.mubr.bf16.mxu0 %v2333
        %2428 = vmatmul.mubr.bf16.gmra.mrb[0].mxu0 %v2183
        %v2429 = vpop.f32.mrb[0].mxu0
        %v2430 = vadd.f32 %v2249, %v2429
        %v2431 = vpop.f32.mrb[0].mxu0
        %v2432 = vpop.f32.mrb[0].mxu0
        %v2433 = vadd.f32 %v2249, %v2432
        %v2434 = vpop.f32.mrb[0].mxu0
        %2435 = vmatprep.mubr.bf16.mxu0 %v2336
        %2436 = vmatmul.mubr.bf16.gmra.mrb[0].mxu0 %v2186
        %v2437 = vpop.f32.mrb[0].mxu0
        %v2438 = vadd.f32 %v2249, %v2437
        %v2439 = vpop.f32.mrb[0].mxu0
        %v2440 = vpop.f32.mrb[0].mxu0
        %v2441 = vadd.f32 %v2249, %v2440
        %v2442 = vpop.f32.mrb[0].mxu0
        %2443 = vmatprep.mubr.bf16.mxu0 %v2339
        %2444 = vmatmul.mubr.bf16.gmra.mrb[0].mxu0 %v2189
        %v2445 = vpop.f32.mrb[0].mxu0
        %v2446 = vadd.f32 %v2249, %v2445
        %v2447 = vpop.f32.mrb[0].mxu0
        %v2448 = vpop.f32.mrb[0].mxu0
        %v2449 = vadd.f32 %v2249, %v2448
        %v2450 = vpop.f32.mrb[0].mxu0
        %2451 = vmatprep.mubr.bf16.mxu0 %v2342
        %2452 = vmatmul.mubr.bf16.gmra.mrb[0].mxu0 %v2192
        %v2453 = vpop.f32.mrb[0].mxu0
        %v2454 = vadd.f32 %v2249, %v2453
        %v2455 = vpop.f32.mrb[0].mxu0
        %v2456 = vpop.f32.mrb[0].mxu0
        %v2457 = vadd.f32 %v2249, %v2456
        %v2458 = vpop.f32.mrb[0].mxu0
        %2459 = vmatprep.mubr.bf16.mxu0 %v2345
        %2460 = vmatmul.mubr.bf16.gmra.mrb[0].mxu0 %v2195
        %v2461 = vpop.f32.mrb[0].mxu0
        %v2462 = vadd.f32 %v2249, %v2461
        %v2463 = vpop.f32.mrb[0].mxu0
        %v2464 = vpop.f32.mrb[0].mxu0
        %v2465 = vadd.f32 %v2249, %v2464
        %v2466 = vpop.f32.mrb[0].mxu0
        %2467 = vmatprep.mubr.bf16.mxu0 %v2348
        %2468 = vmatmul.mubr.bf16.gmra.mrb[0].mxu0 %v2198
        %v2469 = vpop.f32.mrb[0].mxu0
        %v2470 = vadd.f32 %v2249, %v2469
        %v2471 = vpop.f32.mrb[0].mxu0
        %v2472 = vpop.f32.mrb[0].mxu0
        %v2473 = vadd.f32 %v2249, %v2472
        %v2474 = vpop.f32.mrb[0].mxu0
        %2475 = vmatprep.mubr.bf16.mxu0 %v2351
        %2476 = vmatmul.mubr.bf16.gmra.mrb[0].mxu0 %v2201
        %v2477 = vpop.f32.mrb[0].mxu0
        %v2478 = vadd.f32 %v2249, %v2477
        %v2479 = vpop.f32.mrb[0].mxu0
        %v2480 = vpop.f32.mrb[0].mxu0
        %v2481 = vadd.f32 %v2249, %v2480
        %v2482 = vpop.f32.mrb[0].mxu0
        %2483 = vmatprep.mubr.bf16.mxu0 %v2354
        %2484 = vmatmul.mubr.bf16.gmra.mrb[0].mxu0 %v2204
        %v2485 = vpop.f32.mrb[0].mxu0
        %v2486 = vadd.f32 %v2249, %v2485
        %v2487 = vpop.f32.mrb[0].mxu0
        %v2488 = vpop.f32.mrb[0].mxu0
        %v2489 = vadd.f32 %v2249, %v2488
        %v2490 = vpop.f32.mrb[0].mxu0
        %2491 = vmatprep.mubr.bf16.mxu0 %v2357
        %2492 = vmatmul.mubr.bf16.gmra.mrb[0].mxu0 %v2207
        %v2493 = vpop.f32.mrb[0].mxu0
        %v2494 = vadd.f32 %v2249, %v2493
        %v2495 = vpop.f32.mrb[0].mxu0
        %v2496 = vpop.f32.mrb[0].mxu0
        %v2497 = vadd.f32 %v2249, %v2496
        %v2498 = vpop.f32.mrb[0].mxu0
        %2499 = vmatprep.mubr.bf16.mxu0 %v2360
        %2500 = vmatmul.mubr.bf16.gmra.mrb[0].mxu0 %v2210
        %v2501 = vpop.f32.mrb[0].mxu0
        %v2502 = vadd.f32 %v2249, %v2501
        %v2503 = vpop.f32.mrb[0].mxu0
        %v2504 = vpop.f32.mrb[0].mxu0
        %v2505 = vadd.f32 %v2249, %v2504
        %v2506 = vpop.f32.mrb[0].mxu0
        %2507 = vmatprep.mubr.bf16.mxu0 %v2363
        %2508 = vmatmul.mubr.bf16.gmra.mrb[0].mxu0 %v2213
        %v2509 = vpop.f32.mrb[0].mxu0
        %v2510 = vadd.f32 %v2249, %v2509
        %v2511 = vpop.f32.mrb[0].mxu0
        %v2512 = vpop.f32.mrb[0].mxu0
        %v2513 = vadd.f32 %v2249, %v2512
        %v2514 = vpop.f32.mrb[0].mxu0
        %2515 = vmatprep.mubr.bf16.mxu0 %v2366
        %2516 = vmatmul.mubr.bf16.gmra.mrb[0].mxu0 %v2216
        %v2517 = vpop.f32.mrb[0].mxu0
        %v2518 = vadd.f32 %v2249, %v2517
        %v2519 = vpop.f32.mrb[0].mxu0
        %v2520 = vpop.f32.mrb[0].mxu0
        %v2521 = vadd.f32 %v2249, %v2520
        %v2522 = vpop.f32.mrb[0].mxu0
        %2523 = vmatprep.mubr.bf16.mxu0 %v2369
        %2524 = vmatmul.mubr.bf16.gmra.mrb[0].mxu0 %v2219
        %v2525 = vpop.f32.mrb[0].mxu0
        %v2526 = vadd.f32 %v2249, %v2525
        %v2527 = vpop.f32.mrb[0].mxu0
        %v2528 = vpop.f32.mrb[0].mxu0
        %v2529 = vadd.f32 %v2249, %v2528
        %v2530 = vpop.f32.mrb[0].mxu0
        %2531 = vdwg.mxu0
        %2532 = vst [vmem:[#allocation4] sm:$0xff] %v2406
        %2533 = vst [vmem:[#allocation4 + $0x8] sm:$0xff] %v2409
        %2534 = vst [vmem:[#allocation4 + $0x10] sm:$0xff] %v2414
        %2535 = vst [vmem:[#allocation4 + $0x18] sm:$0xff] %v2417
        %2536 = vst [vmem:[#allocation4 + $0x20] sm:$0xff] %v2422
        %2537 = vst [vmem:[#allocation4 + $0x28] sm:$0xff] %v2425
        %2538 = vst [vmem:[#allocation4 + $0x30] sm:$0xff] %v2430
        %2539 = vst [vmem:[#allocation4 + $0x38] sm:$0xff] %v2433
        %2540 = vst [vmem:[#allocation4 + $0x40] sm:$0xff] %v2438
        %2541 = vst [vmem:[#allocation4 + $0x48] sm:$0xff] %v2441
        %2542 = vst [vmem:[#allocation4 + $0x50] sm:$0xff] %v2446
        %2543 = vst [vmem:[#allocation4 + $0x58] sm:$0xff] %v2449
        %2544 = vst [vmem:[#allocation4 + $0x60] sm:$0xff] %v2454
        %2545 = vst [vmem:[#allocation4 + $0x68] sm:$0xff] %v2457
        %2546 = vst [vmem:[#allocation4 + $0x70] sm:$0xff] %v2462
        %2547 = vst [vmem:[#allocation4 + $0x78] sm:$0xff] %v2465
        %2548 = vst [vmem:[#allocation4 + $0x80] sm:$0xff] %v2470
        %2549 = vst [vmem:[#allocation4 + $0x88] sm:$0xff] %v2473
        %2550 = vst [vmem:[#allocation4 + $0x90] sm:$0xff] %v2478
        %2551 = vst [vmem:[#allocation4 + $0x98] sm:$0xff] %v2481
        %2552 = vst [vmem:[#allocation4 + $0xa0] sm:$0xff] %v2486
        %2553 = vst [vmem:[#allocation4 + $0xa8] sm:$0xff] %v2489
        %2554 = vst [vmem:[#allocation4 + $0xb0] sm:$0xff] %v2494
        %2555 = vst [vmem:[#allocation4 + $0xb8] sm:$0xff] %v2497
        %2556 = vst [vmem:[#allocation4 + $0xc0] sm:$0xff] %v2502
        %2557 = vst [vmem:[#allocation4 + $0xc8] sm:$0xff] %v2505
        %2558 = vst [vmem:[#allocation4 + $0xd0] sm:$0xff] %v2510
        %2559 = vst [vmem:[#allocation4 + $0xd8] sm:$0xff] %v2513
        %2560 = vst [vmem:[#allocation4 + $0xe0] sm:$0xff] %v2518
        %2561 = vst [vmem:[#allocation4 + $0xe8] sm:$0xff] %v2521
        %2562 = vst [vmem:[#allocation4 + $0xf0] sm:$0xff] %v2526
        %2563 = vst [vmem:[#allocation4 + $0xf8] sm:$0xff] %v2529
        %v2564 = vld [vmem:[%s1104] sm:$0xf]
        %v2565 = vld [vmem:[%s1104 + $0x4] sm:$0xf]
        %v2566 = vld [vmem:[%s1104 + $0x8] sm:$0x1]
        %v2567 = vld [vmem:[%s1104 + $0xc] sm:$0xf]
        %v2568 = vld [vmem:[%s1104 + $0x10] sm:$0xf]
        %v2569 = vld [vmem:[%s1104 + $0x14] sm:$0x1]
        %v2570 = vld [vmem:[%s1104 + $0x18] sm:$0xf]
        %v2571 = vld [vmem:[%s1104 + $0x1c] sm:$0xf]
        %v2572 = vld [vmem:[%s1104 + $0x20] sm:$0x1]
        %v2573 = vld [vmem:[%s1104 + $0x24] sm:$0xf]
        %v2574 = vld [vmem:[%s1104 + $0x28] sm:$0xf]
        %v2575 = vld [vmem:[%s1104 + $0x2c] sm:$0x1]
        %v2576 = vld [vmem:[%s1104 + $0x30] sm:$0xf]
        %v2577 = vld [vmem:[%s1104 + $0x34] sm:$0xf]
        %v2578 = vld [vmem:[%s1104 + $0x38] sm:$0x1]
        %v2579 = vld [vmem:[%s1104 + $0x3c] sm:$0xf]
        %v2580 = vld [vmem:[%s1104 + $0x40] sm:$0xf]
        %v2581 = vld [vmem:[%s1104 + $0x44] sm:$0x1]
        %v2582 = vld [vmem:[%s1104 + $0x48] sm:$0xf]
        %v2583 = vld [vmem:[%s1104 + $0x4c] sm:$0xf]
        %v2584 = vld [vmem:[%s1104 + $0x50] sm:$0x1]
        %v2585 = vld [vmem:[%s1104 + $0x54] sm:$0xf]
        %v2586 = vld [vmem:[%s1104 + $0x58] sm:$0xf]
        %v2587 = vld [vmem:[%s1104 + $0x5c] sm:$0x1]
        %v2588 = vld [vmem:[%s1104 + $0x60] sm:$0xf]
        %v2589 = vld [vmem:[%s1104 + $0x64] sm:$0xf]
        %v2590 = vld [vmem:[%s1104 + $0x68] sm:$0x1]
        %v2591 = vld [vmem:[%s1104 + $0x6c] sm:$0xf]
        %v2592 = vld [vmem:[%s1104 + $0x70] sm:$0xf]
        %v2593 = vld [vmem:[%s1104 + $0x74] sm:$0x1]
        %v2594 = vld [vmem:[%s1104 + $0x78] sm:$0xf]
        %v2595 = vld [vmem:[%s1104 + $0x7c] sm:$0xf]
        %v2596 = vld [vmem:[%s1104 + $0x80] sm:$0x1]
        %v2597 = vld [vmem:[%s1104 + $0x84] sm:$0xf]
        %v2598 = vld [vmem:[%s1104 + $0x88] sm:$0xf]
        %v2599 = vld [vmem:[%s1104 + $0x8c] sm:$0x1]
        %v2600 = vld [vmem:[%s1104 + $0x90] sm:$0xf]
        %v2601 = vld [vmem:[%s1104 + $0x94] sm:$0xf]
        %v2602 = vld [vmem:[%s1104 + $0x98] sm:$0x1]
        %v2603 = vld [vmem:[%s1104 + $0x9c] sm:$0xf]
        %v2604 = vld [vmem:[%s1104 + $0xa0] sm:$0xf]
        %v2605 = vld [vmem:[%s1104 + $0xa4] sm:$0x1]
        %v2606 = vld [vmem:[%s1104 + $0xa8] sm:$0xf]
        %v2607 = vld [vmem:[%s1104 + $0xac] sm:$0xf]
        %v2608 = vld [vmem:[%s1104 + $0xb0] sm:$0x1]
        %v2609 = vld [vmem:[%s1104 + $0xb4] sm:$0xf]
        %v2610 = vld [vmem:[%s1104 + $0xb8] sm:$0xf]
        %v2611 = vld [vmem:[%s1104 + $0xbc] sm:$0x1]
        %v2644 = vunpack.c.l.b16 %v2564
        %v2645 = vunpack.c.l.b16 %v2565
        %v2646 = vunpack.c.l.b16 %v2567
        %v2647 = vunpack.c.l.b16 %v2568
        %v2648 = vunpack.c.l.b16 %v2570
        %v2649 = vunpack.c.l.b16 %v2571
        %v2650 = vunpack.c.l.b16 %v2573
        %v2651 = vunpack.c.l.b16 %v2574
        %v2652 = vunpack.c.l.b16 %v2576
        %v2653 = vunpack.c.l.b16 %v2577
        %v2654 = vunpack.c.l.b16 %v2579
        %v2655 = vunpack.c.l.b16 %v2580
        %v2656 = vunpack.c.l.b16 %v2582
        %v2657 = vunpack.c.l.b16 %v2583
        %v2658 = vunpack.c.l.b16 %v2585
        %v2659 = vunpack.c.l.b16 %v2586
        %v2660 = vunpack.c.l.b16 %v2588
        %v2661 = vunpack.c.l.b16 %v2589
        %v2662 = vunpack.c.l.b16 %v2591
        %v2663 = vunpack.c.l.b16 %v2592
        %v2664 = vunpack.c.l.b16 %v2594
        %v2665 = vunpack.c.l.b16 %v2595
        %v2666 = vunpack.c.l.b16 %v2597
        %v2667 = vunpack.c.l.b16 %v2598
        %v2668 = vunpack.c.l.b16 %v2600
        %v2669 = vunpack.c.l.b16 %v2601
        %v2670 = vunpack.c.l.b16 %v2603
        %v2671 = vunpack.c.l.b16 %v2604
        %v2672 = vunpack.c.l.b16 %v2606
        %v2673 = vunpack.c.l.b16 %v2607
        %v2674 = vunpack.c.l.b16 %v2609
        %v2675 = vunpack.c.l.b16 %v2610
        %v2676 = vpack.c.b16 %v2645, %v2644
        %v2677 = vpack.c.b16 %v2647, %v2646
        %v2678 = vpack.c.b16 %v2649, %v2648
        %v2679 = vpack.c.b16 %v2651, %v2650
        %v2680 = vpack.c.b16 %v2653, %v2652
        %v2681 = vpack.c.b16 %v2655, %v2654
        %v2682 = vpack.c.b16 %v2657, %v2656
        %v2683 = vpack.c.b16 %v2659, %v2658
        %v2684 = vpack.c.b16 %v2661, %v2660
        %v2685 = vpack.c.b16 %v2663, %v2662
        %v2686 = vpack.c.b16 %v2665, %v2664
        %v2687 = vpack.c.b16 %v2667, %v2666
        %v2688 = vpack.c.b16 %v2669, %v2668
        %v2689 = vpack.c.b16 %v2671, %v2670
        %v2690 = vpack.c.b16 %v2673, %v2672
        %v2691 = vpack.c.b16 %v2675, %v2674
        %v2708 = vunpack.c.l.b16 %v2566
        %v2709 = vunpack.c.l.b16 %v2569
        %v2710 = vunpack.c.l.b16 %v2572
        %v2711 = vunpack.c.l.b16 %v2575
        %v2712 = vunpack.c.l.b16 %v2578
        %v2713 = vunpack.c.l.b16 %v2581
        %v2714 = vunpack.c.l.b16 %v2584
        %v2715 = vunpack.c.l.b16 %v2587
        %v2716 = vunpack.c.l.b16 %v2590
        %v2717 = vunpack.c.l.b16 %v2593
        %v2718 = vunpack.c.l.b16 %v2596
        %v2719 = vunpack.c.l.b16 %v2599
        %v2720 = vunpack.c.l.b16 %v2602
        %v2721 = vunpack.c.l.b16 %v2605
        %v2722 = vunpack.c.l.b16 %v2608
        %v2723 = vunpack.c.l.b16 %v2611
        %v2724 = vpack.c.b16 %v2708, %v2708
        %v2725 = vpack.c.b16 %v2709, %v2709
        %v2726 = vpack.c.b16 %v2710, %v2710
        %v2727 = vpack.c.b16 %v2711, %v2711
        %v2728 = vpack.c.b16 %v2712, %v2712
        %v2729 = vpack.c.b16 %v2713, %v2713
        %v2730 = vpack.c.b16 %v2714, %v2714
        %v2731 = vpack.c.b16 %v2715, %v2715
        %v2732 = vpack.c.b16 %v2716, %v2716
        %v2733 = vpack.c.b16 %v2717, %v2717
        %v2734 = vpack.c.b16 %v2718, %v2718
        %v2735 = vpack.c.b16 %v2719, %v2719
        %v2736 = vpack.c.b16 %v2720, %v2720
        %v2737 = vpack.c.b16 %v2721, %v2721
        %v2738 = vpack.c.b16 %v2722, %v2722
        %v2739 = vpack.c.b16 %v2723, %v2723
        %v2741 = vshrl.u32 %v2676, 16
        %v2743 = vshll.u32 %v2676, 16
        %v2745 = vrot.slane %v2743, 1
        %v2746 = vor.u32 %v2741, %v2745
        %v2748 = vshll.u32 %v2724, 16
        %v2750 = vrot.slane %v2748, 1
        %v2751 = vsel %vm1899, %v2746, %v2750
        %v2753 = vshrl.u32 %v2677, 16
        %v2755 = vshll.u32 %v2677, 16
        %v2757 = vrot.slane %v2755, 1
        %v2758 = vor.u32 %v2753, %v2757
        %v2760 = vshll.u32 %v2725, 16
        %v2762 = vrot.slane %v2760, 1
        %v2763 = vsel %vm1899, %v2758, %v2762
        %v2765 = vshrl.u32 %v2678, 16
        %v2767 = vshll.u32 %v2678, 16
        %v2769 = vrot.slane %v2767, 1
        %v2770 = vor.u32 %v2765, %v2769
        %v2772 = vshll.u32 %v2726, 16
        %v2774 = vrot.slane %v2772, 1
        %v2775 = vsel %vm1899, %v2770, %v2774
        %v2777 = vshrl.u32 %v2679, 16
        %v2779 = vshll.u32 %v2679, 16
        %v2781 = vrot.slane %v2779, 1
        %v2782 = vor.u32 %v2777, %v2781
        %v2784 = vshll.u32 %v2727, 16
        %v2786 = vrot.slane %v2784, 1
        %v2787 = vsel %vm1899, %v2782, %v2786
        %v2789 = vshrl.u32 %v2680, 16
        %v2791 = vshll.u32 %v2680, 16
        %v2793 = vrot.slane %v2791, 1
        %v2794 = vor.u32 %v2789, %v2793
        %v2796 = vshll.u32 %v2728, 16
        %v2798 = vrot.slane %v2796, 1
        %v2799 = vsel %vm1899, %v2794, %v2798
        %v2801 = vshrl.u32 %v2681, 16
        %v2803 = vshll.u32 %v2681, 16
        %v2805 = vrot.slane %v2803, 1
        %v2806 = vor.u32 %v2801, %v2805
        %v2808 = vshll.u32 %v2729, 16
        %v2810 = vrot.slane %v2808, 1
        %v2811 = vsel %vm1899, %v2806, %v2810
        %v2813 = vshrl.u32 %v2682, 16
        %v2815 = vshll.u32 %v2682, 16
        %v2817 = vrot.slane %v2815, 1
        %v2818 = vor.u32 %v2813, %v2817
        %v2820 = vshll.u32 %v2730, 16
        %v2822 = vrot.slane %v2820, 1
        %v2823 = vsel %vm1899, %v2818, %v2822
        %v2825 = vshrl.u32 %v2683, 16
        %v2827 = vshll.u32 %v2683, 16
        %v2829 = vrot.slane %v2827, 1
        %v2830 = vor.u32 %v2825, %v2829
        %v2832 = vshll.u32 %v2731, 16
        %v2834 = vrot.slane %v2832, 1
        %v2835 = vsel %vm1899, %v2830, %v2834
        %v2837 = vshrl.u32 %v2684, 16
        %v2839 = vshll.u32 %v2684, 16
        %v2841 = vrot.slane %v2839, 1
        %v2842 = vor.u32 %v2837, %v2841
        %v2844 = vshll.u32 %v2732, 16
        %v2846 = vrot.slane %v2844, 1
        %v2847 = vsel %vm1899, %v2842, %v2846
        %v2849 = vshrl.u32 %v2685, 16
        %v2851 = vshll.u32 %v2685, 16
        %v2853 = vrot.slane %v2851, 1
        %v2854 = vor.u32 %v2849, %v2853
        %v2856 = vshll.u32 %v2733, 16
        %v2858 = vrot.slane %v2856, 1
        %v2859 = vsel %vm1899, %v2854, %v2858
        %v2861 = vshrl.u32 %v2686, 16
        %v2863 = vshll.u32 %v2686, 16
        %v2865 = vrot.slane %v2863, 1
        %v2866 = vor.u32 %v2861, %v2865
        %v2868 = vshll.u32 %v2734, 16
        %v2870 = vrot.slane %v2868, 1
        %v2871 = vsel %vm1899, %v2866, %v2870
        %v2873 = vshrl.u32 %v2687, 16
        %v2875 = vshll.u32 %v2687, 16
        %v2877 = vrot.slane %v2875, 1
        %v2878 = vor.u32 %v2873, %v2877
        %v2880 = vshll.u32 %v2735, 16
        %v2882 = vrot.slane %v2880, 1
        %v2883 = vsel %vm1899, %v2878, %v2882
        %v2885 = vshrl.u32 %v2688, 16
        %v2887 = vshll.u32 %v2688, 16
        %v2889 = vrot.slane %v2887, 1
        %v2890 = vor.u32 %v2885, %v2889
        %v2892 = vshll.u32 %v2736, 16
        %v2894 = vrot.slane %v2892, 1
        %v2895 = vsel %vm1899, %v2890, %v2894
        %v2897 = vshrl.u32 %v2689, 16
        %v2899 = vshll.u32 %v2689, 16
        %v2901 = vrot.slane %v2899, 1
        %v2902 = vor.u32 %v2897, %v2901
        %v2904 = vshll.u32 %v2737, 16
        %v2906 = vrot.slane %v2904, 1
        %v2907 = vsel %vm1899, %v2902, %v2906
        %v2909 = vshrl.u32 %v2690, 16
        %v2911 = vshll.u32 %v2690, 16
        %v2913 = vrot.slane %v2911, 1
        %v2914 = vor.u32 %v2909, %v2913
        %v2916 = vshll.u32 %v2738, 16
        %v2918 = vrot.slane %v2916, 1
        %v2919 = vsel %vm1899, %v2914, %v2918
        %v2921 = vshrl.u32 %v2691, 16
        %v2923 = vshll.u32 %v2691, 16
        %v2925 = vrot.slane %v2923, 1
        %v2926 = vor.u32 %v2921, %v2925
        %v2928 = vshll.u32 %v2739, 16
        %v2930 = vrot.slane %v2928, 1
        %v2931 = vsel %vm1899, %v2926, %v2930
        %2932 = vrot.lane.b32.xlu0 %v2751, 64
        %v2933 = vpop.permute.xlu0 %2932
        %2934 = vrot.lane.b32.xlu0 %v2763, 64
        %v2935 = vpop.permute.xlu0 %2934
        %2936 = vrot.lane.b32.xlu0 %v2775, 64
        %v2937 = vpop.permute.xlu0 %2936
        %2938 = vrot.lane.b32.xlu0 %v2787, 64
        %v2939 = vpop.permute.xlu0 %2938
        %2940 = vrot.lane.b32.xlu0 %v2799, 64
        %v2941 = vpop.permute.xlu0 %2940
        %2942 = vrot.lane.b32.xlu0 %v2811, 64
        %v2943 = vpop.permute.xlu0 %2942
        %2944 = vrot.lane.b32.xlu0 %v2823, 64
        %v2945 = vpop.permute.xlu0 %2944
        %2946 = vrot.lane.b32.xlu0 %v2835, 64
        %v2947 = vpop.permute.xlu0 %2946
        %2948 = vrot.lane.b32.xlu0 %v2847, 64
        %v2949 = vpop.permute.xlu0 %2948
        %2950 = vrot.lane.b32.xlu0 %v2859, 64
        %v2951 = vpop.permute.xlu0 %2950
        %2952 = vrot.lane.b32.xlu0 %v2871, 64
        %v2953 = vpop.permute.xlu0 %2952
        %2954 = vrot.lane.b32.xlu0 %v2883, 64
        %v2955 = vpop.permute.xlu0 %2954
        %2956 = vrot.lane.b32.xlu0 %v2895, 64
        %v2957 = vpop.permute.xlu0 %2956
        %2958 = vrot.lane.b32.xlu0 %v2907, 64
        %v2959 = vpop.permute.xlu0 %2958
        %2960 = vrot.lane.b32.xlu0 %v2919, 64
        %v2961 = vpop.permute.xlu0 %2960
        %2962 = vrot.lane.b32.xlu0 %v2931, 64
        %v2963 = vpop.permute.xlu0 %2962
        %v2964 = vrot.slane %v2676, 1
        %v2965 = vrot.slane %v2724, 1
        %v2966 = vsel %vm2124, %v2964, %v2965
        %v2967 = vrot.slane %v2677, 1
        %v2968 = vrot.slane %v2725, 1
        %v2969 = vsel %vm2124, %v2967, %v2968
        %v2970 = vrot.slane %v2678, 1
        %v2971 = vrot.slane %v2726, 1
        %v2972 = vsel %vm2124, %v2970, %v2971
        %v2973 = vrot.slane %v2679, 1
        %v2974 = vrot.slane %v2727, 1
        %v2975 = vsel %vm2124, %v2973, %v2974
        %v2976 = vrot.slane %v2680, 1
        %v2977 = vrot.slane %v2728, 1
        %v2978 = vsel %vm2124, %v2976, %v2977
        %v2979 = vrot.slane %v2681, 1
        %v2980 = vrot.slane %v2729, 1
        %v2981 = vsel %vm2124, %v2979, %v2980
        %v2982 = vrot.slane %v2682, 1
        %v2983 = vrot.slane %v2730, 1
        %v2984 = vsel %vm2124, %v2982, %v2983
        %v2985 = vrot.slane %v2683, 1
        %v2986 = vrot.slane %v2731, 1
        %v2987 = vsel %vm2124, %v2985, %v2986
        %v2988 = vrot.slane %v2684, 1
        %v2989 = vrot.slane %v2732, 1
        %v2990 = vsel %vm2124, %v2988, %v2989
        %v2991 = vrot.slane %v2685, 1
        %v2992 = vrot.slane %v2733, 1
        %v2993 = vsel %vm2124, %v2991, %v2992
        %v2994 = vrot.slane %v2686, 1
        %v2995 = vrot.slane %v2734, 1
        %v2996 = vsel %vm2124, %v2994, %v2995
        %v2997 = vrot.slane %v2687, 1
        %v2998 = vrot.slane %v2735, 1
        %v2999 = vsel %vm2124, %v2997, %v2998
        %v3000 = vrot.slane %v2688, 1
        %v3001 = vrot.slane %v2736, 1
        %v3002 = vsel %vm2124, %v3000, %v3001
        %v3003 = vrot.slane %v2689, 1
        %v3004 = vrot.slane %v2737, 1
        %v3005 = vsel %vm2124, %v3003, %v3004
        %v3006 = vrot.slane %v2690, 1
        %v3007 = vrot.slane %v2738, 1
        %v3008 = vsel %vm2124, %v3006, %v3007
        %v3009 = vrot.slane %v2691, 1
        %v3010 = vrot.slane %v2739, 1
        %v3011 = vsel %vm2124, %v3009, %v3010
        %v3013 = vsel %vm472, %v2676, %v2933
        %v3016 = vsel %vm472, %v2677, %v2935
        %v3019 = vsel %vm472, %v2678, %v2937
        %v3022 = vsel %vm472, %v2679, %v2939
        %v3025 = vsel %vm472, %v2680, %v2941
        %v3028 = vsel %vm472, %v2681, %v2943
        %v3031 = vsel %vm472, %v2682, %v2945
        %v3034 = vsel %vm472, %v2683, %v2947
        %v3037 = vsel %vm472, %v2684, %v2949
        %v3040 = vsel %vm472, %v2685, %v2951
        %v3043 = vsel %vm472, %v2686, %v2953
        %v3046 = vsel %vm472, %v2687, %v2955
        %v3049 = vsel %vm472, %v2688, %v2957
        %v3052 = vsel %vm472, %v2689, %v2959
        %v3055 = vsel %vm472, %v2690, %v2961
        %v3058 = vsel %vm472, %v2691, %v2963
        %s3060 = scalar_lea.vmem %s4, 96
        %v3061 = vld [vmem:[%s3060] sm:$0xf]
        %v3062 = vld [vmem:[%s3060 + $0x4] sm:$0xf]
        %v3063 = vld [vmem:[%s3060 + $0x8] sm:$0xf]
        %v3064 = vld [vmem:[%s3060 + $0xc] sm:$0xf]
        %v3065 = vld [vmem:[%s3060 + $0x10] sm:$0xf]
        %v3066 = vld [vmem:[%s3060 + $0x14] sm:$0xf]
        %v3067 = vld [vmem:[%s3060 + $0x18] sm:$0xf]
        %v3068 = vld [vmem:[%s3060 + $0x1c] sm:$0xf]
        %v3069 = vld [vmem:[%s3060 + $0x20] sm:$0xf]
        %v3070 = vld [vmem:[%s3060 + $0x24] sm:$0xf]
        %v3071 = vld [vmem:[%s3060 + $0x28] sm:$0xf]
        %v3072 = vld [vmem:[%s3060 + $0x2c] sm:$0xf]
        %v3073 = vld [vmem:[%s3060 + $0x30] sm:$0xf]
        %v3074 = vld [vmem:[%s3060 + $0x34] sm:$0xf]
        %v3075 = vld [vmem:[%s3060 + $0x38] sm:$0xf]
        %v3076 = vld [vmem:[%s3060 + $0x3c] sm:$0xf]
        %v3077 = vld [vmem:[%s3060 + $0x40] sm:$0xf]
        %v3078 = vld [vmem:[%s3060 + $0x44] sm:$0xf]
        %v3079 = vld [vmem:[%s3060 + $0x48] sm:$0xf]
        %v3080 = vld [vmem:[%s3060 + $0x4c] sm:$0xf]
        %v3081 = vld [vmem:[%s3060 + $0x50] sm:$0xf]
        %v3082 = vld [vmem:[%s3060 + $0x54] sm:$0xf]
        %v3083 = vld [vmem:[%s3060 + $0x58] sm:$0xf]
        %v3084 = vld [vmem:[%s3060 + $0x5c] sm:$0xf]
        %v3109 = vunpack.c.l.b16 %v3061
        %v3110 = vunpack.c.l.b16 %v3062
        %v3111 = vunpack.c.l.b16 %v3063
        %v3112 = vunpack.c.l.b16 %v3064
        %v3113 = vunpack.c.l.b16 %v3065
        %v3114 = vunpack.c.l.b16 %v3066
        %v3115 = vunpack.c.l.b16 %v3067
        %v3116 = vunpack.c.l.b16 %v3068
        %v3117 = vunpack.c.l.b16 %v3069
        %v3118 = vunpack.c.l.b16 %v3070
        %v3119 = vunpack.c.l.b16 %v3071
        %v3120 = vunpack.c.l.b16 %v3072
        %v3121 = vunpack.c.l.b16 %v3073
        %v3122 = vunpack.c.l.b16 %v3074
        %v3123 = vunpack.c.l.b16 %v3075
        %v3124 = vunpack.c.l.b16 %v3076
        %v3125 = vunpack.c.l.b16 %v3077
        %v3126 = vunpack.c.l.b16 %v3078
        %v3127 = vunpack.c.l.b16 %v3079
        %v3128 = vunpack.c.l.b16 %v3080
        %v3129 = vunpack.c.l.b16 %v3081
        %v3130 = vunpack.c.l.b16 %v3082
        %v3131 = vunpack.c.l.b16 %v3083
        %v3132 = vunpack.c.l.b16 %v3084
        %v3133 = vpack.c.b16 %v3110, %v3109
        %v3134 = vpack.c.b16 %v3112, %v3111
        %v3135 = vpack.c.b16 %v3114, %v3113
        %v3136 = vpack.c.b16 %v3116, %v3115
        %v3137 = vpack.c.b16 %v3118, %v3117
        %v3138 = vpack.c.b16 %v3120, %v3119
        %v3139 = vpack.c.b16 %v3122, %v3121
        %v3140 = vpack.c.b16 %v3124, %v3123
        %v3141 = vpack.c.b16 %v3126, %v3125
        %v3142 = vpack.c.b16 %v3128, %v3127
        %v3143 = vpack.c.b16 %v3130, %v3129
        %v3144 = vpack.c.b16 %v3132, %v3131
        %v3158 = vsel %vm472, %v2966, 0
        %v3161 = vsel %vm472, %v2969, 0
        %v3164 = vsel %vm472, %v2972, 0
        %v3167 = vsel %vm472, %v2975, 0
        %v3170 = vsel %vm472, %v2978, 0
        %v3173 = vsel %vm472, %v2981, 0
        %v3176 = vsel %vm472, %v2984, 0
        %v3179 = vsel %vm472, %v2987, 0
        %v3182 = vsel %vm472, %v2990, 0
        %v3185 = vsel %vm472, %v2993, 0
        %v3188 = vsel %vm472, %v2996, 0
        %v3191 = vsel %vm472, %v2999, 0
        %v3194 = vsel %vm472, %v3002, 0
        %v3197 = vsel %vm472, %v3005, 0
        %v3200 = vsel %vm472, %v3008, 0
        %v3203 = vsel %vm472, %v3011, 0
        %3205 = vmatprep.subr.bf16.mxu0 0
        %3206 = vmatpush1.bf16.msra.mxu0 %v3133
        %3207 = vmatprep.subr.bf16.mxu0 0
        %3208 = vmatpush1.bf16.msra.mxu0 %v3134
        %3209 = vmatprep.subr.bf16.mxu0 0
        %3210 = vmatpush1.bf16.msra.mxu0 %v3135
        %3211 = vmatprep.subr.bf16.mxu0 0
        %3212 = vmatpush1.bf16.msra.mxu0 %v3136
        %3213 = vmatprep.subr.bf16.mxu0 0
        %3214 = vmatpush1.bf16.msra.mxu0 %v3137
        %3215 = vmatprep.subr.bf16.mxu0 0
        %3216 = vmatpush1.bf16.msra.mxu0 %v3138
        %3217 = vmatprep.subr.bf16.mxu0 0
        %3218 = vmatpush1.bf16.msra.mxu0 %v3139
        %3219 = vmatprep.subr.bf16.mxu0 0
        %3220 = vmatpush1.bf16.msra.mxu0 %v3140
        %3221 = vmatprep.subr.bf16.mxu0 0
        %3222 = vmatpush1.bf16.msra.mxu0 %v3141
        %3223 = vmatprep.subr.bf16.mxu0 0
        %3224 = vmatpush1.bf16.msra.mxu0 %v3142
        %3225 = vmatprep.subr.bf16.mxu0 0
        %3226 = vmatpush1.bf16.msra.mxu0 %v3143
        %3227 = vmatprep.subr.bf16.mxu0 0
        %3228 = vmatpush1.bf16.msra.mxu0 %v3144
        %3229 = vmatprep.subr.bf16.mxu0 0
        %3230 = vmatpush1.bf16.msra.mxu0 0
        %3231 = vmatprep.subr.bf16.mxu0 0
        %3232 = vmatpush1.bf16.msra.mxu0 0
        %3233 = vmatprep.subr.bf16.mxu0 0
        %3234 = vmatpush1.bf16.msra.mxu0 0
        %3235 = vmatprep.subr.bf16.mxu0 0
        %3236 = vmatpush1.bf16.msra.mxu0 0
        %3237 = vmatprep.mubr.bf16.mxu0 %v3158
        %3238 = vmatmul.mubr.bf16.gmra.mrb[0].mxu0 %v3013
        %v3239 = vpop.f32.mrb[0].mxu0
        %v3240 = vadd.f32 0.0, %v3239
        %v3241 = vpop.f32.mrb[0].mxu0
        %v3242 = vpop.f32.mrb[0].mxu0
        %v3243 = vadd.f32 0.0, %v3242
        %v3244 = vpop.f32.mrb[0].mxu0
        %3245 = vmatprep.mubr.bf16.mxu0 %v3161
        %3246 = vmatmul.mubr.bf16.gmra.mrb[0].mxu0 %v3016
        %v3247 = vpop.f32.mrb[0].mxu0
        %v3248 = vadd.f32 0.0, %v3247
        %v3249 = vpop.f32.mrb[0].mxu0
        %v3250 = vpop.f32.mrb[0].mxu0
        %v3251 = vadd.f32 0.0, %v3250
        %v3252 = vpop.f32.mrb[0].mxu0
        %3253 = vmatprep.mubr.bf16.mxu0 %v3164
        %3254 = vmatmul.mubr.bf16.gmra.mrb[0].mxu0 %v3019
        %v3255 = vpop.f32.mrb[0].mxu0
        %v3256 = vadd.f32 0.0, %v3255
        %v3257 = vpop.f32.mrb[0].mxu0
        %v3258 = vpop.f32.mrb[0].mxu0
        %v3259 = vadd.f32 0.0, %v3258
        %v3260 = vpop.f32.mrb[0].mxu0
        %3261 = vmatprep.mubr.bf16.mxu0 %v3167
        %3262 = vmatmul.mubr.bf16.gmra.mrb[0].mxu0 %v3022
        %v3263 = vpop.f32.mrb[0].mxu0
        %v3264 = vadd.f32 0.0, %v3263
        %v3265 = vpop.f32.mrb[0].mxu0
        %v3266 = vpop.f32.mrb[0].mxu0
        %v3267 = vadd.f32 0.0, %v3266
        %v3268 = vpop.f32.mrb[0].mxu0
        %3269 = vmatprep.mubr.bf16.mxu0 %v3170
        %3270 = vmatmul.mubr.bf16.gmra.mrb[0].mxu0 %v3025
        %v3271 = vpop.f32.mrb[0].mxu0
        %v3272 = vadd.f32 0.0, %v3271
        %v3273 = vpop.f32.mrb[0].mxu0
        %v3274 = vpop.f32.mrb[0].mxu0
        %v3275 = vadd.f32 0.0, %v3274
        %v3276 = vpop.f32.mrb[0].mxu0
        %3277 = vmatprep.mubr.bf16.mxu0 %v3173
        %3278 = vmatmul.mubr.bf16.gmra.mrb[0].mxu0 %v3028
        %v3279 = vpop.f32.mrb[0].mxu0
        %v3280 = vadd.f32 0.0, %v3279
        %v3281 = vpop.f32.mrb[0].mxu0
        %v3282 = vpop.f32.mrb[0].mxu0
        %v3283 = vadd.f32 0.0, %v3282
        %v3284 = vpop.f32.mrb[0].mxu0
        %3285 = vmatprep.mubr.bf16.mxu0 %v3176
        %3286 = vmatmul.mubr.bf16.gmra.mrb[0].mxu0 %v3031
        %v3287 = vpop.f32.mrb[0].mxu0
        %v3288 = vadd.f32 0.0, %v3287
        %v3289 = vpop.f32.mrb[0].mxu0
        %v3290 = vpop.f32.mrb[0].mxu0
        %v3291 = vadd.f32 0.0, %v3290
        %v3292 = vpop.f32.mrb[0].mxu0
        %3293 = vmatprep.mubr.bf16.mxu0 %v3179
        %3294 = vmatmul.mubr.bf16.gmra.mrb[0].mxu0 %v3034
        %v3295 = vpop.f32.mrb[0].mxu0
        %v3296 = vadd.f32 0.0, %v3295
        %v3297 = vpop.f32.mrb[0].mxu0
        %v3298 = vpop.f32.mrb[0].mxu0
        %v3299 = vadd.f32 0.0, %v3298
        %v3300 = vpop.f32.mrb[0].mxu0
        %3301 = vmatprep.mubr.bf16.mxu0 %v3182
        %3302 = vmatmul.mubr.bf16.gmra.mrb[0].mxu0 %v3037
        %v3303 = vpop.f32.mrb[0].mxu0
        %v3304 = vadd.f32 0.0, %v3303
        %v3305 = vpop.f32.mrb[0].mxu0
        %v3306 = vpop.f32.mrb[0].mxu0
        %v3307 = vadd.f32 0.0, %v3306
        %v3308 = vpop.f32.mrb[0].mxu0
        %3309 = vmatprep.mubr.bf16.mxu0 %v3185
        %3310 = vmatmul.mubr.bf16.gmra.mrb[0].mxu0 %v3040
        %v3311 = vpop.f32.mrb[0].mxu0
        %v3312 = vadd.f32 0.0, %v3311
        %v3313 = vpop.f32.mrb[0].mxu0
        %v3314 = vpop.f32.mrb[0].mxu0
        %v3315 = vadd.f32 0.0, %v3314
        %v3316 = vpop.f32.mrb[0].mxu0
        %3317 = vmatprep.mubr.bf16.mxu0 %v3188
        %3318 = vmatmul.mubr.bf16.gmra.mrb[0].mxu0 %v3043
        %v3319 = vpop.f32.mrb[0].mxu0
        %v3320 = vadd.f32 0.0, %v3319
        %v3321 = vpop.f32.mrb[0].mxu0
        %v3322 = vpop.f32.mrb[0].mxu0
        %v3323 = vadd.f32 0.0, %v3322
        %v3324 = vpop.f32.mrb[0].mxu0
        %3325 = vmatprep.mubr.bf16.mxu0 %v3191
        %3326 = vmatmul.mubr.bf16.gmra.mrb[0].mxu0 %v3046
        %v3327 = vpop.f32.mrb[0].mxu0
        %v3328 = vadd.f32 0.0, %v3327
        %v3329 = vpop.f32.mrb[0].mxu0
        %v3330 = vpop.f32.mrb[0].mxu0
        %v3331 = vadd.f32 0.0, %v3330
        %v3332 = vpop.f32.mrb[0].mxu0
        %3333 = vmatprep.mubr.bf16.mxu0 %v3194
        %3334 = vmatmul.mubr.bf16.gmra.mrb[0].mxu0 %v3049
        %v3335 = vpop.f32.mrb[0].mxu0
        %v3336 = vadd.f32 0.0, %v3335
        %v3337 = vpop.f32.mrb[0].mxu0
        %v3338 = vpop.f32.mrb[0].mxu0
        %v3339 = vadd.f32 0.0, %v3338
        %v3340 = vpop.f32.mrb[0].mxu0
        %3341 = vmatprep.mubr.bf16.mxu0 %v3197
        %3342 = vmatmul.mubr.bf16.gmra.mrb[0].mxu0 %v3052
        %v3343 = vpop.f32.mrb[0].mxu0
        %v3344 = vadd.f32 0.0, %v3343
        %v3345 = vpop.f32.mrb[0].mxu0
        %v3346 = vpop.f32.mrb[0].mxu0
        %v3347 = vadd.f32 0.0, %v3346
        %v3348 = vpop.f32.mrb[0].mxu0
        %3349 = vmatprep.mubr.bf16.mxu0 %v3200
        %3350 = vmatmul.mubr.bf16.gmra.mrb[0].mxu0 %v3055
        %v3351 = vpop.f32.mrb[0].mxu0
        %v3352 = vadd.f32 0.0, %v3351
        %v3353 = vpop.f32.mrb[0].mxu0
        %v3354 = vpop.f32.mrb[0].mxu0
        %v3355 = vadd.f32 0.0, %v3354
        %v3356 = vpop.f32.mrb[0].mxu0
        %3357 = vmatprep.mubr.bf16.mxu0 %v3203
        %3358 = vmatmul.mubr.bf16.gmra.mrb[0].mxu0 %v3058
        %v3359 = vpop.f32.mrb[0].mxu0
        %v3360 = vadd.f32 0.0, %v3359
        %v3361 = vpop.f32.mrb[0].mxu0
        %v3362 = vpop.f32.mrb[0].mxu0
        %v3363 = vadd.f32 0.0, %v3362
        %v3364 = vpop.f32.mrb[0].mxu0
        %3365 = vdwg.mxu0
        %v3366 = vld [vmem:[#allocation4] sm:$0xff]
        %v3367 = vld [vmem:[#allocation4 + $0x8] sm:$0xff]
        %v3368 = vld [vmem:[#allocation4 + $0x10] sm:$0xff]
        %v3369 = vld [vmem:[#allocation4 + $0x18] sm:$0xff]
        %v3370 = vld [vmem:[#allocation4 + $0x20] sm:$0xff]
        %v3371 = vld [vmem:[#allocation4 + $0x28] sm:$0xff]
        %v3372 = vld [vmem:[#allocation4 + $0x30] sm:$0xff]
        %v3373 = vld [vmem:[#allocation4 + $0x38] sm:$0xff]
        %v3374 = vld [vmem:[#allocation4 + $0x40] sm:$0xff]
        %v3375 = vld [vmem:[#allocation4 + $0x48] sm:$0xff]
        %v3376 = vld [vmem:[#allocation4 + $0x50] sm:$0xff]
        %v3377 = vld [vmem:[#allocation4 + $0x58] sm:$0xff]
        %v3378 = vld [vmem:[#allocation4 + $0x60] sm:$0xff]
        %v3379 = vld [vmem:[#allocation4 + $0x68] sm:$0xff]
        %v3380 = vld [vmem:[#allocation4 + $0x70] sm:$0xff]
        %v3381 = vld [vmem:[#allocation4 + $0x78] sm:$0xff]
        %v3382 = vld [vmem:[#allocation4 + $0x80] sm:$0xff]
        %v3383 = vld [vmem:[#allocation4 + $0x88] sm:$0xff]
        %v3384 = vld [vmem:[#allocation4 + $0x90] sm:$0xff]
        %v3385 = vld [vmem:[#allocation4 + $0x98] sm:$0xff]
        %v3386 = vld [vmem:[#allocation4 + $0xa0] sm:$0xff]
        %v3387 = vld [vmem:[#allocation4 + $0xa8] sm:$0xff]
        %v3388 = vld [vmem:[#allocation4 + $0xb0] sm:$0xff]
        %v3389 = vld [vmem:[#allocation4 + $0xb8] sm:$0xff]
        %v3390 = vld [vmem:[#allocation4 + $0xc0] sm:$0xff]
        %v3391 = vld [vmem:[#allocation4 + $0xc8] sm:$0xff]
        %v3392 = vld [vmem:[#allocation4 + $0xd0] sm:$0xff]
        %v3393 = vld [vmem:[#allocation4 + $0xd8] sm:$0xff]
        %v3394 = vld [vmem:[#allocation4 + $0xe0] sm:$0xff]
        %v3395 = vld [vmem:[#allocation4 + $0xe8] sm:$0xff]
        %v3396 = vld [vmem:[#allocation4 + $0xf0] sm:$0xff]
        %v3397 = vld [vmem:[#allocation4 + $0xf8] sm:$0xff]
        %v3398 = vadd.f32 %v3366, %v3240
        %v3399 = vadd.f32 %v3367, %v3243
        %v3400 = vadd.f32 %v3368, %v3248
        %v3401 = vadd.f32 %v3369, %v3251
        %v3402 = vadd.f32 %v3370, %v3256
        %v3403 = vadd.f32 %v3371, %v3259
        %v3404 = vadd.f32 %v3372, %v3264
        %v3405 = vadd.f32 %v3373, %v3267
        %v3406 = vadd.f32 %v3374, %v3272
        %v3407 = vadd.f32 %v3375, %v3275
        %v3408 = vadd.f32 %v3376, %v3280
        %v3409 = vadd.f32 %v3377, %v3283
        %v3410 = vadd.f32 %v3378, %v3288
        %v3411 = vadd.f32 %v3379, %v3291
        %v3412 = vadd.f32 %v3380, %v3296
        %v3413 = vadd.f32 %v3381, %v3299
        %v3414 = vadd.f32 %v3382, %v3304
        %v3415 = vadd.f32 %v3383, %v3307
        %v3416 = vadd.f32 %v3384, %v3312
        %v3417 = vadd.f32 %v3385, %v3315
        %v3418 = vadd.f32 %v3386, %v3320
        %v3419 = vadd.f32 %v3387, %v3323
        %v3420 = vadd.f32 %v3388, %v3328
        %v3421 = vadd.f32 %v3389, %v3331
        %v3422 = vadd.f32 %v3390, %v3336
        %v3423 = vadd.f32 %v3391, %v3339
        %v3424 = vadd.f32 %v3392, %v3344
        %v3425 = vadd.f32 %v3393, %v3347
        %v3426 = vadd.f32 %v3394, %v3352
        %v3427 = vadd.f32 %v3395, %v3355
        %v3428 = vadd.f32 %v3396, %v3360
        %v3429 = vadd.f32 %v3397, %v3363
        %3430 = vst [vmem:[#allocation4] sm:$0xff] %v3398
        %3431 = vst [vmem:[#allocation4 + $0x8] sm:$0xff] %v3399
        %3432 = vst [vmem:[#allocation4 + $0x10] sm:$0xff] %v3400
        %3433 = vst [vmem:[#allocation4 + $0x18] sm:$0xff] %v3401
        %3434 = vst [vmem:[#allocation4 + $0x20] sm:$0xff] %v3402
        %3435 = vst [vmem:[#allocation4 + $0x28] sm:$0xff] %v3403
        %3436 = vst [vmem:[#allocation4 + $0x30] sm:$0xff] %v3404
        %3437 = vst [vmem:[#allocation4 + $0x38] sm:$0xff] %v3405
        %3438 = vst [vmem:[#allocation4 + $0x40] sm:$0xff] %v3406
        %3439 = vst [vmem:[#allocation4 + $0x48] sm:$0xff] %v3407
        %3440 = vst [vmem:[#allocation4 + $0x50] sm:$0xff] %v3408
        %3441 = vst [vmem:[#allocation4 + $0x58] sm:$0xff] %v3409
        %3442 = vst [vmem:[#allocation4 + $0x60] sm:$0xff] %v3410
        %3443 = vst [vmem:[#allocation4 + $0x68] sm:$0xff] %v3411
        %3444 = vst [vmem:[#allocation4 + $0x70] sm:$0xff] %v3412
        %3445 = vst [vmem:[#allocation4 + $0x78] sm:$0xff] %v3413
        %3446 = vst [vmem:[#allocation4 + $0x80] sm:$0xff] %v3414
        %3447 = vst [vmem:[#allocation4 + $0x88] sm:$0xff] %v3415
        %3448 = vst [vmem:[#allocation4 + $0x90] sm:$0xff] %v3416
        %3449 = vst [vmem:[#allocation4 + $0x98] sm:$0xff] %v3417
        %3450 = vst [vmem:[#allocation4 + $0xa0] sm:$0xff] %v3418
        %3451 = vst [vmem:[#allocation4 + $0xa8] sm:$0xff] %v3419
        %3452 = vst [vmem:[#allocation4 + $0xb0] sm:$0xff] %v3420
        %3453 = vst [vmem:[#allocation4 + $0xb8] sm:$0xff] %v3421
        %3454 = vst [vmem:[#allocation4 + $0xc0] sm:$0xff] %v3422
        %3455 = vst [vmem:[#allocation4 + $0xc8] sm:$0xff] %v3423
        %3456 = vst [vmem:[#allocation4 + $0xd0] sm:$0xff] %v3424
        %3457 = vst [vmem:[#allocation4 + $0xd8] sm:$0xff] %v3425
        %3458 = vst [vmem:[#allocation4 + $0xe0] sm:$0xff] %v3426
        %3459 = vst [vmem:[#allocation4 + $0xe8] sm:$0xff] %v3427
        %3460 = vst [vmem:[#allocation4 + $0xf0] sm:$0xff] %v3428
        %3461 = vst [vmem:[#allocation4 + $0xf8] sm:$0xff] %v3429
        %s3462 = scalar_lea.vmem [#allocation2], 24
        %v3463 = vld [vmem:[%s3462] sm:$0xf]
        %v3464 = vld [vmem:[%s3462 + $0x4] sm:$0xf]
        %v3465 = vld [vmem:[%s3462 + $0x8] sm:$0x1]
        %v3466 = vld [vmem:[%s3462 + $0xc] sm:$0xf]
        %v3467 = vld [vmem:[%s3462 + $0x10] sm:$0xf]
        %v3468 = vld [vmem:[%s3462 + $0x14] sm:$0x1]
        %v3469 = vld [vmem:[%s3462 + $0x18] sm:$0xf]
        %v3470 = vld [vmem:[%s3462 + $0x1c] sm:$0xf]
        %v3471 = vld [vmem:[%s3462 + $0x20] sm:$0x1]
        %v3472 = vld [vmem:[%s3462 + $0x24] sm:$0xf]
        %v3473 = vld [vmem:[%s3462 + $0x28] sm:$0xf]
        %v3474 = vld [vmem:[%s3462 + $0x2c] sm:$0x1]
        %v3475 = vld [vmem:[%s3462 + $0x30] sm:$0xf]
        %v3476 = vld [vmem:[%s3462 + $0x34] sm:$0xf]
        %v3477 = vld [vmem:[%s3462 + $0x38] sm:$0x1]
        %v3478 = vld [vmem:[%s3462 + $0x3c] sm:$0xf]
        %v3479 = vld [vmem:[%s3462 + $0x40] sm:$0xf]
        %v3480 = vld [vmem:[%s3462 + $0x44] sm:$0x1]
        %v3481 = vld [vmem:[%s3462 + $0x48] sm:$0xf]
        %v3482 = vld [vmem:[%s3462 + $0x4c] sm:$0xf]
        %v3483 = vld [vmem:[%s3462 + $0x50] sm:$0x1]
        %v3484 = vld [vmem:[%s3462 + $0x54] sm:$0xf]
        %v3485 = vld [vmem:[%s3462 + $0x58] sm:$0xf]
        %v3486 = vld [vmem:[%s3462 + $0x5c] sm:$0x1]
        %v3487 = vld [vmem:[%s3462 + $0x60] sm:$0xf]
        %v3488 = vld [vmem:[%s3462 + $0x64] sm:$0xf]
        %v3489 = vld [vmem:[%s3462 + $0x68] sm:$0x1]
        %v3490 = vld [vmem:[%s3462 + $0x6c] sm:$0xf]
        %v3491 = vld [vmem:[%s3462 + $0x70] sm:$0xf]
        %v3492 = vld [vmem:[%s3462 + $0x74] sm:$0x1]
        %v3493 = vld [vmem:[%s3462 + $0x78] sm:$0xf]
        %v3494 = vld [vmem:[%s3462 + $0x7c] sm:$0xf]
        %v3495 = vld [vmem:[%s3462 + $0x80] sm:$0x1]
        %v3496 = vld [vmem:[%s3462 + $0x84] sm:$0xf]
        %v3497 = vld [vmem:[%s3462 + $0x88] sm:$0xf]
        %v3498 = vld [vmem:[%s3462 + $0x8c] sm:$0x1]
        %v3499 = vld [vmem:[%s3462 + $0x90] sm:$0xf]
        %v3500 = vld [vmem:[%s3462 + $0x94] sm:$0xf]
        %v3501 = vld [vmem:[%s3462 + $0x98] sm:$0x1]
        %v3502 = vld [vmem:[%s3462 + $0x9c] sm:$0xf]
        %v3503 = vld [vmem:[%s3462 + $0xa0] sm:$0xf]
        %v3504 = vld [vmem:[%s3462 + $0xa4] sm:$0x1]
        %v3505 = vld [vmem:[%s3462 + $0xa8] sm:$0xf]
        %v3506 = vld [vmem:[%s3462 + $0xac] sm:$0xf]
        %v3507 = vld [vmem:[%s3462 + $0xb0] sm:$0x1]
        %v3508 = vld [vmem:[%s3462 + $0xb4] sm:$0xf]
        %v3509 = vld [vmem:[%s3462 + $0xb8] sm:$0xf]
        %v3510 = vld [vmem:[%s3462 + $0xbc] sm:$0x1]
        %v3543 = vunpack.c.l.b16 %v3463
        %v3544 = vunpack.c.l.b16 %v3464
        %v3545 = vunpack.c.l.b16 %v3466
        %v3546 = vunpack.c.l.b16 %v3467
        %v3547 = vunpack.c.l.b16 %v3469
        %v3548 = vunpack.c.l.b16 %v3470
        %v3549 = vunpack.c.l.b16 %v3472
        %v3550 = vunpack.c.l.b16 %v3473
        %v3551 = vunpack.c.l.b16 %v3475
        %v3552 = vunpack.c.l.b16 %v3476
        %v3553 = vunpack.c.l.b16 %v3478
        %v3554 = vunpack.c.l.b16 %v3479
        %v3555 = vunpack.c.l.b16 %v3481
        %v3556 = vunpack.c.l.b16 %v3482
        %v3557 = vunpack.c.l.b16 %v3484
        %v3558 = vunpack.c.l.b16 %v3485
        %v3559 = vunpack.c.l.b16 %v3487
        %v3560 = vunpack.c.l.b16 %v3488
        %v3561 = vunpack.c.l.b16 %v3490
        %v3562 = vunpack.c.l.b16 %v3491
        %v3563 = vunpack.c.l.b16 %v3493
        %v3564 = vunpack.c.l.b16 %v3494
        %v3565 = vunpack.c.l.b16 %v3496
        %v3566 = vunpack.c.l.b16 %v3497
        %v3567 = vunpack.c.l.b16 %v3499
        %v3568 = vunpack.c.l.b16 %v3500
        %v3569 = vunpack.c.l.b16 %v3502
        %v3570 = vunpack.c.l.b16 %v3503
        %v3571 = vunpack.c.l.b16 %v3505
        %v3572 = vunpack.c.l.b16 %v3506
        %v3573 = vunpack.c.l.b16 %v3508
        %v3574 = vunpack.c.l.b16 %v3509
        %v3575 = vpack.c.b16 %v3544, %v3543
        %v3576 = vpack.c.b16 %v3546, %v3545
        %v3577 = vpack.c.b16 %v3548, %v3547
        %v3578 = vpack.c.b16 %v3550, %v3549
        %v3579 = vpack.c.b16 %v3552, %v3551
        %v3580 = vpack.c.b16 %v3554, %v3553
        %v3581 = vpack.c.b16 %v3556, %v3555
        %v3582 = vpack.c.b16 %v3558, %v3557
        %v3583 = vpack.c.b16 %v3560, %v3559
        %v3584 = vpack.c.b16 %v3562, %v3561
        %v3585 = vpack.c.b16 %v3564, %v3563
        %v3586 = vpack.c.b16 %v3566, %v3565
        %v3587 = vpack.c.b16 %v3568, %v3567
        %v3588 = vpack.c.b16 %v3570, %v3569
        %v3589 = vpack.c.b16 %v3572, %v3571
        %v3590 = vpack.c.b16 %v3574, %v3573
        %v3607 = vunpack.c.l.b16 %v3465
        %v3608 = vunpack.c.l.b16 %v3468
        %v3609 = vunpack.c.l.b16 %v3471
        %v3610 = vunpack.c.l.b16 %v3474
        %v3611 = vunpack.c.l.b16 %v3477
        %v3612 = vunpack.c.l.b16 %v3480
        %v3613 = vunpack.c.l.b16 %v3483
        %v3614 = vunpack.c.l.b16 %v3486
        %v3615 = vunpack.c.l.b16 %v3489
        %v3616 = vunpack.c.l.b16 %v3492
        %v3617 = vunpack.c.l.b16 %v3495
        %v3618 = vunpack.c.l.b16 %v3498
        %v3619 = vunpack.c.l.b16 %v3501
        %v3620 = vunpack.c.l.b16 %v3504
        %v3621 = vunpack.c.l.b16 %v3507
        %v3622 = vunpack.c.l.b16 %v3510
        %v3623 = vpack.c.b16 %v3607, %v3607
        %v3624 = vpack.c.b16 %v3608, %v3608
        %v3625 = vpack.c.b16 %v3609, %v3609
        %v3626 = vpack.c.b16 %v3610, %v3610
        %v3627 = vpack.c.b16 %v3611, %v3611
        %v3628 = vpack.c.b16 %v3612, %v3612
        %v3629 = vpack.c.b16 %v3613, %v3613
        %v3630 = vpack.c.b16 %v3614, %v3614
        %v3631 = vpack.c.b16 %v3615, %v3615
        %v3632 = vpack.c.b16 %v3616, %v3616
        %v3633 = vpack.c.b16 %v3617, %v3617
        %v3634 = vpack.c.b16 %v3618, %v3618
        %v3635 = vpack.c.b16 %v3619, %v3619
        %v3636 = vpack.c.b16 %v3620, %v3620
        %v3637 = vpack.c.b16 %v3621, %v3621
        %v3638 = vpack.c.b16 %v3622, %v3622
        %v3640 = vshrl.u32 %v3575, 16
        %v3642 = vshll.u32 %v3575, 16
        %v3644 = vrot.slane %v3642, 1
        %v3645 = vor.u32 %v3640, %v3644
        %v3647 = vshll.u32 %v3623, 16
        %v3649 = vrot.slane %v3647, 1
        %v3650 = vsel %vm1899, %v3645, %v3649
        %v3652 = vshrl.u32 %v3576, 16
        %v3654 = vshll.u32 %v3576, 16
        %v3656 = vrot.slane %v3654, 1
        %v3657 = vor.u32 %v3652, %v3656
        %v3659 = vshll.u32 %v3624, 16
        %v3661 = vrot.slane %v3659, 1
        %v3662 = vsel %vm1899, %v3657, %v3661
        %v3664 = vshrl.u32 %v3577, 16
        %v3666 = vshll.u32 %v3577, 16
        %v3668 = vrot.slane %v3666, 1
        %v3669 = vor.u32 %v3664, %v3668
        %v3671 = vshll.u32 %v3625, 16
        %v3673 = vrot.slane %v3671, 1
        %v3674 = vsel %vm1899, %v3669, %v3673
        %v3676 = vshrl.u32 %v3578, 16
        %v3678 = vshll.u32 %v3578, 16
        %v3680 = vrot.slane %v3678, 1
        %v3681 = vor.u32 %v3676, %v3680
        %v3683 = vshll.u32 %v3626, 16
        %v3685 = vrot.slane %v3683, 1
        %v3686 = vsel %vm1899, %v3681, %v3685
        %v3688 = vshrl.u32 %v3579, 16
        %v3690 = vshll.u32 %v3579, 16
        %v3692 = vrot.slane %v3690, 1
        %v3693 = vor.u32 %v3688, %v3692
        %v3695 = vshll.u32 %v3627, 16
        %v3697 = vrot.slane %v3695, 1
        %v3698 = vsel %vm1899, %v3693, %v3697
        %v3700 = vshrl.u32 %v3580, 16
        %v3702 = vshll.u32 %v3580, 16
        %v3704 = vrot.slane %v3702, 1
        %v3705 = vor.u32 %v3700, %v3704
        %v3707 = vshll.u32 %v3628, 16
        %v3709 = vrot.slane %v3707, 1
        %v3710 = vsel %vm1899, %v3705, %v3709
        %v3712 = vshrl.u32 %v3581, 16
        %v3714 = vshll.u32 %v3581, 16
        %v3716 = vrot.slane %v3714, 1
        %v3717 = vor.u32 %v3712, %v3716
        %v3719 = vshll.u32 %v3629, 16
        %v3721 = vrot.slane %v3719, 1
        %v3722 = vsel %vm1899, %v3717, %v3721
        %v3724 = vshrl.u32 %v3582, 16
        %v3726 = vshll.u32 %v3582, 16
        %v3728 = vrot.slane %v3726, 1
        %v3729 = vor.u32 %v3724, %v3728
        %v3731 = vshll.u32 %v3630, 16
        %v3733 = vrot.slane %v3731, 1
        %v3734 = vsel %vm1899, %v3729, %v3733
        %v3736 = vshrl.u32 %v3583, 16
        %v3738 = vshll.u32 %v3583, 16
        %v3740 = vrot.slane %v3738, 1
        %v3741 = vor.u32 %v3736, %v3740
        %v3743 = vshll.u32 %v3631, 16
        %v3745 = vrot.slane %v3743, 1
        %v3746 = vsel %vm1899, %v3741, %v3745
        %v3748 = vshrl.u32 %v3584, 16
        %v3750 = vshll.u32 %v3584, 16
        %v3752 = vrot.slane %v3750, 1
        %v3753 = vor.u32 %v3748, %v3752
        %v3755 = vshll.u32 %v3632, 16
        %v3757 = vrot.slane %v3755, 1
        %v3758 = vsel %vm1899, %v3753, %v3757
        %v3760 = vshrl.u32 %v3585, 16
        %v3762 = vshll.u32 %v3585, 16
        %v3764 = vrot.slane %v3762, 1
        %v3765 = vor.u32 %v3760, %v3764
        %v3767 = vshll.u32 %v3633, 16
        %v3769 = vrot.slane %v3767, 1
        %v3770 = vsel %vm1899, %v3765, %v3769
        %v3772 = vshrl.u32 %v3586, 16
        %v3774 = vshll.u32 %v3586, 16
        %v3776 = vrot.slane %v3774, 1
        %v3777 = vor.u32 %v3772, %v3776
        %v3779 = vshll.u32 %v3634, 16
        %v3781 = vrot.slane %v3779, 1
        %v3782 = vsel %vm1899, %v3777, %v3781
        %v3784 = vshrl.u32 %v3587, 16
        %v3786 = vshll.u32 %v3587, 16
        %v3788 = vrot.slane %v3786, 1
        %v3789 = vor.u32 %v3784, %v3788
        %v3791 = vshll.u32 %v3635, 16
        %v3793 = vrot.slane %v3791, 1
        %v3794 = vsel %vm1899, %v3789, %v3793
        %v3796 = vshrl.u32 %v3588, 16
        %v3798 = vshll.u32 %v3588, 16
        %v3800 = vrot.slane %v3798, 1
        %v3801 = vor.u32 %v3796, %v3800
        %v3803 = vshll.u32 %v3636, 16
        %v3805 = vrot.slane %v3803, 1
        %v3806 = vsel %vm1899, %v3801, %v3805
        %v3808 = vshrl.u32 %v3589, 16
        %v3810 = vshll.u32 %v3589, 16
        %v3812 = vrot.slane %v3810, 1
        %v3813 = vor.u32 %v3808, %v3812
        %v3815 = vshll.u32 %v3637, 16
        %v3817 = vrot.slane %v3815, 1
        %v3818 = vsel %vm1899, %v3813, %v3817
        %v3820 = vshrl.u32 %v3590, 16
        %v3822 = vshll.u32 %v3590, 16
        %v3824 = vrot.slane %v3822, 1
        %v3825 = vor.u32 %v3820, %v3824
        %v3827 = vshll.u32 %v3638, 16
        %v3829 = vrot.slane %v3827, 1
        %v3830 = vsel %vm1899, %v3825, %v3829
        %3831 = vrot.lane.b32.xlu0 %v3650, 64
        %v3832 = vpop.permute.xlu0 %3831
        %3833 = vrot.lane.b32.xlu0 %v3662, 64
        %v3834 = vpop.permute.xlu0 %3833
        %3835 = vrot.lane.b32.xlu0 %v3674, 64
        %v3836 = vpop.permute.xlu0 %3835
        %3837 = vrot.lane.b32.xlu0 %v3686, 64
        %v3838 = vpop.permute.xlu0 %3837
        %3839 = vrot.lane.b32.xlu0 %v3698, 64
        %v3840 = vpop.permute.xlu0 %3839
        %3841 = vrot.lane.b32.xlu0 %v3710, 64
        %v3842 = vpop.permute.xlu0 %3841
        %3843 = vrot.lane.b32.xlu0 %v3722, 64
        %v3844 = vpop.permute.xlu0 %3843
        %3845 = vrot.lane.b32.xlu0 %v3734, 64
        %v3846 = vpop.permute.xlu0 %3845
        %3847 = vrot.lane.b32.xlu0 %v3746, 64
        %v3848 = vpop.permute.xlu0 %3847
        %3849 = vrot.lane.b32.xlu0 %v3758, 64
        %v3850 = vpop.permute.xlu0 %3849
        %3851 = vrot.lane.b32.xlu0 %v3770, 64
        %v3852 = vpop.permute.xlu0 %3851
        %3853 = vrot.lane.b32.xlu0 %v3782, 64
        %v3854 = vpop.permute.xlu0 %3853
        %3855 = vrot.lane.b32.xlu0 %v3794, 64
        %v3856 = vpop.permute.xlu0 %3855
        %3857 = vrot.lane.b32.xlu0 %v3806, 64
        %v3858 = vpop.permute.xlu0 %3857
        %3859 = vrot.lane.b32.xlu0 %v3818, 64
        %v3860 = vpop.permute.xlu0 %3859
        %3861 = vrot.lane.b32.xlu0 %v3830, 64
        %v3862 = vpop.permute.xlu0 %3861
        %v3863 = vrot.slane %v3575, 1
        %v3864 = vrot.slane %v3623, 1
        %v3865 = vsel %vm2124, %v3863, %v3864
        %v3866 = vrot.slane %v3576, 1
        %v3867 = vrot.slane %v3624, 1
        %v3868 = vsel %vm2124, %v3866, %v3867
        %v3869 = vrot.slane %v3577, 1
        %v3870 = vrot.slane %v3625, 1
        %v3871 = vsel %vm2124, %v3869, %v3870
        %v3872 = vrot.slane %v3578, 1
        %v3873 = vrot.slane %v3626, 1
        %v3874 = vsel %vm2124, %v3872, %v3873
        %v3875 = vrot.slane %v3579, 1
        %v3876 = vrot.slane %v3627, 1
        %v3877 = vsel %vm2124, %v3875, %v3876
        %v3878 = vrot.slane %v3580, 1
        %v3879 = vrot.slane %v3628, 1
        %v3880 = vsel %vm2124, %v3878, %v3879
        %v3881 = vrot.slane %v3581, 1
        %v3882 = vrot.slane %v3629, 1
        %v3883 = vsel %vm2124, %v3881, %v3882
        %v3884 = vrot.slane %v3582, 1
        %v3885 = vrot.slane %v3630, 1
        %v3886 = vsel %vm2124, %v3884, %v3885
        %v3887 = vrot.slane %v3583, 1
        %v3888 = vrot.slane %v3631, 1
        %v3889 = vsel %vm2124, %v3887, %v3888
        %v3890 = vrot.slane %v3584, 1
        %v3891 = vrot.slane %v3632, 1
        %v3892 = vsel %vm2124, %v3890, %v3891
        %v3893 = vrot.slane %v3585, 1
        %v3894 = vrot.slane %v3633, 1
        %v3895 = vsel %vm2124, %v3893, %v3894
        %v3896 = vrot.slane %v3586, 1
        %v3897 = vrot.slane %v3634, 1
        %v3898 = vsel %vm2124, %v3896, %v3897
        %v3899 = vrot.slane %v3587, 1
        %v3900 = vrot.slane %v3635, 1
        %v3901 = vsel %vm2124, %v3899, %v3900
        %v3902 = vrot.slane %v3588, 1
        %v3903 = vrot.slane %v3636, 1
        %v3904 = vsel %vm2124, %v3902, %v3903
        %v3905 = vrot.slane %v3589, 1
        %v3906 = vrot.slane %v3637, 1
        %v3907 = vsel %vm2124, %v3905, %v3906
        %v3908 = vrot.slane %v3590, 1
        %v3909 = vrot.slane %v3638, 1
        %v3910 = vsel %vm2124, %v3908, %v3909
        %v3912 = vsel %vm472, %v3575, %v3832
        %v3915 = vsel %vm472, %v3576, %v3834
        %v3918 = vsel %vm472, %v3577, %v3836
        %v3921 = vsel %vm472, %v3578, %v3838
        %v3924 = vsel %vm472, %v3579, %v3840
        %v3927 = vsel %vm472, %v3580, %v3842
        %v3930 = vsel %vm472, %v3581, %v3844
        %v3933 = vsel %vm472, %v3582, %v3846
        %v3936 = vsel %vm472, %v3583, %v3848
        %v3939 = vsel %vm472, %v3584, %v3850
        %v3942 = vsel %vm472, %v3585, %v3852
        %v3945 = vsel %vm472, %v3586, %v3854
        %v3948 = vsel %vm472, %v3587, %v3856
        %v3951 = vsel %vm472, %v3588, %v3858
        %v3954 = vsel %vm472, %v3589, %v3860
        %v3957 = vsel %vm472, %v3590, %v3862
        %s3959 = scalar_lea.vmem %s4, 192
        %v3960 = vld [vmem:[%s3959] sm:$0xf]
        %v3961 = vld [vmem:[%s3959 + $0x4] sm:$0xf]
        %v3962 = vld [vmem:[%s3959 + $0x8] sm:$0xf]
        %v3963 = vld [vmem:[%s3959 + $0xc] sm:$0xf]
        %v3964 = vld [vmem:[%s3959 + $0x10] sm:$0xf]
        %v3965 = vld [vmem:[%s3959 + $0x14] sm:$0xf]
        %v3966 = vld [vmem:[%s3959 + $0x18] sm:$0xf]
        %v3967 = vld [vmem:[%s3959 + $0x1c] sm:$0xf]
        %v3968 = vld [vmem:[%s3959 + $0x20] sm:$0xf]
        %v3969 = vld [vmem:[%s3959 + $0x24] sm:$0xf]
        %v3970 = vld [vmem:[%s3959 + $0x28] sm:$0xf]
        %v3971 = vld [vmem:[%s3959 + $0x2c] sm:$0xf]
        %v3972 = vld [vmem:[%s3959 + $0x30] sm:$0xf]
        %v3973 = vld [vmem:[%s3959 + $0x34] sm:$0xf]
        %v3974 = vld [vmem:[%s3959 + $0x38] sm:$0xf]
        %v3975 = vld [vmem:[%s3959 + $0x3c] sm:$0xf]
        %v3976 = vld [vmem:[%s3959 + $0x40] sm:$0xf]
        %v3977 = vld [vmem:[%s3959 + $0x44] sm:$0xf]
        %v3978 = vld [vmem:[%s3959 + $0x48] sm:$0xf]
        %v3979 = vld [vmem:[%s3959 + $0x4c] sm:$0xf]
        %v3980 = vld [vmem:[%s3959 + $0x50] sm:$0xf]
        %v3981 = vld [vmem:[%s3959 + $0x54] sm:$0xf]
        %v3982 = vld [vmem:[%s3959 + $0x58] sm:$0xf]
        %v3983 = vld [vmem:[%s3959 + $0x5c] sm:$0xf]
        %v4008 = vunpack.c.l.b16 %v3960
        %v4009 = vunpack.c.l.b16 %v3961
        %v4010 = vunpack.c.l.b16 %v3962
        %v4011 = vunpack.c.l.b16 %v3963
        %v4012 = vunpack.c.l.b16 %v3964
        %v4013 = vunpack.c.l.b16 %v3965
        %v4014 = vunpack.c.l.b16 %v3966
        %v4015 = vunpack.c.l.b16 %v3967
        %v4016 = vunpack.c.l.b16 %v3968
        %v4017 = vunpack.c.l.b16 %v3969
        %v4018 = vunpack.c.l.b16 %v3970
        %v4019 = vunpack.c.l.b16 %v3971
        %v4020 = vunpack.c.l.b16 %v3972
        %v4021 = vunpack.c.l.b16 %v3973
        %v4022 = vunpack.c.l.b16 %v3974
        %v4023 = vunpack.c.l.b16 %v3975
        %v4024 = vunpack.c.l.b16 %v3976
        %v4025 = vunpack.c.l.b16 %v3977
        %v4026 = vunpack.c.l.b16 %v3978
        %v4027 = vunpack.c.l.b16 %v3979
        %v4028 = vunpack.c.l.b16 %v3980
        %v4029 = vunpack.c.l.b16 %v3981
        %v4030 = vunpack.c.l.b16 %v3982
        %v4031 = vunpack.c.l.b16 %v3983
        %v4032 = vpack.c.b16 %v4009, %v4008
        %v4033 = vpack.c.b16 %v4011, %v4010
        %v4034 = vpack.c.b16 %v4013, %v4012
        %v4035 = vpack.c.b16 %v4015, %v4014
        %v4036 = vpack.c.b16 %v4017, %v4016
        %v4037 = vpack.c.b16 %v4019, %v4018
        %v4038 = vpack.c.b16 %v4021, %v4020
        %v4039 = vpack.c.b16 %v4023, %v4022
        %v4040 = vpack.c.b16 %v4025, %v4024
        %v4041 = vpack.c.b16 %v4027, %v4026
        %v4042 = vpack.c.b16 %v4029, %v4028
        %v4043 = vpack.c.b16 %v4031, %v4030
        %v4057 = vsel %vm472, %v3865, 0
        %v4060 = vsel %vm472, %v3868, 0
        %v4063 = vsel %vm472, %v3871, 0
        %v4066 = vsel %vm472, %v3874, 0
        %v4069 = vsel %vm472, %v3877, 0
        %v4072 = vsel %vm472, %v3880, 0
        %v4075 = vsel %vm472, %v3883, 0
        %v4078 = vsel %vm472, %v3886, 0
        %v4081 = vsel %vm472, %v3889, 0
        %v4084 = vsel %vm472, %v3892, 0
        %v4087 = vsel %vm472, %v3895, 0
        %v4090 = vsel %vm472, %v3898, 0
        %v4093 = vsel %vm472, %v3901, 0
        %v4096 = vsel %vm472, %v3904, 0
        %v4099 = vsel %vm472, %v3907, 0
        %v4102 = vsel %vm472, %v3910, 0
        %4104 = vmatprep.subr.bf16.mxu0 0
        %4105 = vmatpush1.bf16.msra.mxu0 %v4032
        %4106 = vmatprep.subr.bf16.mxu0 0
        %4107 = vmatpush1.bf16.msra.mxu0 %v4033
        %4108 = vmatprep.subr.bf16.mxu0 0
        %4109 = vmatpush1.bf16.msra.mxu0 %v4034
        %4110 = vmatprep.subr.bf16.mxu0 0
        %4111 = vmatpush1.bf16.msra.mxu0 %v4035
        %4112 = vmatprep.subr.bf16.mxu0 0
        %4113 = vmatpush1.bf16.msra.mxu0 %v4036
        %4114 = vmatprep.subr.bf16.mxu0 0
        %4115 = vmatpush1.bf16.msra.mxu0 %v4037
        %4116 = vmatprep.subr.bf16.mxu0 0
        %4117 = vmatpush1.bf16.msra.mxu0 %v4038
        %4118 = vmatprep.subr.bf16.mxu0 0
        %4119 = vmatpush1.bf16.msra.mxu0 %v4039
        %4120 = vmatprep.subr.bf16.mxu0 0
        %4121 = vmatpush1.bf16.msra.mxu0 %v4040
        %4122 = vmatprep.subr.bf16.mxu0 0
        %4123 = vmatpush1.bf16.msra.mxu0 %v4041
        %4124 = vmatprep.subr.bf16.mxu0 0
        %4125 = vmatpush1.bf16.msra.mxu0 %v4042
        %4126 = vmatprep.subr.bf16.mxu0 0
        %4127 = vmatpush1.bf16.msra.mxu0 %v4043
        %4128 = vmatprep.subr.bf16.mxu0 0
        %4129 = vmatpush1.bf16.msra.mxu0 0
        %4130 = vmatprep.subr.bf16.mxu0 0
        %4131 = vmatpush1.bf16.msra.mxu0 0
        %4132 = vmatprep.subr.bf16.mxu0 0
        %4133 = vmatpush1.bf16.msra.mxu0 0
        %4134 = vmatprep.subr.bf16.mxu0 0
        %4135 = vmatpush1.bf16.msra.mxu0 0
        %4136 = vmatprep.mubr.bf16.mxu0 %v4057
        %4137 = vmatmul.mubr.bf16.gmra.mrb[0].mxu0 %v3912
        %v4138 = vpop.f32.mrb[0].mxu0
        %v4139 = vadd.f32 0.0, %v4138
        %v4140 = vpop.f32.mrb[0].mxu0
        %v4141 = vpop.f32.mrb[0].mxu0
        %v4142 = vadd.f32 0.0, %v4141
        %v4143 = vpop.f32.mrb[0].mxu0
        %4144 = vmatprep.mubr.bf16.mxu0 %v4060
        %4145 = vmatmul.mubr.bf16.gmra.mrb[0].mxu0 %v3915
        %v4146 = vpop.f32.mrb[0].mxu0
        %v4147 = vadd.f32 0.0, %v4146
        %v4148 = vpop.f32.mrb[0].mxu0
        %v4149 = vpop.f32.mrb[0].mxu0
        %v4150 = vadd.f32 0.0, %v4149
        %v4151 = vpop.f32.mrb[0].mxu0
        %4152 = vmatprep.mubr.bf16.mxu0 %v4063
        %4153 = vmatmul.mubr.bf16.gmra.mrb[0].mxu0 %v3918
        %v4154 = vpop.f32.mrb[0].mxu0
        %v4155 = vadd.f32 0.0, %v4154
        %v4156 = vpop.f32.mrb[0].mxu0
        %v4157 = vpop.f32.mrb[0].mxu0
        %v4158 = vadd.f32 0.0, %v4157
        %v4159 = vpop.f32.mrb[0].mxu0
        %4160 = vmatprep.mubr.bf16.mxu0 %v4066
        %4161 = vmatmul.mubr.bf16.gmra.mrb[0].mxu0 %v3921
        %v4162 = vpop.f32.mrb[0].mxu0
        %v4163 = vadd.f32 0.0, %v4162
        %v4164 = vpop.f32.mrb[0].mxu0
        %v4165 = vpop.f32.mrb[0].mxu0
        %v4166 = vadd.f32 0.0, %v4165
        %v4167 = vpop.f32.mrb[0].mxu0
        %4168 = vmatprep.mubr.bf16.mxu0 %v4069
        %4169 = vmatmul.mubr.bf16.gmra.mrb[0].mxu0 %v3924
        %v4170 = vpop.f32.mrb[0].mxu0
        %v4171 = vadd.f32 0.0, %v4170
        %v4172 = vpop.f32.mrb[0].mxu0
        %v4173 = vpop.f32.mrb[0].mxu0
        %v4174 = vadd.f32 0.0, %v4173
        %v4175 = vpop.f32.mrb[0].mxu0
        %4176 = vmatprep.mubr.bf16.mxu0 %v4072
        %4177 = vmatmul.mubr.bf16.gmra.mrb[0].mxu0 %v3927
        %v4178 = vpop.f32.mrb[0].mxu0
        %v4179 = vadd.f32 0.0, %v4178
        %v4180 = vpop.f32.mrb[0].mxu0
        %v4181 = vpop.f32.mrb[0].mxu0
        %v4182 = vadd.f32 0.0, %v4181
        %v4183 = vpop.f32.mrb[0].mxu0
        %4184 = vmatprep.mubr.bf16.mxu0 %v4075
        %4185 = vmatmul.mubr.bf16.gmra.mrb[0].mxu0 %v3930
        %v4186 = vpop.f32.mrb[0].mxu0
        %v4187 = vadd.f32 0.0, %v4186
        %v4188 = vpop.f32.mrb[0].mxu0
        %v4189 = vpop.f32.mrb[0].mxu0
        %v4190 = vadd.f32 0.0, %v4189
        %v4191 = vpop.f32.mrb[0].mxu0
        %4192 = vmatprep.mubr.bf16.mxu0 %v4078
        %4193 = vmatmul.mubr.bf16.gmra.mrb[0].mxu0 %v3933
        %v4194 = vpop.f32.mrb[0].mxu0
        %v4195 = vadd.f32 0.0, %v4194
        %v4196 = vpop.f32.mrb[0].mxu0
        %v4197 = vpop.f32.mrb[0].mxu0
        %v4198 = vadd.f32 0.0, %v4197
        %v4199 = vpop.f32.mrb[0].mxu0
        %4200 = vmatprep.mubr.bf16.mxu0 %v4081
        %4201 = vmatmul.mubr.bf16.gmra.mrb[0].mxu0 %v3936
        %v4202 = vpop.f32.mrb[0].mxu0
        %v4203 = vadd.f32 0.0, %v4202
        %v4204 = vpop.f32.mrb[0].mxu0
        %v4205 = vpop.f32.mrb[0].mxu0
        %v4206 = vadd.f32 0.0, %v4205
        %v4207 = vpop.f32.mrb[0].mxu0
        %4208 = vmatprep.mubr.bf16.mxu0 %v4084
        %4209 = vmatmul.mubr.bf16.gmra.mrb[0].mxu0 %v3939
        %v4210 = vpop.f32.mrb[0].mxu0
        %v4211 = vadd.f32 0.0, %v4210
        %v4212 = vpop.f32.mrb[0].mxu0
        %v4213 = vpop.f32.mrb[0].mxu0
        %v4214 = vadd.f32 0.0, %v4213
        %v4215 = vpop.f32.mrb[0].mxu0
        %4216 = vmatprep.mubr.bf16.mxu0 %v4087
        %4217 = vmatmul.mubr.bf16.gmra.mrb[0].mxu0 %v3942
        %v4218 = vpop.f32.mrb[0].mxu0
        %v4219 = vadd.f32 0.0, %v4218
        %v4220 = vpop.f32.mrb[0].mxu0
        %v4221 = vpop.f32.mrb[0].mxu0
        %v4222 = vadd.f32 0.0, %v4221
        %v4223 = vpop.f32.mrb[0].mxu0
        %4224 = vmatprep.mubr.bf16.mxu0 %v4090
        %4225 = vmatmul.mubr.bf16.gmra.mrb[0].mxu0 %v3945
        %v4226 = vpop.f32.mrb[0].mxu0
        %v4227 = vadd.f32 0.0, %v4226
        %v4228 = vpop.f32.mrb[0].mxu0
        %v4229 = vpop.f32.mrb[0].mxu0
        %v4230 = vadd.f32 0.0, %v4229
        %v4231 = vpop.f32.mrb[0].mxu0
        %4232 = vmatprep.mubr.bf16.mxu0 %v4093
        %4233 = vmatmul.mubr.bf16.gmra.mrb[0].mxu0 %v3948
        %v4234 = vpop.f32.mrb[0].mxu0
        %v4235 = vadd.f32 0.0, %v4234
        %v4236 = vpop.f32.mrb[0].mxu0
        %v4237 = vpop.f32.mrb[0].mxu0
        %v4238 = vadd.f32 0.0, %v4237
        %v4239 = vpop.f32.mrb[0].mxu0
        %4240 = vmatprep.mubr.bf16.mxu0 %v4096
        %4241 = vmatmul.mubr.bf16.gmra.mrb[0].mxu0 %v3951
        %v4242 = vpop.f32.mrb[0].mxu0
        %v4243 = vadd.f32 0.0, %v4242
        %v4244 = vpop.f32.mrb[0].mxu0
        %v4245 = vpop.f32.mrb[0].mxu0
        %v4246 = vadd.f32 0.0, %v4245
        %v4247 = vpop.f32.mrb[0].mxu0
        %4248 = vmatprep.mubr.bf16.mxu0 %v4099
        %4249 = vmatmul.mubr.bf16.gmra.mrb[0].mxu0 %v3954
        %v4250 = vpop.f32.mrb[0].mxu0
        %v4251 = vadd.f32 0.0, %v4250
        %v4252 = vpop.f32.mrb[0].mxu0
        %v4253 = vpop.f32.mrb[0].mxu0
        %v4254 = vadd.f32 0.0, %v4253
        %v4255 = vpop.f32.mrb[0].mxu0
        %4256 = vmatprep.mubr.bf16.mxu0 %v4102
        %4257 = vmatmul.mubr.bf16.gmra.mrb[0].mxu0 %v3957
        %v4258 = vpop.f32.mrb[0].mxu0
        %v4259 = vadd.f32 0.0, %v4258
        %v4260 = vpop.f32.mrb[0].mxu0
        %v4261 = vpop.f32.mrb[0].mxu0
        %v4262 = vadd.f32 0.0, %v4261
        %v4263 = vpop.f32.mrb[0].mxu0
        %4264 = vdwg.mxu0
        %v4265 = vld [vmem:[#allocation4] sm:$0xff]
        %v4266 = vld [vmem:[#allocation4 + $0x8] sm:$0xff]
        %v4267 = vld [vmem:[#allocation4 + $0x10] sm:$0xff]
        %v4268 = vld [vmem:[#allocation4 + $0x18] sm:$0xff]
        %v4269 = vld [vmem:[#allocation4 + $0x20] sm:$0xff]
        %v4270 = vld [vmem:[#allocation4 + $0x28] sm:$0xff]
        %v4271 = vld [vmem:[#allocation4 + $0x30] sm:$0xff]
        %v4272 = vld [vmem:[#allocation4 + $0x38] sm:$0xff]
        %v4273 = vld [vmem:[#allocation4 + $0x40] sm:$0xff]
        %v4274 = vld [vmem:[#allocation4 + $0x48] sm:$0xff]
        %v4275 = vld [vmem:[#allocation4 + $0x50] sm:$0xff]
        %v4276 = vld [vmem:[#allocation4 + $0x58] sm:$0xff]
        %v4277 = vld [vmem:[#allocation4 + $0x60] sm:$0xff]
        %v4278 = vld [vmem:[#allocation4 + $0x68] sm:$0xff]
        %v4279 = vld [vmem:[#allocation4 + $0x70] sm:$0xff]
        %v4280 = vld [vmem:[#allocation4 + $0x78] sm:$0xff]
        %v4281 = vld [vmem:[#allocation4 + $0x80] sm:$0xff]
        %v4282 = vld [vmem:[#allocation4 + $0x88] sm:$0xff]
        %v4283 = vld [vmem:[#allocation4 + $0x90] sm:$0xff]
        %v4284 = vld [vmem:[#allocation4 + $0x98] sm:$0xff]
        %v4285 = vld [vmem:[#allocation4 + $0xa0] sm:$0xff]
        %v4286 = vld [vmem:[#allocation4 + $0xa8] sm:$0xff]
        %v4287 = vld [vmem:[#allocation4 + $0xb0] sm:$0xff]
        %v4288 = vld [vmem:[#allocation4 + $0xb8] sm:$0xff]
        %v4289 = vld [vmem:[#allocation4 + $0xc0] sm:$0xff]
        %v4290 = vld [vmem:[#allocation4 + $0xc8] sm:$0xff]
        %v4291 = vld [vmem:[#allocation4 + $0xd0] sm:$0xff]
        %v4292 = vld [vmem:[#allocation4 + $0xd8] sm:$0xff]
        %v4293 = vld [vmem:[#allocation4 + $0xe0] sm:$0xff]
        %v4294 = vld [vmem:[#allocation4 + $0xe8] sm:$0xff]
        %v4295 = vld [vmem:[#allocation4 + $0xf0] sm:$0xff]
        %v4296 = vld [vmem:[#allocation4 + $0xf8] sm:$0xff]
        %v4297 = vadd.f32 %v4265, %v4139
        %v4298 = vadd.f32 %v4266, %v4142
        %v4299 = vadd.f32 %v4267, %v4147
        %v4300 = vadd.f32 %v4268, %v4150
        %v4301 = vadd.f32 %v4269, %v4155
        %v4302 = vadd.f32 %v4270, %v4158
        %v4303 = vadd.f32 %v4271, %v4163
        %v4304 = vadd.f32 %v4272, %v4166
        %v4305 = vadd.f32 %v4273, %v4171
        %v4306 = vadd.f32 %v4274, %v4174
        %v4307 = vadd.f32 %v4275, %v4179
        %v4308 = vadd.f32 %v4276, %v4182
        %v4309 = vadd.f32 %v4277, %v4187
        %v4310 = vadd.f32 %v4278, %v4190
        %v4311 = vadd.f32 %v4279, %v4195
        %v4312 = vadd.f32 %v4280, %v4198
        %v4313 = vadd.f32 %v4281, %v4203
        %v4314 = vadd.f32 %v4282, %v4206
        %v4315 = vadd.f32 %v4283, %v4211
        %v4316 = vadd.f32 %v4284, %v4214
        %v4317 = vadd.f32 %v4285, %v4219
        %v4318 = vadd.f32 %v4286, %v4222
        %v4319 = vadd.f32 %v4287, %v4227
        %v4320 = vadd.f32 %v4288, %v4230
        %v4321 = vadd.f32 %v4289, %v4235
        %v4322 = vadd.f32 %v4290, %v4238
        %v4323 = vadd.f32 %v4291, %v4243
        %v4324 = vadd.f32 %v4292, %v4246
        %v4325 = vadd.f32 %v4293, %v4251
        %v4326 = vadd.f32 %v4294, %v4254
        %v4327 = vadd.f32 %v4295, %v4259
        %v4328 = vadd.f32 %v4296, %v4262
        %4329 = vst [vmem:[#allocation4] sm:$0xff] %v4297
        %4330 = vst [vmem:[#allocation4 + $0x8] sm:$0xff] %v4298
        %4331 = vst [vmem:[#allocation4 + $0x10] sm:$0xff] %v4299
        %4332 = vst [vmem:[#allocation4 + $0x18] sm:$0xff] %v4300
        %4333 = vst [vmem:[#allocation4 + $0x20] sm:$0xff] %v4301
        %4334 = vst [vmem:[#allocation4 + $0x28] sm:$0xff] %v4302
        %4335 = vst [vmem:[#allocation4 + $0x30] sm:$0xff] %v4303
        %4336 = vst [vmem:[#allocation4 + $0x38] sm:$0xff] %v4304
        %4337 = vst [vmem:[#allocation4 + $0x40] sm:$0xff] %v4305
        %4338 = vst [vmem:[#allocation4 + $0x48] sm:$0xff] %v4306
        %4339 = vst [vmem:[#allocation4 + $0x50] sm:$0xff] %v4307
        %4340 = vst [vmem:[#allocation4 + $0x58] sm:$0xff] %v4308
        %4341 = vst [vmem:[#allocation4 + $0x60] sm:$0xff] %v4309
        %4342 = vst [vmem:[#allocation4 + $0x68] sm:$0xff] %v4310
        %4343 = vst [vmem:[#allocation4 + $0x70] sm:$0xff] %v4311
        %4344 = vst [vmem:[#allocation4 + $0x78] sm:$0xff] %v4312
        %4345 = vst [vmem:[#allocation4 + $0x80] sm:$0xff] %v4313
        %4346 = vst [vmem:[#allocation4 + $0x88] sm:$0xff] %v4314
        %4347 = vst [vmem:[#allocation4 + $0x90] sm:$0xff] %v4315
        %4348 = vst [vmem:[#allocation4 + $0x98] sm:$0xff] %v4316
        %4349 = vst [vmem:[#allocation4 + $0xa0] sm:$0xff] %v4317
        %4350 = vst [vmem:[#allocation4 + $0xa8] sm:$0xff] %v4318
        %4351 = vst [vmem:[#allocation4 + $0xb0] sm:$0xff] %v4319
        %4352 = vst [vmem:[#allocation4 + $0xb8] sm:$0xff] %v4320
        %4353 = vst [vmem:[#allocation4 + $0xc0] sm:$0xff] %v4321
        %4354 = vst [vmem:[#allocation4 + $0xc8] sm:$0xff] %v4322
        %4355 = vst [vmem:[#allocation4 + $0xd0] sm:$0xff] %v4323
        %4356 = vst [vmem:[#allocation4 + $0xd8] sm:$0xff] %v4324
        %4357 = vst [vmem:[#allocation4 + $0xe0] sm:$0xff] %v4325
        %4358 = vst [vmem:[#allocation4 + $0xe8] sm:$0xff] %v4326
        %4359 = vst [vmem:[#allocation4 + $0xf0] sm:$0xff] %v4327
        %4360 = vst [vmem:[#allocation4 + $0xf8] sm:$0xff] %v4328
        %v4361 = vld [vmem:[#allocation4] sm:$0xff]
        %v4362 = vld [vmem:[#allocation4 + $0x8] sm:$0xff]
        %v4363 = vld [vmem:[#allocation4 + $0x10] sm:$0xff]
        %v4364 = vld [vmem:[#allocation4 + $0x18] sm:$0xff]
        %v4365 = vld [vmem:[#allocation4 + $0x20] sm:$0xff]
        %v4366 = vld [vmem:[#allocation4 + $0x28] sm:$0xff]
        %v4367 = vld [vmem:[#allocation4 + $0x30] sm:$0xff]
        %v4368 = vld [vmem:[#allocation4 + $0x38] sm:$0xff]
        %v4369 = vld [vmem:[#allocation4 + $0x40] sm:$0xff]
        %v4370 = vld [vmem:[#allocation4 + $0x48] sm:$0xff]
        %v4371 = vld [vmem:[#allocation4 + $0x50] sm:$0xff]
        %v4372 = vld [vmem:[#allocation4 + $0x58] sm:$0xff]
        %v4373 = vld [vmem:[#allocation4 + $0x60] sm:$0xff]
        %v4374 = vld [vmem:[#allocation4 + $0x68] sm:$0xff]
        %v4375 = vld [vmem:[#allocation4 + $0x70] sm:$0xff]
        %v4376 = vld [vmem:[#allocation4 + $0x78] sm:$0xff]
        %v4377 = vld [vmem:[#allocation4 + $0x80] sm:$0xff]
        %v4378 = vld [vmem:[#allocation4 + $0x88] sm:$0xff]
        %v4379 = vld [vmem:[#allocation4 + $0x90] sm:$0xff]
        %v4380 = vld [vmem:[#allocation4 + $0x98] sm:$0xff]
        %v4381 = vld [vmem:[#allocation4 + $0xa0] sm:$0xff]
        %v4382 = vld [vmem:[#allocation4 + $0xa8] sm:$0xff]
        %v4383 = vld [vmem:[#allocation4 + $0xb0] sm:$0xff]
        %v4384 = vld [vmem:[#allocation4 + $0xb8] sm:$0xff]
        %v4385 = vld [vmem:[#allocation4 + $0xc0] sm:$0xff]
        %v4386 = vld [vmem:[#allocation4 + $0xc8] sm:$0xff]
        %v4387 = vld [vmem:[#allocation4 + $0xd0] sm:$0xff]
        %v4388 = vld [vmem:[#allocation4 + $0xd8] sm:$0xff]
        %v4389 = vld [vmem:[#allocation4 + $0xe0] sm:$0xff]
        %v4390 = vld [vmem:[#allocation4 + $0xe8] sm:$0xff]
        %v4391 = vld [vmem:[#allocation4 + $0xf0] sm:$0xff]
        %v4392 = vld [vmem:[#allocation4 + $0xf8] sm:$0xff]
        %v4393 = vadd.f32 %v4361, %v4362
        %v4394 = vadd.f32 %v4393, %v4363
        %v4395 = vadd.f32 %v4394, %v4364
        %v4396 = vadd.f32 %v4395, %v4365
        %v4397 = vadd.f32 %v4396, %v4366
        %v4398 = vadd.f32 %v4397, %v4367
        %v4399 = vadd.f32 %v4398, %v4368
        %v4400 = vadd.f32 %v4399, %v4369
        %v4401 = vadd.f32 %v4400, %v4370
        %v4402 = vadd.f32 %v4401, %v4371
        %v4403 = vadd.f32 %v4402, %v4372
        %v4404 = vadd.f32 %v4403, %v4373
        %v4405 = vadd.f32 %v4404, %v4374
        %v4406 = vadd.f32 %v4405, %v4375
        %v4407 = vadd.f32 %v4406, %v4376
        %v4408 = vadd.f32 %v4407, %v4377
        %v4409 = vadd.f32 %v4408, %v4378
        %v4410 = vadd.f32 %v4409, %v4379
        %v4411 = vadd.f32 %v4410, %v4380
        %v4412 = vadd.f32 %v4411, %v4381
        %v4413 = vadd.f32 %v4412, %v4382
        %v4414 = vadd.f32 %v4413, %v4383
        %v4415 = vadd.f32 %v4414, %v4384
        %v4416 = vadd.f32 %v4415, %v4385
        %v4417 = vadd.f32 %v4416, %v4386
        %v4418 = vadd.f32 %v4417, %v4387
        %v4419 = vadd.f32 %v4418, %v4388
        %v4420 = vadd.f32 %v4419, %v4389
        %v4421 = vadd.f32 %v4420, %v4390
        %v4422 = vadd.f32 %v4421, %v4391
        %v4423 = vadd.f32 %v4422, %v4392
        %v4424 = vrot.slane %v4423, 4
        %v4425 = vadd.f32 %v4423, %v4424
        %v4426 = vrot.slane %v4425, 2
        %v4427 = vadd.f32 %v4425, %v4426
        %v4428 = vrot.slane %v4427, 1
        %v4429 = vadd.f32 %v4427, %v4428
        %v4430 = vmul.f32 %v4429, %v542
        %v4431 = vmul.f32 %v4361, %v4361
        %v4432 = vmul.f32 %v4362, %v4362
        %v4433 = vmul.f32 %v4363, %v4363
        %v4434 = vmul.f32 %v4364, %v4364
        %v4435 = vmul.f32 %v4365, %v4365
        %v4436 = vmul.f32 %v4366, %v4366
        %v4437 = vmul.f32 %v4367, %v4367
        %v4438 = vmul.f32 %v4368, %v4368
        %v4439 = vmul.f32 %v4369, %v4369
        %v4440 = vmul.f32 %v4370, %v4370
        %v4441 = vmul.f32 %v4371, %v4371
        %v4442 = vmul.f32 %v4372, %v4372
        %v4443 = vmul.f32 %v4373, %v4373
        %v4444 = vmul.f32 %v4374, %v4374
        %v4445 = vmul.f32 %v4375, %v4375
        %v4446 = vmul.f32 %v4376, %v4376
        %v4447 = vmul.f32 %v4377, %v4377
        %v4448 = vmul.f32 %v4378, %v4378
        %v4449 = vmul.f32 %v4379, %v4379
        %v4450 = vmul.f32 %v4380, %v4380
        %v4451 = vmul.f32 %v4381, %v4381
        %v4452 = vmul.f32 %v4382, %v4382
        %v4453 = vmul.f32 %v4383, %v4383
        %v4454 = vmul.f32 %v4384, %v4384
        %v4455 = vmul.f32 %v4385, %v4385
        %v4456 = vmul.f32 %v4386, %v4386
        %v4457 = vmul.f32 %v4387, %v4387
        %v4458 = vmul.f32 %v4388, %v4388
        %v4459 = vmul.f32 %v4389, %v4389
        %v4460 = vmul.f32 %v4390, %v4390
        %v4461 = vmul.f32 %v4391, %v4391
        %v4462 = vmul.f32 %v4392, %v4392
        %v4463 = vadd.f32 %v4431, %v4432
        %v4464 = vadd.f32 %v4463, %v4433
        %v4465 = vadd.f32 %v4464, %v4434
        %v4466 = vadd.f32 %v4465, %v4435
        %v4467 = vadd.f32 %v4466, %v4436
        %v4468 = vadd.f32 %v4467, %v4437
        %v4469 = vadd.f32 %v4468, %v4438
        %v4470 = vadd.f32 %v4469, %v4439
        %v4471 = vadd.f32 %v4470, %v4440
        %v4472 = vadd.f32 %v4471, %v4441
        %v4473 = vadd.f32 %v4472, %v4442
        %v4474 = vadd.f32 %v4473, %v4443
        %v4475 = vadd.f32 %v4474, %v4444
        %v4476 = vadd.f32 %v4475, %v4445
        %v4477 = vadd.f32 %v4476, %v4446
        %v4478 = vadd.f32 %v4477, %v4447
        %v4479 = vadd.f32 %v4478, %v4448
        %v4480 = vadd.f32 %v4479, %v4449
        %v4481 = vadd.f32 %v4480, %v4450
        %v4482 = vadd.f32 %v4481, %v4451
        %v4483 = vadd.f32 %v4482, %v4452
        %v4484 = vadd.f32 %v4483, %v4453
        %v4485 = vadd.f32 %v4484, %v4454
        %v4486 = vadd.f32 %v4485, %v4455
        %v4487 = vadd.f32 %v4486, %v4456
        %v4488 = vadd.f32 %v4487, %v4457
        %v4489 = vadd.f32 %v4488, %v4458
        %v4490 = vadd.f32 %v4489, %v4459
        %v4491 = vadd.f32 %v4490, %v4460
        %v4492 = vadd.f32 %v4491, %v4461
        %v4493 = vadd.f32 %v4492, %v4462
        %v4494 = vrot.slane %v4493, 4
        %v4495 = vadd.f32 %v4493, %v4494
        %v4496 = vrot.slane %v4495, 2
        %v4497 = vadd.f32 %v4495, %v4496
        %v4498 = vrot.slane %v4497, 1
        %v4499 = vadd.f32 %v4497, %v4498
        %v4500 = vmul.f32 %v4499, %v542
        %v4501 = vsel %vm646, %v4430, %v4500
        %v4502 = vld [vmem:[%s8] sm:$0xff]
        %v4503 = vld [vmem:[%s8 + $0x8] sm:$0xff]
        %v4504 = vld [vmem:[%s8 + $0x10] sm:$0xff]
        %v4505 = vld [vmem:[%s8 + $0x18] sm:$0xff]
        %v4506 = vld [vmem:[%s8 + $0x20] sm:$0xff]
        %v4507 = vld [vmem:[%s8 + $0x28] sm:$0xff]
        %v4508 = vld [vmem:[%s8 + $0x30] sm:$0xff]
        %v4509 = vld [vmem:[%s8 + $0x38] sm:$0xff]
        %v4510 = vld [vmem:[%s8 + $0x40] sm:$0xff]
        %v4511 = vld [vmem:[%s8 + $0x48] sm:$0xff]
        %v4512 = vld [vmem:[%s8 + $0x50] sm:$0xff]
        %v4513 = vld [vmem:[%s8 + $0x58] sm:$0xff]
        %v4514 = vld [vmem:[%s8 + $0x60] sm:$0xff]
        %v4515 = vld [vmem:[%s8 + $0x68] sm:$0xff]
        %v4516 = vld [vmem:[%s8 + $0x70] sm:$0xff]
        %v4517 = vld [vmem:[%s8 + $0x78] sm:$0xff]
        %4518 = vmatprep.subr.mxu0 0.0
        %4519 = vmatpush1.msra.mxu0 %v4502
        %4520 = vmatprep.subr.mxu0 0.0
        %4521 = vmatpush1.msra.mxu0 %v4503
        %4522 = vmatprep.subr.mxu0 0.0
        %4523 = vmatpush1.msra.mxu0 %v4504
        %4524 = vmatprep.subr.mxu0 0.0
        %4525 = vmatpush1.msra.mxu0 %v4505
        %4526 = vmatprep.subr.mxu0 0.0
        %4527 = vmatpush1.msra.mxu0 %v4506
        %4528 = vmatprep.subr.mxu0 0.0
        %4529 = vmatpush1.msra.mxu0 %v4507
        %4530 = vmatprep.subr.mxu0 0.0
        %4531 = vmatpush1.msra.mxu0 %v4508
        %4532 = vmatprep.subr.mxu0 0.0
        %4533 = vmatpush1.msra.mxu0 %v4509
        %4534 = vmatprep.subr.mxu0 0.0
        %4535 = vmatpush1.msra.mxu0 %v4510
        %4536 = vmatprep.subr.mxu0 0.0
        %4537 = vmatpush1.msra.mxu0 %v4511
        %4538 = vmatprep.subr.mxu0 0.0
        %4539 = vmatpush1.msra.mxu0 %v4512
        %4540 = vmatprep.subr.mxu0 0.0
        %4541 = vmatpush1.msra.mxu0 %v4513
        %4542 = vmatprep.subr.mxu0 0.0
        %4543 = vmatpush1.msra.mxu0 %v4514
        %4544 = vmatprep.subr.mxu0 0.0
        %4545 = vmatpush1.msra.mxu0 %v4515
        %4546 = vmatprep.subr.mxu0 0.0
        %4547 = vmatpush1.msra.mxu0 %v4516
        %4548 = vmatprep.subr.mxu0 0.0
        %4549 = vmatpush1.msra.mxu0 %v4517
        %4550 = vmatprep.subr.mxu0 0.0
        %4551 = vmatpush1.msra.mxu0 0.0
        %4552 = vmatprep.subr.mxu0 0.0
        %4553 = vmatpush1.msra.mxu0 0.0
        %4554 = vmatprep.subr.mxu0 0.0
        %4555 = vmatpush1.msra.mxu0 0.0
        %4556 = vmatprep.subr.mxu0 0.0
        %4557 = vmatpush1.msra.mxu0 0.0
        %4558 = vmatprep.subr.mxu0 0.0
        %4559 = vmatpush1.msra.mxu0 0.0
        %4560 = vmatprep.subr.mxu0 0.0
        %4561 = vmatpush1.msra.mxu0 0.0
        %4562 = vmatprep.subr.mxu0 0.0
        %4563 = vmatpush1.msra.mxu0 0.0
        %4564 = vmatprep.subr.mxu0 0.0
        %4565 = vmatpush1.msra.mxu0 0.0
        %4566 = vmatprep.subr.mxu0 0.0
        %4567 = vmatpush1.msra.mxu0 0.0
        %4568 = vmatprep.subr.mxu0 0.0
        %4569 = vmatpush1.msra.mxu0 0.0
        %4570 = vmatprep.subr.mxu0 0.0
        %4571 = vmatpush1.msra.mxu0 0.0
        %4572 = vmatprep.subr.mxu0 0.0
        %4573 = vmatpush1.msra.mxu0 0.0
        %4574 = vmatprep.subr.mxu0 0.0
        %4575 = vmatpush1.msra.mxu0 0.0
        %4576 = vmatprep.subr.mxu0 0.0
        %4577 = vmatpush1.msra.mxu0 0.0
        %4578 = vmatprep.subr.mxu0 0.0
        %4579 = vmatpush1.msra.mxu0 0.0
        %4580 = vmatprep.subr.mxu0 0.0
        %4581 = vmatpush1.msra.mxu0 0.0
        %4582 = vmatprep.mubr.f32.mxu0 0.0
        %4583 = vmatmul.mubr.f32.gmra.mrb[0].mxu0 %v4501
        %v4584 = vpop.f32.mrb[0].mxu0
        %v4585 = vadd.f32 0.0, %v4584
        %v4586 = vpop.f32.mrb[0].mxu0
        %4587 = vdwg.mxu0
        %v4588 = vmul.f32 %v4585, %v4585
        %v4590 = vrot.slane %v4588, 7
        %v4592 = vsub.f32 %v4585, %v4590
        %v4593 = vadd.f32 %v4592, 1e-06
        %v4594 = vrsqrt.pop %v4593
        %v4595 = vld [vmem:[%s6] sm:$0x1]
        %v4597 = vlaneseq
        %v4598 = vshrl.u32 %v4597, 7
        %v4599 = vsub.s32 0, %v4598
        %v4600 = vrot.slane %v4595, %v4599
        %v4602 = vmul.f32 %v4594, %v4600
        %v4603 = vlaneseq
        %v4604 = vshrl.u32 %v4603, 7
        %v4605 = vsub.s32 0, %v4604
        %v4606 = vrot.slane %v4585, %v4605
        %v4607 = vsub.f32 %v4361, %v4606
        %v4608 = vsub.f32 %v4362, %v4606
        %v4609 = vsub.f32 %v4363, %v4606
        %v4610 = vsub.f32 %v4364, %v4606
        %v4611 = vsub.f32 %v4365, %v4606
        %v4612 = vsub.f32 %v4366, %v4606
        %v4613 = vsub.f32 %v4367, %v4606
        %v4614 = vsub.f32 %v4368, %v4606
        %v4615 = vsub.f32 %v4369, %v4606
        %v4616 = vsub.f32 %v4370, %v4606
        %v4617 = vsub.f32 %v4371, %v4606
        %v4618 = vsub.f32 %v4372, %v4606
        %v4619 = vsub.f32 %v4373, %v4606
        %v4620 = vsub.f32 %v4374, %v4606
        %v4621 = vsub.f32 %v4375, %v4606
        %v4622 = vsub.f32 %v4376, %v4606
        %v4623 = vsub.f32 %v4377, %v4606
        %v4624 = vsub.f32 %v4378, %v4606
        %v4625 = vsub.f32 %v4379, %v4606
        %v4626 = vsub.f32 %v4380, %v4606
        %v4627 = vsub.f32 %v4381, %v4606
        %v4628 = vsub.f32 %v4382, %v4606
        %v4629 = vsub.f32 %v4383, %v4606
        %v4630 = vsub.f32 %v4384, %v4606
        %v4631 = vsub.f32 %v4385, %v4606
        %v4632 = vsub.f32 %v4386, %v4606
        %v4633 = vsub.f32 %v4387, %v4606
        %v4634 = vsub.f32 %v4388, %v4606
        %v4635 = vsub.f32 %v4389, %v4606
        %v4636 = vsub.f32 %v4390, %v4606
        %v4637 = vsub.f32 %v4391, %v4606
        %v4638 = vsub.f32 %v4392, %v4606
        %v4639 = vlaneseq
        %v4640 = vshrl.u32 %v4639, 7
        %v4641 = vsub.s32 1, %v4640
        %v4642 = vrot.slane %v4602, %v4641
        %v4643 = vmul.f32 %v4607, %v4642
        %v4644 = vmul.f32 %v4608, %v4642
        %v4645 = vmul.f32 %v4609, %v4642
        %v4646 = vmul.f32 %v4610, %v4642
        %v4647 = vmul.f32 %v4611, %v4642
        %v4648 = vmul.f32 %v4612, %v4642
        %v4649 = vmul.f32 %v4613, %v4642
        %v4650 = vmul.f32 %v4614, %v4642
        %v4651 = vmul.f32 %v4615, %v4642
        %v4652 = vmul.f32 %v4616, %v4642
        %v4653 = vmul.f32 %v4617, %v4642
        %v4654 = vmul.f32 %v4618, %v4642
        %v4655 = vmul.f32 %v4619, %v4642
        %v4656 = vmul.f32 %v4620, %v4642
        %v4657 = vmul.f32 %v4621, %v4642
        %v4658 = vmul.f32 %v4622, %v4642
        %v4659 = vmul.f32 %v4623, %v4642
        %v4660 = vmul.f32 %v4624, %v4642
        %v4661 = vmul.f32 %v4625, %v4642
        %v4662 = vmul.f32 %v4626, %v4642
        %v4663 = vmul.f32 %v4627, %v4642
        %v4664 = vmul.f32 %v4628, %v4642
        %v4665 = vmul.f32 %v4629, %v4642
        %v4666 = vmul.f32 %v4630, %v4642
        %v4667 = vmul.f32 %v4631, %v4642
        %v4668 = vmul.f32 %v4632, %v4642
        %v4669 = vmul.f32 %v4633, %v4642
        %v4670 = vmul.f32 %v4634, %v4642
        %v4671 = vmul.f32 %v4635, %v4642
        %v4672 = vmul.f32 %v4636, %v4642
        %v4673 = vmul.f32 %v4637, %v4642
        %v4674 = vmul.f32 %v4638, %v4642
        %v4675 = vld [vmem:[%s7] sm:$0x1]
        %v4677 = vlaneseq
        %v4678 = vshrl.u32 %v4677, 7
        %v4679 = vsub.s32 0, %v4678
        %v4680 = vrot.slane %v4675, %v4679
        %v4682 = vadd.f32 %v4643, %v4680
        %v4683 = vadd.f32 %v4644, %v4680
        %v4684 = vadd.f32 %v4645, %v4680
        %v4685 = vadd.f32 %v4646, %v4680
        %v4686 = vadd.f32 %v4647, %v4680
        %v4687 = vadd.f32 %v4648, %v4680
        %v4688 = vadd.f32 %v4649, %v4680
        %v4689 = vadd.f32 %v4650, %v4680
        %v4690 = vadd.f32 %v4651, %v4680
        %v4691 = vadd.f32 %v4652, %v4680
        %v4692 = vadd.f32 %v4653, %v4680
        %v4693 = vadd.f32 %v4654, %v4680
        %v4694 = vadd.f32 %v4655, %v4680
        %v4695 = vadd.f32 %v4656, %v4680
        %v4696 = vadd.f32 %v4657, %v4680
        %v4697 = vadd.f32 %v4658, %v4680
        %v4698 = vadd.f32 %v4659, %v4680
        %v4699 = vadd.f32 %v4660, %v4680
        %v4700 = vadd.f32 %v4661, %v4680
        %v4701 = vadd.f32 %v4662, %v4680
        %v4702 = vadd.f32 %v4663, %v4680
        %v4703 = vadd.f32 %v4664, %v4680
        %v4704 = vadd.f32 %v4665, %v4680
        %v4705 = vadd.f32 %v4666, %v4680
        %v4706 = vadd.f32 %v4667, %v4680
        %v4707 = vadd.f32 %v4668, %v4680
        %v4708 = vadd.f32 %v4669, %v4680
        %v4709 = vadd.f32 %v4670, %v4680
        %v4710 = vadd.f32 %v4671, %v4680
        %v4711 = vadd.f32 %v4672, %v4680
        %v4712 = vadd.f32 %v4673, %v4680
        %v4713 = vadd.f32 %v4674, %v4680
        %v4714 = vxor.u32 %v4682, 2147483648
        %v4715 = vxor.u32 %v4683, 2147483648
        %v4716 = vxor.u32 %v4684, 2147483648
        %v4717 = vxor.u32 %v4685, 2147483648
        %v4718 = vxor.u32 %v4686, 2147483648
        %v4719 = vxor.u32 %v4687, 2147483648
        %v4720 = vxor.u32 %v4688, 2147483648
        %v4721 = vxor.u32 %v4689, 2147483648
        %v4722 = vxor.u32 %v4690, 2147483648
        %v4723 = vxor.u32 %v4691, 2147483648
        %v4724 = vxor.u32 %v4692, 2147483648
        %v4725 = vxor.u32 %v4693, 2147483648
        %v4726 = vxor.u32 %v4694, 2147483648
        %v4727 = vxor.u32 %v4695, 2147483648
        %v4728 = vxor.u32 %v4696, 2147483648
        %v4729 = vxor.u32 %v4697, 2147483648
        %v4730 = vxor.u32 %v4698, 2147483648
        %v4731 = vxor.u32 %v4699, 2147483648
        %v4732 = vxor.u32 %v4700, 2147483648
        %v4733 = vxor.u32 %v4701, 2147483648
        %v4734 = vxor.u32 %v4702, 2147483648
        %v4735 = vxor.u32 %v4703, 2147483648
        %v4736 = vxor.u32 %v4704, 2147483648
        %v4737 = vxor.u32 %v4705, 2147483648
        %v4738 = vxor.u32 %v4706, 2147483648
        %v4739 = vxor.u32 %v4707, 2147483648
        %v4740 = vxor.u32 %v4708, 2147483648
        %v4741 = vxor.u32 %v4709, 2147483648
        %v4742 = vxor.u32 %v4710, 2147483648
        %v4743 = vxor.u32 %v4711, 2147483648
        %v4744 = vxor.u32 %v4712, 2147483648
        %v4745 = vxor.u32 %v4713, 2147483648
        %v4746 = vmul.f32 %v4714, 1.442695
        %v4747 = vpow.pop %v4746
        %v4748 = vmul.f32 %v4715, 1.442695
        %v4749 = vpow.pop %v4748
        %v4750 = vmul.f32 %v4716, 1.442695
        %v4751 = vpow.pop %v4750
        %v4752 = vmul.f32 %v4717, 1.442695
        %v4753 = vpow.pop %v4752
        %v4754 = vmul.f32 %v4718, 1.442695
        %v4755 = vpow.pop %v4754
        %v4756 = vmul.f32 %v4719, 1.442695
        %v4757 = vpow.pop %v4756
        %v4758 = vmul.f32 %v4720, 1.442695
        %v4759 = vpow.pop %v4758
        %v4760 = vmul.f32 %v4721, 1.442695
        %v4761 = vpow.pop %v4760
        %v4762 = vmul.f32 %v4722, 1.442695
        %v4763 = vpow.pop %v4762
        %v4764 = vmul.f32 %v4723, 1.442695
        %v4765 = vpow.pop %v4764
        %v4766 = vmul.f32 %v4724, 1.442695
        %v4767 = vpow.pop %v4766
        %v4768 = vmul.f32 %v4725, 1.442695
        %v4769 = vpow.pop %v4768
        %v4770 = vmul.f32 %v4726, 1.442695
        %v4771 = vpow.pop %v4770
        %v4772 = vmul.f32 %v4727, 1.442695
        %v4773 = vpow.pop %v4772
        %v4774 = vmul.f32 %v4728, 1.442695
        %v4775 = vpow.pop %v4774
        %v4776 = vmul.f32 %v4729, 1.442695
        %v4777 = vpow.pop %v4776
        %v4778 = vmul.f32 %v4730, 1.442695
        %v4779 = vpow.pop %v4778
        %v4780 = vmul.f32 %v4731, 1.442695
        %v4781 = vpow.pop %v4780
        %v4782 = vmul.f32 %v4732, 1.442695
        %v4783 = vpow.pop %v4782
        %v4784 = vmul.f32 %v4733, 1.442695
        %v4785 = vpow.pop %v4784
        %v4786 = vmul.f32 %v4734, 1.442695
        %v4787 = vpow.pop %v4786
        %v4788 = vmul.f32 %v4735, 1.442695
        %v4789 = vpow.pop %v4788
        %v4790 = vmul.f32 %v4736, 1.442695
        %v4791 = vpow.pop %v4790
        %v4792 = vmul.f32 %v4737, 1.442695
        %v4793 = vpow.pop %v4792
        %v4794 = vmul.f32 %v4738, 1.442695
        %v4795 = vpow.pop %v4794
        %v4796 = vmul.f32 %v4739, 1.442695
        %v4797 = vpow.pop %v4796
        %v4798 = vmul.f32 %v4740, 1.442695
        %v4799 = vpow.pop %v4798
        %v4800 = vmul.f32 %v4741, 1.442695
        %v4801 = vpow.pop %v4800
        %v4802 = vmul.f32 %v4742, 1.442695
        %v4803 = vpow.pop %v4802
        %v4804 = vmul.f32 %v4743, 1.442695
        %v4805 = vpow.pop %v4804
        %v4806 = vmul.f32 %v4744, 1.442695
        %v4807 = vpow.pop %v4806
        %v4808 = vmul.f32 %v4745, 1.442695
        %v4809 = vpow.pop %v4808
        %v4810 = vadd.f32 %v4747, 1.0
        %v4811 = vadd.f32 %v4749, 1.0
        %v4812 = vadd.f32 %v4751, 1.0
        %v4813 = vadd.f32 %v4753, 1.0
        %v4814 = vadd.f32 %v4755, 1.0
        %v4815 = vadd.f32 %v4757, 1.0
        %v4816 = vadd.f32 %v4759, 1.0
        %v4817 = vadd.f32 %v4761, 1.0
        %v4818 = vadd.f32 %v4763, 1.0
        %v4819 = vadd.f32 %v4765, 1.0
        %v4820 = vadd.f32 %v4767, 1.0
        %v4821 = vadd.f32 %v4769, 1.0
        %v4822 = vadd.f32 %v4771, 1.0
        %v4823 = vadd.f32 %v4773, 1.0
        %v4824 = vadd.f32 %v4775, 1.0
        %v4825 = vadd.f32 %v4777, 1.0
        %v4826 = vadd.f32 %v4779, 1.0
        %v4827 = vadd.f32 %v4781, 1.0
        %v4828 = vadd.f32 %v4783, 1.0
        %v4829 = vadd.f32 %v4785, 1.0
        %v4830 = vadd.f32 %v4787, 1.0
        %v4831 = vadd.f32 %v4789, 1.0
        %v4832 = vadd.f32 %v4791, 1.0
        %v4833 = vadd.f32 %v4793, 1.0
        %v4834 = vadd.f32 %v4795, 1.0
        %v4835 = vadd.f32 %v4797, 1.0
        %v4836 = vadd.f32 %v4799, 1.0
        %v4837 = vadd.f32 %v4801, 1.0
        %v4838 = vadd.f32 %v4803, 1.0
        %v4839 = vadd.f32 %v4805, 1.0
        %v4840 = vadd.f32 %v4807, 1.0
        %v4841 = vadd.f32 %v4809, 1.0
        %v4842 = vrcp.pop %v4810
        %v4843 = vmul.f32 1.0, %v4842
        %v4844 = vrcp.pop %v4811
        %v4845 = vmul.f32 1.0, %v4844
        %v4846 = vrcp.pop %v4812
        %v4847 = vmul.f32 1.0, %v4846
        %v4848 = vrcp.pop %v4813
        %v4849 = vmul.f32 1.0, %v4848
        %v4850 = vrcp.pop %v4814
        %v4851 = vmul.f32 1.0, %v4850
        %v4852 = vrcp.pop %v4815
        %v4853 = vmul.f32 1.0, %v4852
        %v4854 = vrcp.pop %v4816
        %v4855 = vmul.f32 1.0, %v4854
        %v4856 = vrcp.pop %v4817
        %v4857 = vmul.f32 1.0, %v4856
        %v4858 = vrcp.pop %v4818
        %v4859 = vmul.f32 1.0, %v4858
        %v4860 = vrcp.pop %v4819
        %v4861 = vmul.f32 1.0, %v4860
        %v4862 = vrcp.pop %v4820
        %v4863 = vmul.f32 1.0, %v4862
        %v4864 = vrcp.pop %v4821
        %v4865 = vmul.f32 1.0, %v4864
        %v4866 = vrcp.pop %v4822
        %v4867 = vmul.f32 1.0, %v4866
        %v4868 = vrcp.pop %v4823
        %v4869 = vmul.f32 1.0, %v4868
        %v4870 = vrcp.pop %v4824
        %v4871 = vmul.f32 1.0, %v4870
        %v4872 = vrcp.pop %v4825
        %v4873 = vmul.f32 1.0, %v4872
        %v4874 = vrcp.pop %v4826
        %v4875 = vmul.f32 1.0, %v4874
        %v4876 = vrcp.pop %v4827
        %v4877 = vmul.f32 1.0, %v4876
        %v4878 = vrcp.pop %v4828
        %v4879 = vmul.f32 1.0, %v4878
        %v4880 = vrcp.pop %v4829
        %v4881 = vmul.f32 1.0, %v4880
        %v4882 = vrcp.pop %v4830
        %v4883 = vmul.f32 1.0, %v4882
        %v4884 = vrcp.pop %v4831
        %v4885 = vmul.f32 1.0, %v4884
        %v4886 = vrcp.pop %v4832
        %v4887 = vmul.f32 1.0, %v4886
        %v4888 = vrcp.pop %v4833
        %v4889 = vmul.f32 1.0, %v4888
        %v4890 = vrcp.pop %v4834
        %v4891 = vmul.f32 1.0, %v4890
        %v4892 = vrcp.pop %v4835
        %v4893 = vmul.f32 1.0, %v4892
        %v4894 = vrcp.pop %v4836
        %v4895 = vmul.f32 1.0, %v4894
        %v4896 = vrcp.pop %v4837
        %v4897 = vmul.f32 1.0, %v4896
        %v4898 = vrcp.pop %v4838
        %v4899 = vmul.f32 1.0, %v4898
        %v4900 = vrcp.pop %v4839
        %v4901 = vmul.f32 1.0, %v4900
        %v4902 = vrcp.pop %v4840
        %v4903 = vmul.f32 1.0, %v4902
        %v4904 = vrcp.pop %v4841
        %v4905 = vmul.f32 1.0, %v4904
        %v4906 = vmul.f32 %v4682, %v4843
        %v4907 = vmul.f32 %v4683, %v4845
        %v4908 = vmul.f32 %v4684, %v4847
        %v4909 = vmul.f32 %v4685, %v4849
        %v4910 = vmul.f32 %v4686, %v4851
        %v4911 = vmul.f32 %v4687, %v4853
        %v4912 = vmul.f32 %v4688, %v4855
        %v4913 = vmul.f32 %v4689, %v4857
        %v4914 = vmul.f32 %v4690, %v4859
        %v4915 = vmul.f32 %v4691, %v4861
        %v4916 = vmul.f32 %v4692, %v4863
        %v4917 = vmul.f32 %v4693, %v4865
        %v4918 = vmul.f32 %v4694, %v4867
        %v4919 = vmul.f32 %v4695, %v4869
        %v4920 = vmul.f32 %v4696, %v4871
        %v4921 = vmul.f32 %v4697, %v4873
        %v4922 = vmul.f32 %v4698, %v4875
        %v4923 = vmul.f32 %v4699, %v4877
        %v4924 = vmul.f32 %v4700, %v4879
        %v4925 = vmul.f32 %v4701, %v4881
        %v4926 = vmul.f32 %v4702, %v4883
        %v4927 = vmul.f32 %v4703, %v4885
        %v4928 = vmul.f32 %v4704, %v4887
        %v4929 = vmul.f32 %v4705, %v4889
        %v4930 = vmul.f32 %v4706, %v4891
        %v4931 = vmul.f32 %v4707, %v4893
        %v4932 = vmul.f32 %v4708, %v4895
        %v4933 = vmul.f32 %v4709, %v4897
        %v4934 = vmul.f32 %v4710, %v4899
        %v4935 = vmul.f32 %v4711, %v4901
        %v4936 = vmul.f32 %v4712, %v4903
        %v4937 = vmul.f32 %v4713, %v4905
        %v4938 = vpack.c.bf16 %v4907, %v4906
        %v4939 = vpack.c.bf16 %v4909, %v4908
        %v4940 = vpack.c.bf16 %v4911, %v4910
        %v4941 = vpack.c.bf16 %v4913, %v4912
        %v4942 = vpack.c.bf16 %v4915, %v4914
        %v4943 = vpack.c.bf16 %v4917, %v4916
        %v4944 = vpack.c.bf16 %v4919, %v4918
        %v4945 = vpack.c.bf16 %v4921, %v4920
        %v4946 = vpack.c.bf16 %v4923, %v4922
        %v4947 = vpack.c.bf16 %v4925, %v4924
        %v4948 = vpack.c.bf16 %v4927, %v4926
        %v4949 = vpack.c.bf16 %v4929, %v4928
        %v4950 = vpack.c.bf16 %v4931, %v4930
        %v4951 = vpack.c.bf16 %v4933, %v4932
        %v4952 = vpack.c.bf16 %v4935, %v4934
        %v4953 = vpack.c.bf16 %v4937, %v4936
        %4954 = vst [vmem:[#allocation3] sm:$0xf] 0
        %4955 = vst [vmem:[#allocation3 + $0x4] sm:$0xf] 0
        %4956 = vst [vmem:[#allocation3 + $0x8] sm:$0x1] 0
        %s4957 = scalar_lea.vmem [#allocation3], 204
        %4958 = vst [vmem:[%s4957] sm:$0xf] 0
        %4959 = vst [vmem:[%s4957 + $0x4] sm:$0xf] 0
        %4960 = vst [vmem:[%s4957 + $0x8] sm:$0x1] 0
        %s4961 = scalar_lea.vmem [#allocation3], 12
        %vm4962 = vcmask 1040384
        %vm4963 = vmand %vm4962, %vm1106
        %v4964 = vld [vmem:[%s4961] sm:$0x1]
        %v4965 = vsel %vm4963, 0, %v4964
        %4966 = vst [vmem:[%s4961] sm:$0x1] %v4965
        %v4967 = vld [vmem:[%s4961 + $0xc] sm:$0x1]
        %v4968 = vsel %vm4963, 0, %v4967
        %4969 = vst [vmem:[%s4961 + $0xc] sm:$0x1] %v4968
        %v4970 = vld [vmem:[%s4961 + $0x18] sm:$0x1]
        %v4971 = vsel %vm4963, 0, %v4970
        %4972 = vst [vmem:[%s4961 + $0x18] sm:$0x1] %v4971
        %v4973 = vld [vmem:[%s4961 + $0x24] sm:$0x1]
        %v4974 = vsel %vm4963, 0, %v4973
        %4975 = vst [vmem:[%s4961 + $0x24] sm:$0x1] %v4974
        %v4976 = vld [vmem:[%s4961 + $0x30] sm:$0x1]
        %v4977 = vsel %vm4963, 0, %v4976
        %4978 = vst [vmem:[%s4961 + $0x30] sm:$0x1] %v4977
        %v4979 = vld [vmem:[%s4961 + $0x3c] sm:$0x1]
        %v4980 = vsel %vm4963, 0, %v4979
        %4981 = vst [vmem:[%s4961 + $0x3c] sm:$0x1] %v4980
        %v4982 = vld [vmem:[%s4961 + $0x48] sm:$0x1]
        %v4983 = vsel %vm4963, 0, %v4982
        %4984 = vst [vmem:[%s4961 + $0x48] sm:$0x1] %v4983
        %v4985 = vld [vmem:[%s4961 + $0x54] sm:$0x1]
        %v4986 = vsel %vm4963, 0, %v4985
        %4987 = vst [vmem:[%s4961 + $0x54] sm:$0x1] %v4986
        %v4988 = vld [vmem:[%s4961 + $0x60] sm:$0x1]
        %v4989 = vsel %vm4963, 0, %v4988
        %4990 = vst [vmem:[%s4961 + $0x60] sm:$0x1] %v4989
        %v4991 = vld [vmem:[%s4961 + $0x6c] sm:$0x1]
        %v4992 = vsel %vm4963, 0, %v4991
        %4993 = vst [vmem:[%s4961 + $0x6c] sm:$0x1] %v4992
        %v4994 = vld [vmem:[%s4961 + $0x78] sm:$0x1]
        %v4995 = vsel %vm4963, 0, %v4994
        %4996 = vst [vmem:[%s4961 + $0x78] sm:$0x1] %v4995
        %v4997 = vld [vmem:[%s4961 + $0x84] sm:$0x1]
        %v4998 = vsel %vm4963, 0, %v4997
        %4999 = vst [vmem:[%s4961 + $0x84] sm:$0x1] %v4998
        %v5000 = vld [vmem:[%s4961 + $0x90] sm:$0x1]
        %v5001 = vsel %vm4963, 0, %v5000
        %5002 = vst [vmem:[%s4961 + $0x90] sm:$0x1] %v5001
        %v5003 = vld [vmem:[%s4961 + $0x9c] sm:$0x1]
        %v5004 = vsel %vm4963, 0, %v5003
        %5005 = vst [vmem:[%s4961 + $0x9c] sm:$0x1] %v5004
        %v5006 = vld [vmem:[%s4961 + $0xa8] sm:$0x1]
        %v5007 = vsel %vm4963, 0, %v5006
        %5008 = vst [vmem:[%s4961 + $0xa8] sm:$0x1] %v5007
        %v5009 = vld [vmem:[%s4961 + $0xb4] sm:$0x1]
        %v5010 = vsel %vm4963, 0, %v5009
        %5011 = vst [vmem:[%s4961 + $0xb4] sm:$0x1] %v5010
        %vm5012 = vmand %vm4962, %vm1156
        %v5013 = vld [vmem:[%s4961 + $0x8] sm:$0x1]
        %v5014 = vsel %vm5012, 0, %v5013
        %5015 = vst [vmem:[%s4961 + $0x8] sm:$0x1] %v5014
        %v5016 = vld [vmem:[%s4961 + $0x14] sm:$0x1]
        %v5017 = vsel %vm5012, 0, %v5016
        %5018 = vst [vmem:[%s4961 + $0x14] sm:$0x1] %v5017
        %v5019 = vld [vmem:[%s4961 + $0x20] sm:$0x1]
        %v5020 = vsel %vm5012, 0, %v5019
        %5021 = vst [vmem:[%s4961 + $0x20] sm:$0x1] %v5020
        %v5022 = vld [vmem:[%s4961 + $0x2c] sm:$0x1]
        %v5023 = vsel %vm5012, 0, %v5022
        %5024 = vst [vmem:[%s4961 + $0x2c] sm:$0x1] %v5023
        %v5025 = vld [vmem:[%s4961 + $0x38] sm:$0x1]
        %v5026 = vsel %vm5012, 0, %v5025
        %5027 = vst [vmem:[%s4961 + $0x38] sm:$0x1] %v5026
        %v5028 = vld [vmem:[%s4961 + $0x44] sm:$0x1]
        %v5029 = vsel %vm5012, 0, %v5028
        %5030 = vst [vmem:[%s4961 + $0x44] sm:$0x1] %v5029
        %v5031 = vld [vmem:[%s4961 + $0x50] sm:$0x1]
        %v5032 = vsel %vm5012, 0, %v5031
        %5033 = vst [vmem:[%s4961 + $0x50] sm:$0x1] %v5032
        %v5034 = vld [vmem:[%s4961 + $0x5c] sm:$0x1]
        %v5035 = vsel %vm5012, 0, %v5034
        %5036 = vst [vmem:[%s4961 + $0x5c] sm:$0x1] %v5035
        %v5037 = vld [vmem:[%s4961 + $0x68] sm:$0x1]
        %v5038 = vsel %vm5012, 0, %v5037
        %5039 = vst [vmem:[%s4961 + $0x68] sm:$0x1] %v5038
        %v5040 = vld [vmem:[%s4961 + $0x74] sm:$0x1]
        %v5041 = vsel %vm5012, 0, %v5040
        %5042 = vst [vmem:[%s4961 + $0x74] sm:$0x1] %v5041
        %v5043 = vld [vmem:[%s4961 + $0x80] sm:$0x1]
        %v5044 = vsel %vm5012, 0, %v5043
        %5045 = vst [vmem:[%s4961 + $0x80] sm:$0x1] %v5044
        %v5046 = vld [vmem:[%s4961 + $0x8c] sm:$0x1]
        %v5047 = vsel %vm5012, 0, %v5046
        %5048 = vst [vmem:[%s4961 + $0x8c] sm:$0x1] %v5047
        %v5049 = vld [vmem:[%s4961 + $0x98] sm:$0x1]
        %v5050 = vsel %vm5012, 0, %v5049
        %5051 = vst [vmem:[%s4961 + $0x98] sm:$0x1] %v5050
        %v5052 = vld [vmem:[%s4961 + $0xa4] sm:$0x1]
        %v5053 = vsel %vm5012, 0, %v5052
        %5054 = vst [vmem:[%s4961 + $0xa4] sm:$0x1] %v5053
        %v5055 = vld [vmem:[%s4961 + $0xb0] sm:$0x1]
        %v5056 = vsel %vm5012, 0, %v5055
        %5057 = vst [vmem:[%s4961 + $0xb0] sm:$0x1] %v5056
        %v5058 = vld [vmem:[%s4961 + $0xbc] sm:$0x1]
        %v5059 = vsel %vm5012, 0, %v5058
        %5060 = vst [vmem:[%s4961 + $0xbc] sm:$0x1] %v5059
        %v5077 = vunpack.c.l.b16 %v4938
        %v5078 = vunpack.c.h.b16 %v4938
        %v5079 = vunpack.c.l.b16 %v4939
        %v5080 = vunpack.c.h.b16 %v4939
        %v5081 = vunpack.c.l.b16 %v4940
        %v5082 = vunpack.c.h.b16 %v4940
        %v5083 = vunpack.c.l.b16 %v4941
        %v5084 = vunpack.c.h.b16 %v4941
        %v5085 = vunpack.c.l.b16 %v4942
        %v5086 = vunpack.c.h.b16 %v4942
        %v5087 = vunpack.c.l.b16 %v4943
        %v5088 = vunpack.c.h.b16 %v4943
        %v5089 = vunpack.c.l.b16 %v4944
        %v5090 = vunpack.c.h.b16 %v4944
        %v5091 = vunpack.c.l.b16 %v4945
        %v5092 = vunpack.c.h.b16 %v4945
        %v5093 = vunpack.c.l.b16 %v4946
        %v5094 = vunpack.c.h.b16 %v4946
        %v5095 = vunpack.c.l.b16 %v4947
        %v5096 = vunpack.c.h.b16 %v4947
        %v5097 = vunpack.c.l.b16 %v4948
        %v5098 = vunpack.c.h.b16 %v4948
        %v5099 = vunpack.c.l.b16 %v4949
        %v5100 = vunpack.c.h.b16 %v4949
        %v5101 = vunpack.c.l.b16 %v4950
        %v5102 = vunpack.c.h.b16 %v4950
        %v5103 = vunpack.c.l.b16 %v4951
        %v5104 = vunpack.c.h.b16 %v4951
        %v5105 = vunpack.c.l.b16 %v4952
        %v5106 = vunpack.c.h.b16 %v4952
        %v5107 = vunpack.c.l.b16 %v4953
        %v5108 = vunpack.c.h.b16 %v4953
        %v5109 = vpack.c.b16 %v5077, %v5077
        %v5110 = vpack.c.b16 %v5078, %v5078
        %v5111 = vpack.c.b16 %v5079, %v5079
        %v5112 = vpack.c.b16 %v5080, %v5080
        %v5113 = vpack.c.b16 %v5081, %v5081
        %v5114 = vpack.c.b16 %v5082, %v5082
        %v5115 = vpack.c.b16 %v5083, %v5083
        %v5116 = vpack.c.b16 %v5084, %v5084
        %v5117 = vpack.c.b16 %v5085, %v5085
        %v5118 = vpack.c.b16 %v5086, %v5086
        %v5119 = vpack.c.b16 %v5087, %v5087
        %v5120 = vpack.c.b16 %v5088, %v5088
        %v5121 = vpack.c.b16 %v5089, %v5089
        %v5122 = vpack.c.b16 %v5090, %v5090
        %v5123 = vpack.c.b16 %v5091, %v5091
        %v5124 = vpack.c.b16 %v5092, %v5092
        %v5125 = vpack.c.b16 %v5093, %v5093
        %v5126 = vpack.c.b16 %v5094, %v5094
        %v5127 = vpack.c.b16 %v5095, %v5095
        %v5128 = vpack.c.b16 %v5096, %v5096
        %v5129 = vpack.c.b16 %v5097, %v5097
        %v5130 = vpack.c.b16 %v5098, %v5098
        %v5131 = vpack.c.b16 %v5099, %v5099
        %v5132 = vpack.c.b16 %v5100, %v5100
        %v5133 = vpack.c.b16 %v5101, %v5101
        %v5134 = vpack.c.b16 %v5102, %v5102
        %v5135 = vpack.c.b16 %v5103, %v5103
        %v5136 = vpack.c.b16 %v5104, %v5104
        %v5137 = vpack.c.b16 %v5105, %v5105
        %v5138 = vpack.c.b16 %v5106, %v5106
        %v5139 = vpack.c.b16 %v5107, %v5107
        %v5140 = vpack.c.b16 %v5108, %v5108
        %v5142 = vshrl.u32 %v5109, 16
        %v5144 = vrot.slane %v5142, 7
        %v5145 = vshll.u32 %v5109, 16
        %v5147 = vor.u32 %v5144, %v5145
        %v5148 = vrot.slane %v5144, 4
        %v5150 = vshrl.u32 %v5110, 16
        %v5152 = vrot.slane %v5150, 7
        %v5153 = vshll.u32 %v5110, 16
        %v5155 = vor.u32 %v5152, %v5153
        %v5156 = vsel %vm1287, %v5148, %v5155
        %v5157 = vrot.slane %v5152, 4
        %v5159 = vshrl.u32 %v5111, 16
        %v5161 = vrot.slane %v5159, 7
        %v5162 = vshll.u32 %v5111, 16
        %v5164 = vor.u32 %v5161, %v5162
        %v5165 = vrot.slane %v5161, 4
        %v5167 = vshrl.u32 %v5112, 16
        %v5169 = vrot.slane %v5167, 7
        %v5170 = vshll.u32 %v5112, 16
        %v5172 = vor.u32 %v5169, %v5170
        %v5173 = vsel %vm1287, %v5165, %v5172
        %v5174 = vrot.slane %v5169, 4
        %v5176 = vshrl.u32 %v5113, 16
        %v5178 = vrot.slane %v5176, 7
        %v5179 = vshll.u32 %v5113, 16
        %v5181 = vor.u32 %v5178, %v5179
        %v5182 = vrot.slane %v5178, 4
        %v5184 = vshrl.u32 %v5114, 16
        %v5186 = vrot.slane %v5184, 7
        %v5187 = vshll.u32 %v5114, 16
        %v5189 = vor.u32 %v5186, %v5187
        %v5190 = vsel %vm1287, %v5182, %v5189
        %v5191 = vrot.slane %v5186, 4
        %v5193 = vshrl.u32 %v5115, 16
        %v5195 = vrot.slane %v5193, 7
        %v5196 = vshll.u32 %v5115, 16
        %v5198 = vor.u32 %v5195, %v5196
        %v5199 = vrot.slane %v5195, 4
        %v5201 = vshrl.u32 %v5116, 16
        %v5203 = vrot.slane %v5201, 7
        %v5204 = vshll.u32 %v5116, 16
        %v5206 = vor.u32 %v5203, %v5204
        %v5207 = vsel %vm1287, %v5199, %v5206
        %v5208 = vrot.slane %v5203, 4
        %v5210 = vshrl.u32 %v5117, 16
        %v5212 = vrot.slane %v5210, 7
        %v5213 = vshll.u32 %v5117, 16
        %v5215 = vor.u32 %v5212, %v5213
        %v5216 = vrot.slane %v5212, 4
        %v5218 = vshrl.u32 %v5118, 16
        %v5220 = vrot.slane %v5218, 7
        %v5221 = vshll.u32 %v5118, 16
        %v5223 = vor.u32 %v5220, %v5221
        %v5224 = vsel %vm1287, %v5216, %v5223
        %v5225 = vrot.slane %v5220, 4
        %v5227 = vshrl.u32 %v5119, 16
        %v5229 = vrot.slane %v5227, 7
        %v5230 = vshll.u32 %v5119, 16
        %v5232 = vor.u32 %v5229, %v5230
        %v5233 = vrot.slane %v5229, 4
        %v5235 = vshrl.u32 %v5120, 16
        %v5237 = vrot.slane %v5235, 7
        %v5238 = vshll.u32 %v5120, 16
        %v5240 = vor.u32 %v5237, %v5238
        %v5241 = vsel %vm1287, %v5233, %v5240
        %v5242 = vrot.slane %v5237, 4
        %v5244 = vshrl.u32 %v5121, 16
        %v5246 = vrot.slane %v5244, 7
        %v5247 = vshll.u32 %v5121, 16
        %v5249 = vor.u32 %v5246, %v5247
        %v5250 = vrot.slane %v5246, 4
        %v5252 = vshrl.u32 %v5122, 16
        %v5254 = vrot.slane %v5252, 7
        %v5255 = vshll.u32 %v5122, 16
        %v5257 = vor.u32 %v5254, %v5255
        %v5258 = vsel %vm1287, %v5250, %v5257
        %v5259 = vrot.slane %v5254, 4
        %v5261 = vshrl.u32 %v5123, 16
        %v5263 = vrot.slane %v5261, 7
        %v5264 = vshll.u32 %v5123, 16
        %v5266 = vor.u32 %v5263, %v5264
        %v5267 = vrot.slane %v5263, 4
        %v5269 = vshrl.u32 %v5124, 16
        %v5271 = vrot.slane %v5269, 7
        %v5272 = vshll.u32 %v5124, 16
        %v5274 = vor.u32 %v5271, %v5272
        %v5275 = vsel %vm1287, %v5267, %v5274
        %v5276 = vrot.slane %v5271, 4
        %v5278 = vshrl.u32 %v5125, 16
        %v5280 = vrot.slane %v5278, 7
        %v5281 = vshll.u32 %v5125, 16
        %v5283 = vor.u32 %v5280, %v5281
        %v5284 = vrot.slane %v5280, 4
        %v5286 = vshrl.u32 %v5126, 16
        %v5288 = vrot.slane %v5286, 7
        %v5289 = vshll.u32 %v5126, 16
        %v5291 = vor.u32 %v5288, %v5289
        %v5292 = vsel %vm1287, %v5284, %v5291
        %v5293 = vrot.slane %v5288, 4
        %v5295 = vshrl.u32 %v5127, 16
        %v5297 = vrot.slane %v5295, 7
        %v5298 = vshll.u32 %v5127, 16
        %v5300 = vor.u32 %v5297, %v5298
        %v5301 = vrot.slane %v5297, 4
        %v5303 = vshrl.u32 %v5128, 16
        %v5305 = vrot.slane %v5303, 7
        %v5306 = vshll.u32 %v5128, 16
        %v5308 = vor.u32 %v5305, %v5306
        %v5309 = vsel %vm1287, %v5301, %v5308
        %v5310 = vrot.slane %v5305, 4
        %v5312 = vshrl.u32 %v5129, 16
        %v5314 = vrot.slane %v5312, 7
        %v5315 = vshll.u32 %v5129, 16
        %v5317 = vor.u32 %v5314, %v5315
        %v5318 = vrot.slane %v5314, 4
        %v5320 = vshrl.u32 %v5130, 16
        %v5322 = vrot.slane %v5320, 7
        %v5323 = vshll.u32 %v5130, 16
        %v5325 = vor.u32 %v5322, %v5323
        %v5326 = vsel %vm1287, %v5318, %v5325
        %v5327 = vrot.slane %v5322, 4
        %v5329 = vshrl.u32 %v5131, 16
        %v5331 = vrot.slane %v5329, 7
        %v5332 = vshll.u32 %v5131, 16
        %v5334 = vor.u32 %v5331, %v5332
        %v5335 = vrot.slane %v5331, 4
        %v5337 = vshrl.u32 %v5132, 16
        %v5339 = vrot.slane %v5337, 7
        %v5340 = vshll.u32 %v5132, 16
        %v5342 = vor.u32 %v5339, %v5340
        %v5343 = vsel %vm1287, %v5335, %v5342
        %v5344 = vrot.slane %v5339, 4
        %v5346 = vshrl.u32 %v5133, 16
        %v5348 = vrot.slane %v5346, 7
        %v5349 = vshll.u32 %v5133, 16
        %v5351 = vor.u32 %v5348, %v5349
        %v5352 = vrot.slane %v5348, 4
        %v5354 = vshrl.u32 %v5134, 16
        %v5356 = vrot.slane %v5354, 7
        %v5357 = vshll.u32 %v5134, 16
        %v5359 = vor.u32 %v5356, %v5357
        %v5360 = vsel %vm1287, %v5352, %v5359
        %v5361 = vrot.slane %v5356, 4
        %v5363 = vshrl.u32 %v5135, 16
        %v5365 = vrot.slane %v5363, 7
        %v5366 = vshll.u32 %v5135, 16
        %v5368 = vor.u32 %v5365, %v5366
        %v5369 = vrot.slane %v5365, 4
        %v5371 = vshrl.u32 %v5136, 16
        %v5373 = vrot.slane %v5371, 7
        %v5374 = vshll.u32 %v5136, 16
        %v5376 = vor.u32 %v5373, %v5374
        %v5377 = vsel %vm1287, %v5369, %v5376
        %v5378 = vrot.slane %v5373, 4
        %v5380 = vshrl.u32 %v5137, 16
        %v5382 = vrot.slane %v5380, 7
        %v5383 = vshll.u32 %v5137, 16
        %v5385 = vor.u32 %v5382, %v5383
        %v5386 = vrot.slane %v5382, 4
        %v5388 = vshrl.u32 %v5138, 16
        %v5390 = vrot.slane %v5388, 7
        %v5391 = vshll.u32 %v5138, 16
        %v5393 = vor.u32 %v5390, %v5391
        %v5394 = vsel %vm1287, %v5386, %v5393
        %v5395 = vrot.slane %v5390, 4
        %v5397 = vshrl.u32 %v5139, 16
        %v5399 = vrot.slane %v5397, 7
        %v5400 = vshll.u32 %v5139, 16
        %v5402 = vor.u32 %v5399, %v5400
        %v5403 = vrot.slane %v5399, 4
        %v5405 = vshrl.u32 %v5140, 16
        %v5407 = vrot.slane %v5405, 7
        %v5408 = vshll.u32 %v5140, 16
        %v5410 = vor.u32 %v5407, %v5408
        %v5411 = vsel %vm1287, %v5403, %v5410
        %v5412 = vrot.slane %v5407, 4
        %vm5461 = vcmask 1043456
        %vm5462 = vmand %vm5461, %vm1156
        %v5463 = vld [vmem:[%s4961] sm:$0xf]
        %v5464 = vsel %vm5462, %v5147, %v5463
        %5465 = vst [vmem:[%s4961] sm:$0xf] %v5464
        %5466 = vst [vmem:[%s4961 + $0x4] sm:$0xf] %v5156
        %v5467 = vld [vmem:[%s4961 + $0x8] sm:$0x1]
        %v5468 = vsel %vm4963, %v5157, %v5467
        %5469 = vst [vmem:[%s4961 + $0x8] sm:$0x1] %v5468
        %v5470 = vld [vmem:[%s4961 + $0xc] sm:$0xf]
        %v5471 = vsel %vm5462, %v5164, %v5470
        %5472 = vst [vmem:[%s4961 + $0xc] sm:$0xf] %v5471
        %5473 = vst [vmem:[%s4961 + $0x10] sm:$0xf] %v5173
        %v5474 = vld [vmem:[%s4961 + $0x14] sm:$0x1]
        %v5475 = vsel %vm4963, %v5174, %v5474
        %5476 = vst [vmem:[%s4961 + $0x14] sm:$0x1] %v5475
        %v5477 = vld [vmem:[%s4961 + $0x18] sm:$0xf]
        %v5478 = vsel %vm5462, %v5181, %v5477
        %5479 = vst [vmem:[%s4961 + $0x18] sm:$0xf] %v5478
        %5480 = vst [vmem:[%s4961 + $0x1c] sm:$0xf] %v5190
        %v5481 = vld [vmem:[%s4961 + $0x20] sm:$0x1]
        %v5482 = vsel %vm4963, %v5191, %v5481
        %5483 = vst [vmem:[%s4961 + $0x20] sm:$0x1] %v5482
        %v5484 = vld [vmem:[%s4961 + $0x24] sm:$0xf]
        %v5485 = vsel %vm5462, %v5198, %v5484
        %5486 = vst [vmem:[%s4961 + $0x24] sm:$0xf] %v5485
        %5487 = vst [vmem:[%s4961 + $0x28] sm:$0xf] %v5207
        %v5488 = vld [vmem:[%s4961 + $0x2c] sm:$0x1]
        %v5489 = vsel %vm4963, %v5208, %v5488
        %5490 = vst [vmem:[%s4961 + $0x2c] sm:$0x1] %v5489
        %v5491 = vld [vmem:[%s4961 + $0x30] sm:$0xf]
        %v5492 = vsel %vm5462, %v5215, %v5491
        %5493 = vst [vmem:[%s4961 + $0x30] sm:$0xf] %v5492
        %5494 = vst [vmem:[%s4961 + $0x34] sm:$0xf] %v5224
        %v5495 = vld [vmem:[%s4961 + $0x38] sm:$0x1]
        %v5496 = vsel %vm4963, %v5225, %v5495
        %5497 = vst [vmem:[%s4961 + $0x38] sm:$0x1] %v5496
        %v5498 = vld [vmem:[%s4961 + $0x3c] sm:$0xf]
        %v5499 = vsel %vm5462, %v5232, %v5498
        %5500 = vst [vmem:[%s4961 + $0x3c] sm:$0xf] %v5499
        %5501 = vst [vmem:[%s4961 + $0x40] sm:$0xf] %v5241
        %v5502 = vld [vmem:[%s4961 + $0x44] sm:$0x1]
        %v5503 = vsel %vm4963, %v5242, %v5502
        %5504 = vst [vmem:[%s4961 + $0x44] sm:$0x1] %v5503
        %v5505 = vld [vmem:[%s4961 + $0x48] sm:$0xf]
        %v5506 = vsel %vm5462, %v5249, %v5505
        %5507 = vst [vmem:[%s4961 + $0x48] sm:$0xf] %v5506
        %5508 = vst [vmem:[%s4961 + $0x4c] sm:$0xf] %v5258
        %v5509 = vld [vmem:[%s4961 + $0x50] sm:$0x1]
        %v5510 = vsel %vm4963, %v5259, %v5509
        %5511 = vst [vmem:[%s4961 + $0x50] sm:$0x1] %v5510
        %v5512 = vld [vmem:[%s4961 + $0x54] sm:$0xf]
        %v5513 = vsel %vm5462, %v5266, %v5512
        %5514 = vst [vmem:[%s4961 + $0x54] sm:$0xf] %v5513
        %5515 = vst [vmem:[%s4961 + $0x58] sm:$0xf] %v5275
        %v5516 = vld [vmem:[%s4961 + $0x5c] sm:$0x1]
        %v5517 = vsel %vm4963, %v5276, %v5516
        %5518 = vst [vmem:[%s4961 + $0x5c] sm:$0x1] %v5517
        %v5519 = vld [vmem:[%s4961 + $0x60] sm:$0xf]
        %v5520 = vsel %vm5462, %v5283, %v5519
        %5521 = vst [vmem:[%s4961 + $0x60] sm:$0xf] %v5520
        %5522 = vst [vmem:[%s4961 + $0x64] sm:$0xf] %v5292
        %v5523 = vld [vmem:[%s4961 + $0x68] sm:$0x1]
        %v5524 = vsel %vm4963, %v5293, %v5523
        %5525 = vst [vmem:[%s4961 + $0x68] sm:$0x1] %v5524
        %v5526 = vld [vmem:[%s4961 + $0x6c] sm:$0xf]
        %v5527 = vsel %vm5462, %v5300, %v5526
        %5528 = vst [vmem:[%s4961 + $0x6c] sm:$0xf] %v5527
        %5529 = vst [vmem:[%s4961 + $0x70] sm:$0xf] %v5309
        %v5530 = vld [vmem:[%s4961 + $0x74] sm:$0x1]
        %v5531 = vsel %vm4963, %v5310, %v5530
        %5532 = vst [vmem:[%s4961 + $0x74] sm:$0x1] %v5531
        %v5533 = vld [vmem:[%s4961 + $0x78] sm:$0xf]
        %v5534 = vsel %vm5462, %v5317, %v5533
        %5535 = vst [vmem:[%s4961 + $0x78] sm:$0xf] %v5534
        %5536 = vst [vmem:[%s4961 + $0x7c] sm:$0xf] %v5326
        %v5537 = vld [vmem:[%s4961 + $0x80] sm:$0x1]
        %v5538 = vsel %vm4963, %v5327, %v5537
        %5539 = vst [vmem:[%s4961 + $0x80] sm:$0x1] %v5538
        %v5540 = vld [vmem:[%s4961 + $0x84] sm:$0xf]
        %v5541 = vsel %vm5462, %v5334, %v5540
        %5542 = vst [vmem:[%s4961 + $0x84] sm:$0xf] %v5541
        %5543 = vst [vmem:[%s4961 + $0x88] sm:$0xf] %v5343
        %v5544 = vld [vmem:[%s4961 + $0x8c] sm:$0x1]
        %v5545 = vsel %vm4963, %v5344, %v5544
        %5546 = vst [vmem:[%s4961 + $0x8c] sm:$0x1] %v5545
        %v5547 = vld [vmem:[%s4961 + $0x90] sm:$0xf]
        %v5548 = vsel %vm5462, %v5351, %v5547
        %5549 = vst [vmem:[%s4961 + $0x90] sm:$0xf] %v5548
        %5550 = vst [vmem:[%s4961 + $0x94] sm:$0xf] %v5360
        %v5551 = vld [vmem:[%s4961 + $0x98] sm:$0x1]
        %v5552 = vsel %vm4963, %v5361, %v5551
        %5553 = vst [vmem:[%s4961 + $0x98] sm:$0x1] %v5552
        %v5554 = vld [vmem:[%s4961 + $0x9c] sm:$0xf]
        %v5555 = vsel %vm5462, %v5368, %v5554
        %5556 = vst [vmem:[%s4961 + $0x9c] sm:$0xf] %v5555
        %5557 = vst [vmem:[%s4961 + $0xa0] sm:$0xf] %v5377
        %v5558 = vld [vmem:[%s4961 + $0xa4] sm:$0x1]
        %v5559 = vsel %vm4963, %v5378, %v5558
        %5560 = vst [vmem:[%s4961 + $0xa4] sm:$0x1] %v5559
        %v5561 = vld [vmem:[%s4961 + $0xa8] sm:$0xf]
        %v5562 = vsel %vm5462, %v5385, %v5561
        %5563 = vst [vmem:[%s4961 + $0xa8] sm:$0xf] %v5562
        %5564 = vst [vmem:[%s4961 + $0xac] sm:$0xf] %v5394
        %v5565 = vld [vmem:[%s4961 + $0xb0] sm:$0x1]
        %v5566 = vsel %vm4963, %v5395, %v5565
        %5567 = vst [vmem:[%s4961 + $0xb0] sm:$0x1] %v5566
        %v5568 = vld [vmem:[%s4961 + $0xb4] sm:$0xf]
        %v5569 = vsel %vm5462, %v5402, %v5568
        %5570 = vst [vmem:[%s4961 + $0xb4] sm:$0xf] %v5569
        %5571 = vst [vmem:[%s4961 + $0xb8] sm:$0xf] %v5411
        %v5572 = vld [vmem:[%s4961 + $0xbc] sm:$0x1]
        %v5573 = vsel %vm4963, %v5412, %v5572
        %5574 = vst [vmem:[%s4961 + $0xbc] sm:$0x1] %v5573
        %v5575 = vld [vmem:[%s438] sm:$0xff]
        %v5576 = vld [vmem:[%s438 + $0x8] sm:$0xff]
        %v5577 = vld [vmem:[%s438 + $0x10] sm:$0xff]
        %v5578 = vld [vmem:[%s438 + $0x18] sm:$0xff]
        %v5579 = vld [vmem:[%s438 + $0x20] sm:$0xff]
        %v5580 = vld [vmem:[%s438 + $0x28] sm:$0xff]
        %v5581 = vld [vmem:[%s438 + $0x30] sm:$0xff]
        %v5582 = vld [vmem:[%s438 + $0x38] sm:$0xff]
        %v5583 = vld [vmem:[%s438 + $0x40] sm:$0xff]
        %v5584 = vld [vmem:[%s438 + $0x48] sm:$0xff]
        %v5585 = vld [vmem:[%s438 + $0x50] sm:$0xff]
        %v5586 = vld [vmem:[%s438 + $0x58] sm:$0xff]
        %v5587 = vld [vmem:[%s438 + $0x60] sm:$0xff]
        %v5588 = vld [vmem:[%s438 + $0x68] sm:$0xff]
        %v5589 = vld [vmem:[%s438 + $0x70] sm:$0xff]
        %v5590 = vld [vmem:[%s438 + $0x78] sm:$0xff]
        %v5591 = vld [vmem:[%s438 + $0x80] sm:$0xff]
        %v5592 = vld [vmem:[%s438 + $0x88] sm:$0xff]
        %v5593 = vld [vmem:[%s438 + $0x90] sm:$0xff]
        %v5594 = vld [vmem:[%s438 + $0x98] sm:$0xff]
        %v5595 = vld [vmem:[%s438 + $0xa0] sm:$0xff]
        %v5596 = vld [vmem:[%s438 + $0xa8] sm:$0xff]
        %v5597 = vld [vmem:[%s438 + $0xb0] sm:$0xff]
        %v5598 = vld [vmem:[%s438 + $0xb8] sm:$0xff]
        %v5599 = vld [vmem:[%s438 + $0xc0] sm:$0xff]
        %v5600 = vld [vmem:[%s438 + $0xc8] sm:$0xff]
        %v5601 = vld [vmem:[%s438 + $0xd0] sm:$0xff]
        %v5602 = vld [vmem:[%s438 + $0xd8] sm:$0xff]
        %v5603 = vld [vmem:[%s438 + $0xe0] sm:$0xff]
        %v5604 = vld [vmem:[%s438 + $0xe8] sm:$0xff]
        %v5605 = vld [vmem:[%s438 + $0xf0] sm:$0xff]
        %v5606 = vld [vmem:[%s438 + $0xf8] sm:$0xff]
        %v5607 = vpack.c.bf16 %v5576, %v5575
        %v5608 = vpack.c.bf16 %v5578, %v5577
        %v5609 = vpack.c.bf16 %v5580, %v5579
        %v5610 = vpack.c.bf16 %v5582, %v5581
        %v5611 = vpack.c.bf16 %v5584, %v5583
        %v5612 = vpack.c.bf16 %v5586, %v5585
        %v5613 = vpack.c.bf16 %v5588, %v5587
        %v5614 = vpack.c.bf16 %v5590, %v5589
        %v5615 = vpack.c.bf16 %v5592, %v5591
        %v5616 = vpack.c.bf16 %v5594, %v5593
        %v5617 = vpack.c.bf16 %v5596, %v5595
        %v5618 = vpack.c.bf16 %v5598, %v5597
        %v5619 = vpack.c.bf16 %v5600, %v5599
        %v5620 = vpack.c.bf16 %v5602, %v5601
        %v5621 = vpack.c.bf16 %v5604, %v5603
        %v5622 = vpack.c.bf16 %v5606, %v5605
        %v5623 = vld [vmem:[%s11] sm:$0xf]
        %v5624 = vld [vmem:[%s11 + $0x4] sm:$0xf]
        %v5625 = vld [vmem:[%s11 + $0x8] sm:$0xf]
        %v5626 = vld [vmem:[%s11 + $0xc] sm:$0xf]
        %v5627 = vld [vmem:[%s11 + $0x10] sm:$0xf]
        %v5628 = vld [vmem:[%s11 + $0x14] sm:$0xf]
        %v5629 = vld [vmem:[%s11 + $0x18] sm:$0xf]
        %v5630 = vld [vmem:[%s11 + $0x1c] sm:$0xf]
        %v5631 = vld [vmem:[%s12] sm:$0x1]
        %v5633 = vlaneseq
        %v5634 = vshrl.u32 %v5633, 7
        %v5635 = vsub.s32 0, %v5634
        %v5636 = vrot.slane %v5631, %v5635
        %v5646 = vunpack.c.l.b16 %v5623
        %v5647 = vunpack.c.l.b16 %v5624
        %v5648 = vunpack.c.l.b16 %v5625
        %v5649 = vunpack.c.l.b16 %v5626
        %v5650 = vunpack.c.l.b16 %v5627
        %v5651 = vunpack.c.l.b16 %v5628
        %v5652 = vunpack.c.l.b16 %v5629
        %v5653 = vunpack.c.l.b16 %v5630
        %v5654 = vpack.c.b16 %v5647, %v5646
        %v5655 = vpack.c.b16 %v5649, %v5648
        %v5656 = vpack.c.b16 %v5651, %v5650
        %v5657 = vpack.c.b16 %v5653, %v5652
        %v5663 = vsel %vm472, %v5607, 0
        %v5666 = vsel %vm472, %v5608, 0
        %v5669 = vsel %vm472, %v5609, 0
        %v5672 = vsel %vm472, %v5610, 0
        %v5675 = vsel %vm472, %v5611, 0
        %v5678 = vsel %vm472, %v5612, 0
        %v5681 = vsel %vm472, %v5613, 0
        %v5684 = vsel %vm472, %v5614, 0
        %v5687 = vsel %vm472, %v5615, 0
        %v5690 = vsel %vm472, %v5616, 0
        %v5693 = vsel %vm472, %v5617, 0
        %v5696 = vsel %vm472, %v5618, 0
        %v5699 = vsel %vm472, %v5619, 0
        %v5702 = vsel %vm472, %v5620, 0
        %v5705 = vsel %vm472, %v5621, 0
        %v5708 = vsel %vm472, %v5622, 0
        %5710 = vmatprep.subr.bf16.mxu0 0
        %5711 = vmatpush1.bf16.msra.mxu0 %v5654
        %5712 = vmatprep.subr.bf16.mxu0 0
        %5713 = vmatpush1.bf16.msra.mxu0 %v5655
        %5714 = vmatprep.subr.bf16.mxu0 0
        %5715 = vmatpush1.bf16.msra.mxu0 %v5656
        %5716 = vmatprep.subr.bf16.mxu0 0
        %5717 = vmatpush1.bf16.msra.mxu0 %v5657
        %5718 = vmatprep.subr.bf16.mxu0 0
        %5719 = vmatpush1.bf16.msra.mxu0 0
        %5720 = vmatprep.subr.bf16.mxu0 0
        %5721 = vmatpush1.bf16.msra.mxu0 0
        %5722 = vmatprep.subr.bf16.mxu0 0
        %5723 = vmatpush1.bf16.msra.mxu0 0
        %5724 = vmatprep.subr.bf16.mxu0 0
        %5725 = vmatpush1.bf16.msra.mxu0 0
        %5726 = vmatprep.subr.bf16.mxu0 0
        %5727 = vmatpush1.bf16.msra.mxu0 0
        %5728 = vmatprep.subr.bf16.mxu0 0
        %5729 = vmatpush1.bf16.msra.mxu0 0
        %5730 = vmatprep.subr.bf16.mxu0 0
        %5731 = vmatpush1.bf16.msra.mxu0 0
        %5732 = vmatprep.subr.bf16.mxu0 0
        %5733 = vmatpush1.bf16.msra.mxu0 0
        %5734 = vmatprep.subr.bf16.mxu0 0
        %5735 = vmatpush1.bf16.msra.mxu0 0
        %5736 = vmatprep.subr.bf16.mxu0 0
        %5737 = vmatpush1.bf16.msra.mxu0 0
        %5738 = vmatprep.subr.bf16.mxu0 0
        %5739 = vmatpush1.bf16.msra.mxu0 0
        %5740 = vmatprep.subr.bf16.mxu0 0
        %5741 = vmatpush1.bf16.msra.mxu0 0
        %5742 = vmatprep.mubr.bf16.mxu0 0
        %5743 = vmatmul.mubr.bf16.gmra.mrb[0].mxu0 %v5663
        %v5744 = vpop.f32.mrb[0].mxu0
        %v5745 = vadd.f32 %v5636, %v5744
        %v5746 = vpop.f32.mrb[0].mxu0
        %v5747 = vpop.f32.mrb[0].mxu0
        %v5748 = vadd.f32 %v5636, %v5747
        %v5749 = vpop.f32.mrb[0].mxu0
        %5750 = vmatprep.mubr.bf16.mxu0 0
        %5751 = vmatmul.mubr.bf16.gmra.mrb[0].mxu0 %v5666
        %v5752 = vpop.f32.mrb[0].mxu0
        %v5753 = vadd.f32 %v5636, %v5752
        %v5754 = vpop.f32.mrb[0].mxu0
        %v5755 = vpop.f32.mrb[0].mxu0
        %v5756 = vadd.f32 %v5636, %v5755
        %v5757 = vpop.f32.mrb[0].mxu0
        %5758 = vmatprep.mubr.bf16.mxu0 0
        %5759 = vmatmul.mubr.bf16.gmra.mrb[0].mxu0 %v5669
        %v5760 = vpop.f32.mrb[0].mxu0
        %v5761 = vadd.f32 %v5636, %v5760
        %v5762 = vpop.f32.mrb[0].mxu0
        %v5763 = vpop.f32.mrb[0].mxu0
        %v5764 = vadd.f32 %v5636, %v5763
        %v5765 = vpop.f32.mrb[0].mxu0
        %5766 = vmatprep.mubr.bf16.mxu0 0
        %5767 = vmatmul.mubr.bf16.gmra.mrb[0].mxu0 %v5672
        %v5768 = vpop.f32.mrb[0].mxu0
        %v5769 = vadd.f32 %v5636, %v5768
        %v5770 = vpop.f32.mrb[0].mxu0
        %v5771 = vpop.f32.mrb[0].mxu0
        %v5772 = vadd.f32 %v5636, %v5771
        %v5773 = vpop.f32.mrb[0].mxu0
        %5774 = vmatprep.mubr.bf16.mxu0 0
        %5775 = vmatmul.mubr.bf16.gmra.mrb[0].mxu0 %v5675
        %v5776 = vpop.f32.mrb[0].mxu0
        %v5777 = vadd.f32 %v5636, %v5776
        %v5778 = vpop.f32.mrb[0].mxu0
        %v5779 = vpop.f32.mrb[0].mxu0
        %v5780 = vadd.f32 %v5636, %v5779
        %v5781 = vpop.f32.mrb[0].mxu0
        %5782 = vmatprep.mubr.bf16.mxu0 0
        %5783 = vmatmul.mubr.bf16.gmra.mrb[0].mxu0 %v5678
        %v5784 = vpop.f32.mrb[0].mxu0
        %v5785 = vadd.f32 %v5636, %v5784
        %v5786 = vpop.f32.mrb[0].mxu0
        %v5787 = vpop.f32.mrb[0].mxu0
        %v5788 = vadd.f32 %v5636, %v5787
        %v5789 = vpop.f32.mrb[0].mxu0
        %5790 = vmatprep.mubr.bf16.mxu0 0
        %5791 = vmatmul.mubr.bf16.gmra.mrb[0].mxu0 %v5681
        %v5792 = vpop.f32.mrb[0].mxu0
        %v5793 = vadd.f32 %v5636, %v5792
        %v5794 = vpop.f32.mrb[0].mxu0
        %v5795 = vpop.f32.mrb[0].mxu0
        %v5796 = vadd.f32 %v5636, %v5795
        %v5797 = vpop.f32.mrb[0].mxu0
        %5798 = vmatprep.mubr.bf16.mxu0 0
        %5799 = vmatmul.mubr.bf16.gmra.mrb[0].mxu0 %v5684
        %v5800 = vpop.f32.mrb[0].mxu0
        %v5801 = vadd.f32 %v5636, %v5800
        %v5802 = vpop.f32.mrb[0].mxu0
        %v5803 = vpop.f32.mrb[0].mxu0
        %v5804 = vadd.f32 %v5636, %v5803
        %v5805 = vpop.f32.mrb[0].mxu0
        %5806 = vmatprep.mubr.bf16.mxu0 0
        %5807 = vmatmul.mubr.bf16.gmra.mrb[0].mxu0 %v5687
        %v5808 = vpop.f32.mrb[0].mxu0
        %v5809 = vadd.f32 %v5636, %v5808
        %v5810 = vpop.f32.mrb[0].mxu0
        %v5811 = vpop.f32.mrb[0].mxu0
        %v5812 = vadd.f32 %v5636, %v5811
        %v5813 = vpop.f32.mrb[0].mxu0
        %5814 = vmatprep.mubr.bf16.mxu0 0
        %5815 = vmatmul.mubr.bf16.gmra.mrb[0].mxu0 %v5690
        %v5816 = vpop.f32.mrb[0].mxu0
        %v5817 = vadd.f32 %v5636, %v5816
        %v5818 = vpop.f32.mrb[0].mxu0
        %v5819 = vpop.f32.mrb[0].mxu0
        %v5820 = vadd.f32 %v5636, %v5819
        %v5821 = vpop.f32.mrb[0].mxu0
        %5822 = vmatprep.mubr.bf16.mxu0 0
        %5823 = vmatmul.mubr.bf16.gmra.mrb[0].mxu0 %v5693
        %v5824 = vpop.f32.mrb[0].mxu0
        %v5825 = vadd.f32 %v5636, %v5824
        %v5826 = vpop.f32.mrb[0].mxu0
        %v5827 = vpop.f32.mrb[0].mxu0
        %v5828 = vadd.f32 %v5636, %v5827
        %v5829 = vpop.f32.mrb[0].mxu0
        %5830 = vmatprep.mubr.bf16.mxu0 0
        %5831 = vmatmul.mubr.bf16.gmra.mrb[0].mxu0 %v5696
        %v5832 = vpop.f32.mrb[0].mxu0
        %v5833 = vadd.f32 %v5636, %v5832
        %v5834 = vpop.f32.mrb[0].mxu0
        %v5835 = vpop.f32.mrb[0].mxu0
        %v5836 = vadd.f32 %v5636, %v5835
        %v5837 = vpop.f32.mrb[0].mxu0
        %5838 = vmatprep.mubr.bf16.mxu0 0
        %5839 = vmatmul.mubr.bf16.gmra.mrb[0].mxu0 %v5699
        %v5840 = vpop.f32.mrb[0].mxu0
        %v5841 = vadd.f32 %v5636, %v5840
        %v5842 = vpop.f32.mrb[0].mxu0
        %v5843 = vpop.f32.mrb[0].mxu0
        %v5844 = vadd.f32 %v5636, %v5843
        %v5845 = vpop.f32.mrb[0].mxu0
        %5846 = vmatprep.mubr.bf16.mxu0 0
        %5847 = vmatmul.mubr.bf16.gmra.mrb[0].mxu0 %v5702
        %v5848 = vpop.f32.mrb[0].mxu0
        %v5849 = vadd.f32 %v5636, %v5848
        %v5850 = vpop.f32.mrb[0].mxu0
        %v5851 = vpop.f32.mrb[0].mxu0
        %v5852 = vadd.f32 %v5636, %v5851
        %v5853 = vpop.f32.mrb[0].mxu0
        %5854 = vmatprep.mubr.bf16.mxu0 0
        %5855 = vmatmul.mubr.bf16.gmra.mrb[0].mxu0 %v5705
        %v5856 = vpop.f32.mrb[0].mxu0
        %v5857 = vadd.f32 %v5636, %v5856
        %v5858 = vpop.f32.mrb[0].mxu0
        %v5859 = vpop.f32.mrb[0].mxu0
        %v5860 = vadd.f32 %v5636, %v5859
        %v5861 = vpop.f32.mrb[0].mxu0
        %5862 = vmatprep.mubr.bf16.mxu0 0
        %5863 = vmatmul.mubr.bf16.gmra.mrb[0].mxu0 %v5708
        %v5864 = vpop.f32.mrb[0].mxu0
        %v5865 = vadd.f32 %v5636, %v5864
        %v5866 = vpop.f32.mrb[0].mxu0
        %v5867 = vpop.f32.mrb[0].mxu0
        %v5868 = vadd.f32 %v5636, %v5867
        %v5869 = vpop.f32.mrb[0].mxu0
        %5870 = vdwg.mxu0
        %v5871 = vld [vmem:[%s10] sm:$0x1]
        %v5873 = vlaneseq
        %v5874 = vshrl.u32 %v5873, 7
        %v5875 = vsub.s32 0, %v5874
        %v5876 = vrot.slane %v5871, %v5875
        %v5878 = vadd.f32 %v5876, %v5745
        %v5879 = vadd.f32 %v5876, %v5748
        %v5880 = vadd.f32 %v5876, %v5753
        %v5881 = vadd.f32 %v5876, %v5756
        %v5882 = vadd.f32 %v5876, %v5761
        %v5883 = vadd.f32 %v5876, %v5764
        %v5884 = vadd.f32 %v5876, %v5769
        %v5885 = vadd.f32 %v5876, %v5772
        %v5886 = vadd.f32 %v5876, %v5777
        %v5887 = vadd.f32 %v5876, %v5780
        %v5888 = vadd.f32 %v5876, %v5785
        %v5889 = vadd.f32 %v5876, %v5788
        %v5890 = vadd.f32 %v5876, %v5793
        %v5891 = vadd.f32 %v5876, %v5796
        %v5892 = vadd.f32 %v5876, %v5801
        %v5893 = vadd.f32 %v5876, %v5804
        %v5894 = vadd.f32 %v5876, %v5809
        %v5895 = vadd.f32 %v5876, %v5812
        %v5896 = vadd.f32 %v5876, %v5817
        %v5897 = vadd.f32 %v5876, %v5820
        %v5898 = vadd.f32 %v5876, %v5825
        %v5899 = vadd.f32 %v5876, %v5828
        %v5900 = vadd.f32 %v5876, %v5833
        %v5901 = vadd.f32 %v5876, %v5836
        %v5902 = vadd.f32 %v5876, %v5841
        %v5903 = vadd.f32 %v5876, %v5844
        %v5904 = vadd.f32 %v5876, %v5849
        %v5905 = vadd.f32 %v5876, %v5852
        %v5906 = vadd.f32 %v5876, %v5857
        %v5907 = vadd.f32 %v5876, %v5860
        %v5908 = vadd.f32 %v5876, %v5865
        %v5909 = vadd.f32 %v5876, %v5868
        %v5910 = vld [vmem:[#allocation3] sm:$0xf]
        %v5911 = vld [vmem:[#allocation3 + $0x4] sm:$0xf]
        %v5912 = vld [vmem:[#allocation3 + $0x8] sm:$0x1]
        %v5913 = vld [vmem:[#allocation3 + $0xc] sm:$0xf]
        %v5914 = vld [vmem:[#allocation3 + $0x10] sm:$0xf]
        %v5915 = vld [vmem:[#allocation3 + $0x14] sm:$0x1]
        %v5916 = vld [vmem:[#allocation3 + $0x18] sm:$0xf]
        %v5917 = vld [vmem:[#allocation3 + $0x1c] sm:$0xf]
        %v5918 = vld [vmem:[#allocation3 + $0x20] sm:$0x1]
        %v5919 = vld [vmem:[#allocation3 + $0x24] sm:$0xf]
        %v5920 = vld [vmem:[#allocation3 + $0x28] sm:$0xf]
        %v5921 = vld [vmem:[#allocation3 + $0x2c] sm:$0x1]
        %v5922 = vld [vmem:[#allocation3 + $0x30] sm:$0xf]
        %v5923 = vld [vmem:[#allocation3 + $0x34] sm:$0xf]
        %v5924 = vld [vmem:[#allocation3 + $0x38] sm:$0x1]
        %v5925 = vld [vmem:[#allocation3 + $0x3c] sm:$0xf]
        %v5926 = vld [vmem:[#allocation3 + $0x40] sm:$0xf]
        %v5927 = vld [vmem:[#allocation3 + $0x44] sm:$0x1]
        %v5928 = vld [vmem:[#allocation3 + $0x48] sm:$0xf]
        %v5929 = vld [vmem:[#allocation3 + $0x4c] sm:$0xf]
        %v5930 = vld [vmem:[#allocation3 + $0x50] sm:$0x1]
        %v5931 = vld [vmem:[#allocation3 + $0x54] sm:$0xf]
        %v5932 = vld [vmem:[#allocation3 + $0x58] sm:$0xf]
        %v5933 = vld [vmem:[#allocation3 + $0x5c] sm:$0x1]
        %v5934 = vld [vmem:[#allocation3 + $0x60] sm:$0xf]
        %v5935 = vld [vmem:[#allocation3 + $0x64] sm:$0xf]
        %v5936 = vld [vmem:[#allocation3 + $0x68] sm:$0x1]
        %v5937 = vld [vmem:[#allocation3 + $0x6c] sm:$0xf]
        %v5938 = vld [vmem:[#allocation3 + $0x70] sm:$0xf]
        %v5939 = vld [vmem:[#allocation3 + $0x74] sm:$0x1]
        %v5940 = vld [vmem:[#allocation3 + $0x78] sm:$0xf]
        %v5941 = vld [vmem:[#allocation3 + $0x7c] sm:$0xf]
        %v5942 = vld [vmem:[#allocation3 + $0x80] sm:$0x1]
        %v5943 = vld [vmem:[#allocation3 + $0x84] sm:$0xf]
        %v5944 = vld [vmem:[#allocation3 + $0x88] sm:$0xf]
        %v5945 = vld [vmem:[#allocation3 + $0x8c] sm:$0x1]
        %v5946 = vld [vmem:[#allocation3 + $0x90] sm:$0xf]
        %v5947 = vld [vmem:[#allocation3 + $0x94] sm:$0xf]
        %v5948 = vld [vmem:[#allocation3 + $0x98] sm:$0x1]
        %v5949 = vld [vmem:[#allocation3 + $0x9c] sm:$0xf]
        %v5950 = vld [vmem:[#allocation3 + $0xa0] sm:$0xf]
        %v5951 = vld [vmem:[#allocation3 + $0xa4] sm:$0x1]
        %v5952 = vld [vmem:[#allocation3 + $0xa8] sm:$0xf]
        %v5953 = vld [vmem:[#allocation3 + $0xac] sm:$0xf]
        %v5954 = vld [vmem:[#allocation3 + $0xb0] sm:$0x1]
        %v5955 = vld [vmem:[#allocation3 + $0xb4] sm:$0xf]
        %v5956 = vld [vmem:[#allocation3 + $0xb8] sm:$0xf]
        %v5957 = vld [vmem:[#allocation3 + $0xbc] sm:$0x1]
        %v5990 = vunpack.c.l.b16 %v5910
        %v5991 = vunpack.c.l.b16 %v5911
        %v5992 = vunpack.c.l.b16 %v5913
        %v5993 = vunpack.c.l.b16 %v5914
        %v5994 = vunpack.c.l.b16 %v5916
        %v5995 = vunpack.c.l.b16 %v5917
        %v5996 = vunpack.c.l.b16 %v5919
        %v5997 = vunpack.c.l.b16 %v5920
        %v5998 = vunpack.c.l.b16 %v5922
        %v5999 = vunpack.c.l.b16 %v5923
        %v6000 = vunpack.c.l.b16 %v5925
        %v6001 = vunpack.c.l.b16 %v5926
        %v6002 = vunpack.c.l.b16 %v5928
        %v6003 = vunpack.c.l.b16 %v5929
        %v6004 = vunpack.c.l.b16 %v5931
        %v6005 = vunpack.c.l.b16 %v5932
        %v6006 = vunpack.c.l.b16 %v5934
        %v6007 = vunpack.c.l.b16 %v5935
        %v6008 = vunpack.c.l.b16 %v5937
        %v6009 = vunpack.c.l.b16 %v5938
        %v6010 = vunpack.c.l.b16 %v5940
        %v6011 = vunpack.c.l.b16 %v5941
        %v6012 = vunpack.c.l.b16 %v5943
        %v6013 = vunpack.c.l.b16 %v5944
        %v6014 = vunpack.c.l.b16 %v5946
        %v6015 = vunpack.c.l.b16 %v5947
        %v6016 = vunpack.c.l.b16 %v5949
        %v6017 = vunpack.c.l.b16 %v5950
        %v6018 = vunpack.c.l.b16 %v5952
        %v6019 = vunpack.c.l.b16 %v5953
        %v6020 = vunpack.c.l.b16 %v5955
        %v6021 = vunpack.c.l.b16 %v5956
        %v6022 = vpack.c.b16 %v5991, %v5990
        %v6023 = vpack.c.b16 %v5993, %v5992
        %v6024 = vpack.c.b16 %v5995, %v5994
        %v6025 = vpack.c.b16 %v5997, %v5996
        %v6026 = vpack.c.b16 %v5999, %v5998
        %v6027 = vpack.c.b16 %v6001, %v6000
        %v6028 = vpack.c.b16 %v6003, %v6002
        %v6029 = vpack.c.b16 %v6005, %v6004
        %v6030 = vpack.c.b16 %v6007, %v6006
        %v6031 = vpack.c.b16 %v6009, %v6008
        %v6032 = vpack.c.b16 %v6011, %v6010
        %v6033 = vpack.c.b16 %v6013, %v6012
        %v6034 = vpack.c.b16 %v6015, %v6014
        %v6035 = vpack.c.b16 %v6017, %v6016
        %v6036 = vpack.c.b16 %v6019, %v6018
        %v6037 = vpack.c.b16 %v6021, %v6020
        %v6070 = vunpack.c.l.b16 %v5912
        %v6071 = vunpack.c.l.b16 %v5915
        %v6072 = vunpack.c.l.b16 %v5918
        %v6073 = vunpack.c.l.b16 %v5921
        %v6074 = vunpack.c.l.b16 %v5924
        %v6075 = vunpack.c.l.b16 %v5927
        %v6076 = vunpack.c.l.b16 %v5930
        %v6077 = vunpack.c.l.b16 %v5933
        %v6078 = vunpack.c.l.b16 %v5936
        %v6079 = vunpack.c.l.b16 %v5939
        %v6080 = vunpack.c.l.b16 %v5942
        %v6081 = vunpack.c.l.b16 %v5945
        %v6082 = vunpack.c.l.b16 %v5948
        %v6083 = vunpack.c.l.b16 %v5951
        %v6084 = vunpack.c.l.b16 %v5954
        %v6085 = vunpack.c.l.b16 %v5957
        %v6086 = vpack.c.b16 %v6070, %v6070
        %v6087 = vpack.c.b16 %v6071, %v6071
        %v6088 = vpack.c.b16 %v6072, %v6072
        %v6089 = vpack.c.b16 %v6073, %v6073
        %v6090 = vpack.c.b16 %v6074, %v6074
        %v6091 = vpack.c.b16 %v6075, %v6075
        %v6092 = vpack.c.b16 %v6076, %v6076
        %v6093 = vpack.c.b16 %v6077, %v6077
        %v6094 = vpack.c.b16 %v6078, %v6078
        %v6095 = vpack.c.b16 %v6079, %v6079
        %v6096 = vpack.c.b16 %v6080, %v6080
        %v6097 = vpack.c.b16 %v6081, %v6081
        %v6098 = vpack.c.b16 %v6082, %v6082
        %v6099 = vpack.c.b16 %v6083, %v6083
        %v6100 = vpack.c.b16 %v6084, %v6084
        %v6101 = vpack.c.b16 %v6085, %v6085
        %v6103 = vshrl.u32 %v6022, 16
        %v6105 = vshll.u32 %v6022, 16
        %v6107 = vrot.slane %v6105, 1
        %v6108 = vor.u32 %v6103, %v6107
        %v6110 = vshll.u32 %v6086, 16
        %v6112 = vrot.slane %v6110, 1
        %v6113 = vsel %vm1899, %v6108, %v6112
        %v6115 = vshrl.u32 %v6023, 16
        %v6117 = vshll.u32 %v6023, 16
        %v6119 = vrot.slane %v6117, 1
        %v6120 = vor.u32 %v6115, %v6119
        %v6122 = vshll.u32 %v6087, 16
        %v6124 = vrot.slane %v6122, 1
        %v6125 = vsel %vm1899, %v6120, %v6124
        %v6127 = vshrl.u32 %v6024, 16
        %v6129 = vshll.u32 %v6024, 16
        %v6131 = vrot.slane %v6129, 1
        %v6132 = vor.u32 %v6127, %v6131
        %v6134 = vshll.u32 %v6088, 16
        %v6136 = vrot.slane %v6134, 1
        %v6137 = vsel %vm1899, %v6132, %v6136
        %v6139 = vshrl.u32 %v6025, 16
        %v6141 = vshll.u32 %v6025, 16
        %v6143 = vrot.slane %v6141, 1
        %v6144 = vor.u32 %v6139, %v6143
        %v6146 = vshll.u32 %v6089, 16
        %v6148 = vrot.slane %v6146, 1
        %v6149 = vsel %vm1899, %v6144, %v6148
        %v6151 = vshrl.u32 %v6026, 16
        %v6153 = vshll.u32 %v6026, 16
        %v6155 = vrot.slane %v6153, 1
        %v6156 = vor.u32 %v6151, %v6155
        %v6158 = vshll.u32 %v6090, 16
        %v6160 = vrot.slane %v6158, 1
        %v6161 = vsel %vm1899, %v6156, %v6160
        %v6163 = vshrl.u32 %v6027, 16
        %v6165 = vshll.u32 %v6027, 16
        %v6167 = vrot.slane %v6165, 1
        %v6168 = vor.u32 %v6163, %v6167
        %v6170 = vshll.u32 %v6091, 16
        %v6172 = vrot.slane %v6170, 1
        %v6173 = vsel %vm1899, %v6168, %v6172
        %v6175 = vshrl.u32 %v6028, 16
        %v6177 = vshll.u32 %v6028, 16
        %v6179 = vrot.slane %v6177, 1
        %v6180 = vor.u32 %v6175, %v6179
        %v6182 = vshll.u32 %v6092, 16
        %v6184 = vrot.slane %v6182, 1
        %v6185 = vsel %vm1899, %v6180, %v6184
        %v6187 = vshrl.u32 %v6029, 16
        %v6189 = vshll.u32 %v6029, 16
        %v6191 = vrot.slane %v6189, 1
        %v6192 = vor.u32 %v6187, %v6191
        %v6194 = vshll.u32 %v6093, 16
        %v6196 = vrot.slane %v6194, 1
        %v6197 = vsel %vm1899, %v6192, %v6196
        %v6199 = vshrl.u32 %v6030, 16
        %v6201 = vshll.u32 %v6030, 16
        %v6203 = vrot.slane %v6201, 1
        %v6204 = vor.u32 %v6199, %v6203
        %v6206 = vshll.u32 %v6094, 16
        %v6208 = vrot.slane %v6206, 1
        %v6209 = vsel %vm1899, %v6204, %v6208
        %v6211 = vshrl.u32 %v6031, 16
        %v6213 = vshll.u32 %v6031, 16
        %v6215 = vrot.slane %v6213, 1
        %v6216 = vor.u32 %v6211, %v6215
        %v6218 = vshll.u32 %v6095, 16
        %v6220 = vrot.slane %v6218, 1
        %v6221 = vsel %vm1899, %v6216, %v6220
        %v6223 = vshrl.u32 %v6032, 16
        %v6225 = vshll.u32 %v6032, 16
        %v6227 = vrot.slane %v6225, 1
        %v6228 = vor.u32 %v6223, %v6227
        %v6230 = vshll.u32 %v6096, 16
        %v6232 = vrot.slane %v6230, 1
        %v6233 = vsel %vm1899, %v6228, %v6232
        %v6235 = vshrl.u32 %v6033, 16
        %v6237 = vshll.u32 %v6033, 16
        %v6239 = vrot.slane %v6237, 1
        %v6240 = vor.u32 %v6235, %v6239
        %v6242 = vshll.u32 %v6097, 16
        %v6244 = vrot.slane %v6242, 1
        %v6245 = vsel %vm1899, %v6240, %v6244
        %v6247 = vshrl.u32 %v6034, 16
        %v6249 = vshll.u32 %v6034, 16
        %v6251 = vrot.slane %v6249, 1
        %v6252 = vor.u32 %v6247, %v6251
        %v6254 = vshll.u32 %v6098, 16
        %v6256 = vrot.slane %v6254, 1
        %v6257 = vsel %vm1899, %v6252, %v6256
        %v6259 = vshrl.u32 %v6035, 16
        %v6261 = vshll.u32 %v6035, 16
        %v6263 = vrot.slane %v6261, 1
        %v6264 = vor.u32 %v6259, %v6263
        %v6266 = vshll.u32 %v6099, 16
        %v6268 = vrot.slane %v6266, 1
        %v6269 = vsel %vm1899, %v6264, %v6268
        %v6271 = vshrl.u32 %v6036, 16
        %v6273 = vshll.u32 %v6036, 16
        %v6275 = vrot.slane %v6273, 1
        %v6276 = vor.u32 %v6271, %v6275
        %v6278 = vshll.u32 %v6100, 16
        %v6280 = vrot.slane %v6278, 1
        %v6281 = vsel %vm1899, %v6276, %v6280
        %v6283 = vshrl.u32 %v6037, 16
        %v6285 = vshll.u32 %v6037, 16
        %v6287 = vrot.slane %v6285, 1
        %v6288 = vor.u32 %v6283, %v6287
        %v6290 = vshll.u32 %v6101, 16
        %v6292 = vrot.slane %v6290, 1
        %v6293 = vsel %vm1899, %v6288, %v6292
        %v6310 = vrot.slane %v6022, 1
        %v6311 = vrot.slane %v6086, 1
        %v6312 = vsel %vm2124, %v6310, %v6311
        %v6313 = vrot.slane %v6023, 1
        %v6314 = vrot.slane %v6087, 1
        %v6315 = vsel %vm2124, %v6313, %v6314
        %v6316 = vrot.slane %v6024, 1
        %v6317 = vrot.slane %v6088, 1
        %v6318 = vsel %vm2124, %v6316, %v6317
        %v6319 = vrot.slane %v6025, 1
        %v6320 = vrot.slane %v6089, 1
        %v6321 = vsel %vm2124, %v6319, %v6320
        %v6322 = vrot.slane %v6026, 1
        %v6323 = vrot.slane %v6090, 1
        %v6324 = vsel %vm2124, %v6322, %v6323
        %v6325 = vrot.slane %v6027, 1
        %v6326 = vrot.slane %v6091, 1
        %v6327 = vsel %vm2124, %v6325, %v6326
        %v6328 = vrot.slane %v6028, 1
        %v6329 = vrot.slane %v6092, 1
        %v6330 = vsel %vm2124, %v6328, %v6329
        %v6331 = vrot.slane %v6029, 1
        %v6332 = vrot.slane %v6093, 1
        %v6333 = vsel %vm2124, %v6331, %v6332
        %v6334 = vrot.slane %v6030, 1
        %v6335 = vrot.slane %v6094, 1
        %v6336 = vsel %vm2124, %v6334, %v6335
        %v6337 = vrot.slane %v6031, 1
        %v6338 = vrot.slane %v6095, 1
        %v6339 = vsel %vm2124, %v6337, %v6338
        %v6340 = vrot.slane %v6032, 1
        %v6341 = vrot.slane %v6096, 1
        %v6342 = vsel %vm2124, %v6340, %v6341
        %v6343 = vrot.slane %v6033, 1
        %v6344 = vrot.slane %v6097, 1
        %v6345 = vsel %vm2124, %v6343, %v6344
        %v6346 = vrot.slane %v6034, 1
        %v6347 = vrot.slane %v6098, 1
        %v6348 = vsel %vm2124, %v6346, %v6347
        %v6349 = vrot.slane %v6035, 1
        %v6350 = vrot.slane %v6099, 1
        %v6351 = vsel %vm2124, %v6349, %v6350
        %v6352 = vrot.slane %v6036, 1
        %v6353 = vrot.slane %v6100, 1
        %v6354 = vsel %vm2124, %v6352, %v6353
        %v6355 = vrot.slane %v6037, 1
        %v6356 = vrot.slane %v6101, 1
        %v6357 = vsel %vm2124, %v6355, %v6356
        %v6374 = vld [vmem:[%s9] sm:$0xf]
        %v6375 = vld [vmem:[%s9 + $0x4] sm:$0xf]
        %v6376 = vld [vmem:[%s9 + $0x8] sm:$0xf]
        %v6377 = vld [vmem:[%s9 + $0xc] sm:$0xf]
        %v6378 = vld [vmem:[%s9 + $0x10] sm:$0xf]
        %v6379 = vld [vmem:[%s9 + $0x14] sm:$0xf]
        %v6380 = vld [vmem:[%s9 + $0x18] sm:$0xf]
        %v6381 = vld [vmem:[%s9 + $0x1c] sm:$0xf]
        %v6382 = vld [vmem:[%s9 + $0x20] sm:$0xf]
        %v6383 = vld [vmem:[%s9 + $0x24] sm:$0xf]
        %v6384 = vld [vmem:[%s9 + $0x28] sm:$0xf]
        %v6385 = vld [vmem:[%s9 + $0x2c] sm:$0xf]
        %v6386 = vld [vmem:[%s9 + $0x30] sm:$0xf]
        %v6387 = vld [vmem:[%s9 + $0x34] sm:$0xf]
        %v6388 = vld [vmem:[%s9 + $0x38] sm:$0xf]
        %v6389 = vld [vmem:[%s9 + $0x3c] sm:$0xf]
        %v6390 = vld [vmem:[%s9 + $0x40] sm:$0xf]
        %v6391 = vld [vmem:[%s9 + $0x44] sm:$0xf]
        %v6392 = vld [vmem:[%s9 + $0x48] sm:$0xf]
        %v6393 = vld [vmem:[%s9 + $0x4c] sm:$0xf]
        %v6394 = vld [vmem:[%s9 + $0x50] sm:$0xf]
        %v6395 = vld [vmem:[%s9 + $0x54] sm:$0xf]
        %v6396 = vld [vmem:[%s9 + $0x58] sm:$0xf]
        %v6397 = vld [vmem:[%s9 + $0x5c] sm:$0xf]
        %v6398 = vld [vmem:[%s9 + $0x60] sm:$0xf]
        %v6399 = vld [vmem:[%s9 + $0x64] sm:$0xf]
        %v6400 = vld [vmem:[%s9 + $0x68] sm:$0xf]
        %v6401 = vld [vmem:[%s9 + $0x6c] sm:$0xf]
        %v6402 = vld [vmem:[%s9 + $0x70] sm:$0xf]
        %v6403 = vld [vmem:[%s9 + $0x74] sm:$0xf]
        %v6404 = vld [vmem:[%s9 + $0x78] sm:$0xf]
        %v6405 = vld [vmem:[%s9 + $0x7c] sm:$0xf]
        %v6406 = vld [vmem:[%s9 + $0x80] sm:$0xf]
        %v6407 = vld [vmem:[%s9 + $0x84] sm:$0xf]
        %v6408 = vld [vmem:[%s9 + $0x88] sm:$0xf]
        %v6409 = vld [vmem:[%s9 + $0x8c] sm:$0xf]
        %v6410 = vld [vmem:[%s9 + $0x90] sm:$0xf]
        %v6411 = vld [vmem:[%s9 + $0x94] sm:$0xf]
        %v6412 = vld [vmem:[%s9 + $0x98] sm:$0xf]
        %v6413 = vld [vmem:[%s9 + $0x9c] sm:$0xf]
        %v6414 = vld [vmem:[%s9 + $0xa0] sm:$0xf]
        %v6415 = vld [vmem:[%s9 + $0xa4] sm:$0xf]
        %v6416 = vld [vmem:[%s9 + $0xa8] sm:$0xf]
        %v6417 = vld [vmem:[%s9 + $0xac] sm:$0xf]
        %v6418 = vld [vmem:[%s9 + $0xb0] sm:$0xf]
        %v6419 = vld [vmem:[%s9 + $0xb4] sm:$0xf]
        %v6420 = vld [vmem:[%s9 + $0xb8] sm:$0xf]
        %v6421 = vld [vmem:[%s9 + $0xbc] sm:$0xf]
        %v6470 = vunpack.c.l.b16 %v6374
        %v6471 = vunpack.c.l.b16 %v6375
        %v6472 = vunpack.c.l.b16 %v6376
        %v6473 = vunpack.c.l.b16 %v6377
        %v6474 = vunpack.c.l.b16 %v6378
        %v6475 = vunpack.c.l.b16 %v6379
        %v6476 = vunpack.c.l.b16 %v6380
        %v6477 = vunpack.c.l.b16 %v6381
        %v6478 = vunpack.c.l.b16 %v6382
        %v6479 = vunpack.c.l.b16 %v6383
        %v6480 = vunpack.c.l.b16 %v6384
        %v6481 = vunpack.c.l.b16 %v6385
        %v6482 = vunpack.c.l.b16 %v6386
        %v6483 = vunpack.c.l.b16 %v6387
        %v6484 = vunpack.c.l.b16 %v6388
        %v6485 = vunpack.c.l.b16 %v6389
        %v6486 = vunpack.c.l.b16 %v6390
        %v6487 = vunpack.c.l.b16 %v6391
        %v6488 = vunpack.c.l.b16 %v6392
        %v6489 = vunpack.c.l.b16 %v6393
        %v6490 = vunpack.c.l.b16 %v6394
        %v6491 = vunpack.c.l.b16 %v6395
        %v6492 = vunpack.c.l.b16 %v6396
        %v6493 = vunpack.c.l.b16 %v6397
        %v6494 = vunpack.c.l.b16 %v6398
        %v6495 = vunpack.c.l.b16 %v6399
        %v6496 = vunpack.c.l.b16 %v6400
        %v6497 = vunpack.c.l.b16 %v6401
        %v6498 = vunpack.c.l.b16 %v6402
        %v6499 = vunpack.c.l.b16 %v6403
        %v6500 = vunpack.c.l.b16 %v6404
        %v6501 = vunpack.c.l.b16 %v6405
        %v6502 = vunpack.c.l.b16 %v6406
        %v6503 = vunpack.c.l.b16 %v6407
        %v6504 = vunpack.c.l.b16 %v6408
        %v6505 = vunpack.c.l.b16 %v6409
        %v6506 = vunpack.c.l.b16 %v6410
        %v6507 = vunpack.c.l.b16 %v6411
        %v6508 = vunpack.c.l.b16 %v6412
        %v6509 = vunpack.c.l.b16 %v6413
        %v6510 = vunpack.c.l.b16 %v6414
        %v6511 = vunpack.c.l.b16 %v6415
        %v6512 = vunpack.c.l.b16 %v6416
        %v6513 = vunpack.c.l.b16 %v6417
        %v6514 = vunpack.c.l.b16 %v6418
        %v6515 = vunpack.c.l.b16 %v6419
        %v6516 = vunpack.c.l.b16 %v6420
        %v6517 = vunpack.c.l.b16 %v6421
        %v6518 = vpack.c.b16 %v6471, %v6470
        %v6519 = vpack.c.b16 %v6473, %v6472
        %v6520 = vpack.c.b16 %v6475, %v6474
        %v6521 = vpack.c.b16 %v6477, %v6476
        %v6522 = vpack.c.b16 %v6479, %v6478
        %v6523 = vpack.c.b16 %v6481, %v6480
        %v6524 = vpack.c.b16 %v6483, %v6482
        %v6525 = vpack.c.b16 %v6485, %v6484
        %v6526 = vpack.c.b16 %v6487, %v6486
        %v6527 = vpack.c.b16 %v6489, %v6488
        %v6528 = vpack.c.b16 %v6491, %v6490
        %v6529 = vpack.c.b16 %v6493, %v6492
        %v6530 = vpack.c.b16 %v6495, %v6494
        %v6531 = vpack.c.b16 %v6497, %v6496
        %v6532 = vpack.c.b16 %v6499, %v6498
        %v6533 = vpack.c.b16 %v6501, %v6500
        %v6534 = vpack.c.b16 %v6503, %v6502
        %v6535 = vpack.c.b16 %v6505, %v6504
        %v6536 = vpack.c.b16 %v6507, %v6506
        %v6537 = vpack.c.b16 %v6509, %v6508
        %v6538 = vpack.c.b16 %v6511, %v6510
        %v6539 = vpack.c.b16 %v6513, %v6512
        %v6540 = vpack.c.b16 %v6515, %v6514
        %v6541 = vpack.c.b16 %v6517, %v6516
        %6566 = vmatprep.subr.bf16.mxu0 0
        %6567 = vmatpush1.bf16.msra.mxu0 %v6518
        %6568 = vmatprep.subr.bf16.mxu0 0
        %6569 = vmatpush1.bf16.msra.mxu0 %v6519
        %6570 = vmatprep.subr.bf16.mxu0 0
        %6571 = vmatpush1.bf16.msra.mxu0 %v6520
        %6572 = vmatprep.subr.bf16.mxu0 0
        %6573 = vmatpush1.bf16.msra.mxu0 %v6521
        %6574 = vmatprep.subr.bf16.mxu0 0
        %6575 = vmatpush1.bf16.msra.mxu0 %v6522
        %6576 = vmatprep.subr.bf16.mxu0 0
        %6577 = vmatpush1.bf16.msra.mxu0 %v6523
        %6578 = vmatprep.subr.bf16.mxu0 0
        %6579 = vmatpush1.bf16.msra.mxu0 %v6524
        %6580 = vmatprep.subr.bf16.mxu0 0
        %6581 = vmatpush1.bf16.msra.mxu0 %v6525
        %6582 = vmatprep.subr.bf16.mxu0 0
        %6583 = vmatpush1.bf16.msra.mxu0 %v6526
        %6584 = vmatprep.subr.bf16.mxu0 0
        %6585 = vmatpush1.bf16.msra.mxu0 %v6527
        %6586 = vmatprep.subr.bf16.mxu0 0
        %6587 = vmatpush1.bf16.msra.mxu0 %v6528
        %6588 = vmatprep.subr.bf16.mxu0 0
        %6589 = vmatpush1.bf16.msra.mxu0 %v6529
        %6590 = vmatprep.subr.bf16.mxu0 0
        %6591 = vmatpush1.bf16.msra.mxu0 %v6530
        %6592 = vmatprep.subr.bf16.mxu0 0
        %6593 = vmatpush1.bf16.msra.mxu0 %v6531
        %6594 = vmatprep.subr.bf16.mxu0 0
        %6595 = vmatpush1.bf16.msra.mxu0 %v6532
        %6596 = vmatprep.subr.bf16.mxu0 0
        %6597 = vmatpush1.bf16.msra.mxu0 %v6533
        %6598 = vmatprep.mubr.bf16.mxu0 %v6113
        %6599 = vmatmul.mubr.bf16.gmra.mrb[0].mxu0 %v6022
        %v6600 = vpop.f32.mrb[0].mxu0
        %v6601 = vadd.f32 %v5878, %v6600
        %v6602 = vpop.f32.mrb[0].mxu0
        %v6603 = vpop.f32.mrb[0].mxu0
        %v6604 = vadd.f32 %v5879, %v6603
        %v6605 = vpop.f32.mrb[0].mxu0
        %6606 = vmatprep.mubr.bf16.mxu0 %v6125
        %6607 = vmatmul.mubr.bf16.gmra.mrb[0].mxu0 %v6023
        %v6608 = vpop.f32.mrb[0].mxu0
        %v6609 = vadd.f32 %v5880, %v6608
        %v6610 = vpop.f32.mrb[0].mxu0
        %v6611 = vpop.f32.mrb[0].mxu0
        %v6612 = vadd.f32 %v5881, %v6611
        %v6613 = vpop.f32.mrb[0].mxu0
        %6614 = vmatprep.mubr.bf16.mxu0 %v6137
        %6615 = vmatmul.mubr.bf16.gmra.mrb[0].mxu0 %v6024
        %v6616 = vpop.f32.mrb[0].mxu0
        %v6617 = vadd.f32 %v5882, %v6616
        %v6618 = vpop.f32.mrb[0].mxu0
        %v6619 = vpop.f32.mrb[0].mxu0
        %v6620 = vadd.f32 %v5883, %v6619
        %v6621 = vpop.f32.mrb[0].mxu0
        %6622 = vmatprep.mubr.bf16.mxu0 %v6149
        %6623 = vmatmul.mubr.bf16.gmra.mrb[0].mxu0 %v6025
        %v6624 = vpop.f32.mrb[0].mxu0
        %v6625 = vadd.f32 %v5884, %v6624
        %v6626 = vpop.f32.mrb[0].mxu0
        %v6627 = vpop.f32.mrb[0].mxu0
        %v6628 = vadd.f32 %v5885, %v6627
        %v6629 = vpop.f32.mrb[0].mxu0
        %6630 = vmatprep.mubr.bf16.mxu0 %v6161
        %6631 = vmatmul.mubr.bf16.gmra.mrb[0].mxu0 %v6026
        %v6632 = vpop.f32.mrb[0].mxu0
        %v6633 = vadd.f32 %v5886, %v6632
        %v6634 = vpop.f32.mrb[0].mxu0
        %v6635 = vpop.f32.mrb[0].mxu0
        %v6636 = vadd.f32 %v5887, %v6635
        %v6637 = vpop.f32.mrb[0].mxu0
        %6638 = vmatprep.mubr.bf16.mxu0 %v6173
        %6639 = vmatmul.mubr.bf16.gmra.mrb[0].mxu0 %v6027
        %v6640 = vpop.f32.mrb[0].mxu0
        %v6641 = vadd.f32 %v5888, %v6640
        %v6642 = vpop.f32.mrb[0].mxu0
        %v6643 = vpop.f32.mrb[0].mxu0
        %v6644 = vadd.f32 %v5889, %v6643
        %v6645 = vpop.f32.mrb[0].mxu0
        %6646 = vmatprep.mubr.bf16.mxu0 %v6185
        %6647 = vmatmul.mubr.bf16.gmra.mrb[0].mxu0 %v6028
        %v6648 = vpop.f32.mrb[0].mxu0
        %v6649 = vadd.f32 %v5890, %v6648
        %v6650 = vpop.f32.mrb[0].mxu0
        %v6651 = vpop.f32.mrb[0].mxu0
        %v6652 = vadd.f32 %v5891, %v6651
        %v6653 = vpop.f32.mrb[0].mxu0
        %6654 = vmatprep.mubr.bf16.mxu0 %v6197
        %6655 = vmatmul.mubr.bf16.gmra.mrb[0].mxu0 %v6029
        %v6656 = vpop.f32.mrb[0].mxu0
        %v6657 = vadd.f32 %v5892, %v6656
        %v6658 = vpop.f32.mrb[0].mxu0
        %v6659 = vpop.f32.mrb[0].mxu0
        %v6660 = vadd.f32 %v5893, %v6659
        %v6661 = vpop.f32.mrb[0].mxu0
        %6662 = vmatprep.mubr.bf16.mxu0 %v6209
        %6663 = vmatmul.mubr.bf16.gmra.mrb[0].mxu0 %v6030
        %v6664 = vpop.f32.mrb[0].mxu0
        %v6665 = vadd.f32 %v5894, %v6664
        %v6666 = vpop.f32.mrb[0].mxu0
        %v6667 = vpop.f32.mrb[0].mxu0
        %v6668 = vadd.f32 %v5895, %v6667
        %v6669 = vpop.f32.mrb[0].mxu0
        %6670 = vmatprep.mubr.bf16.mxu0 %v6221
        %6671 = vmatmul.mubr.bf16.gmra.mrb[0].mxu0 %v6031
        %v6672 = vpop.f32.mrb[0].mxu0
        %v6673 = vadd.f32 %v5896, %v6672
        %v6674 = vpop.f32.mrb[0].mxu0
        %v6675 = vpop.f32.mrb[0].mxu0
        %v6676 = vadd.f32 %v5897, %v6675
        %v6677 = vpop.f32.mrb[0].mxu0
        %6678 = vmatprep.mubr.bf16.mxu0 %v6233
        %6679 = vmatmul.mubr.bf16.gmra.mrb[0].mxu0 %v6032
        %v6680 = vpop.f32.mrb[0].mxu0
        %v6681 = vadd.f32 %v5898, %v6680
        %v6682 = vpop.f32.mrb[0].mxu0
        %v6683 = vpop.f32.mrb[0].mxu0
        %v6684 = vadd.f32 %v5899, %v6683
        %v6685 = vpop.f32.mrb[0].mxu0
        %6686 = vmatprep.mubr.bf16.mxu0 %v6245
        %6687 = vmatmul.mubr.bf16.gmra.mrb[0].mxu0 %v6033
        %v6688 = vpop.f32.mrb[0].mxu0
        %v6689 = vadd.f32 %v5900, %v6688
        %v6690 = vpop.f32.mrb[0].mxu0
        %v6691 = vpop.f32.mrb[0].mxu0
        %v6692 = vadd.f32 %v5901, %v6691
        %v6693 = vpop.f32.mrb[0].mxu0
        %6694 = vmatprep.mubr.bf16.mxu0 %v6257
        %6695 = vmatmul.mubr.bf16.gmra.mrb[0].mxu0 %v6034
        %v6696 = vpop.f32.mrb[0].mxu0
        %v6697 = vadd.f32 %v5902, %v6696
        %v6698 = vpop.f32.mrb[0].mxu0
        %v6699 = vpop.f32.mrb[0].mxu0
        %v6700 = vadd.f32 %v5903, %v6699
        %v6701 = vpop.f32.mrb[0].mxu0
        %6702 = vmatprep.mubr.bf16.mxu0 %v6269
        %6703 = vmatmul.mubr.bf16.gmra.mrb[0].mxu0 %v6035
        %v6704 = vpop.f32.mrb[0].mxu0
        %v6705 = vadd.f32 %v5904, %v6704
        %v6706 = vpop.f32.mrb[0].mxu0
        %v6707 = vpop.f32.mrb[0].mxu0
        %v6708 = vadd.f32 %v5905, %v6707
        %v6709 = vpop.f32.mrb[0].mxu0
        %6710 = vmatprep.mubr.bf16.mxu0 %v6281
        %6711 = vmatmul.mubr.bf16.gmra.mrb[0].mxu0 %v6036
        %v6712 = vpop.f32.mrb[0].mxu0
        %v6713 = vadd.f32 %v5906, %v6712
        %v6714 = vpop.f32.mrb[0].mxu0
        %v6715 = vpop.f32.mrb[0].mxu0
        %v6716 = vadd.f32 %v5907, %v6715
        %v6717 = vpop.f32.mrb[0].mxu0
        %6718 = vmatprep.mubr.bf16.mxu0 %v6293
        %6719 = vmatmul.mubr.bf16.gmra.mrb[0].mxu0 %v6037
        %v6720 = vpop.f32.mrb[0].mxu0
        %v6721 = vadd.f32 %v5908, %v6720
        %v6722 = vpop.f32.mrb[0].mxu0
        %v6723 = vpop.f32.mrb[0].mxu0
        %v6724 = vadd.f32 %v5909, %v6723
        %v6725 = vpop.f32.mrb[0].mxu0
        %6726 = vdwg.mxu0
        %6727 = vmatprep.subr.bf16.mxu0 0
        %6728 = vmatpush1.bf16.msra.mxu0 %v6534
        %6729 = vmatprep.subr.bf16.mxu0 0
        %6730 = vmatpush1.bf16.msra.mxu0 %v6535
        %6731 = vmatprep.subr.bf16.mxu0 0
        %6732 = vmatpush1.bf16.msra.mxu0 %v6536
        %6733 = vmatprep.subr.bf16.mxu0 0
        %6734 = vmatpush1.bf16.msra.mxu0 %v6537
        %6735 = vmatprep.subr.bf16.mxu0 0
        %6736 = vmatpush1.bf16.msra.mxu0 %v6538
        %6737 = vmatprep.subr.bf16.mxu0 0
        %6738 = vmatpush1.bf16.msra.mxu0 %v6539
        %6739 = vmatprep.subr.bf16.mxu0 0
        %6740 = vmatpush1.bf16.msra.mxu0 %v6540
        %6741 = vmatprep.subr.bf16.mxu0 0
        %6742 = vmatpush1.bf16.msra.mxu0 %v6541
        %6743 = vmatprep.subr.bf16.mxu0 0
        %6744 = vmatpush1.bf16.msra.mxu0 0
        %6745 = vmatprep.subr.bf16.mxu0 0
        %6746 = vmatpush1.bf16.msra.mxu0 0
        %6747 = vmatprep.subr.bf16.mxu0 0
        %6748 = vmatpush1.bf16.msra.mxu0 0
        %6749 = vmatprep.subr.bf16.mxu0 0
        %6750 = vmatpush1.bf16.msra.mxu0 0
        %6751 = vmatprep.subr.bf16.mxu0 0
        %6752 = vmatpush1.bf16.msra.mxu0 0
        %6753 = vmatprep.subr.bf16.mxu0 0
        %6754 = vmatpush1.bf16.msra.mxu0 0
        %6755 = vmatprep.subr.bf16.mxu0 0
        %6756 = vmatpush1.bf16.msra.mxu0 0
        %6757 = vmatprep.subr.bf16.mxu0 0
        %6758 = vmatpush1.bf16.msra.mxu0 0
        %6759 = vmatprep.mubr.bf16.mxu0 0
        %6760 = vmatmul.mubr.bf16.gmra.mrb[0].mxu0 %v6312
        %v6761 = vpop.f32.mrb[0].mxu0
        %v6762 = vadd.f32 %v6601, %v6761
        %v6763 = vpop.f32.mrb[0].mxu0
        %v6764 = vpop.f32.mrb[0].mxu0
        %v6765 = vadd.f32 %v6604, %v6764
        %v6766 = vpop.f32.mrb[0].mxu0
        %6767 = vmatprep.mubr.bf16.mxu0 0
        %6768 = vmatmul.mubr.bf16.gmra.mrb[0].mxu0 %v6315
        %v6769 = vpop.f32.mrb[0].mxu0
        %v6770 = vadd.f32 %v6609, %v6769
        %v6771 = vpop.f32.mrb[0].mxu0
        %v6772 = vpop.f32.mrb[0].mxu0
        %v6773 = vadd.f32 %v6612, %v6772
        %v6774 = vpop.f32.mrb[0].mxu0
        %6775 = vmatprep.mubr.bf16.mxu0 0
        %6776 = vmatmul.mubr.bf16.gmra.mrb[0].mxu0 %v6318
        %v6777 = vpop.f32.mrb[0].mxu0
        %v6778 = vadd.f32 %v6617, %v6777
        %v6779 = vpop.f32.mrb[0].mxu0
        %v6780 = vpop.f32.mrb[0].mxu0
        %v6781 = vadd.f32 %v6620, %v6780
        %v6782 = vpop.f32.mrb[0].mxu0
        %6783 = vmatprep.mubr.bf16.mxu0 0
        %6784 = vmatmul.mubr.bf16.gmra.mrb[0].mxu0 %v6321
        %v6785 = vpop.f32.mrb[0].mxu0
        %v6786 = vadd.f32 %v6625, %v6785
        %v6787 = vpop.f32.mrb[0].mxu0
        %v6788 = vpop.f32.mrb[0].mxu0
        %v6789 = vadd.f32 %v6628, %v6788
        %v6790 = vpop.f32.mrb[0].mxu0
        %6791 = vmatprep.mubr.bf16.mxu0 0
        %6792 = vmatmul.mubr.bf16.gmra.mrb[0].mxu0 %v6324
        %v6793 = vpop.f32.mrb[0].mxu0
        %v6794 = vadd.f32 %v6633, %v6793
        %v6795 = vpop.f32.mrb[0].mxu0
        %v6796 = vpop.f32.mrb[0].mxu0
        %v6797 = vadd.f32 %v6636, %v6796
        %v6798 = vpop.f32.mrb[0].mxu0
        %6799 = vmatprep.mubr.bf16.mxu0 0
        %6800 = vmatmul.mubr.bf16.gmra.mrb[0].mxu0 %v6327
        %v6801 = vpop.f32.mrb[0].mxu0
        %v6802 = vadd.f32 %v6641, %v6801
        %v6803 = vpop.f32.mrb[0].mxu0
        %v6804 = vpop.f32.mrb[0].mxu0
        %v6805 = vadd.f32 %v6644, %v6804
        %v6806 = vpop.f32.mrb[0].mxu0
        %6807 = vmatprep.mubr.bf16.mxu0 0
        %6808 = vmatmul.mubr.bf16.gmra.mrb[0].mxu0 %v6330
        %v6809 = vpop.f32.mrb[0].mxu0
        %v6810 = vadd.f32 %v6649, %v6809
        %v6811 = vpop.f32.mrb[0].mxu0
        %v6812 = vpop.f32.mrb[0].mxu0
        %v6813 = vadd.f32 %v6652, %v6812
        %v6814 = vpop.f32.mrb[0].mxu0
        %6815 = vmatprep.mubr.bf16.mxu0 0
        %6816 = vmatmul.mubr.bf16.gmra.mrb[0].mxu0 %v6333
        %v6817 = vpop.f32.mrb[0].mxu0
        %v6818 = vadd.f32 %v6657, %v6817
        %v6819 = vpop.f32.mrb[0].mxu0
        %v6820 = vpop.f32.mrb[0].mxu0
        %v6821 = vadd.f32 %v6660, %v6820
        %v6822 = vpop.f32.mrb[0].mxu0
        %6823 = vmatprep.mubr.bf16.mxu0 0
        %6824 = vmatmul.mubr.bf16.gmra.mrb[0].mxu0 %v6336
        %v6825 = vpop.f32.mrb[0].mxu0
        %v6826 = vadd.f32 %v6665, %v6825
        %v6827 = vpop.f32.mrb[0].mxu0
        %v6828 = vpop.f32.mrb[0].mxu0
        %v6829 = vadd.f32 %v6668, %v6828
        %v6830 = vpop.f32.mrb[0].mxu0
        %6831 = vmatprep.mubr.bf16.mxu0 0
        %6832 = vmatmul.mubr.bf16.gmra.mrb[0].mxu0 %v6339
        %v6833 = vpop.f32.mrb[0].mxu0
        %v6834 = vadd.f32 %v6673, %v6833
        %v6835 = vpop.f32.mrb[0].mxu0
        %v6836 = vpop.f32.mrb[0].mxu0
        %v6837 = vadd.f32 %v6676, %v6836
        %v6838 = vpop.f32.mrb[0].mxu0
        %6839 = vmatprep.mubr.bf16.mxu0 0
        %6840 = vmatmul.mubr.bf16.gmra.mrb[0].mxu0 %v6342
        %v6841 = vpop.f32.mrb[0].mxu0
        %v6842 = vadd.f32 %v6681, %v6841
        %v6843 = vpop.f32.mrb[0].mxu0
        %v6844 = vpop.f32.mrb[0].mxu0
        %v6845 = vadd.f32 %v6684, %v6844
        %v6846 = vpop.f32.mrb[0].mxu0
        %6847 = vmatprep.mubr.bf16.mxu0 0
        %6848 = vmatmul.mubr.bf16.gmra.mrb[0].mxu0 %v6345
        %v6849 = vpop.f32.mrb[0].mxu0
        %v6850 = vadd.f32 %v6689, %v6849
        %v6851 = vpop.f32.mrb[0].mxu0
        %v6852 = vpop.f32.mrb[0].mxu0
        %v6853 = vadd.f32 %v6692, %v6852
        %v6854 = vpop.f32.mrb[0].mxu0
        %6855 = vmatprep.mubr.bf16.mxu0 0
        %6856 = vmatmul.mubr.bf16.gmra.mrb[0].mxu0 %v6348
        %v6857 = vpop.f32.mrb[0].mxu0
        %v6858 = vadd.f32 %v6697, %v6857
        %v6859 = vpop.f32.mrb[0].mxu0
        %v6860 = vpop.f32.mrb[0].mxu0
        %v6861 = vadd.f32 %v6700, %v6860
        %v6862 = vpop.f32.mrb[0].mxu0
        %6863 = vmatprep.mubr.bf16.mxu0 0
        %6864 = vmatmul.mubr.bf16.gmra.mrb[0].mxu0 %v6351
        %v6865 = vpop.f32.mrb[0].mxu0
        %v6866 = vadd.f32 %v6705, %v6865
        %v6867 = vpop.f32.mrb[0].mxu0
        %v6868 = vpop.f32.mrb[0].mxu0
        %v6869 = vadd.f32 %v6708, %v6868
        %v6870 = vpop.f32.mrb[0].mxu0
        %6871 = vmatprep.mubr.bf16.mxu0 0
        %6872 = vmatmul.mubr.bf16.gmra.mrb[0].mxu0 %v6354
        %v6873 = vpop.f32.mrb[0].mxu0
        %v6874 = vadd.f32 %v6713, %v6873
        %v6875 = vpop.f32.mrb[0].mxu0
        %v6876 = vpop.f32.mrb[0].mxu0
        %v6877 = vadd.f32 %v6716, %v6876
        %v6878 = vpop.f32.mrb[0].mxu0
        %6879 = vmatprep.mubr.bf16.mxu0 0
        %6880 = vmatmul.mubr.bf16.gmra.mrb[0].mxu0 %v6357
        %v6881 = vpop.f32.mrb[0].mxu0
        %v6882 = vadd.f32 %v6721, %v6881
        %v6883 = vpop.f32.mrb[0].mxu0
        %v6884 = vpop.f32.mrb[0].mxu0
        %v6885 = vadd.f32 %v6724, %v6884
        %v6886 = vpop.f32.mrb[0].mxu0
        %6887 = vdwg.mxu0
        %6888 = vst [vmem:[#allocation4] sm:$0xff] %v6762
        %6889 = vst [vmem:[#allocation4 + $0x8] sm:$0xff] %v6765
        %6890 = vst [vmem:[#allocation4 + $0x10] sm:$0xff] %v6770
        %6891 = vst [vmem:[#allocation4 + $0x18] sm:$0xff] %v6773
        %6892 = vst [vmem:[#allocation4 + $0x20] sm:$0xff] %v6778
        %6893 = vst [vmem:[#allocation4 + $0x28] sm:$0xff] %v6781
        %6894 = vst [vmem:[#allocation4 + $0x30] sm:$0xff] %v6786
        %6895 = vst [vmem:[#allocation4 + $0x38] sm:$0xff] %v6789
        %6896 = vst [vmem:[#allocation4 + $0x40] sm:$0xff] %v6794
        %6897 = vst [vmem:[#allocation4 + $0x48] sm:$0xff] %v6797
        %6898 = vst [vmem:[#allocation4 + $0x50] sm:$0xff] %v6802
        %6899 = vst [vmem:[#allocation4 + $0x58] sm:$0xff] %v6805
        %6900 = vst [vmem:[#allocation4 + $0x60] sm:$0xff] %v6810
        %6901 = vst [vmem:[#allocation4 + $0x68] sm:$0xff] %v6813
        %6902 = vst [vmem:[#allocation4 + $0x70] sm:$0xff] %v6818
        %6903 = vst [vmem:[#allocation4 + $0x78] sm:$0xff] %v6821
        %6904 = vst [vmem:[#allocation4 + $0x80] sm:$0xff] %v6826
        %6905 = vst [vmem:[#allocation4 + $0x88] sm:$0xff] %v6829
        %6906 = vst [vmem:[#allocation4 + $0x90] sm:$0xff] %v6834
        %6907 = vst [vmem:[#allocation4 + $0x98] sm:$0xff] %v6837
        %6908 = vst [vmem:[#allocation4 + $0xa0] sm:$0xff] %v6842
        %6909 = vst [vmem:[#allocation4 + $0xa8] sm:$0xff] %v6845
        %6910 = vst [vmem:[#allocation4 + $0xb0] sm:$0xff] %v6850
        %6911 = vst [vmem:[#allocation4 + $0xb8] sm:$0xff] %v6853
        %6912 = vst [vmem:[#allocation4 + $0xc0] sm:$0xff] %v6858
        %6913 = vst [vmem:[#allocation4 + $0xc8] sm:$0xff] %v6861
        %6914 = vst [vmem:[#allocation4 + $0xd0] sm:$0xff] %v6866
        %6915 = vst [vmem:[#allocation4 + $0xd8] sm:$0xff] %v6869
        %6916 = vst [vmem:[#allocation4 + $0xe0] sm:$0xff] %v6874
        %6917 = vst [vmem:[#allocation4 + $0xe8] sm:$0xff] %v6877
        %6918 = vst [vmem:[#allocation4 + $0xf0] sm:$0xff] %v6882
        %6919 = vst [vmem:[#allocation4 + $0xf8] sm:$0xff] %v6885
        %v6920 = vld [vmem:[%s4961] sm:$0xf]
        %v6921 = vld [vmem:[%s4961 + $0x4] sm:$0xf]
        %v6922 = vld [vmem:[%s4961 + $0x8] sm:$0x1]
        %v6923 = vld [vmem:[%s4961 + $0xc] sm:$0xf]
        %v6924 = vld [vmem:[%s4961 + $0x10] sm:$0xf]
        %v6925 = vld [vmem:[%s4961 + $0x14] sm:$0x1]
        %v6926 = vld [vmem:[%s4961 + $0x18] sm:$0xf]
        %v6927 = vld [vmem:[%s4961 + $0x1c] sm:$0xf]
        %v6928 = vld [vmem:[%s4961 + $0x20] sm:$0x1]
        %v6929 = vld [vmem:[%s4961 + $0x24] sm:$0xf]
        %v6930 = vld [vmem:[%s4961 + $0x28] sm:$0xf]
        %v6931 = vld [vmem:[%s4961 + $0x2c] sm:$0x1]
        %v6932 = vld [vmem:[%s4961 + $0x30] sm:$0xf]
        %v6933 = vld [vmem:[%s4961 + $0x34] sm:$0xf]
        %v6934 = vld [vmem:[%s4961 + $0x38] sm:$0x1]
        %v6935 = vld [vmem:[%s4961 + $0x3c] sm:$0xf]
        %v6936 = vld [vmem:[%s4961 + $0x40] sm:$0xf]
        %v6937 = vld [vmem:[%s4961 + $0x44] sm:$0x1]
        %v6938 = vld [vmem:[%s4961 + $0x48] sm:$0xf]
        %v6939 = vld [vmem:[%s4961 + $0x4c] sm:$0xf]
        %v6940 = vld [vmem:[%s4961 + $0x50] sm:$0x1]
        %v6941 = vld [vmem:[%s4961 + $0x54] sm:$0xf]
        %v6942 = vld [vmem:[%s4961 + $0x58] sm:$0xf]
        %v6943 = vld [vmem:[%s4961 + $0x5c] sm:$0x1]
        %v6944 = vld [vmem:[%s4961 + $0x60] sm:$0xf]
        %v6945 = vld [vmem:[%s4961 + $0x64] sm:$0xf]
        %v6946 = vld [vmem:[%s4961 + $0x68] sm:$0x1]
        %v6947 = vld [vmem:[%s4961 + $0x6c] sm:$0xf]
        %v6948 = vld [vmem:[%s4961 + $0x70] sm:$0xf]
        %v6949 = vld [vmem:[%s4961 + $0x74] sm:$0x1]
        %v6950 = vld [vmem:[%s4961 + $0x78] sm:$0xf]
        %v6951 = vld [vmem:[%s4961 + $0x7c] sm:$0xf]
        %v6952 = vld [vmem:[%s4961 + $0x80] sm:$0x1]
        %v6953 = vld [vmem:[%s4961 + $0x84] sm:$0xf]
        %v6954 = vld [vmem:[%s4961 + $0x88] sm:$0xf]
        %v6955 = vld [vmem:[%s4961 + $0x8c] sm:$0x1]
        %v6956 = vld [vmem:[%s4961 + $0x90] sm:$0xf]
        %v6957 = vld [vmem:[%s4961 + $0x94] sm:$0xf]
        %v6958 = vld [vmem:[%s4961 + $0x98] sm:$0x1]
        %v6959 = vld [vmem:[%s4961 + $0x9c] sm:$0xf]
        %v6960 = vld [vmem:[%s4961 + $0xa0] sm:$0xf]
        %v6961 = vld [vmem:[%s4961 + $0xa4] sm:$0x1]
        %v6962 = vld [vmem:[%s4961 + $0xa8] sm:$0xf]
        %v6963 = vld [vmem:[%s4961 + $0xac] sm:$0xf]
        %v6964 = vld [vmem:[%s4961 + $0xb0] sm:$0x1]
        %v6965 = vld [vmem:[%s4961 + $0xb4] sm:$0xf]
        %v6966 = vld [vmem:[%s4961 + $0xb8] sm:$0xf]
        %v6967 = vld [vmem:[%s4961 + $0xbc] sm:$0x1]
        %v7000 = vunpack.c.l.b16 %v6920
        %v7001 = vunpack.c.l.b16 %v6921
        %v7002 = vunpack.c.l.b16 %v6923
        %v7003 = vunpack.c.l.b16 %v6924
        %v7004 = vunpack.c.l.b16 %v6926
        %v7005 = vunpack.c.l.b16 %v6927
        %v7006 = vunpack.c.l.b16 %v6929
        %v7007 = vunpack.c.l.b16 %v6930
        %v7008 = vunpack.c.l.b16 %v6932
        %v7009 = vunpack.c.l.b16 %v6933
        %v7010 = vunpack.c.l.b16 %v6935
        %v7011 = vunpack.c.l.b16 %v6936
        %v7012 = vunpack.c.l.b16 %v6938
        %v7013 = vunpack.c.l.b16 %v6939
        %v7014 = vunpack.c.l.b16 %v6941
        %v7015 = vunpack.c.l.b16 %v6942
        %v7016 = vunpack.c.l.b16 %v6944
        %v7017 = vunpack.c.l.b16 %v6945
        %v7018 = vunpack.c.l.b16 %v6947
        %v7019 = vunpack.c.l.b16 %v6948
        %v7020 = vunpack.c.l.b16 %v6950
        %v7021 = vunpack.c.l.b16 %v6951
        %v7022 = vunpack.c.l.b16 %v6953
        %v7023 = vunpack.c.l.b16 %v6954
        %v7024 = vunpack.c.l.b16 %v6956
        %v7025 = vunpack.c.l.b16 %v6957
        %v7026 = vunpack.c.l.b16 %v6959
        %v7027 = vunpack.c.l.b16 %v6960
        %v7028 = vunpack.c.l.b16 %v6962
        %v7029 = vunpack.c.l.b16 %v6963
        %v7030 = vunpack.c.l.b16 %v6965
        %v7031 = vunpack.c.l.b16 %v6966
        %v7032 = vpack.c.b16 %v7001, %v7000
        %v7033 = vpack.c.b16 %v7003, %v7002
        %v7034 = vpack.c.b16 %v7005, %v7004
        %v7035 = vpack.c.b16 %v7007, %v7006
        %v7036 = vpack.c.b16 %v7009, %v7008
        %v7037 = vpack.c.b16 %v7011, %v7010
        %v7038 = vpack.c.b16 %v7013, %v7012
        %v7039 = vpack.c.b16 %v7015, %v7014
        %v7040 = vpack.c.b16 %v7017, %v7016
        %v7041 = vpack.c.b16 %v7019, %v7018
        %v7042 = vpack.c.b16 %v7021, %v7020
        %v7043 = vpack.c.b16 %v7023, %v7022
        %v7044 = vpack.c.b16 %v7025, %v7024
        %v7045 = vpack.c.b16 %v7027, %v7026
        %v7046 = vpack.c.b16 %v7029, %v7028
        %v7047 = vpack.c.b16 %v7031, %v7030
        %v7080 = vunpack.c.l.b16 %v6922
        %v7081 = vunpack.c.l.b16 %v6925
        %v7082 = vunpack.c.l.b16 %v6928
        %v7083 = vunpack.c.l.b16 %v6931
        %v7084 = vunpack.c.l.b16 %v6934
        %v7085 = vunpack.c.l.b16 %v6937
        %v7086 = vunpack.c.l.b16 %v6940
        %v7087 = vunpack.c.l.b16 %v6943
        %v7088 = vunpack.c.l.b16 %v6946
        %v7089 = vunpack.c.l.b16 %v6949
        %v7090 = vunpack.c.l.b16 %v6952
        %v7091 = vunpack.c.l.b16 %v6955
        %v7092 = vunpack.c.l.b16 %v6958
        %v7093 = vunpack.c.l.b16 %v6961
        %v7094 = vunpack.c.l.b16 %v6964
        %v7095 = vunpack.c.l.b16 %v6967
        %v7096 = vpack.c.b16 %v7080, %v7080
        %v7097 = vpack.c.b16 %v7081, %v7081
        %v7098 = vpack.c.b16 %v7082, %v7082
        %v7099 = vpack.c.b16 %v7083, %v7083
        %v7100 = vpack.c.b16 %v7084, %v7084
        %v7101 = vpack.c.b16 %v7085, %v7085
        %v7102 = vpack.c.b16 %v7086, %v7086
        %v7103 = vpack.c.b16 %v7087, %v7087
        %v7104 = vpack.c.b16 %v7088, %v7088
        %v7105 = vpack.c.b16 %v7089, %v7089
        %v7106 = vpack.c.b16 %v7090, %v7090
        %v7107 = vpack.c.b16 %v7091, %v7091
        %v7108 = vpack.c.b16 %v7092, %v7092
        %v7109 = vpack.c.b16 %v7093, %v7093
        %v7110 = vpack.c.b16 %v7094, %v7094
        %v7111 = vpack.c.b16 %v7095, %v7095
        %v7113 = vshrl.u32 %v7032, 16
        %v7115 = vshll.u32 %v7032, 16
        %v7117 = vrot.slane %v7115, 1
        %v7118 = vor.u32 %v7113, %v7117
        %v7120 = vshll.u32 %v7096, 16
        %v7122 = vrot.slane %v7120, 1
        %v7123 = vsel %vm1899, %v7118, %v7122
        %v7125 = vshrl.u32 %v7033, 16
        %v7127 = vshll.u32 %v7033, 16
        %v7129 = vrot.slane %v7127, 1
        %v7130 = vor.u32 %v7125, %v7129
        %v7132 = vshll.u32 %v7097, 16
        %v7134 = vrot.slane %v7132, 1
        %v7135 = vsel %vm1899, %v7130, %v7134
        %v7137 = vshrl.u32 %v7034, 16
        %v7139 = vshll.u32 %v7034, 16
        %v7141 = vrot.slane %v7139, 1
        %v7142 = vor.u32 %v7137, %v7141
        %v7144 = vshll.u32 %v7098, 16
        %v7146 = vrot.slane %v7144, 1
        %v7147 = vsel %vm1899, %v7142, %v7146
        %v7149 = vshrl.u32 %v7035, 16
        %v7151 = vshll.u32 %v7035, 16
        %v7153 = vrot.slane %v7151, 1
        %v7154 = vor.u32 %v7149, %v7153
        %v7156 = vshll.u32 %v7099, 16
        %v7158 = vrot.slane %v7156, 1
        %v7159 = vsel %vm1899, %v7154, %v7158
        %v7161 = vshrl.u32 %v7036, 16
        %v7163 = vshll.u32 %v7036, 16
        %v7165 = vrot.slane %v7163, 1
        %v7166 = vor.u32 %v7161, %v7165
        %v7168 = vshll.u32 %v7100, 16
        %v7170 = vrot.slane %v7168, 1
        %v7171 = vsel %vm1899, %v7166, %v7170
        %v7173 = vshrl.u32 %v7037, 16
        %v7175 = vshll.u32 %v7037, 16
        %v7177 = vrot.slane %v7175, 1
        %v7178 = vor.u32 %v7173, %v7177
        %v7180 = vshll.u32 %v7101, 16
        %v7182 = vrot.slane %v7180, 1
        %v7183 = vsel %vm1899, %v7178, %v7182
        %v7185 = vshrl.u32 %v7038, 16
        %v7187 = vshll.u32 %v7038, 16
        %v7189 = vrot.slane %v7187, 1
        %v7190 = vor.u32 %v7185, %v7189
        %v7192 = vshll.u32 %v7102, 16
        %v7194 = vrot.slane %v7192, 1
        %v7195 = vsel %vm1899, %v7190, %v7194
        %v7197 = vshrl.u32 %v7039, 16
        %v7199 = vshll.u32 %v7039, 16
        %v7201 = vrot.slane %v7199, 1
        %v7202 = vor.u32 %v7197, %v7201
        %v7204 = vshll.u32 %v7103, 16
        %v7206 = vrot.slane %v7204, 1
        %v7207 = vsel %vm1899, %v7202, %v7206
        %v7209 = vshrl.u32 %v7040, 16
        %v7211 = vshll.u32 %v7040, 16
        %v7213 = vrot.slane %v7211, 1
        %v7214 = vor.u32 %v7209, %v7213
        %v7216 = vshll.u32 %v7104, 16
        %v7218 = vrot.slane %v7216, 1
        %v7219 = vsel %vm1899, %v7214, %v7218
        %v7221 = vshrl.u32 %v7041, 16
        %v7223 = vshll.u32 %v7041, 16
        %v7225 = vrot.slane %v7223, 1
        %v7226 = vor.u32 %v7221, %v7225
        %v7228 = vshll.u32 %v7105, 16
        %v7230 = vrot.slane %v7228, 1
        %v7231 = vsel %vm1899, %v7226, %v7230
        %v7233 = vshrl.u32 %v7042, 16
        %v7235 = vshll.u32 %v7042, 16
        %v7237 = vrot.slane %v7235, 1
        %v7238 = vor.u32 %v7233, %v7237
        %v7240 = vshll.u32 %v7106, 16
        %v7242 = vrot.slane %v7240, 1
        %v7243 = vsel %vm1899, %v7238, %v7242
        %v7245 = vshrl.u32 %v7043, 16
        %v7247 = vshll.u32 %v7043, 16
        %v7249 = vrot.slane %v7247, 1
        %v7250 = vor.u32 %v7245, %v7249
        %v7252 = vshll.u32 %v7107, 16
        %v7254 = vrot.slane %v7252, 1
        %v7255 = vsel %vm1899, %v7250, %v7254
        %v7257 = vshrl.u32 %v7044, 16
        %v7259 = vshll.u32 %v7044, 16
        %v7261 = vrot.slane %v7259, 1
        %v7262 = vor.u32 %v7257, %v7261
        %v7264 = vshll.u32 %v7108, 16
        %v7266 = vrot.slane %v7264, 1
        %v7267 = vsel %vm1899, %v7262, %v7266
        %v7269 = vshrl.u32 %v7045, 16
        %v7271 = vshll.u32 %v7045, 16
        %v7273 = vrot.slane %v7271, 1
        %v7274 = vor.u32 %v7269, %v7273
        %v7276 = vshll.u32 %v7109, 16
        %v7278 = vrot.slane %v7276, 1
        %v7279 = vsel %vm1899, %v7274, %v7278
        %v7281 = vshrl.u32 %v7046, 16
        %v7283 = vshll.u32 %v7046, 16
        %v7285 = vrot.slane %v7283, 1
        %v7286 = vor.u32 %v7281, %v7285
        %v7288 = vshll.u32 %v7110, 16
        %v7290 = vrot.slane %v7288, 1
        %v7291 = vsel %vm1899, %v7286, %v7290
        %v7293 = vshrl.u32 %v7047, 16
        %v7295 = vshll.u32 %v7047, 16
        %v7297 = vrot.slane %v7295, 1
        %v7298 = vor.u32 %v7293, %v7297
        %v7300 = vshll.u32 %v7111, 16
        %v7302 = vrot.slane %v7300, 1
        %v7303 = vsel %vm1899, %v7298, %v7302
        %v7320 = vrot.slane %v7032, 1
        %v7321 = vrot.slane %v7096, 1
        %v7322 = vsel %vm2124, %v7320, %v7321
        %v7323 = vrot.slane %v7033, 1
        %v7324 = vrot.slane %v7097, 1
        %v7325 = vsel %vm2124, %v7323, %v7324
        %v7326 = vrot.slane %v7034, 1
        %v7327 = vrot.slane %v7098, 1
        %v7328 = vsel %vm2124, %v7326, %v7327
        %v7329 = vrot.slane %v7035, 1
        %v7330 = vrot.slane %v7099, 1
        %v7331 = vsel %vm2124, %v7329, %v7330
        %v7332 = vrot.slane %v7036, 1
        %v7333 = vrot.slane %v7100, 1
        %v7334 = vsel %vm2124, %v7332, %v7333
        %v7335 = vrot.slane %v7037, 1
        %v7336 = vrot.slane %v7101, 1
        %v7337 = vsel %vm2124, %v7335, %v7336
        %v7338 = vrot.slane %v7038, 1
        %v7339 = vrot.slane %v7102, 1
        %v7340 = vsel %vm2124, %v7338, %v7339
        %v7341 = vrot.slane %v7039, 1
        %v7342 = vrot.slane %v7103, 1
        %v7343 = vsel %vm2124, %v7341, %v7342
        %v7344 = vrot.slane %v7040, 1
        %v7345 = vrot.slane %v7104, 1
        %v7346 = vsel %vm2124, %v7344, %v7345
        %v7347 = vrot.slane %v7041, 1
        %v7348 = vrot.slane %v7105, 1
        %v7349 = vsel %vm2124, %v7347, %v7348
        %v7350 = vrot.slane %v7042, 1
        %v7351 = vrot.slane %v7106, 1
        %v7352 = vsel %vm2124, %v7350, %v7351
        %v7353 = vrot.slane %v7043, 1
        %v7354 = vrot.slane %v7107, 1
        %v7355 = vsel %vm2124, %v7353, %v7354
        %v7356 = vrot.slane %v7044, 1
        %v7357 = vrot.slane %v7108, 1
        %v7358 = vsel %vm2124, %v7356, %v7357
        %v7359 = vrot.slane %v7045, 1
        %v7360 = vrot.slane %v7109, 1
        %v7361 = vsel %vm2124, %v7359, %v7360
        %v7362 = vrot.slane %v7046, 1
        %v7363 = vrot.slane %v7110, 1
        %v7364 = vsel %vm2124, %v7362, %v7363
        %v7365 = vrot.slane %v7047, 1
        %v7366 = vrot.slane %v7111, 1
        %v7367 = vsel %vm2124, %v7365, %v7366
        %s7384 = scalar_lea.vmem %s9, 192
        %v7385 = vld [vmem:[%s7384] sm:$0xf]
        %v7386 = vld [vmem:[%s7384 + $0x4] sm:$0xf]
        %v7387 = vld [vmem:[%s7384 + $0x8] sm:$0xf]
        %v7388 = vld [vmem:[%s7384 + $0xc] sm:$0xf]
        %v7389 = vld [vmem:[%s7384 + $0x10] sm:$0xf]
        %v7390 = vld [vmem:[%s7384 + $0x14] sm:$0xf]
        %v7391 = vld [vmem:[%s7384 + $0x18] sm:$0xf]
        %v7392 = vld [vmem:[%s7384 + $0x1c] sm:$0xf]
        %v7393 = vld [vmem:[%s7384 + $0x20] sm:$0xf]
        %v7394 = vld [vmem:[%s7384 + $0x24] sm:$0xf]
        %v7395 = vld [vmem:[%s7384 + $0x28] sm:$0xf]
        %v7396 = vld [vmem:[%s7384 + $0x2c] sm:$0xf]
        %v7397 = vld [vmem:[%s7384 + $0x30] sm:$0xf]
        %v7398 = vld [vmem:[%s7384 + $0x34] sm:$0xf]
        %v7399 = vld [vmem:[%s7384 + $0x38] sm:$0xf]
        %v7400 = vld [vmem:[%s7384 + $0x3c] sm:$0xf]
        %v7401 = vld [vmem:[%s7384 + $0x40] sm:$0xf]
        %v7402 = vld [vmem:[%s7384 + $0x44] sm:$0xf]
        %v7403 = vld [vmem:[%s7384 + $0x48] sm:$0xf]
        %v7404 = vld [vmem:[%s7384 + $0x4c] sm:$0xf]
        %v7405 = vld [vmem:[%s7384 + $0x50] sm:$0xf]
        %v7406 = vld [vmem:[%s7384 + $0x54] sm:$0xf]
        %v7407 = vld [vmem:[%s7384 + $0x58] sm:$0xf]
        %v7408 = vld [vmem:[%s7384 + $0x5c] sm:$0xf]
        %v7409 = vld [vmem:[%s7384 + $0x60] sm:$0xf]
        %v7410 = vld [vmem:[%s7384 + $0x64] sm:$0xf]
        %v7411 = vld [vmem:[%s7384 + $0x68] sm:$0xf]
        %v7412 = vld [vmem:[%s7384 + $0x6c] sm:$0xf]
        %v7413 = vld [vmem:[%s7384 + $0x70] sm:$0xf]
        %v7414 = vld [vmem:[%s7384 + $0x74] sm:$0xf]
        %v7415 = vld [vmem:[%s7384 + $0x78] sm:$0xf]
        %v7416 = vld [vmem:[%s7384 + $0x7c] sm:$0xf]
        %v7417 = vld [vmem:[%s7384 + $0x80] sm:$0xf]
        %v7418 = vld [vmem:[%s7384 + $0x84] sm:$0xf]
        %v7419 = vld [vmem:[%s7384 + $0x88] sm:$0xf]
        %v7420 = vld [vmem:[%s7384 + $0x8c] sm:$0xf]
        %v7421 = vld [vmem:[%s7384 + $0x90] sm:$0xf]
        %v7422 = vld [vmem:[%s7384 + $0x94] sm:$0xf]
        %v7423 = vld [vmem:[%s7384 + $0x98] sm:$0xf]
        %v7424 = vld [vmem:[%s7384 + $0x9c] sm:$0xf]
        %v7425 = vld [vmem:[%s7384 + $0xa0] sm:$0xf]
        %v7426 = vld [vmem:[%s7384 + $0xa4] sm:$0xf]
        %v7427 = vld [vmem:[%s7384 + $0xa8] sm:$0xf]
        %v7428 = vld [vmem:[%s7384 + $0xac] sm:$0xf]
        %v7429 = vld [vmem:[%s7384 + $0xb0] sm:$0xf]
        %v7430 = vld [vmem:[%s7384 + $0xb4] sm:$0xf]
        %v7431 = vld [vmem:[%s7384 + $0xb8] sm:$0xf]
        %v7432 = vld [vmem:[%s7384 + $0xbc] sm:$0xf]
        %v7481 = vunpack.c.l.b16 %v7385
        %v7482 = vunpack.c.l.b16 %v7386
        %v7483 = vunpack.c.l.b16 %v7387
        %v7484 = vunpack.c.l.b16 %v7388
        %v7485 = vunpack.c.l.b16 %v7389
        %v7486 = vunpack.c.l.b16 %v7390
        %v7487 = vunpack.c.l.b16 %v7391
        %v7488 = vunpack.c.l.b16 %v7392
        %v7489 = vunpack.c.l.b16 %v7393
        %v7490 = vunpack.c.l.b16 %v7394
        %v7491 = vunpack.c.l.b16 %v7395
        %v7492 = vunpack.c.l.b16 %v7396
        %v7493 = vunpack.c.l.b16 %v7397
        %v7494 = vunpack.c.l.b16 %v7398
        %v7495 = vunpack.c.l.b16 %v7399
        %v7496 = vunpack.c.l.b16 %v7400
        %v7497 = vunpack.c.l.b16 %v7401
        %v7498 = vunpack.c.l.b16 %v7402
        %v7499 = vunpack.c.l.b16 %v7403
        %v7500 = vunpack.c.l.b16 %v7404
        %v7501 = vunpack.c.l.b16 %v7405
        %v7502 = vunpack.c.l.b16 %v7406
        %v7503 = vunpack.c.l.b16 %v7407
        %v7504 = vunpack.c.l.b16 %v7408
        %v7505 = vunpack.c.l.b16 %v7409
        %v7506 = vunpack.c.l.b16 %v7410
        %v7507 = vunpack.c.l.b16 %v7411
        %v7508 = vunpack.c.l.b16 %v7412
        %v7509 = vunpack.c.l.b16 %v7413
        %v7510 = vunpack.c.l.b16 %v7414
        %v7511 = vunpack.c.l.b16 %v7415
        %v7512 = vunpack.c.l.b16 %v7416
        %v7513 = vunpack.c.l.b16 %v7417
        %v7514 = vunpack.c.l.b16 %v7418
        %v7515 = vunpack.c.l.b16 %v7419
        %v7516 = vunpack.c.l.b16 %v7420
        %v7517 = vunpack.c.l.b16 %v7421
        %v7518 = vunpack.c.l.b16 %v7422
        %v7519 = vunpack.c.l.b16 %v7423
        %v7520 = vunpack.c.l.b16 %v7424
        %v7521 = vunpack.c.l.b16 %v7425
        %v7522 = vunpack.c.l.b16 %v7426
        %v7523 = vunpack.c.l.b16 %v7427
        %v7524 = vunpack.c.l.b16 %v7428
        %v7525 = vunpack.c.l.b16 %v7429
        %v7526 = vunpack.c.l.b16 %v7430
        %v7527 = vunpack.c.l.b16 %v7431
        %v7528 = vunpack.c.l.b16 %v7432
        %v7529 = vpack.c.b16 %v7482, %v7481
        %v7530 = vpack.c.b16 %v7484, %v7483
        %v7531 = vpack.c.b16 %v7486, %v7485
        %v7532 = vpack.c.b16 %v7488, %v7487
        %v7533 = vpack.c.b16 %v7490, %v7489
        %v7534 = vpack.c.b16 %v7492, %v7491
        %v7535 = vpack.c.b16 %v7494, %v7493
        %v7536 = vpack.c.b16 %v7496, %v7495
        %v7537 = vpack.c.b16 %v7498, %v7497
        %v7538 = vpack.c.b16 %v7500, %v7499
        %v7539 = vpack.c.b16 %v7502, %v7501
        %v7540 = vpack.c.b16 %v7504, %v7503
        %v7541 = vpack.c.b16 %v7506, %v7505
        %v7542 = vpack.c.b16 %v7508, %v7507
        %v7543 = vpack.c.b16 %v7510, %v7509
        %v7544 = vpack.c.b16 %v7512, %v7511
        %v7545 = vpack.c.b16 %v7514, %v7513
        %v7546 = vpack.c.b16 %v7516, %v7515
        %v7547 = vpack.c.b16 %v7518, %v7517
        %v7548 = vpack.c.b16 %v7520, %v7519
        %v7549 = vpack.c.b16 %v7522, %v7521
        %v7550 = vpack.c.b16 %v7524, %v7523
        %v7551 = vpack.c.b16 %v7526, %v7525
        %v7552 = vpack.c.b16 %v7528, %v7527
        %7577 = vmatprep.subr.bf16.mxu0 0
        %7578 = vmatpush1.bf16.msra.mxu0 %v7529
        %7579 = vmatprep.subr.bf16.mxu0 0
        %7580 = vmatpush1.bf16.msra.mxu0 %v7530
        %7581 = vmatprep.subr.bf16.mxu0 0
        %7582 = vmatpush1.bf16.msra.mxu0 %v7531
        %7583 = vmatprep.subr.bf16.mxu0 0
        %7584 = vmatpush1.bf16.msra.mxu0 %v7532
        %7585 = vmatprep.subr.bf16.mxu0 0
        %7586 = vmatpush1.bf16.msra.mxu0 %v7533
        %7587 = vmatprep.subr.bf16.mxu0 0
        %7588 = vmatpush1.bf16.msra.mxu0 %v7534
        %7589 = vmatprep.subr.bf16.mxu0 0
        %7590 = vmatpush1.bf16.msra.mxu0 %v7535
        %7591 = vmatprep.subr.bf16.mxu0 0
        %7592 = vmatpush1.bf16.msra.mxu0 %v7536
        %7593 = vmatprep.subr.bf16.mxu0 0
        %7594 = vmatpush1.bf16.msra.mxu0 %v7537
        %7595 = vmatprep.subr.bf16.mxu0 0
        %7596 = vmatpush1.bf16.msra.mxu0 %v7538
        %7597 = vmatprep.subr.bf16.mxu0 0
        %7598 = vmatpush1.bf16.msra.mxu0 %v7539
        %7599 = vmatprep.subr.bf16.mxu0 0
        %7600 = vmatpush1.bf16.msra.mxu0 %v7540
        %7601 = vmatprep.subr.bf16.mxu0 0
        %7602 = vmatpush1.bf16.msra.mxu0 %v7541
        %7603 = vmatprep.subr.bf16.mxu0 0
        %7604 = vmatpush1.bf16.msra.mxu0 %v7542
        %7605 = vmatprep.subr.bf16.mxu0 0
        %7606 = vmatpush1.bf16.msra.mxu0 %v7543
        %7607 = vmatprep.subr.bf16.mxu0 0
        %7608 = vmatpush1.bf16.msra.mxu0 %v7544
        %7609 = vmatprep.mubr.bf16.mxu0 %v7123
        %7610 = vmatmul.mubr.bf16.gmra.mrb[0].mxu0 %v7032
        %v7611 = vpop.f32.mrb[0].mxu0
        %v7612 = vadd.f32 0.0, %v7611
        %v7613 = vpop.f32.mrb[0].mxu0
        %v7614 = vpop.f32.mrb[0].mxu0
        %v7615 = vadd.f32 0.0, %v7614
        %v7616 = vpop.f32.mrb[0].mxu0
        %7617 = vmatprep.mubr.bf16.mxu0 %v7135
        %7618 = vmatmul.mubr.bf16.gmra.mrb[0].mxu0 %v7033
        %v7619 = vpop.f32.mrb[0].mxu0
        %v7620 = vadd.f32 0.0, %v7619
        %v7621 = vpop.f32.mrb[0].mxu0
        %v7622 = vpop.f32.mrb[0].mxu0
        %v7623 = vadd.f32 0.0, %v7622
        %v7624 = vpop.f32.mrb[0].mxu0
        %7625 = vmatprep.mubr.bf16.mxu0 %v7147
        %7626 = vmatmul.mubr.bf16.gmra.mrb[0].mxu0 %v7034
        %v7627 = vpop.f32.mrb[0].mxu0
        %v7628 = vadd.f32 0.0, %v7627
        %v7629 = vpop.f32.mrb[0].mxu0
        %v7630 = vpop.f32.mrb[0].mxu0
        %v7631 = vadd.f32 0.0, %v7630
        %v7632 = vpop.f32.mrb[0].mxu0
        %7633 = vmatprep.mubr.bf16.mxu0 %v7159
        %7634 = vmatmul.mubr.bf16.gmra.mrb[0].mxu0 %v7035
        %v7635 = vpop.f32.mrb[0].mxu0
        %v7636 = vadd.f32 0.0, %v7635
        %v7637 = vpop.f32.mrb[0].mxu0
        %v7638 = vpop.f32.mrb[0].mxu0
        %v7639 = vadd.f32 0.0, %v7638
        %v7640 = vpop.f32.mrb[0].mxu0
        %7641 = vmatprep.mubr.bf16.mxu0 %v7171
        %7642 = vmatmul.mubr.bf16.gmra.mrb[0].mxu0 %v7036
        %v7643 = vpop.f32.mrb[0].mxu0
        %v7644 = vadd.f32 0.0, %v7643
        %v7645 = vpop.f32.mrb[0].mxu0
        %v7646 = vpop.f32.mrb[0].mxu0
        %v7647 = vadd.f32 0.0, %v7646
        %v7648 = vpop.f32.mrb[0].mxu0
        %7649 = vmatprep.mubr.bf16.mxu0 %v7183
        %7650 = vmatmul.mubr.bf16.gmra.mrb[0].mxu0 %v7037
        %v7651 = vpop.f32.mrb[0].mxu0
        %v7652 = vadd.f32 0.0, %v7651
        %v7653 = vpop.f32.mrb[0].mxu0
        %v7654 = vpop.f32.mrb[0].mxu0
        %v7655 = vadd.f32 0.0, %v7654
        %v7656 = vpop.f32.mrb[0].mxu0
        %7657 = vmatprep.mubr.bf16.mxu0 %v7195
        %7658 = vmatmul.mubr.bf16.gmra.mrb[0].mxu0 %v7038
        %v7659 = vpop.f32.mrb[0].mxu0
        %v7660 = vadd.f32 0.0, %v7659
        %v7661 = vpop.f32.mrb[0].mxu0
        %v7662 = vpop.f32.mrb[0].mxu0
        %v7663 = vadd.f32 0.0, %v7662
        %v7664 = vpop.f32.mrb[0].mxu0
        %7665 = vmatprep.mubr.bf16.mxu0 %v7207
        %7666 = vmatmul.mubr.bf16.gmra.mrb[0].mxu0 %v7039
        %v7667 = vpop.f32.mrb[0].mxu0
        %v7668 = vadd.f32 0.0, %v7667
        %v7669 = vpop.f32.mrb[0].mxu0
        %v7670 = vpop.f32.mrb[0].mxu0
        %v7671 = vadd.f32 0.0, %v7670
        %v7672 = vpop.f32.mrb[0].mxu0
        %7673 = vmatprep.mubr.bf16.mxu0 %v7219
        %7674 = vmatmul.mubr.bf16.gmra.mrb[0].mxu0 %v7040
        %v7675 = vpop.f32.mrb[0].mxu0
        %v7676 = vadd.f32 0.0, %v7675
        %v7677 = vpop.f32.mrb[0].mxu0
        %v7678 = vpop.f32.mrb[0].mxu0
        %v7679 = vadd.f32 0.0, %v7678
        %v7680 = vpop.f32.mrb[0].mxu0
        %7681 = vmatprep.mubr.bf16.mxu0 %v7231
        %7682 = vmatmul.mubr.bf16.gmra.mrb[0].mxu0 %v7041
        %v7683 = vpop.f32.mrb[0].mxu0
        %v7684 = vadd.f32 0.0, %v7683
        %v7685 = vpop.f32.mrb[0].mxu0
        %v7686 = vpop.f32.mrb[0].mxu0
        %v7687 = vadd.f32 0.0, %v7686
        %v7688 = vpop.f32.mrb[0].mxu0
        %7689 = vmatprep.mubr.bf16.mxu0 %v7243
        %7690 = vmatmul.mubr.bf16.gmra.mrb[0].mxu0 %v7042
        %v7691 = vpop.f32.mrb[0].mxu0
        %v7692 = vadd.f32 0.0, %v7691
        %v7693 = vpop.f32.mrb[0].mxu0
        %v7694 = vpop.f32.mrb[0].mxu0
        %v7695 = vadd.f32 0.0, %v7694
        %v7696 = vpop.f32.mrb[0].mxu0
        %7697 = vmatprep.mubr.bf16.mxu0 %v7255
        %7698 = vmatmul.mubr.bf16.gmra.mrb[0].mxu0 %v7043
        %v7699 = vpop.f32.mrb[0].mxu0
        %v7700 = vadd.f32 0.0, %v7699
        %v7701 = vpop.f32.mrb[0].mxu0
        %v7702 = vpop.f32.mrb[0].mxu0
        %v7703 = vadd.f32 0.0, %v7702
        %v7704 = vpop.f32.mrb[0].mxu0
        %7705 = vmatprep.mubr.bf16.mxu0 %v7267
        %7706 = vmatmul.mubr.bf16.gmra.mrb[0].mxu0 %v7044
        %v7707 = vpop.f32.mrb[0].mxu0
        %v7708 = vadd.f32 0.0, %v7707
        %v7709 = vpop.f32.mrb[0].mxu0
        %v7710 = vpop.f32.mrb[0].mxu0
        %v7711 = vadd.f32 0.0, %v7710
        %v7712 = vpop.f32.mrb[0].mxu0
        %7713 = vmatprep.mubr.bf16.mxu0 %v7279
        %7714 = vmatmul.mubr.bf16.gmra.mrb[0].mxu0 %v7045
        %v7715 = vpop.f32.mrb[0].mxu0
        %v7716 = vadd.f32 0.0, %v7715
        %v7717 = vpop.f32.mrb[0].mxu0
        %v7718 = vpop.f32.mrb[0].mxu0
        %v7719 = vadd.f32 0.0, %v7718
        %v7720 = vpop.f32.mrb[0].mxu0
        %7721 = vmatprep.mubr.bf16.mxu0 %v7291
        %7722 = vmatmul.mubr.bf16.gmra.mrb[0].mxu0 %v7046
        %v7723 = vpop.f32.mrb[0].mxu0
        %v7724 = vadd.f32 0.0, %v7723
        %v7725 = vpop.f32.mrb[0].mxu0
        %v7726 = vpop.f32.mrb[0].mxu0
        %v7727 = vadd.f32 0.0, %v7726
        %v7728 = vpop.f32.mrb[0].mxu0
        %7729 = vmatprep.mubr.bf16.mxu0 %v7303
        %7730 = vmatmul.mubr.bf16.gmra.mrb[0].mxu0 %v7047
        %v7731 = vpop.f32.mrb[0].mxu0
        %v7732 = vadd.f32 0.0, %v7731
        %v7733 = vpop.f32.mrb[0].mxu0
        %v7734 = vpop.f32.mrb[0].mxu0
        %v7735 = vadd.f32 0.0, %v7734
        %v7736 = vpop.f32.mrb[0].mxu0
        %7737 = vdwg.mxu0
        %7738 = vmatprep.subr.bf16.mxu0 0
        %7739 = vmatpush1.bf16.msra.mxu0 %v7545
        %7740 = vmatprep.subr.bf16.mxu0 0
        %7741 = vmatpush1.bf16.msra.mxu0 %v7546
        %7742 = vmatprep.subr.bf16.mxu0 0
        %7743 = vmatpush1.bf16.msra.mxu0 %v7547
        %7744 = vmatprep.subr.bf16.mxu0 0
        %7745 = vmatpush1.bf16.msra.mxu0 %v7548
        %7746 = vmatprep.subr.bf16.mxu0 0
        %7747 = vmatpush1.bf16.msra.mxu0 %v7549
        %7748 = vmatprep.subr.bf16.mxu0 0
        %7749 = vmatpush1.bf16.msra.mxu0 %v7550
        %7750 = vmatprep.subr.bf16.mxu0 0
        %7751 = vmatpush1.bf16.msra.mxu0 %v7551
        %7752 = vmatprep.subr.bf16.mxu0 0
        %7753 = vmatpush1.bf16.msra.mxu0 %v7552
        %7754 = vmatprep.subr.bf16.mxu0 0
        %7755 = vmatpush1.bf16.msra.mxu0 0
        %7756 = vmatprep.subr.bf16.mxu0 0
        %7757 = vmatpush1.bf16.msra.mxu0 0
        %7758 = vmatprep.subr.bf16.mxu0 0
        %7759 = vmatpush1.bf16.msra.mxu0 0
        %7760 = vmatprep.subr.bf16.mxu0 0
        %7761 = vmatpush1.bf16.msra.mxu0 0
        %7762 = vmatprep.subr.bf16.mxu0 0
        %7763 = vmatpush1.bf16.msra.mxu0 0
        %7764 = vmatprep.subr.bf16.mxu0 0
        %7765 = vmatpush1.bf16.msra.mxu0 0
        %7766 = vmatprep.subr.bf16.mxu0 0
        %7767 = vmatpush1.bf16.msra.mxu0 0
        %7768 = vmatprep.subr.bf16.mxu0 0
        %7769 = vmatpush1.bf16.msra.mxu0 0
        %7770 = vmatprep.mubr.bf16.mxu0 0
        %7771 = vmatmul.mubr.bf16.gmra.mrb[0].mxu0 %v7322
        %v7772 = vpop.f32.mrb[0].mxu0
        %v7773 = vadd.f32 %v7612, %v7772
        %v7774 = vpop.f32.mrb[0].mxu0
        %v7775 = vpop.f32.mrb[0].mxu0
        %v7776 = vadd.f32 %v7615, %v7775
        %v7777 = vpop.f32.mrb[0].mxu0
        %7778 = vmatprep.mubr.bf16.mxu0 0
        %7779 = vmatmul.mubr.bf16.gmra.mrb[0].mxu0 %v7325
        %v7780 = vpop.f32.mrb[0].mxu0
        %v7781 = vadd.f32 %v7620, %v7780
        %v7782 = vpop.f32.mrb[0].mxu0
        %v7783 = vpop.f32.mrb[0].mxu0
        %v7784 = vadd.f32 %v7623, %v7783
        %v7785 = vpop.f32.mrb[0].mxu0
        %7786 = vmatprep.mubr.bf16.mxu0 0
        %7787 = vmatmul.mubr.bf16.gmra.mrb[0].mxu0 %v7328
        %v7788 = vpop.f32.mrb[0].mxu0
        %v7789 = vadd.f32 %v7628, %v7788
        %v7790 = vpop.f32.mrb[0].mxu0
        %v7791 = vpop.f32.mrb[0].mxu0
        %v7792 = vadd.f32 %v7631, %v7791
        %v7793 = vpop.f32.mrb[0].mxu0
        %7794 = vmatprep.mubr.bf16.mxu0 0
        %7795 = vmatmul.mubr.bf16.gmra.mrb[0].mxu0 %v7331
        %v7796 = vpop.f32.mrb[0].mxu0
        %v7797 = vadd.f32 %v7636, %v7796
        %v7798 = vpop.f32.mrb[0].mxu0
        %v7799 = vpop.f32.mrb[0].mxu0
        %v7800 = vadd.f32 %v7639, %v7799
        %v7801 = vpop.f32.mrb[0].mxu0
        %7802 = vmatprep.mubr.bf16.mxu0 0
        %7803 = vmatmul.mubr.bf16.gmra.mrb[0].mxu0 %v7334
        %v7804 = vpop.f32.mrb[0].mxu0
        %v7805 = vadd.f32 %v7644, %v7804
        %v7806 = vpop.f32.mrb[0].mxu0
        %v7807 = vpop.f32.mrb[0].mxu0
        %v7808 = vadd.f32 %v7647, %v7807
        %v7809 = vpop.f32.mrb[0].mxu0
        %7810 = vmatprep.mubr.bf16.mxu0 0
        %7811 = vmatmul.mubr.bf16.gmra.mrb[0].mxu0 %v7337
        %v7812 = vpop.f32.mrb[0].mxu0
        %v7813 = vadd.f32 %v7652, %v7812
        %v7814 = vpop.f32.mrb[0].mxu0
        %v7815 = vpop.f32.mrb[0].mxu0
        %v7816 = vadd.f32 %v7655, %v7815
        %v7817 = vpop.f32.mrb[0].mxu0
        %7818 = vmatprep.mubr.bf16.mxu0 0
        %7819 = vmatmul.mubr.bf16.gmra.mrb[0].mxu0 %v7340
        %v7820 = vpop.f32.mrb[0].mxu0
        %v7821 = vadd.f32 %v7660, %v7820
        %v7822 = vpop.f32.mrb[0].mxu0
        %v7823 = vpop.f32.mrb[0].mxu0
        %v7824 = vadd.f32 %v7663, %v7823
        %v7825 = vpop.f32.mrb[0].mxu0
        %7826 = vmatprep.mubr.bf16.mxu0 0
        %7827 = vmatmul.mubr.bf16.gmra.mrb[0].mxu0 %v7343
        %v7828 = vpop.f32.mrb[0].mxu0
        %v7829 = vadd.f32 %v7668, %v7828
        %v7830 = vpop.f32.mrb[0].mxu0
        %v7831 = vpop.f32.mrb[0].mxu0
        %v7832 = vadd.f32 %v7671, %v7831
        %v7833 = vpop.f32.mrb[0].mxu0
        %7834 = vmatprep.mubr.bf16.mxu0 0
        %7835 = vmatmul.mubr.bf16.gmra.mrb[0].mxu0 %v7346
        %v7836 = vpop.f32.mrb[0].mxu0
        %v7837 = vadd.f32 %v7676, %v7836
        %v7838 = vpop.f32.mrb[0].mxu0
        %v7839 = vpop.f32.mrb[0].mxu0
        %v7840 = vadd.f32 %v7679, %v7839
        %v7841 = vpop.f32.mrb[0].mxu0
        %7842 = vmatprep.mubr.bf16.mxu0 0
        %7843 = vmatmul.mubr.bf16.gmra.mrb[0].mxu0 %v7349
        %v7844 = vpop.f32.mrb[0].mxu0
        %v7845 = vadd.f32 %v7684, %v7844
        %v7846 = vpop.f32.mrb[0].mxu0
        %v7847 = vpop.f32.mrb[0].mxu0
        %v7848 = vadd.f32 %v7687, %v7847
        %v7849 = vpop.f32.mrb[0].mxu0
        %7850 = vmatprep.mubr.bf16.mxu0 0
        %7851 = vmatmul.mubr.bf16.gmra.mrb[0].mxu0 %v7352
        %v7852 = vpop.f32.mrb[0].mxu0
        %v7853 = vadd.f32 %v7692, %v7852
        %v7854 = vpop.f32.mrb[0].mxu0
        %v7855 = vpop.f32.mrb[0].mxu0
        %v7856 = vadd.f32 %v7695, %v7855
        %v7857 = vpop.f32.mrb[0].mxu0
        %7858 = vmatprep.mubr.bf16.mxu0 0
        %7859 = vmatmul.mubr.bf16.gmra.mrb[0].mxu0 %v7355
        %v7860 = vpop.f32.mrb[0].mxu0
        %v7861 = vadd.f32 %v7700, %v7860
        %v7862 = vpop.f32.mrb[0].mxu0
        %v7863 = vpop.f32.mrb[0].mxu0
        %v7864 = vadd.f32 %v7703, %v7863
        %v7865 = vpop.f32.mrb[0].mxu0
        %7866 = vmatprep.mubr.bf16.mxu0 0
        %7867 = vmatmul.mubr.bf16.gmra.mrb[0].mxu0 %v7358
        %v7868 = vpop.f32.mrb[0].mxu0
        %v7869 = vadd.f32 %v7708, %v7868
        %v7870 = vpop.f32.mrb[0].mxu0
        %v7871 = vpop.f32.mrb[0].mxu0
        %v7872 = vadd.f32 %v7711, %v7871
        %v7873 = vpop.f32.mrb[0].mxu0
        %7874 = vmatprep.mubr.bf16.mxu0 0
        %7875 = vmatmul.mubr.bf16.gmra.mrb[0].mxu0 %v7361
        %v7876 = vpop.f32.mrb[0].mxu0
        %v7877 = vadd.f32 %v7716, %v7876
        %v7878 = vpop.f32.mrb[0].mxu0
        %v7879 = vpop.f32.mrb[0].mxu0
        %v7880 = vadd.f32 %v7719, %v7879
        %v7881 = vpop.f32.mrb[0].mxu0
        %7882 = vmatprep.mubr.bf16.mxu0 0
        %7883 = vmatmul.mubr.bf16.gmra.mrb[0].mxu0 %v7364
        %v7884 = vpop.f32.mrb[0].mxu0
        %v7885 = vadd.f32 %v7724, %v7884
        %v7886 = vpop.f32.mrb[0].mxu0
        %v7887 = vpop.f32.mrb[0].mxu0
        %v7888 = vadd.f32 %v7727, %v7887
        %v7889 = vpop.f32.mrb[0].mxu0
        %7890 = vmatprep.mubr.bf16.mxu0 0
        %7891 = vmatmul.mubr.bf16.gmra.mrb[0].mxu0 %v7367
        %v7892 = vpop.f32.mrb[0].mxu0
        %v7893 = vadd.f32 %v7732, %v7892
        %v7894 = vpop.f32.mrb[0].mxu0
        %v7895 = vpop.f32.mrb[0].mxu0
        %v7896 = vadd.f32 %v7735, %v7895
        %v7897 = vpop.f32.mrb[0].mxu0
        %7898 = vdwg.mxu0
        %v7899 = vld [vmem:[#allocation4] sm:$0xff]
        %v7900 = vld [vmem:[#allocation4 + $0x8] sm:$0xff]
        %v7901 = vld [vmem:[#allocation4 + $0x10] sm:$0xff]
        %v7902 = vld [vmem:[#allocation4 + $0x18] sm:$0xff]
        %v7903 = vld [vmem:[#allocation4 + $0x20] sm:$0xff]
        %v7904 = vld [vmem:[#allocation4 + $0x28] sm:$0xff]
        %v7905 = vld [vmem:[#allocation4 + $0x30] sm:$0xff]
        %v7906 = vld [vmem:[#allocation4 + $0x38] sm:$0xff]
        %v7907 = vld [vmem:[#allocation4 + $0x40] sm:$0xff]
        %v7908 = vld [vmem:[#allocation4 + $0x48] sm:$0xff]
        %v7909 = vld [vmem:[#allocation4 + $0x50] sm:$0xff]
        %v7910 = vld [vmem:[#allocation4 + $0x58] sm:$0xff]
        %v7911 = vld [vmem:[#allocation4 + $0x60] sm:$0xff]
        %v7912 = vld [vmem:[#allocation4 + $0x68] sm:$0xff]
        %v7913 = vld [vmem:[#allocation4 + $0x70] sm:$0xff]
        %v7914 = vld [vmem:[#allocation4 + $0x78] sm:$0xff]
        %v7915 = vld [vmem:[#allocation4 + $0x80] sm:$0xff]
        %v7916 = vld [vmem:[#allocation4 + $0x88] sm:$0xff]
        %v7917 = vld [vmem:[#allocation4 + $0x90] sm:$0xff]
        %v7918 = vld [vmem:[#allocation4 + $0x98] sm:$0xff]
        %v7919 = vld [vmem:[#allocation4 + $0xa0] sm:$0xff]
        %v7920 = vld [vmem:[#allocation4 + $0xa8] sm:$0xff]
        %v7921 = vld [vmem:[#allocation4 + $0xb0] sm:$0xff]
        %v7922 = vld [vmem:[#allocation4 + $0xb8] sm:$0xff]
        %v7923 = vld [vmem:[#allocation4 + $0xc0] sm:$0xff]
        %v7924 = vld [vmem:[#allocation4 + $0xc8] sm:$0xff]
        %v7925 = vld [vmem:[#allocation4 + $0xd0] sm:$0xff]
        %v7926 = vld [vmem:[#allocation4 + $0xd8] sm:$0xff]
        %v7927 = vld [vmem:[#allocation4 + $0xe0] sm:$0xff]
        %v7928 = vld [vmem:[#allocation4 + $0xe8] sm:$0xff]
        %v7929 = vld [vmem:[#allocation4 + $0xf0] sm:$0xff]
        %v7930 = vld [vmem:[#allocation4 + $0xf8] sm:$0xff]
        %v7931 = vadd.f32 %v7899, %v7773
        %v7932 = vadd.f32 %v7900, %v7776
        %v7933 = vadd.f32 %v7901, %v7781
        %v7934 = vadd.f32 %v7902, %v7784
        %v7935 = vadd.f32 %v7903, %v7789
        %v7936 = vadd.f32 %v7904, %v7792
        %v7937 = vadd.f32 %v7905, %v7797
        %v7938 = vadd.f32 %v7906, %v7800
        %v7939 = vadd.f32 %v7907, %v7805
        %v7940 = vadd.f32 %v7908, %v7808
        %v7941 = vadd.f32 %v7909, %v7813
        %v7942 = vadd.f32 %v7910, %v7816
        %v7943 = vadd.f32 %v7911, %v7821
        %v7944 = vadd.f32 %v7912, %v7824
        %v7945 = vadd.f32 %v7913, %v7829
        %v7946 = vadd.f32 %v7914, %v7832
        %v7947 = vadd.f32 %v7915, %v7837
        %v7948 = vadd.f32 %v7916, %v7840
        %v7949 = vadd.f32 %v7917, %v7845
        %v7950 = vadd.f32 %v7918, %v7848
        %v7951 = vadd.f32 %v7919, %v7853
        %v7952 = vadd.f32 %v7920, %v7856
        %v7953 = vadd.f32 %v7921, %v7861
        %v7954 = vadd.f32 %v7922, %v7864
        %v7955 = vadd.f32 %v7923, %v7869
        %v7956 = vadd.f32 %v7924, %v7872
        %v7957 = vadd.f32 %v7925, %v7877
        %v7958 = vadd.f32 %v7926, %v7880
        %v7959 = vadd.f32 %v7927, %v7885
        %v7960 = vadd.f32 %v7928, %v7888
        %v7961 = vadd.f32 %v7929, %v7893
        %v7962 = vadd.f32 %v7930, %v7896
        %7963 = vst [vmem:[#allocation4] sm:$0xff] %v7931
        %7964 = vst [vmem:[#allocation4 + $0x8] sm:$0xff] %v7932
        %7965 = vst [vmem:[#allocation4 + $0x10] sm:$0xff] %v7933
        %7966 = vst [vmem:[#allocation4 + $0x18] sm:$0xff] %v7934
        %7967 = vst [vmem:[#allocation4 + $0x20] sm:$0xff] %v7935
        %7968 = vst [vmem:[#allocation4 + $0x28] sm:$0xff] %v7936
        %7969 = vst [vmem:[#allocation4 + $0x30] sm:$0xff] %v7937
        %7970 = vst [vmem:[#allocation4 + $0x38] sm:$0xff] %v7938
        %7971 = vst [vmem:[#allocation4 + $0x40] sm:$0xff] %v7939
        %7972 = vst [vmem:[#allocation4 + $0x48] sm:$0xff] %v7940
        %7973 = vst [vmem:[#allocation4 + $0x50] sm:$0xff] %v7941
        %7974 = vst [vmem:[#allocation4 + $0x58] sm:$0xff] %v7942
        %7975 = vst [vmem:[#allocation4 + $0x60] sm:$0xff] %v7943
        %7976 = vst [vmem:[#allocation4 + $0x68] sm:$0xff] %v7944
        %7977 = vst [vmem:[#allocation4 + $0x70] sm:$0xff] %v7945
        %7978 = vst [vmem:[#allocation4 + $0x78] sm:$0xff] %v7946
        %7979 = vst [vmem:[#allocation4 + $0x80] sm:$0xff] %v7947
        %7980 = vst [vmem:[#allocation4 + $0x88] sm:$0xff] %v7948
        %7981 = vst [vmem:[#allocation4 + $0x90] sm:$0xff] %v7949
        %7982 = vst [vmem:[#allocation4 + $0x98] sm:$0xff] %v7950
        %7983 = vst [vmem:[#allocation4 + $0xa0] sm:$0xff] %v7951
        %7984 = vst [vmem:[#allocation4 + $0xa8] sm:$0xff] %v7952
        %7985 = vst [vmem:[#allocation4 + $0xb0] sm:$0xff] %v7953
        %7986 = vst [vmem:[#allocation4 + $0xb8] sm:$0xff] %v7954
        %7987 = vst [vmem:[#allocation4 + $0xc0] sm:$0xff] %v7955
        %7988 = vst [vmem:[#allocation4 + $0xc8] sm:$0xff] %v7956
        %7989 = vst [vmem:[#allocation4 + $0xd0] sm:$0xff] %v7957
        %7990 = vst [vmem:[#allocation4 + $0xd8] sm:$0xff] %v7958
        %7991 = vst [vmem:[#allocation4 + $0xe0] sm:$0xff] %v7959
        %7992 = vst [vmem:[#allocation4 + $0xe8] sm:$0xff] %v7960
        %7993 = vst [vmem:[#allocation4 + $0xf0] sm:$0xff] %v7961
        %7994 = vst [vmem:[#allocation4 + $0xf8] sm:$0xff] %v7962
        %s7995 = scalar_lea.vmem [#allocation3], 24
        %v7996 = vld [vmem:[%s7995] sm:$0xf]
        %v7997 = vld [vmem:[%s7995 + $0x4] sm:$0xf]
        %v7998 = vld [vmem:[%s7995 + $0x8] sm:$0x1]
        %v7999 = vld [vmem:[%s7995 + $0xc] sm:$0xf]
        %v8000 = vld [vmem:[%s7995 + $0x10] sm:$0xf]
        %v8001 = vld [vmem:[%s7995 + $0x14] sm:$0x1]
        %v8002 = vld [vmem:[%s7995 + $0x18] sm:$0xf]
        %v8003 = vld [vmem:[%s7995 + $0x1c] sm:$0xf]
        %v8004 = vld [vmem:[%s7995 + $0x20] sm:$0x1]
        %v8005 = vld [vmem:[%s7995 + $0x24] sm:$0xf]
        %v8006 = vld [vmem:[%s7995 + $0x28] sm:$0xf]
        %v8007 = vld [vmem:[%s7995 + $0x2c] sm:$0x1]
        %v8008 = vld [vmem:[%s7995 + $0x30] sm:$0xf]
        %v8009 = vld [vmem:[%s7995 + $0x34] sm:$0xf]
        %v8010 = vld [vmem:[%s7995 + $0x38] sm:$0x1]
        %v8011 = vld [vmem:[%s7995 + $0x3c] sm:$0xf]
        %v8012 = vld [vmem:[%s7995 + $0x40] sm:$0xf]
        %v8013 = vld [vmem:[%s7995 + $0x44] sm:$0x1]
        %v8014 = vld [vmem:[%s7995 + $0x48] sm:$0xf]
        %v8015 = vld [vmem:[%s7995 + $0x4c] sm:$0xf]
        %v8016 = vld [vmem:[%s7995 + $0x50] sm:$0x1]
        %v8017 = vld [vmem:[%s7995 + $0x54] sm:$0xf]
        %v8018 = vld [vmem:[%s7995 + $0x58] sm:$0xf]
        %v8019 = vld [vmem:[%s7995 + $0x5c] sm:$0x1]
        %v8020 = vld [vmem:[%s7995 + $0x60] sm:$0xf]
        %v8021 = vld [vmem:[%s7995 + $0x64] sm:$0xf]
        %v8022 = vld [vmem:[%s7995 + $0x68] sm:$0x1]
        %v8023 = vld [vmem:[%s7995 + $0x6c] sm:$0xf]
        %v8024 = vld [vmem:[%s7995 + $0x70] sm:$0xf]
        %v8025 = vld [vmem:[%s7995 + $0x74] sm:$0x1]
        %v8026 = vld [vmem:[%s7995 + $0x78] sm:$0xf]
        %v8027 = vld [vmem:[%s7995 + $0x7c] sm:$0xf]
        %v8028 = vld [vmem:[%s7995 + $0x80] sm:$0x1]
        %v8029 = vld [vmem:[%s7995 + $0x84] sm:$0xf]
        %v8030 = vld [vmem:[%s7995 + $0x88] sm:$0xf]
        %v8031 = vld [vmem:[%s7995 + $0x8c] sm:$0x1]
        %v8032 = vld [vmem:[%s7995 + $0x90] sm:$0xf]
        %v8033 = vld [vmem:[%s7995 + $0x94] sm:$0xf]
        %v8034 = vld [vmem:[%s7995 + $0x98] sm:$0x1]
        %v8035 = vld [vmem:[%s7995 + $0x9c] sm:$0xf]
        %v8036 = vld [vmem:[%s7995 + $0xa0] sm:$0xf]
        %v8037 = vld [vmem:[%s7995 + $0xa4] sm:$0x1]
        %v8038 = vld [vmem:[%s7995 + $0xa8] sm:$0xf]
        %v8039 = vld [vmem:[%s7995 + $0xac] sm:$0xf]
        %v8040 = vld [vmem:[%s7995 + $0xb0] sm:$0x1]
        %v8041 = vld [vmem:[%s7995 + $0xb4] sm:$0xf]
        %v8042 = vld [vmem:[%s7995 + $0xb8] sm:$0xf]
        %v8043 = vld [vmem:[%s7995 + $0xbc] sm:$0x1]
        %v8076 = vunpack.c.l.b16 %v7996
        %v8077 = vunpack.c.l.b16 %v7997
        %v8078 = vunpack.c.l.b16 %v7999
        %v8079 = vunpack.c.l.b16 %v8000
        %v8080 = vunpack.c.l.b16 %v8002
        %v8081 = vunpack.c.l.b16 %v8003
        %v8082 = vunpack.c.l.b16 %v8005
        %v8083 = vunpack.c.l.b16 %v8006
        %v8084 = vunpack.c.l.b16 %v8008
        %v8085 = vunpack.c.l.b16 %v8009
        %v8086 = vunpack.c.l.b16 %v8011
        %v8087 = vunpack.c.l.b16 %v8012
        %v8088 = vunpack.c.l.b16 %v8014
        %v8089 = vunpack.c.l.b16 %v8015
        %v8090 = vunpack.c.l.b16 %v8017
        %v8091 = vunpack.c.l.b16 %v8018
        %v8092 = vunpack.c.l.b16 %v8020
        %v8093 = vunpack.c.l.b16 %v8021
        %v8094 = vunpack.c.l.b16 %v8023
        %v8095 = vunpack.c.l.b16 %v8024
        %v8096 = vunpack.c.l.b16 %v8026
        %v8097 = vunpack.c.l.b16 %v8027
        %v8098 = vunpack.c.l.b16 %v8029
        %v8099 = vunpack.c.l.b16 %v8030
        %v8100 = vunpack.c.l.b16 %v8032
        %v8101 = vunpack.c.l.b16 %v8033
        %v8102 = vunpack.c.l.b16 %v8035
        %v8103 = vunpack.c.l.b16 %v8036
        %v8104 = vunpack.c.l.b16 %v8038
        %v8105 = vunpack.c.l.b16 %v8039
        %v8106 = vunpack.c.l.b16 %v8041
        %v8107 = vunpack.c.l.b16 %v8042
        %v8108 = vpack.c.b16 %v8077, %v8076
        %v8109 = vpack.c.b16 %v8079, %v8078
        %v8110 = vpack.c.b16 %v8081, %v8080
        %v8111 = vpack.c.b16 %v8083, %v8082
        %v8112 = vpack.c.b16 %v8085, %v8084
        %v8113 = vpack.c.b16 %v8087, %v8086
        %v8114 = vpack.c.b16 %v8089, %v8088
        %v8115 = vpack.c.b16 %v8091, %v8090
        %v8116 = vpack.c.b16 %v8093, %v8092
        %v8117 = vpack.c.b16 %v8095, %v8094
        %v8118 = vpack.c.b16 %v8097, %v8096
        %v8119 = vpack.c.b16 %v8099, %v8098
        %v8120 = vpack.c.b16 %v8101, %v8100
        %v8121 = vpack.c.b16 %v8103, %v8102
        %v8122 = vpack.c.b16 %v8105, %v8104
        %v8123 = vpack.c.b16 %v8107, %v8106
        %v8156 = vunpack.c.l.b16 %v7998
        %v8157 = vunpack.c.l.b16 %v8001
        %v8158 = vunpack.c.l.b16 %v8004
        %v8159 = vunpack.c.l.b16 %v8007
        %v8160 = vunpack.c.l.b16 %v8010
        %v8161 = vunpack.c.l.b16 %v8013
        %v8162 = vunpack.c.l.b16 %v8016
        %v8163 = vunpack.c.l.b16 %v8019
        %v8164 = vunpack.c.l.b16 %v8022
        %v8165 = vunpack.c.l.b16 %v8025
        %v8166 = vunpack.c.l.b16 %v8028
        %v8167 = vunpack.c.l.b16 %v8031
        %v8168 = vunpack.c.l.b16 %v8034
        %v8169 = vunpack.c.l.b16 %v8037
        %v8170 = vunpack.c.l.b16 %v8040
        %v8171 = vunpack.c.l.b16 %v8043
        %v8172 = vpack.c.b16 %v8156, %v8156
        %v8173 = vpack.c.b16 %v8157, %v8157
        %v8174 = vpack.c.b16 %v8158, %v8158
        %v8175 = vpack.c.b16 %v8159, %v8159
        %v8176 = vpack.c.b16 %v8160, %v8160
        %v8177 = vpack.c.b16 %v8161, %v8161
        %v8178 = vpack.c.b16 %v8162, %v8162
        %v8179 = vpack.c.b16 %v8163, %v8163
        %v8180 = vpack.c.b16 %v8164, %v8164
        %v8181 = vpack.c.b16 %v8165, %v8165
        %v8182 = vpack.c.b16 %v8166, %v8166
        %v8183 = vpack.c.b16 %v8167, %v8167
        %v8184 = vpack.c.b16 %v8168, %v8168
        %v8185 = vpack.c.b16 %v8169, %v8169
        %v8186 = vpack.c.b16 %v8170, %v8170
        %v8187 = vpack.c.b16 %v8171, %v8171
        %v8189 = vshrl.u32 %v8108, 16
        %v8191 = vshll.u32 %v8108, 16
        %v8193 = vrot.slane %v8191, 1
        %v8194 = vor.u32 %v8189, %v8193
        %v8196 = vshll.u32 %v8172, 16
        %v8198 = vrot.slane %v8196, 1
        %v8199 = vsel %vm1899, %v8194, %v8198
        %v8201 = vshrl.u32 %v8109, 16
        %v8203 = vshll.u32 %v8109, 16
        %v8205 = vrot.slane %v8203, 1
        %v8206 = vor.u32 %v8201, %v8205
        %v8208 = vshll.u32 %v8173, 16
        %v8210 = vrot.slane %v8208, 1
        %v8211 = vsel %vm1899, %v8206, %v8210
        %v8213 = vshrl.u32 %v8110, 16
        %v8215 = vshll.u32 %v8110, 16
        %v8217 = vrot.slane %v8215, 1
        %v8218 = vor.u32 %v8213, %v8217
        %v8220 = vshll.u32 %v8174, 16
        %v8222 = vrot.slane %v8220, 1
        %v8223 = vsel %vm1899, %v8218, %v8222
        %v8225 = vshrl.u32 %v8111, 16
        %v8227 = vshll.u32 %v8111, 16
        %v8229 = vrot.slane %v8227, 1
        %v8230 = vor.u32 %v8225, %v8229
        %v8232 = vshll.u32 %v8175, 16
        %v8234 = vrot.slane %v8232, 1
        %v8235 = vsel %vm1899, %v8230, %v8234
        %v8237 = vshrl.u32 %v8112, 16
        %v8239 = vshll.u32 %v8112, 16
        %v8241 = vrot.slane %v8239, 1
        %v8242 = vor.u32 %v8237, %v8241
        %v8244 = vshll.u32 %v8176, 16
        %v8246 = vrot.slane %v8244, 1
        %v8247 = vsel %vm1899, %v8242, %v8246
        %v8249 = vshrl.u32 %v8113, 16
        %v8251 = vshll.u32 %v8113, 16
        %v8253 = vrot.slane %v8251, 1
        %v8254 = vor.u32 %v8249, %v8253
        %v8256 = vshll.u32 %v8177, 16
        %v8258 = vrot.slane %v8256, 1
        %v8259 = vsel %vm1899, %v8254, %v8258
        %v8261 = vshrl.u32 %v8114, 16
        %v8263 = vshll.u32 %v8114, 16
        %v8265 = vrot.slane %v8263, 1
        %v8266 = vor.u32 %v8261, %v8265
        %v8268 = vshll.u32 %v8178, 16
        %v8270 = vrot.slane %v8268, 1
        %v8271 = vsel %vm1899, %v8266, %v8270
        %v8273 = vshrl.u32 %v8115, 16
        %v8275 = vshll.u32 %v8115, 16
        %v8277 = vrot.slane %v8275, 1
        %v8278 = vor.u32 %v8273, %v8277
        %v8280 = vshll.u32 %v8179, 16
        %v8282 = vrot.slane %v8280, 1
        %v8283 = vsel %vm1899, %v8278, %v8282
        %v8285 = vshrl.u32 %v8116, 16
        %v8287 = vshll.u32 %v8116, 16
        %v8289 = vrot.slane %v8287, 1
        %v8290 = vor.u32 %v8285, %v8289
        %v8292 = vshll.u32 %v8180, 16
        %v8294 = vrot.slane %v8292, 1
        %v8295 = vsel %vm1899, %v8290, %v8294
        %v8297 = vshrl.u32 %v8117, 16
        %v8299 = vshll.u32 %v8117, 16
        %v8301 = vrot.slane %v8299, 1
        %v8302 = vor.u32 %v8297, %v8301
        %v8304 = vshll.u32 %v8181, 16
        %v8306 = vrot.slane %v8304, 1
        %v8307 = vsel %vm1899, %v8302, %v8306
        %v8309 = vshrl.u32 %v8118, 16
        %v8311 = vshll.u32 %v8118, 16
        %v8313 = vrot.slane %v8311, 1
        %v8314 = vor.u32 %v8309, %v8313
        %v8316 = vshll.u32 %v8182, 16
        %v8318 = vrot.slane %v8316, 1
        %v8319 = vsel %vm1899, %v8314, %v8318
        %v8321 = vshrl.u32 %v8119, 16
        %v8323 = vshll.u32 %v8119, 16
        %v8325 = vrot.slane %v8323, 1
        %v8326 = vor.u32 %v8321, %v8325
        %v8328 = vshll.u32 %v8183, 16
        %v8330 = vrot.slane %v8328, 1
        %v8331 = vsel %vm1899, %v8326, %v8330
        %v8333 = vshrl.u32 %v8120, 16
        %v8335 = vshll.u32 %v8120, 16
        %v8337 = vrot.slane %v8335, 1
        %v8338 = vor.u32 %v8333, %v8337
        %v8340 = vshll.u32 %v8184, 16
        %v8342 = vrot.slane %v8340, 1
        %v8343 = vsel %vm1899, %v8338, %v8342
        %v8345 = vshrl.u32 %v8121, 16
        %v8347 = vshll.u32 %v8121, 16
        %v8349 = vrot.slane %v8347, 1
        %v8350 = vor.u32 %v8345, %v8349
        %v8352 = vshll.u32 %v8185, 16
        %v8354 = vrot.slane %v8352, 1
        %v8355 = vsel %vm1899, %v8350, %v8354
        %v8357 = vshrl.u32 %v8122, 16
        %v8359 = vshll.u32 %v8122, 16
        %v8361 = vrot.slane %v8359, 1
        %v8362 = vor.u32 %v8357, %v8361
        %v8364 = vshll.u32 %v8186, 16
        %v8366 = vrot.slane %v8364, 1
        %v8367 = vsel %vm1899, %v8362, %v8366
        %v8369 = vshrl.u32 %v8123, 16
        %v8371 = vshll.u32 %v8123, 16
        %v8373 = vrot.slane %v8371, 1
        %v8374 = vor.u32 %v8369, %v8373
        %v8376 = vshll.u32 %v8187, 16
        %v8378 = vrot.slane %v8376, 1
        %v8379 = vsel %vm1899, %v8374, %v8378
        %v8396 = vrot.slane %v8108, 1
        %v8397 = vrot.slane %v8172, 1
        %v8398 = vsel %vm2124, %v8396, %v8397
        %v8399 = vrot.slane %v8109, 1
        %v8400 = vrot.slane %v8173, 1
        %v8401 = vsel %vm2124, %v8399, %v8400
        %v8402 = vrot.slane %v8110, 1
        %v8403 = vrot.slane %v8174, 1
        %v8404 = vsel %vm2124, %v8402, %v8403
        %v8405 = vrot.slane %v8111, 1
        %v8406 = vrot.slane %v8175, 1
        %v8407 = vsel %vm2124, %v8405, %v8406
        %v8408 = vrot.slane %v8112, 1
        %v8409 = vrot.slane %v8176, 1
        %v8410 = vsel %vm2124, %v8408, %v8409
        %v8411 = vrot.slane %v8113, 1
        %v8412 = vrot.slane %v8177, 1
        %v8413 = vsel %vm2124, %v8411, %v8412
        %v8414 = vrot.slane %v8114, 1
        %v8415 = vrot.slane %v8178, 1
        %v8416 = vsel %vm2124, %v8414, %v8415
        %v8417 = vrot.slane %v8115, 1
        %v8418 = vrot.slane %v8179, 1
        %v8419 = vsel %vm2124, %v8417, %v8418
        %v8420 = vrot.slane %v8116, 1
        %v8421 = vrot.slane %v8180, 1
        %v8422 = vsel %vm2124, %v8420, %v8421
        %v8423 = vrot.slane %v8117, 1
        %v8424 = vrot.slane %v8181, 1
        %v8425 = vsel %vm2124, %v8423, %v8424
        %v8426 = vrot.slane %v8118, 1
        %v8427 = vrot.slane %v8182, 1
        %v8428 = vsel %vm2124, %v8426, %v8427
        %v8429 = vrot.slane %v8119, 1
        %v8430 = vrot.slane %v8183, 1
        %v8431 = vsel %vm2124, %v8429, %v8430
        %v8432 = vrot.slane %v8120, 1
        %v8433 = vrot.slane %v8184, 1
        %v8434 = vsel %vm2124, %v8432, %v8433
        %v8435 = vrot.slane %v8121, 1
        %v8436 = vrot.slane %v8185, 1
        %v8437 = vsel %vm2124, %v8435, %v8436
        %v8438 = vrot.slane %v8122, 1
        %v8439 = vrot.slane %v8186, 1
        %v8440 = vsel %vm2124, %v8438, %v8439
        %v8441 = vrot.slane %v8123, 1
        %v8442 = vrot.slane %v8187, 1
        %v8443 = vsel %vm2124, %v8441, %v8442
        %s8460 = scalar_lea.vmem %s9, 384
        %v8461 = vld [vmem:[%s8460] sm:$0xf]
        %v8462 = vld [vmem:[%s8460 + $0x4] sm:$0xf]
        %v8463 = vld [vmem:[%s8460 + $0x8] sm:$0xf]
        %v8464 = vld [vmem:[%s8460 + $0xc] sm:$0xf]
        %v8465 = vld [vmem:[%s8460 + $0x10] sm:$0xf]
        %v8466 = vld [vmem:[%s8460 + $0x14] sm:$0xf]
        %v8467 = vld [vmem:[%s8460 + $0x18] sm:$0xf]
        %v8468 = vld [vmem:[%s8460 + $0x1c] sm:$0xf]
        %v8469 = vld [vmem:[%s8460 + $0x20] sm:$0xf]
        %v8470 = vld [vmem:[%s8460 + $0x24] sm:$0xf]
        %v8471 = vld [vmem:[%s8460 + $0x28] sm:$0xf]
        %v8472 = vld [vmem:[%s8460 + $0x2c] sm:$0xf]
        %v8473 = vld [vmem:[%s8460 + $0x30] sm:$0xf]
        %v8474 = vld [vmem:[%s8460 + $0x34] sm:$0xf]
        %v8475 = vld [vmem:[%s8460 + $0x38] sm:$0xf]
        %v8476 = vld [vmem:[%s8460 + $0x3c] sm:$0xf]
        %v8477 = vld [vmem:[%s8460 + $0x40] sm:$0xf]
        %v8478 = vld [vmem:[%s8460 + $0x44] sm:$0xf]
        %v8479 = vld [vmem:[%s8460 + $0x48] sm:$0xf]
        %v8480 = vld [vmem:[%s8460 + $0x4c] sm:$0xf]
        %v8481 = vld [vmem:[%s8460 + $0x50] sm:$0xf]
        %v8482 = vld [vmem:[%s8460 + $0x54] sm:$0xf]
        %v8483 = vld [vmem:[%s8460 + $0x58] sm:$0xf]
        %v8484 = vld [vmem:[%s8460 + $0x5c] sm:$0xf]
        %v8485 = vld [vmem:[%s8460 + $0x60] sm:$0xf]
        %v8486 = vld [vmem:[%s8460 + $0x64] sm:$0xf]
        %v8487 = vld [vmem:[%s8460 + $0x68] sm:$0xf]
        %v8488 = vld [vmem:[%s8460 + $0x6c] sm:$0xf]
        %v8489 = vld [vmem:[%s8460 + $0x70] sm:$0xf]
        %v8490 = vld [vmem:[%s8460 + $0x74] sm:$0xf]
        %v8491 = vld [vmem:[%s8460 + $0x78] sm:$0xf]
        %v8492 = vld [vmem:[%s8460 + $0x7c] sm:$0xf]
        %v8493 = vld [vmem:[%s8460 + $0x80] sm:$0xf]
        %v8494 = vld [vmem:[%s8460 + $0x84] sm:$0xf]
        %v8495 = vld [vmem:[%s8460 + $0x88] sm:$0xf]
        %v8496 = vld [vmem:[%s8460 + $0x8c] sm:$0xf]
        %v8497 = vld [vmem:[%s8460 + $0x90] sm:$0xf]
        %v8498 = vld [vmem:[%s8460 + $0x94] sm:$0xf]
        %v8499 = vld [vmem:[%s8460 + $0x98] sm:$0xf]
        %v8500 = vld [vmem:[%s8460 + $0x9c] sm:$0xf]
        %v8501 = vld [vmem:[%s8460 + $0xa0] sm:$0xf]
        %v8502 = vld [vmem:[%s8460 + $0xa4] sm:$0xf]
        %v8503 = vld [vmem:[%s8460 + $0xa8] sm:$0xf]
        %v8504 = vld [vmem:[%s8460 + $0xac] sm:$0xf]
        %v8505 = vld [vmem:[%s8460 + $0xb0] sm:$0xf]
        %v8506 = vld [vmem:[%s8460 + $0xb4] sm:$0xf]
        %v8507 = vld [vmem:[%s8460 + $0xb8] sm:$0xf]
        %v8508 = vld [vmem:[%s8460 + $0xbc] sm:$0xf]
        %v8557 = vunpack.c.l.b16 %v8461
        %v8558 = vunpack.c.l.b16 %v8462
        %v8559 = vunpack.c.l.b16 %v8463
        %v8560 = vunpack.c.l.b16 %v8464
        %v8561 = vunpack.c.l.b16 %v8465
        %v8562 = vunpack.c.l.b16 %v8466
        %v8563 = vunpack.c.l.b16 %v8467
        %v8564 = vunpack.c.l.b16 %v8468
        %v8565 = vunpack.c.l.b16 %v8469
        %v8566 = vunpack.c.l.b16 %v8470
        %v8567 = vunpack.c.l.b16 %v8471
        %v8568 = vunpack.c.l.b16 %v8472
        %v8569 = vunpack.c.l.b16 %v8473
        %v8570 = vunpack.c.l.b16 %v8474
        %v8571 = vunpack.c.l.b16 %v8475
        %v8572 = vunpack.c.l.b16 %v8476
        %v8573 = vunpack.c.l.b16 %v8477
        %v8574 = vunpack.c.l.b16 %v8478
        %v8575 = vunpack.c.l.b16 %v8479
        %v8576 = vunpack.c.l.b16 %v8480
        %v8577 = vunpack.c.l.b16 %v8481
        %v8578 = vunpack.c.l.b16 %v8482
        %v8579 = vunpack.c.l.b16 %v8483
        %v8580 = vunpack.c.l.b16 %v8484
        %v8581 = vunpack.c.l.b16 %v8485
        %v8582 = vunpack.c.l.b16 %v8486
        %v8583 = vunpack.c.l.b16 %v8487
        %v8584 = vunpack.c.l.b16 %v8488
        %v8585 = vunpack.c.l.b16 %v8489
        %v8586 = vunpack.c.l.b16 %v8490
        %v8587 = vunpack.c.l.b16 %v8491
        %v8588 = vunpack.c.l.b16 %v8492
        %v8589 = vunpack.c.l.b16 %v8493
        %v8590 = vunpack.c.l.b16 %v8494
        %v8591 = vunpack.c.l.b16 %v8495
        %v8592 = vunpack.c.l.b16 %v8496
        %v8593 = vunpack.c.l.b16 %v8497
        %v8594 = vunpack.c.l.b16 %v8498
        %v8595 = vunpack.c.l.b16 %v8499
        %v8596 = vunpack.c.l.b16 %v8500
        %v8597 = vunpack.c.l.b16 %v8501
        %v8598 = vunpack.c.l.b16 %v8502
        %v8599 = vunpack.c.l.b16 %v8503
        %v8600 = vunpack.c.l.b16 %v8504
        %v8601 = vunpack.c.l.b16 %v8505
        %v8602 = vunpack.c.l.b16 %v8506
        %v8603 = vunpack.c.l.b16 %v8507
        %v8604 = vunpack.c.l.b16 %v8508
        %v8605 = vpack.c.b16 %v8558, %v8557
        %v8606 = vpack.c.b16 %v8560, %v8559
        %v8607 = vpack.c.b16 %v8562, %v8561
        %v8608 = vpack.c.b16 %v8564, %v8563
        %v8609 = vpack.c.b16 %v8566, %v8565
        %v8610 = vpack.c.b16 %v8568, %v8567
        %v8611 = vpack.c.b16 %v8570, %v8569
        %v8612 = vpack.c.b16 %v8572, %v8571
        %v8613 = vpack.c.b16 %v8574, %v8573
        %v8614 = vpack.c.b16 %v8576, %v8575
        %v8615 = vpack.c.b16 %v8578, %v8577
        %v8616 = vpack.c.b16 %v8580, %v8579
        %v8617 = vpack.c.b16 %v8582, %v8581
        %v8618 = vpack.c.b16 %v8584, %v8583
        %v8619 = vpack.c.b16 %v8586, %v8585
        %v8620 = vpack.c.b16 %v8588, %v8587
        %v8621 = vpack.c.b16 %v8590, %v8589
        %v8622 = vpack.c.b16 %v8592, %v8591
        %v8623 = vpack.c.b16 %v8594, %v8593
        %v8624 = vpack.c.b16 %v8596, %v8595
        %v8625 = vpack.c.b16 %v8598, %v8597
        %v8626 = vpack.c.b16 %v8600, %v8599
        %v8627 = vpack.c.b16 %v8602, %v8601
        %v8628 = vpack.c.b16 %v8604, %v8603
        %8653 = vmatprep.subr.bf16.mxu0 0
        %8654 = vmatpush1.bf16.msra.mxu0 %v8605
        %8655 = vmatprep.subr.bf16.mxu0 0
        %8656 = vmatpush1.bf16.msra.mxu0 %v8606
        %8657 = vmatprep.subr.bf16.mxu0 0
        %8658 = vmatpush1.bf16.msra.mxu0 %v8607
        %8659 = vmatprep.subr.bf16.mxu0 0
        %8660 = vmatpush1.bf16.msra.mxu0 %v8608
        %8661 = vmatprep.subr.bf16.mxu0 0
        %8662 = vmatpush1.bf16.msra.mxu0 %v8609
        %8663 = vmatprep.subr.bf16.mxu0 0
        %8664 = vmatpush1.bf16.msra.mxu0 %v8610
        %8665 = vmatprep.subr.bf16.mxu0 0
        %8666 = vmatpush1.bf16.msra.mxu0 %v8611
        %8667 = vmatprep.subr.bf16.mxu0 0
        %8668 = vmatpush1.bf16.msra.mxu0 %v8612
        %8669 = vmatprep.subr.bf16.mxu0 0
        %8670 = vmatpush1.bf16.msra.mxu0 %v8613
        %8671 = vmatprep.subr.bf16.mxu0 0
        %8672 = vmatpush1.bf16.msra.mxu0 %v8614
        %8673 = vmatprep.subr.bf16.mxu0 0
        %8674 = vmatpush1.bf16.msra.mxu0 %v8615
        %8675 = vmatprep.subr.bf16.mxu0 0
        %8676 = vmatpush1.bf16.msra.mxu0 %v8616
        %8677 = vmatprep.subr.bf16.mxu0 0
        %8678 = vmatpush1.bf16.msra.mxu0 %v8617
        %8679 = vmatprep.subr.bf16.mxu0 0
        %8680 = vmatpush1.bf16.msra.mxu0 %v8618
        %8681 = vmatprep.subr.bf16.mxu0 0
        %8682 = vmatpush1.bf16.msra.mxu0 %v8619
        %8683 = vmatprep.subr.bf16.mxu0 0
        %8684 = vmatpush1.bf16.msra.mxu0 %v8620
        %8685 = vmatprep.mubr.bf16.mxu0 %v8199
        %8686 = vmatmul.mubr.bf16.gmra.mrb[0].mxu0 %v8108
        %v8687 = vpop.f32.mrb[0].mxu0
        %v8688 = vadd.f32 0.0, %v8687
        %v8689 = vpop.f32.mrb[0].mxu0
        %v8690 = vpop.f32.mrb[0].mxu0
        %v8691 = vadd.f32 0.0, %v8690
        %v8692 = vpop.f32.mrb[0].mxu0
        %8693 = vmatprep.mubr.bf16.mxu0 %v8211
        %8694 = vmatmul.mubr.bf16.gmra.mrb[0].mxu0 %v8109
        %v8695 = vpop.f32.mrb[0].mxu0
        %v8696 = vadd.f32 0.0, %v8695
        %v8697 = vpop.f32.mrb[0].mxu0
        %v8698 = vpop.f32.mrb[0].mxu0
        %v8699 = vadd.f32 0.0, %v8698
        %v8700 = vpop.f32.mrb[0].mxu0
        %8701 = vmatprep.mubr.bf16.mxu0 %v8223
        %8702 = vmatmul.mubr.bf16.gmra.mrb[0].mxu0 %v8110
        %v8703 = vpop.f32.mrb[0].mxu0
        %v8704 = vadd.f32 0.0, %v8703
        %v8705 = vpop.f32.mrb[0].mxu0
        %v8706 = vpop.f32.mrb[0].mxu0
        %v8707 = vadd.f32 0.0, %v8706
        %v8708 = vpop.f32.mrb[0].mxu0
        %8709 = vmatprep.mubr.bf16.mxu0 %v8235
        %8710 = vmatmul.mubr.bf16.gmra.mrb[0].mxu0 %v8111
        %v8711 = vpop.f32.mrb[0].mxu0
        %v8712 = vadd.f32 0.0, %v8711
        %v8713 = vpop.f32.mrb[0].mxu0
        %v8714 = vpop.f32.mrb[0].mxu0
        %v8715 = vadd.f32 0.0, %v8714
        %v8716 = vpop.f32.mrb[0].mxu0
        %8717 = vmatprep.mubr.bf16.mxu0 %v8247
        %8718 = vmatmul.mubr.bf16.gmra.mrb[0].mxu0 %v8112
        %v8719 = vpop.f32.mrb[0].mxu0
        %v8720 = vadd.f32 0.0, %v8719
        %v8721 = vpop.f32.mrb[0].mxu0
        %v8722 = vpop.f32.mrb[0].mxu0
        %v8723 = vadd.f32 0.0, %v8722
        %v8724 = vpop.f32.mrb[0].mxu0
        %8725 = vmatprep.mubr.bf16.mxu0 %v8259
        %8726 = vmatmul.mubr.bf16.gmra.mrb[0].mxu0 %v8113
        %v8727 = vpop.f32.mrb[0].mxu0
        %v8728 = vadd.f32 0.0, %v8727
        %v8729 = vpop.f32.mrb[0].mxu0
        %v8730 = vpop.f32.mrb[0].mxu0
        %v8731 = vadd.f32 0.0, %v8730
        %v8732 = vpop.f32.mrb[0].mxu0
        %8733 = vmatprep.mubr.bf16.mxu0 %v8271
        %8734 = vmatmul.mubr.bf16.gmra.mrb[0].mxu0 %v8114
        %v8735 = vpop.f32.mrb[0].mxu0
        %v8736 = vadd.f32 0.0, %v8735
        %v8737 = vpop.f32.mrb[0].mxu0
        %v8738 = vpop.f32.mrb[0].mxu0
        %v8739 = vadd.f32 0.0, %v8738
        %v8740 = vpop.f32.mrb[0].mxu0
        %8741 = vmatprep.mubr.bf16.mxu0 %v8283
        %8742 = vmatmul.mubr.bf16.gmra.mrb[0].mxu0 %v8115
        %v8743 = vpop.f32.mrb[0].mxu0
        %v8744 = vadd.f32 0.0, %v8743
        %v8745 = vpop.f32.mrb[0].mxu0
        %v8746 = vpop.f32.mrb[0].mxu0
        %v8747 = vadd.f32 0.0, %v8746
        %v8748 = vpop.f32.mrb[0].mxu0
        %8749 = vmatprep.mubr.bf16.mxu0 %v8295
        %8750 = vmatmul.mubr.bf16.gmra.mrb[0].mxu0 %v8116
        %v8751 = vpop.f32.mrb[0].mxu0
        %v8752 = vadd.f32 0.0, %v8751
        %v8753 = vpop.f32.mrb[0].mxu0
        %v8754 = vpop.f32.mrb[0].mxu0
        %v8755 = vadd.f32 0.0, %v8754
        %v8756 = vpop.f32.mrb[0].mxu0
        %8757 = vmatprep.mubr.bf16.mxu0 %v8307
        %8758 = vmatmul.mubr.bf16.gmra.mrb[0].mxu0 %v8117
        %v8759 = vpop.f32.mrb[0].mxu0
        %v8760 = vadd.f32 0.0, %v8759
        %v8761 = vpop.f32.mrb[0].mxu0
        %v8762 = vpop.f32.mrb[0].mxu0
        %v8763 = vadd.f32 0.0, %v8762
        %v8764 = vpop.f32.mrb[0].mxu0
        %8765 = vmatprep.mubr.bf16.mxu0 %v8319
        %8766 = vmatmul.mubr.bf16.gmra.mrb[0].mxu0 %v8118
        %v8767 = vpop.f32.mrb[0].mxu0
        %v8768 = vadd.f32 0.0, %v8767
        %v8769 = vpop.f32.mrb[0].mxu0
        %v8770 = vpop.f32.mrb[0].mxu0
        %v8771 = vadd.f32 0.0, %v8770
        %v8772 = vpop.f32.mrb[0].mxu0
        %8773 = vmatprep.mubr.bf16.mxu0 %v8331
        %8774 = vmatmul.mubr.bf16.gmra.mrb[0].mxu0 %v8119
        %v8775 = vpop.f32.mrb[0].mxu0
        %v8776 = vadd.f32 0.0, %v8775
        %v8777 = vpop.f32.mrb[0].mxu0
        %v8778 = vpop.f32.mrb[0].mxu0
        %v8779 = vadd.f32 0.0, %v8778
        %v8780 = vpop.f32.mrb[0].mxu0
        %8781 = vmatprep.mubr.bf16.mxu0 %v8343
        %8782 = vmatmul.mubr.bf16.gmra.mrb[0].mxu0 %v8120
        %v8783 = vpop.f32.mrb[0].mxu0
        %v8784 = vadd.f32 0.0, %v8783
        %v8785 = vpop.f32.mrb[0].mxu0
        %v8786 = vpop.f32.mrb[0].mxu0
        %v8787 = vadd.f32 0.0, %v8786
        %v8788 = vpop.f32.mrb[0].mxu0
        %8789 = vmatprep.mubr.bf16.mxu0 %v8355
        %8790 = vmatmul.mubr.bf16.gmra.mrb[0].mxu0 %v8121
        %v8791 = vpop.f32.mrb[0].mxu0
        %v8792 = vadd.f32 0.0, %v8791
        %v8793 = vpop.f32.mrb[0].mxu0
        %v8794 = vpop.f32.mrb[0].mxu0
        %v8795 = vadd.f32 0.0, %v8794
        %v8796 = vpop.f32.mrb[0].mxu0
        %8797 = vmatprep.mubr.bf16.mxu0 %v8367
        %8798 = vmatmul.mubr.bf16.gmra.mrb[0].mxu0 %v8122
        %v8799 = vpop.f32.mrb[0].mxu0
        %v8800 = vadd.f32 0.0, %v8799
        %v8801 = vpop.f32.mrb[0].mxu0
        %v8802 = vpop.f32.mrb[0].mxu0
        %v8803 = vadd.f32 0.0, %v8802
        %v8804 = vpop.f32.mrb[0].mxu0
        %8805 = vmatprep.mubr.bf16.mxu0 %v8379
        %8806 = vmatmul.mubr.bf16.gmra.mrb[0].mxu0 %v8123
        %v8807 = vpop.f32.mrb[0].mxu0
        %v8808 = vadd.f32 0.0, %v8807
        %v8809 = vpop.f32.mrb[0].mxu0
        %v8810 = vpop.f32.mrb[0].mxu0
        %v8811 = vadd.f32 0.0, %v8810
        %v8812 = vpop.f32.mrb[0].mxu0
        %8813 = vdwg.mxu0
        %8814 = vmatprep.subr.bf16.mxu0 0
        %8815 = vmatpush1.bf16.msra.mxu0 %v8621
        %8816 = vmatprep.subr.bf16.mxu0 0
        %8817 = vmatpush1.bf16.msra.mxu0 %v8622
        %8818 = vmatprep.subr.bf16.mxu0 0
        %8819 = vmatpush1.bf16.msra.mxu0 %v8623
        %8820 = vmatprep.subr.bf16.mxu0 0
        %8821 = vmatpush1.bf16.msra.mxu0 %v8624
        %8822 = vmatprep.subr.bf16.mxu0 0
        %8823 = vmatpush1.bf16.msra.mxu0 %v8625
        %8824 = vmatprep.subr.bf16.mxu0 0
        %8825 = vmatpush1.bf16.msra.mxu0 %v8626
        %8826 = vmatprep.subr.bf16.mxu0 0
        %8827 = vmatpush1.bf16.msra.mxu0 %v8627
        %8828 = vmatprep.subr.bf16.mxu0 0
        %8829 = vmatpush1.bf16.msra.mxu0 %v8628
        %8830 = vmatprep.subr.bf16.mxu0 0
        %8831 = vmatpush1.bf16.msra.mxu0 0
        %8832 = vmatprep.subr.bf16.mxu0 0
        %8833 = vmatpush1.bf16.msra.mxu0 0
        %8834 = vmatprep.subr.bf16.mxu0 0
        %8835 = vmatpush1.bf16.msra.mxu0 0
        %8836 = vmatprep.subr.bf16.mxu0 0
        %8837 = vmatpush1.bf16.msra.mxu0 0
        %8838 = vmatprep.subr.bf16.mxu0 0
        %8839 = vmatpush1.bf16.msra.mxu0 0
        %8840 = vmatprep.subr.bf16.mxu0 0
        %8841 = vmatpush1.bf16.msra.mxu0 0
        %8842 = vmatprep.subr.bf16.mxu0 0
        %8843 = vmatpush1.bf16.msra.mxu0 0
        %8844 = vmatprep.subr.bf16.mxu0 0
        %8845 = vmatpush1.bf16.msra.mxu0 0
        %8846 = vmatprep.mubr.bf16.mxu0 0
        %8847 = vmatmul.mubr.bf16.gmra.mrb[0].mxu0 %v8398
        %v8848 = vpop.f32.mrb[0].mxu0
        %v8849 = vadd.f32 %v8688, %v8848
        %v8850 = vpop.f32.mrb[0].mxu0
        %v8851 = vpop.f32.mrb[0].mxu0
        %v8852 = vadd.f32 %v8691, %v8851
        %v8853 = vpop.f32.mrb[0].mxu0
        %8854 = vmatprep.mubr.bf16.mxu0 0
        %8855 = vmatmul.mubr.bf16.gmra.mrb[0].mxu0 %v8401
        %v8856 = vpop.f32.mrb[0].mxu0
        %v8857 = vadd.f32 %v8696, %v8856
        %v8858 = vpop.f32.mrb[0].mxu0
        %v8859 = vpop.f32.mrb[0].mxu0
        %v8860 = vadd.f32 %v8699, %v8859
        %v8861 = vpop.f32.mrb[0].mxu0
        %8862 = vmatprep.mubr.bf16.mxu0 0
        %8863 = vmatmul.mubr.bf16.gmra.mrb[0].mxu0 %v8404
        %v8864 = vpop.f32.mrb[0].mxu0
        %v8865 = vadd.f32 %v8704, %v8864
        %v8866 = vpop.f32.mrb[0].mxu0
        %v8867 = vpop.f32.mrb[0].mxu0
        %v8868 = vadd.f32 %v8707, %v8867
        %v8869 = vpop.f32.mrb[0].mxu0
        %8870 = vmatprep.mubr.bf16.mxu0 0
        %8871 = vmatmul.mubr.bf16.gmra.mrb[0].mxu0 %v8407
        %v8872 = vpop.f32.mrb[0].mxu0
        %v8873 = vadd.f32 %v8712, %v8872
        %v8874 = vpop.f32.mrb[0].mxu0
        %v8875 = vpop.f32.mrb[0].mxu0
        %v8876 = vadd.f32 %v8715, %v8875
        %v8877 = vpop.f32.mrb[0].mxu0
        %8878 = vmatprep.mubr.bf16.mxu0 0
        %8879 = vmatmul.mubr.bf16.gmra.mrb[0].mxu0 %v8410
        %v8880 = vpop.f32.mrb[0].mxu0
        %v8881 = vadd.f32 %v8720, %v8880
        %v8882 = vpop.f32.mrb[0].mxu0
        %v8883 = vpop.f32.mrb[0].mxu0
        %v8884 = vadd.f32 %v8723, %v8883
        %v8885 = vpop.f32.mrb[0].mxu0
        %8886 = vmatprep.mubr.bf16.mxu0 0
        %8887 = vmatmul.mubr.bf16.gmra.mrb[0].mxu0 %v8413
        %v8888 = vpop.f32.mrb[0].mxu0
        %v8889 = vadd.f32 %v8728, %v8888
        %v8890 = vpop.f32.mrb[0].mxu0
        %v8891 = vpop.f32.mrb[0].mxu0
        %v8892 = vadd.f32 %v8731, %v8891
        %v8893 = vpop.f32.mrb[0].mxu0
        %8894 = vmatprep.mubr.bf16.mxu0 0
        %8895 = vmatmul.mubr.bf16.gmra.mrb[0].mxu0 %v8416
        %v8896 = vpop.f32.mrb[0].mxu0
        %v8897 = vadd.f32 %v8736, %v8896
        %v8898 = vpop.f32.mrb[0].mxu0
        %v8899 = vpop.f32.mrb[0].mxu0
        %v8900 = vadd.f32 %v8739, %v8899
        %v8901 = vpop.f32.mrb[0].mxu0
        %8902 = vmatprep.mubr.bf16.mxu0 0
        %8903 = vmatmul.mubr.bf16.gmra.mrb[0].mxu0 %v8419
        %v8904 = vpop.f32.mrb[0].mxu0
        %v8905 = vadd.f32 %v8744, %v8904
        %v8906 = vpop.f32.mrb[0].mxu0
        %v8907 = vpop.f32.mrb[0].mxu0
        %v8908 = vadd.f32 %v8747, %v8907
        %v8909 = vpop.f32.mrb[0].mxu0
        %8910 = vmatprep.mubr.bf16.mxu0 0
        %8911 = vmatmul.mubr.bf16.gmra.mrb[0].mxu0 %v8422
        %v8912 = vpop.f32.mrb[0].mxu0
        %v8913 = vadd.f32 %v8752, %v8912
        %v8914 = vpop.f32.mrb[0].mxu0
        %v8915 = vpop.f32.mrb[0].mxu0
        %v8916 = vadd.f32 %v8755, %v8915
        %v8917 = vpop.f32.mrb[0].mxu0
        %8918 = vmatprep.mubr.bf16.mxu0 0
        %8919 = vmatmul.mubr.bf16.gmra.mrb[0].mxu0 %v8425
        %v8920 = vpop.f32.mrb[0].mxu0
        %v8921 = vadd.f32 %v8760, %v8920
        %v8922 = vpop.f32.mrb[0].mxu0
        %v8923 = vpop.f32.mrb[0].mxu0
        %v8924 = vadd.f32 %v8763, %v8923
        %v8925 = vpop.f32.mrb[0].mxu0
        %8926 = vmatprep.mubr.bf16.mxu0 0
        %8927 = vmatmul.mubr.bf16.gmra.mrb[0].mxu0 %v8428
        %v8928 = vpop.f32.mrb[0].mxu0
        %v8929 = vadd.f32 %v8768, %v8928
        %v8930 = vpop.f32.mrb[0].mxu0
        %v8931 = vpop.f32.mrb[0].mxu0
        %v8932 = vadd.f32 %v8771, %v8931
        %v8933 = vpop.f32.mrb[0].mxu0
        %8934 = vmatprep.mubr.bf16.mxu0 0
        %8935 = vmatmul.mubr.bf16.gmra.mrb[0].mxu0 %v8431
        %v8936 = vpop.f32.mrb[0].mxu0
        %v8937 = vadd.f32 %v8776, %v8936
        %v8938 = vpop.f32.mrb[0].mxu0
        %v8939 = vpop.f32.mrb[0].mxu0
        %v8940 = vadd.f32 %v8779, %v8939
        %v8941 = vpop.f32.mrb[0].mxu0
        %8942 = vmatprep.mubr.bf16.mxu0 0
        %8943 = vmatmul.mubr.bf16.gmra.mrb[0].mxu0 %v8434
        %v8944 = vpop.f32.mrb[0].mxu0
        %v8945 = vadd.f32 %v8784, %v8944
        %v8946 = vpop.f32.mrb[0].mxu0
        %v8947 = vpop.f32.mrb[0].mxu0
        %v8948 = vadd.f32 %v8787, %v8947
        %v8949 = vpop.f32.mrb[0].mxu0
        %8950 = vmatprep.mubr.bf16.mxu0 0
        %8951 = vmatmul.mubr.bf16.gmra.mrb[0].mxu0 %v8437
        %v8952 = vpop.f32.mrb[0].mxu0
        %v8953 = vadd.f32 %v8792, %v8952
        %v8954 = vpop.f32.mrb[0].mxu0
        %v8955 = vpop.f32.mrb[0].mxu0
        %v8956 = vadd.f32 %v8795, %v8955
        %v8957 = vpop.f32.mrb[0].mxu0
        %8958 = vmatprep.mubr.bf16.mxu0 0
        %8959 = vmatmul.mubr.bf16.gmra.mrb[0].mxu0 %v8440
        %v8960 = vpop.f32.mrb[0].mxu0
        %v8961 = vadd.f32 %v8800, %v8960
        %v8962 = vpop.f32.mrb[0].mxu0
        %v8963 = vpop.f32.mrb[0].mxu0
        %v8964 = vadd.f32 %v8803, %v8963
        %v8965 = vpop.f32.mrb[0].mxu0
        %8966 = vmatprep.mubr.bf16.mxu0 0
        %8967 = vmatmul.mubr.bf16.gmra.mrb[0].mxu0 %v8443
        %v8968 = vpop.f32.mrb[0].mxu0
        %v8969 = vadd.f32 %v8808, %v8968
        %v8970 = vpop.f32.mrb[0].mxu0
        %v8971 = vpop.f32.mrb[0].mxu0
        %v8972 = vadd.f32 %v8811, %v8971
        %v8973 = vpop.f32.mrb[0].mxu0
        %8974 = vdwg.mxu0
        %v8975 = vld [vmem:[#allocation4] sm:$0xff]
        %v8976 = vld [vmem:[#allocation4 + $0x8] sm:$0xff]
        %v8977 = vld [vmem:[#allocation4 + $0x10] sm:$0xff]
        %v8978 = vld [vmem:[#allocation4 + $0x18] sm:$0xff]
        %v8979 = vld [vmem:[#allocation4 + $0x20] sm:$0xff]
        %v8980 = vld [vmem:[#allocation4 + $0x28] sm:$0xff]
        %v8981 = vld [vmem:[#allocation4 + $0x30] sm:$0xff]
        %v8982 = vld [vmem:[#allocation4 + $0x38] sm:$0xff]
        %v8983 = vld [vmem:[#allocation4 + $0x40] sm:$0xff]
        %v8984 = vld [vmem:[#allocation4 + $0x48] sm:$0xff]
        %v8985 = vld [vmem:[#allocation4 + $0x50] sm:$0xff]
        %v8986 = vld [vmem:[#allocation4 + $0x58] sm:$0xff]
        %v8987 = vld [vmem:[#allocation4 + $0x60] sm:$0xff]
        %v8988 = vld [vmem:[#allocation4 + $0x68] sm:$0xff]
        %v8989 = vld [vmem:[#allocation4 + $0x70] sm:$0xff]
        %v8990 = vld [vmem:[#allocation4 + $0x78] sm:$0xff]
        %v8991 = vld [vmem:[#allocation4 + $0x80] sm:$0xff]
        %v8992 = vld [vmem:[#allocation4 + $0x88] sm:$0xff]
        %v8993 = vld [vmem:[#allocation4 + $0x90] sm:$0xff]
        %v8994 = vld [vmem:[#allocation4 + $0x98] sm:$0xff]
        %v8995 = vld [vmem:[#allocation4 + $0xa0] sm:$0xff]
        %v8996 = vld [vmem:[#allocation4 + $0xa8] sm:$0xff]
        %v8997 = vld [vmem:[#allocation4 + $0xb0] sm:$0xff]
        %v8998 = vld [vmem:[#allocation4 + $0xb8] sm:$0xff]
        %v8999 = vld [vmem:[#allocation4 + $0xc0] sm:$0xff]
        %v9000 = vld [vmem:[#allocation4 + $0xc8] sm:$0xff]
        %v9001 = vld [vmem:[#allocation4 + $0xd0] sm:$0xff]
        %v9002 = vld [vmem:[#allocation4 + $0xd8] sm:$0xff]
        %v9003 = vld [vmem:[#allocation4 + $0xe0] sm:$0xff]
        %v9004 = vld [vmem:[#allocation4 + $0xe8] sm:$0xff]
        %v9005 = vld [vmem:[#allocation4 + $0xf0] sm:$0xff]
        %v9006 = vld [vmem:[#allocation4 + $0xf8] sm:$0xff]
        %v9007 = vadd.f32 %v8975, %v8849
        %v9008 = vadd.f32 %v8976, %v8852
        %v9009 = vadd.f32 %v8977, %v8857
        %v9010 = vadd.f32 %v8978, %v8860
        %v9011 = vadd.f32 %v8979, %v8865
        %v9012 = vadd.f32 %v8980, %v8868
        %v9013 = vadd.f32 %v8981, %v8873
        %v9014 = vadd.f32 %v8982, %v8876
        %v9015 = vadd.f32 %v8983, %v8881
        %v9016 = vadd.f32 %v8984, %v8884
        %v9017 = vadd.f32 %v8985, %v8889
        %v9018 = vadd.f32 %v8986, %v8892
        %v9019 = vadd.f32 %v8987, %v8897
        %v9020 = vadd.f32 %v8988, %v8900
        %v9021 = vadd.f32 %v8989, %v8905
        %v9022 = vadd.f32 %v8990, %v8908
        %v9023 = vadd.f32 %v8991, %v8913
        %v9024 = vadd.f32 %v8992, %v8916
        %v9025 = vadd.f32 %v8993, %v8921
        %v9026 = vadd.f32 %v8994, %v8924
        %v9027 = vadd.f32 %v8995, %v8929
        %v9028 = vadd.f32 %v8996, %v8932
        %v9029 = vadd.f32 %v8997, %v8937
        %v9030 = vadd.f32 %v8998, %v8940
        %v9031 = vadd.f32 %v8999, %v8945
        %v9032 = vadd.f32 %v9000, %v8948
        %v9033 = vadd.f32 %v9001, %v8953
        %v9034 = vadd.f32 %v9002, %v8956
        %v9035 = vadd.f32 %v9003, %v8961
        %v9036 = vadd.f32 %v9004, %v8964
        %v9037 = vadd.f32 %v9005, %v8969
        %v9038 = vadd.f32 %v9006, %v8972
        %9039 = vst [vmem:[#allocation4] sm:$0xff] %v9007
        %9040 = vst [vmem:[#allocation4 + $0x8] sm:$0xff] %v9008
        %9041 = vst [vmem:[#allocation4 + $0x10] sm:$0xff] %v9009
        %9042 = vst [vmem:[#allocation4 + $0x18] sm:$0xff] %v9010
        %9043 = vst [vmem:[#allocation4 + $0x20] sm:$0xff] %v9011
        %9044 = vst [vmem:[#allocation4 + $0x28] sm:$0xff] %v9012
        %9045 = vst [vmem:[#allocation4 + $0x30] sm:$0xff] %v9013
        %9046 = vst [vmem:[#allocation4 + $0x38] sm:$0xff] %v9014
        %9047 = vst [vmem:[#allocation4 + $0x40] sm:$0xff] %v9015
        %9048 = vst [vmem:[#allocation4 + $0x48] sm:$0xff] %v9016
        %9049 = vst [vmem:[#allocation4 + $0x50] sm:$0xff] %v9017
        %9050 = vst [vmem:[#allocation4 + $0x58] sm:$0xff] %v9018
        %9051 = vst [vmem:[#allocation4 + $0x60] sm:$0xff] %v9019
        %9052 = vst [vmem:[#allocation4 + $0x68] sm:$0xff] %v9020
        %9053 = vst [vmem:[#allocation4 + $0x70] sm:$0xff] %v9021
        %9054 = vst [vmem:[#allocation4 + $0x78] sm:$0xff] %v9022
        %9055 = vst [vmem:[#allocation4 + $0x80] sm:$0xff] %v9023
        %9056 = vst [vmem:[#allocation4 + $0x88] sm:$0xff] %v9024
        %9057 = vst [vmem:[#allocation4 + $0x90] sm:$0xff] %v9025
        %9058 = vst [vmem:[#allocation4 + $0x98] sm:$0xff] %v9026
        %9059 = vst [vmem:[#allocation4 + $0xa0] sm:$0xff] %v9027
        %9060 = vst [vmem:[#allocation4 + $0xa8] sm:$0xff] %v9028
        %9061 = vst [vmem:[#allocation4 + $0xb0] sm:$0xff] %v9029
        %9062 = vst [vmem:[#allocation4 + $0xb8] sm:$0xff] %v9030
        %9063 = vst [vmem:[#allocation4 + $0xc0] sm:$0xff] %v9031
        %9064 = vst [vmem:[#allocation4 + $0xc8] sm:$0xff] %v9032
        %9065 = vst [vmem:[#allocation4 + $0xd0] sm:$0xff] %v9033
        %9066 = vst [vmem:[#allocation4 + $0xd8] sm:$0xff] %v9034
        %9067 = vst [vmem:[#allocation4 + $0xe0] sm:$0xff] %v9035
        %9068 = vst [vmem:[#allocation4 + $0xe8] sm:$0xff] %v9036
        %9069 = vst [vmem:[#allocation4 + $0xf0] sm:$0xff] %v9037
        %9070 = vst [vmem:[#allocation4 + $0xf8] sm:$0xff] %v9038
        %v9071 = vld [vmem:[#allocation4] sm:$0xff]
        %v9072 = vld [vmem:[#allocation4 + $0x8] sm:$0xff]
        %v9073 = vld [vmem:[#allocation4 + $0x10] sm:$0xff]
        %v9074 = vld [vmem:[#allocation4 + $0x18] sm:$0xff]
        %v9075 = vld [vmem:[#allocation4 + $0x20] sm:$0xff]
        %v9076 = vld [vmem:[#allocation4 + $0x28] sm:$0xff]
        %v9077 = vld [vmem:[#allocation4 + $0x30] sm:$0xff]
        %v9078 = vld [vmem:[#allocation4 + $0x38] sm:$0xff]
        %v9079 = vld [vmem:[#allocation4 + $0x40] sm:$0xff]
        %v9080 = vld [vmem:[#allocation4 + $0x48] sm:$0xff]
        %v9081 = vld [vmem:[#allocation4 + $0x50] sm:$0xff]
        %v9082 = vld [vmem:[#allocation4 + $0x58] sm:$0xff]
        %v9083 = vld [vmem:[#allocation4 + $0x60] sm:$0xff]
        %v9084 = vld [vmem:[#allocation4 + $0x68] sm:$0xff]
        %v9085 = vld [vmem:[#allocation4 + $0x70] sm:$0xff]
        %v9086 = vld [vmem:[#allocation4 + $0x78] sm:$0xff]
        %v9087 = vld [vmem:[#allocation4 + $0x80] sm:$0xff]
        %v9088 = vld [vmem:[#allocation4 + $0x88] sm:$0xff]
        %v9089 = vld [vmem:[#allocation4 + $0x90] sm:$0xff]
        %v9090 = vld [vmem:[#allocation4 + $0x98] sm:$0xff]
        %v9091 = vld [vmem:[#allocation4 + $0xa0] sm:$0xff]
        %v9092 = vld [vmem:[#allocation4 + $0xa8] sm:$0xff]
        %v9093 = vld [vmem:[#allocation4 + $0xb0] sm:$0xff]
        %v9094 = vld [vmem:[#allocation4 + $0xb8] sm:$0xff]
        %v9095 = vld [vmem:[#allocation4 + $0xc0] sm:$0xff]
        %v9096 = vld [vmem:[#allocation4 + $0xc8] sm:$0xff]
        %v9097 = vld [vmem:[#allocation4 + $0xd0] sm:$0xff]
        %v9098 = vld [vmem:[#allocation4 + $0xd8] sm:$0xff]
        %v9099 = vld [vmem:[#allocation4 + $0xe0] sm:$0xff]
        %v9100 = vld [vmem:[#allocation4 + $0xe8] sm:$0xff]
        %v9101 = vld [vmem:[#allocation4 + $0xf0] sm:$0xff]
        %v9102 = vld [vmem:[#allocation4 + $0xf8] sm:$0xff]
        %9103 = vst [vmem:[%s433] sm:$0xff] %v9071
        %9104 = vst [vmem:[%s433 + $0x8] sm:$0xff] %v9072
        %9105 = vst [vmem:[%s433 + $0x10] sm:$0xff] %v9073
        %9106 = vst [vmem:[%s433 + $0x18] sm:$0xff] %v9074
        %9107 = vst [vmem:[%s433 + $0x20] sm:$0xff] %v9075
        %9108 = vst [vmem:[%s433 + $0x28] sm:$0xff] %v9076
        %9109 = vst [vmem:[%s433 + $0x30] sm:$0xff] %v9077
        %9110 = vst [vmem:[%s433 + $0x38] sm:$0xff] %v9078
        %9111 = vst [vmem:[%s433 + $0x40] sm:$0xff] %v9079
        %9112 = vst [vmem:[%s433 + $0x48] sm:$0xff] %v9080
        %9113 = vst [vmem:[%s433 + $0x50] sm:$0xff] %v9081
        %9114 = vst [vmem:[%s433 + $0x58] sm:$0xff] %v9082
        %9115 = vst [vmem:[%s433 + $0x60] sm:$0xff] %v9083
        %9116 = vst [vmem:[%s433 + $0x68] sm:$0xff] %v9084
        %9117 = vst [vmem:[%s433 + $0x70] sm:$0xff] %v9085
        %9118 = vst [vmem:[%s433 + $0x78] sm:$0xff] %v9086
        %9119 = vst [vmem:[%s433 + $0x80] sm:$0xff] %v9087
        %9120 = vst [vmem:[%s433 + $0x88] sm:$0xff] %v9088
        %9121 = vst [vmem:[%s433 + $0x90] sm:$0xff] %v9089
        %9122 = vst [vmem:[%s433 + $0x98] sm:$0xff] %v9090
        %9123 = vst [vmem:[%s433 + $0xa0] sm:$0xff] %v9091
        %9124 = vst [vmem:[%s433 + $0xa8] sm:$0xff] %v9092
        %9125 = vst [vmem:[%s433 + $0xb0] sm:$0xff] %v9093
        %9126 = vst [vmem:[%s433 + $0xb8] sm:$0xff] %v9094
        %9127 = vst [vmem:[%s433 + $0xc0] sm:$0xff] %v9095
        %9128 = vst [vmem:[%s433 + $0xc8] sm:$0xff] %v9096
        %9129 = vst [vmem:[%s433 + $0xd0] sm:$0xff] %v9097
        %9130 = vst [vmem:[%s433 + $0xd8] sm:$0xff] %v9098
        %9131 = vst [vmem:[%s433 + $0xe0] sm:$0xff] %v9099
        %9132 = vst [vmem:[%s433 + $0xe8] sm:$0xff] %v9100
        %9133 = vst [vmem:[%s433 + $0xf0] sm:$0xff] %v9101
        %9134 = vst [vmem:[%s433 + $0xf8] sm:$0xff] %v9102
        %s9135 = sand.u32 %s313, 1
        %s9136 = scalar_lea.sflag [#allocation6], %s9135
        %s9137 = sand.u32 %s313, 1
        %s9138 = smul.addr %s9137, 256
        %s9139 = scalar_lea.vmem [#allocation5], %s9138
        // Predicated region
        $region73: #{chameleon_resnet_block.1} parent=71 // pred_check
          %p9140 = pneg %p323
        $region74: #{chameleon_resnet_block.1} parent=71 // pred_check_branch
          %9142 = sbr.rel (%p9140) target = $region76
        $region75: #{chameleon_resnet_block.1} parent=71 // pred_region
          %s9144 = ssub.s32 4096, 4096
          %9145 = vsyncadd %s9136, %s9144
          %s9146 = smul.addr %s27, 32
          %s9147 = smul.addr %s9146, 128
          %s9148 = scalar_lea.hbm %s13, %s9147
          %s9149 = sshll.u32 %s9139, 4
          %s9150 = int_to_ptr.vmem [resolvable:$true] %s9149
          %9155 = dma.vmem_to_hbm [thread:$0]  %s9150, 4096, %s9148, %s9136, 128, 128, 8
        $region76: #{chameleon_resnet_block.1} parent=71 // pred_fallthru
          _
      $region72: #{chameleon_resnet_block.1} parent=5 // pred_fallthru
        _
      %p9156 = scmp.le.s32.totalorder 2, %s22
      // Predicated region
      $region77: #{chameleon_resnet_block.1} parent=5 // pred_check
        %p9157 = pneg %p9156
      $region78: #{chameleon_resnet_block.1} parent=5 // pred_check_branch
        %9159 = sbr.rel (%p9157) target = $region80
      $region79: #{chameleon_resnet_block.1} parent=5 // pred_region
        %s9160 = ssub.s32 %s22, 2
        // Predicated region
        $region81: #{chameleon_resnet_block.1} parent=79 // pred_check
          %p9161 = pneg %p329
        $region82: #{chameleon_resnet_block.1} parent=79 // pred_check_branch
          %9163 = sbr.rel (%p9161) target = $region84
        $region83: #{chameleon_resnet_block.1} parent=79 // pred_region
          %s9164 = sand.u32 %s314, 1
          %s9165 = scalar_lea.sflag [#allocation6], %s9164
          %s9166 = sand.u32 %s314, 1
          %s9167 = smul.addr %s9166, 256
          %s9168 = scalar_lea.vmem [#allocation5], %s9167
          %9169 = dma.done %s9165, 4096
        $region84: #{chameleon_resnet_block.1} parent=79 // pred_fallthru
          _
      $region80: #{chameleon_resnet_block.1} parent=5 // pred_fallthru
        _
    $region6: #{chameleon_resnet_block.1} parent=1 // loop_footer
      %s26 = sadd.s32 1, %s22
    $region7: #{chameleon_resnet_block.1} parent=1 // loop_footer_branch
      %21 = sbr.rel target = $region3
    $region8: #{chameleon_resnet_block.1} parent=1 // loop_exit
      _
    %9170 = vsyncpa [#allocation6], 1
    %s9171 = scalar_lea.sflag [#allocation6], 1
    %9172 = vsyncpa %s9171, 1

</llo_original>
